<compile_context>
chip_gen: v7x
topology: tpu7x:2x2x1
jax: 0.10.0
libtpu: 0.0.40
codegen_flags: <defaults>
</compile_context>

<pallas_src>
import math

import jax
import jax.numpy as jnp
from jax import lax
from jax.experimental import pallas as pl
from jax.experimental.pallas import tpu as pltpu

INPUT_DIM = 1     # nn.LSTM input_size (module default)
HIDDEN = 10       # hidden_dim (module default)
OUTPUT_DIM = 1    # fc output features (module default)
BATCH = 2         # small example batch
SEQ_LEN = 16      # small example sequence length

# ----- packed-parameter row offsets (single (P_ROWS, 4H) f32 buffer) -----
_H, _I = HIDDEN, INPUT_DIM
P_WIH0 = 0                      # (I, 4H)   W_ih_l0^T  (i/f/o cols pre-scaled by 0.5)
P_B0 = P_WIH0 + _I              # (1, 4H)   b_ih_l0 + b_hh_l0 (scaled)
P_B1 = P_B0 + 1                 # (1, 4H)   b_ih_l1 + b_hh_l1 (scaled)
P_WHH0 = P_B1 + 1               # (H, 4H)   W_hh_l0^T (scaled)
P_WIH1 = P_WHH0 + _H            # (H, 4H)   W_ih_l1^T (scaled)
P_WHH1 = P_WIH1 + _H            # (H, 4H)   W_hh_l1^T (scaled)
P_ATTN_W = P_WHH1 + _H          # (H, H)    attn.weight^T   (cols 0:H)
P_ATTN_B = P_ATTN_W + _H        # (1, H)    attn.bias
P_CTX = P_ATTN_B + 1            # (1, H)    context.weight (as a row)
P_FC_W = P_CTX + 1              # (1, H)    fc.weight (as a row)
P_FC_B = P_FC_W + 1             # (1, 1)    fc.bias (at [0,0])
P_ROWS = P_FC_B + 1             # = 47


def attention_lstm_kernel(x_ref, p_ref, out_ref, attnw_ref, h1_scr):
    """Whole forward pass in one invocation.

    x_ref:   (T*B, I)       time-major rows (t outer, b inner)
    p_ref:   (P_ROWS, 4H)   packed parameters (see offsets above)
    out_ref: (B, OUTPUT_DIM)
    attnw_ref: (T*B, 1)     softmax attention weights, time-major column
                            (wrapper reshapes/transposes to (B, T))
    h1_scr:  VMEM (T*B, H)  per-step layer-1 hidden states
    """
    TB, I = x_ref.shape
    H = HIDDEN
    B = out_ref.shape[0]
    T = TB // B
    f32 = jnp.float32

    # ---- unpack parameters (static slices of the single packed buffer; one DMA) ----
    wih0 = p_ref[P_WIH0:P_WIH0 + I, :]                 # (I, 4H)
    b0 = p_ref[P_B0:P_B0 + 1, :]                       # (1, 4H)
    b1 = p_ref[P_B1:P_B1 + 1, :]                       # (1, 4H)
    whh0 = p_ref[P_WHH0:P_WHH0 + H, :]                 # (H, 4H)
    wih1 = p_ref[P_WIH1:P_WIH1 + H, :]                 # (H, 4H)
    whh1 = p_ref[P_WHH1:P_WHH1 + H, :]                 # (H, 4H)
    attn_w = p_ref[P_ATTN_W:P_ATTN_W + H, 0:H]         # (H, H)
    attn_b = p_ref[P_ATTN_B:P_ATTN_B + 1, 0:H]         # (1, H)
    ctx_row = p_ref[P_CTX:P_CTX + 1, 0:H]              # (1, H)
    fc_row = p_ref[P_FC_W:P_FC_W + 1, 0:H]             # (1, H)
    fc_b = p_ref[P_FC_B:P_FC_B + 1, 0:1]               # (1, 1)

    # Loop-invariant row lists for the VPU matvecs (hoisted once).
    whh0_rows = [whh0[k:k + 1, :] for k in range(H)]
    whh1_rows = [whh1[k:k + 1, :] for k in range(H)]
    wih1_rows = [wih1[k:k + 1, :] for k in range(H)]

    def vpu_matvec(h, rows):
        # (B,H) x (H,4H) -> (B,4H) as broadcast multiplies + pairwise-tree add on the VPU.
        # Keeps the per-step projection off the MXU (M=2, K=10 underfills the systolic
        # array and pays the full push/pop round trip on the serial chain).
        parts = [h[:, k:k + 1] * rows[k] for k in range(len(rows))]
        while len(parts) > 1:
            nxt = [parts[i] + parts[i + 1] for i in range(0, len(parts) - 1, 2)]
            if len(parts) & 1:
                nxt.append(parts[-1])
            parts = nxt
        return parts[0]

    def cell(gate_pre, c_prev):
        # i/f/o columns of gate_pre are pre-scaled by 0.5 (folded into the weights),
        # so one tanh over the whole (B,4H) block covers all four gates:
        #   sigmoid(x) = 0.5*(tanh(x/2)+1) for i/f/o, plain tanh for g.
        th = jnp.tanh(gate_pre)                        # single EUP launch
        i = 0.5 * (th[:, 0:H] + 1.0)
        f = 0.5 * (th[:, H:2 * H] + 1.0)
        g = th[:, 2 * H:3 * H]
        o = 0.5 * (th[:, 3 * H:4 * H] + 1.0)
        c_new = f * c_prev + i * g
        h_new = o * jnp.tanh(c_new)                    # second (and last) EUP launch
        return h_new, c_new

    # ---- layer-0 input projection hoisted for all T*B rows (off the recurrence) ----
    x2d = x_ref[...]                                   # (T*B, I)
    if I == 1:
        gx0 = x2d * wih0 + b0                          # VPU outer product
    else:
        gx0 = jnp.dot(x2d, wih0, preferred_element_type=f32) + b0

    # ---- interleaved 2-layer recurrence (layer-1 step t overlaps layer-0 step t+1) ----
    z = jnp.zeros((B, H), f32)                         # PyTorch default h0 = c0 = 0
    h0, c0, h1, c1 = z, z, z, z
    for t in range(T):
        g0 = gx0[t * B:(t + 1) * B, :] + vpu_matvec(h0, whh0_rows)
        h0, c0 = cell(g0, c0)
        g1 = vpu_matvec(h0, wih1_rows) + b1 + vpu_matvec(h1, whh1_rows)
        h1, c1 = cell(g1, c1)
        h1_scr[t * B:(t + 1) * B, :] = h1              # vst slot is idle: free buffering

    h1_all = h1_scr[...]                               # (T*B, H) time-major hidden states

    # ---- attention head, vectorized on the tail ----
    a = jnp.tanh(jnp.dot(h1_all, attn_w, preferred_element_type=f32) + attn_b)   # (T*B,H)
    v = jnp.sum(a * ctx_row, axis=1, keepdims=True)                              # (T*B,1)

    # Segmented softmax over time directly in the time-major layout (batch id = row % B).
    rows = lax.broadcasted_iota(jnp.int32, (TB, 1), 0)
    m = jnp.max(v, axis=0, keepdims=True)              # global max: valid shift per segment
    e = jnp.exp(v - m)
    denom = jnp.zeros((TB, 1), f32)
    for b in range(B):
        mask = (rows % B) == b
        s_b = jnp.sum(jnp.where(mask, e, 0.0), axis=0, keepdims=True)
        denom = denom + jnp.where(mask, s_b, 0.0)
    w_col = e / denom                                  # (T*B, 1) softmax weights
    attnw_ref[...] = w_col

    # context vector: segmented weighted sum over time (masked sublane reductions)
    weighted = w_col * h1_all                          # (T*B, H)
    ctx_parts = []
    for b in range(B):
        mask = (rows % B) == b
        ctx_parts.append(jnp.sum(jnp.where(mask, weighted, 0.0), axis=0, keepdims=True))
    ctx = jnp.concatenate(ctx_parts, axis=0)           # (B, H)

    # final fc: lane-reduce against the fc weight row
    out_ref[...] = jnp.sum(ctx * fc_row, axis=1, keepdims=True) + fc_b


def init_params(key):
    """Deterministic synthetic parameters with the shapes nn.LSTM / nn.Linear create."""
    H, I = HIDDEN, INPUT_DIM
    s = 1.0 / math.sqrt(H)
    keys = jax.random.split(key, 13)

    def u(kk, shape, scale):
        return jax.random.uniform(kk, shape, jnp.float32, -scale, scale)

    return {
        "w_ih_l0": u(keys[0], (4 * H, I), s),
        "w_hh_l0": u(keys[1], (4 * H, H), s),
        "b_ih_l0": u(keys[2], (4 * H,), s),
        "b_hh_l0": u(keys[3], (4 * H,), s),
        "w_ih_l1": u(keys[4], (4 * H, H), s),
        "w_hh_l1": u(keys[5], (4 * H, H), s),
        "b_ih_l1": u(keys[6], (4 * H,), s),
        "b_hh_l1": u(keys[7], (4 * H,), s),
        "attn_w": u(keys[8], (H, H), s),
        "attn_b": u(keys[9], (H,), s),
        "ctx_w": u(keys[10], (1, H), s),            # context Linear, bias=False
        "fc_w": u(keys[11], (OUTPUT_DIM, H), s),
        "fc_b": u(keys[12], (OUTPUT_DIM,), s),
    }


def _pack_params(params):
    """Pre-transpose, fold biases, pre-scale i/f/o gate columns by 0.5 (single-tanh gate
    fusion), and pack everything into ONE (P_ROWS, 4H) f32 buffer (one input DMA)."""
    H, I = HIDDEN, INPUT_DIM
    H4 = 4 * H
    # 0.5 on i/f/o columns, 1.0 on the g (cell-candidate) columns.
    gate_scale = jnp.concatenate([
        jnp.full((H,), 0.5, jnp.float32), jnp.full((H,), 0.5, jnp.float32),
        jnp.ones((H,), jnp.float32), jnp.full((H,), 0.5, jnp.float32)])      # (4H,)

    wih0T = params["w_ih_l0"].T * gate_scale[None, :]                        # (I, 4H)
    whh0T = params["w_hh_l0"].T * gate_scale[None, :]                        # (H, 4H)
    b0 = ((params["b_ih_l0"] + params["b_hh_l0"]) * gate_scale).reshape(1, H4)
    wih1T = params["w_ih_l1"].T * gate_scale[None, :]                        # (H, 4H)
    whh1T = params["w_hh_l1"].T * gate_scale[None, :]                        # (H, 4H)
    b1 = ((params["b_ih_l1"] + params["b_hh_l1"]) * gate_scale).reshape(1, H4)

    def pad_w(a):                                      # pad width-H rows out to width 4H
        return jnp.pad(a, ((0, 0), (0, H4 - a.shape[1])))

    packed = jnp.concatenate([
        wih0T,                                         # rows P_WIH0 : P_WIH0+I
        b0,                                            # row  P_B0
        b1,                                            # row  P_B1
        whh0T,                                         # rows P_WHH0 : +H
        wih1T,                                         # rows P_WIH1 : +H
        whh1T,                                         # rows P_WHH1 : +H
        pad_w(params["attn_w"].T),                     # rows P_ATTN_W : +H
        pad_w(params["attn_b"].reshape(1, H)),         # row  P_ATTN_B
        pad_w(params["ctx_w"].reshape(1, H)),          # row  P_CTX
        pad_w(params["fc_w"].reshape(1, H)),           # row  P_FC_W
        pad_w(params["fc_b"].reshape(1, 1)),           # row  P_FC_B
    ], axis=0).astype(jnp.float32)                     # (P_ROWS, 4H)
    return packed


def attention_lstm_forward(x, params):
    """x: (B, T, INPUT_DIM) batch-first, as nn.LSTM(batch_first=True) consumes it."""
    B, T, I = x.shape
    H4 = 4 * HIDDEN

    # time-major flattening (t outer, b inner) done in plain JAX
    x_tm = jnp.transpose(x.astype(jnp.float32), (1, 0, 2)).reshape(T * B, I)
    packed = _pack_params(params)

    full = lambda i: (0, 0)   # single resident grid step: whole-array blocks

    out, w_col = pl.pallas_call(
        attention_lstm_kernel,
        out_shape=(jax.ShapeDtypeStruct((B, OUTPUT_DIM), jnp.float32),
                   jax.ShapeDtypeStruct((T * B, 1), jnp.float32)),
        grid_spec=pltpu.PrefetchScalarGridSpec(
            num_scalar_prefetch=0,
            grid=(1,),
            in_specs=[
                pl.BlockSpec((T * B, I), full),        # x (time-major rows)
                pl.BlockSpec((P_ROWS, H4), full),      # packed parameters (one DMA)
            ],
            out_specs=[
                pl.BlockSpec((B, OUTPUT_DIM), full),
                pl.BlockSpec((T * B, 1), full),
            ],
            scratch_shapes=[pltpu.VMEM((T * B, HIDDEN), jnp.float32)],
        ),
        compiler_params=pltpu.CompilerParams(
            dimension_semantics=("arbitrary",)),
    )(x_tm, packed)

    # (T*B,1) time-major column -> (B,T): pure layout plumbing, done outside the kernel.
    attn_w = w_col.reshape(T, B).transpose(1, 0)
    return out, attn_w


def attention_lstm_reference(x, p):
    """Pure-JAX reference mirroring the PyTorch forward exactly."""
    x = x.astype(jnp.float32)
    B, T, _ = x.shape

    def cell(wih, whh, bih, bhh, h, c, inp):
        g = inp @ wih.T + bih + h @ whh.T + bhh
        i, f, gg, o = jnp.split(g, 4, axis=-1)
        c = jax.nn.sigmoid(f) * c + jax.nn.sigmoid(i) * jnp.tanh(gg)
        h = jax.nn.sigmoid(o) * jnp.tanh(c)
        return h, c

    def step(carry, xt):
        h0, c0, h1, c1 = carry
        h0, c0 = cell(p["w_ih_l0"], p["w_hh_l0"], p["b_ih_l0"], p["b_hh_l0"], h0, c0, xt)
        h1, c1 = cell(p["w_ih_l1"], p["w_hh_l1"], p["b_ih_l1"], p["b_hh_l1"], h1, c1, h0)
        return (h0, c0, h1, c1), h1

    z = jnp.zeros((B, HIDDEN), jnp.float32)
    _, hs = lax.scan(step, (z, z, z, z), jnp.transpose(x, (1, 0, 2)))
    out = jnp.transpose(hs, (1, 0, 2))                         # (B, T, H)
    a = jnp.tanh(out @ p["attn_w"].T + p["attn_b"])            # (B, T, H)
    scores = (a @ p["ctx_w"].T)[..., 0]                        # (B, T)
    w = jax.nn.softmax(scores, axis=1)
    context = jnp.sum(w[..., None] * out, axis=1)              # (B, H)
    y = context @ p["fc_w"].T + p["fc_b"]                      # (B, 1)
    return y, w


if __name__ == "__main__":
    key = jax.random.PRNGKey(0)
    pkey, xkey = jax.random.split(key)
    params = init_params(pkey)

    # batch-first input, as the PyTorch module expects: (B, T, input_dim)
    x = jax.random.normal(xkey, (BATCH, SEQ_LEN, INPUT_DIM), jnp.float32)

    out, attn_w = jax.block_until_ready(jax.jit(attention_lstm_forward)(x, params))
    assert out.shape == (BATCH, OUTPUT_DIM), out.shape
    assert attn_w.shape == (BATCH, SEQ_LEN), attn_w.shape

    ref_out, ref_w = jax.block_until_ready(attention_lstm_reference(x, params))
    err = max(float(jnp.max(jnp.abs(out - ref_out))),
              float(jnp.max(jnp.abs(attn_w - ref_w))))
    assert err < 1e-3, f"mismatch vs reference: {err}"

    print("KERNEL_OK")
</pallas_src>

<mosaic_0001>
module attributes {stable_mosaic.version = 11 : i64} {
  func.func @attention_lstm_kernel(%arg0: i32, %arg1: memref<32x1xf32, #tpu.memory_space<vmem>>, %arg2: memref<47x40xf32, #tpu.memory_space<vmem>>, %arg3: memref<2x1xf32, #tpu.memory_space<vmem>>, %arg4: memref<32x1xf32, #tpu.memory_space<vmem>>, %arg5: memref<32x10xf32, #tpu.memory_space<vmem>>) attributes {dimension_semantics = [#tpu.dimension_semantics<arbitrary>], iteration_bounds = array<i64: 1>, scalar_prefetch = 0 : i64, scratch_operands = 1 : i64, tpu.core_type = #tpu.core_type<tc>, window_params = [{pipeline_mode = #tpu.pipeline_mode<synchronous>, transform_indices = @transform_0, window_bounds = array<i64: 32, 1>}, {pipeline_mode = #tpu.pipeline_mode<synchronous>, transform_indices = @transform_1, window_bounds = array<i64: 47, 40>}, {pipeline_mode = #tpu.pipeline_mode<synchronous>, transform_indices = @transform_2, window_bounds = array<i64: 2, 1>}, {pipeline_mode = #tpu.pipeline_mode<synchronous>, transform_indices = @transform_3, window_bounds = array<i64: 32, 1>}]} {
    %c0 = arith.constant 0 : index
    %c0_0 = arith.constant 0 : index
    %0 = vector.load %arg2[%c0, %c0_0] : memref<47x40xf32, #tpu.memory_space<vmem>>, vector<1x40xf32>
    %c1 = arith.constant 1 : index
    %c0_1 = arith.constant 0 : index
    %1 = vector.load %arg2[%c1, %c0_1] : memref<47x40xf32, #tpu.memory_space<vmem>>, vector<1x40xf32>
    %c2 = arith.constant 2 : index
    %c0_2 = arith.constant 0 : index
    %2 = vector.load %arg2[%c2, %c0_2] : memref<47x40xf32, #tpu.memory_space<vmem>>, vector<1x40xf32>
    %c3 = arith.constant 3 : index
    %c0_3 = arith.constant 0 : index
    %3 = vector.load %arg2[%c3, %c0_3] : memref<47x40xf32, #tpu.memory_space<vmem>>, vector<10x40xf32>
    %c13 = arith.constant 13 : index
    %c0_4 = arith.constant 0 : index
    %4 = vector.load %arg2[%c13, %c0_4] : memref<47x40xf32, #tpu.memory_space<vmem>>, vector<10x40xf32>
    %c23 = arith.constant 23 : index
    %c0_5 = arith.constant 0 : index
    %5 = vector.load %arg2[%c23, %c0_5] : memref<47x40xf32, #tpu.memory_space<vmem>>, vector<10x40xf32>
    %c33 = arith.constant 33 : index
    %c0_6 = arith.constant 0 : index
    %6 = vector.load %arg2[%c33, %c0_6] : memref<47x40xf32, #tpu.memory_space<vmem>>, vector<10x10xf32>
    %c43 = arith.constant 43 : index
    %c0_7 = arith.constant 0 : index
    %7 = vector.load %arg2[%c43, %c0_7] : memref<47x40xf32, #tpu.memory_space<vmem>>, vector<1x10xf32>
    %c44 = arith.constant 44 : index
    %c0_8 = arith.constant 0 : index
    %8 = vector.load %arg2[%c44, %c0_8] : memref<47x40xf32, #tpu.memory_space<vmem>>, vector<1x10xf32>
    %c45 = arith.constant 45 : index
    %c0_9 = arith.constant 0 : index
    %9 = vector.load %arg2[%c45, %c0_9] : memref<47x40xf32, #tpu.memory_space<vmem>>, vector<1x10xf32>
    %c46 = arith.constant 46 : index
    %c0_10 = arith.constant 0 : index
    %10 = vector.load %arg2[%c46, %c0_10] : memref<47x40xf32, #tpu.memory_space<vmem>>, vector<1x1xf32>
    %11 = vector.extract_strided_slice %3 {offsets = [0, 0], sizes = [1, 40], strides = [1, 1]} : vector<10x40xf32> to vector<1x40xf32>
    %12 = vector.extract_strided_slice %3 {offsets = [1, 0], sizes = [1, 40], strides = [1, 1]} : vector<10x40xf32> to vector<1x40xf32>
    %13 = vector.extract_strided_slice %3 {offsets = [2, 0], sizes = [1, 40], strides = [1, 1]} : vector<10x40xf32> to vector<1x40xf32>
    %14 = vector.extract_strided_slice %3 {offsets = [3, 0], sizes = [1, 40], strides = [1, 1]} : vector<10x40xf32> to vector<1x40xf32>
    %15 = vector.extract_strided_slice %3 {offsets = [4, 0], sizes = [1, 40], strides = [1, 1]} : vector<10x40xf32> to vector<1x40xf32>
    %16 = vector.extract_strided_slice %3 {offsets = [5, 0], sizes = [1, 40], strides = [1, 1]} : vector<10x40xf32> to vector<1x40xf32>
    %17 = vector.extract_strided_slice %3 {offsets = [6, 0], sizes = [1, 40], strides = [1, 1]} : vector<10x40xf32> to vector<1x40xf32>
    %18 = vector.extract_strided_slice %3 {offsets = [7, 0], sizes = [1, 40], strides = [1, 1]} : vector<10x40xf32> to vector<1x40xf32>
    %19 = vector.extract_strided_slice %3 {offsets = [8, 0], sizes = [1, 40], strides = [1, 1]} : vector<10x40xf32> to vector<1x40xf32>
    %20 = vector.extract_strided_slice %3 {offsets = [9, 0], sizes = [1, 40], strides = [1, 1]} : vector<10x40xf32> to vector<1x40xf32>
    %21 = vector.extract_strided_slice %5 {offsets = [0, 0], sizes = [1, 40], strides = [1, 1]} : vector<10x40xf32> to vector<1x40xf32>
    %22 = vector.extract_strided_slice %5 {offsets = [1, 0], sizes = [1, 40], strides = [1, 1]} : vector<10x40xf32> to vector<1x40xf32>
    %23 = vector.extract_strided_slice %5 {offsets = [2, 0], sizes = [1, 40], strides = [1, 1]} : vector<10x40xf32> to vector<1x40xf32>
    %24 = vector.extract_strided_slice %5 {offsets = [3, 0], sizes = [1, 40], strides = [1, 1]} : vector<10x40xf32> to vector<1x40xf32>
    %25 = vector.extract_strided_slice %5 {offsets = [4, 0], sizes = [1, 40], strides = [1, 1]} : vector<10x40xf32> to vector<1x40xf32>
    %26 = vector.extract_strided_slice %5 {offsets = [5, 0], sizes = [1, 40], strides = [1, 1]} : vector<10x40xf32> to vector<1x40xf32>
    %27 = vector.extract_strided_slice %5 {offsets = [6, 0], sizes = [1, 40], strides = [1, 1]} : vector<10x40xf32> to vector<1x40xf32>
    %28 = vector.extract_strided_slice %5 {offsets = [7, 0], sizes = [1, 40], strides = [1, 1]} : vector<10x40xf32> to vector<1x40xf32>
    %29 = vector.extract_strided_slice %5 {offsets = [8, 0], sizes = [1, 40], strides = [1, 1]} : vector<10x40xf32> to vector<1x40xf32>
    %30 = vector.extract_strided_slice %5 {offsets = [9, 0], sizes = [1, 40], strides = [1, 1]} : vector<10x40xf32> to vector<1x40xf32>
    %31 = vector.extract_strided_slice %4 {offsets = [0, 0], sizes = [1, 40], strides = [1, 1]} : vector<10x40xf32> to vector<1x40xf32>
    %32 = vector.extract_strided_slice %4 {offsets = [1, 0], sizes = [1, 40], strides = [1, 1]} : vector<10x40xf32> to vector<1x40xf32>
    %33 = vector.extract_strided_slice %4 {offsets = [2, 0], sizes = [1, 40], strides = [1, 1]} : vector<10x40xf32> to vector<1x40xf32>
    %34 = vector.extract_strided_slice %4 {offsets = [3, 0], sizes = [1, 40], strides = [1, 1]} : vector<10x40xf32> to vector<1x40xf32>
    %35 = vector.extract_strided_slice %4 {offsets = [4, 0], sizes = [1, 40], strides = [1, 1]} : vector<10x40xf32> to vector<1x40xf32>
    %36 = vector.extract_strided_slice %4 {offsets = [5, 0], sizes = [1, 40], strides = [1, 1]} : vector<10x40xf32> to vector<1x40xf32>
    %37 = vector.extract_strided_slice %4 {offsets = [6, 0], sizes = [1, 40], strides = [1, 1]} : vector<10x40xf32> to vector<1x40xf32>
    %38 = vector.extract_strided_slice %4 {offsets = [7, 0], sizes = [1, 40], strides = [1, 1]} : vector<10x40xf32> to vector<1x40xf32>
    %39 = vector.extract_strided_slice %4 {offsets = [8, 0], sizes = [1, 40], strides = [1, 1]} : vector<10x40xf32> to vector<1x40xf32>
    %40 = vector.extract_strided_slice %4 {offsets = [9, 0], sizes = [1, 40], strides = [1, 1]} : vector<10x40xf32> to vector<1x40xf32>
    %c0_11 = arith.constant 0 : index
    %c0_12 = arith.constant 0 : index
    %41 = vector.load %arg1[%c0_11, %c0_12] : memref<32x1xf32, #tpu.memory_space<vmem>>, vector<32x1xf32>
    %42 = vector.broadcast %41 : vector<32x1xf32> to vector<32x40xf32>
    %43 = vector.broadcast %0 : vector<1x40xf32> to vector<32x40xf32>
    %44 = arith.mulf %42, %43 : vector<32x40xf32>
    %45 = vector.broadcast %1 : vector<1x40xf32> to vector<32x40xf32>
    %46 = arith.addf %44, %45 : vector<32x40xf32>
    %cst = arith.constant 0.000000e+00 : f32
    %47 = vector.broadcast %cst : f32 to vector<2x10xf32>
    %48 = vector.extract_strided_slice %46 {offsets = [0, 0], sizes = [2, 40], strides = [1, 1]} : vector<32x40xf32> to vector<2x40xf32>
    %49 = vector.extract_strided_slice %47 {offsets = [0, 0], sizes = [2, 1], strides = [1, 1]} : vector<2x10xf32> to vector<2x1xf32>
    %50 = vector.broadcast %49 : vector<2x1xf32> to vector<2x40xf32>
    %51 = vector.broadcast %11 : vector<1x40xf32> to vector<2x40xf32>
    %52 = arith.mulf %50, %51 : vector<2x40xf32>
    %53 = vector.extract_strided_slice %47 {offsets = [0, 1], sizes = [2, 1], strides = [1, 1]} : vector<2x10xf32> to vector<2x1xf32>
    %54 = vector.broadcast %53 : vector<2x1xf32> to vector<2x40xf32>
    %55 = vector.broadcast %12 : vector<1x40xf32> to vector<2x40xf32>
    %56 = arith.mulf %54, %55 : vector<2x40xf32>
    %57 = vector.extract_strided_slice %47 {offsets = [0, 2], sizes = [2, 1], strides = [1, 1]} : vector<2x10xf32> to vector<2x1xf32>
    %58 = vector.broadcast %57 : vector<2x1xf32> to vector<2x40xf32>
    %59 = vector.broadcast %13 : vector<1x40xf32> to vector<2x40xf32>
    %60 = arith.mulf %58, %59 : vector<2x40xf32>
    %61 = vector.extract_strided_slice %47 {offsets = [0, 3], sizes = [2, 1], strides = [1, 1]} : vector<2x10xf32> to vector<2x1xf32>
    %62 = vector.broadcast %61 : vector<2x1xf32> to vector<2x40xf32>
    %63 = vector.broadcast %14 : vector<1x40xf32> to vector<2x40xf32>
    %64 = arith.mulf %62, %63 : vector<2x40xf32>
    %65 = vector.extract_strided_slice %47 {offsets = [0, 4], sizes = [2, 1], strides = [1, 1]} : vector<2x10xf32> to vector<2x1xf32>
    %66 = vector.broadcast %65 : vector<2x1xf32> to vector<2x40xf32>
    %67 = vector.broadcast %15 : vector<1x40xf32> to vector<2x40xf32>
    %68 = arith.mulf %66, %67 : vector<2x40xf32>
    %69 = vector.extract_strided_slice %47 {offsets = [0, 5], sizes = [2, 1], strides = [1, 1]} : vector<2x10xf32> to vector<2x1xf32>
    %70 = vector.broadcast %69 : vector<2x1xf32> to vector<2x40xf32>
    %71 = vector.broadcast %16 : vector<1x40xf32> to vector<2x40xf32>
    %72 = arith.mulf %70, %71 : vector<2x40xf32>
    %73 = vector.extract_strided_slice %47 {offsets = [0, 6], sizes = [2, 1], strides = [1, 1]} : vector<2x10xf32> to vector<2x1xf32>
    %74 = vector.broadcast %73 : vector<2x1xf32> to vector<2x40xf32>
    %75 = vector.broadcast %17 : vector<1x40xf32> to vector<2x40xf32>
    %76 = arith.mulf %74, %75 : vector<2x40xf32>
    %77 = vector.extract_strided_slice %47 {offsets = [0, 7], sizes = [2, 1], strides = [1, 1]} : vector<2x10xf32> to vector<2x1xf32>
    %78 = vector.broadcast %77 : vector<2x1xf32> to vector<2x40xf32>
    %79 = vector.broadcast %18 : vector<1x40xf32> to vector<2x40xf32>
    %80 = arith.mulf %78, %79 : vector<2x40xf32>
    %81 = vector.extract_strided_slice %47 {offsets = [0, 8], sizes = [2, 1], strides = [1, 1]} : vector<2x10xf32> to vector<2x1xf32>
    %82 = vector.broadcast %81 : vector<2x1xf32> to vector<2x40xf32>
    %83 = vector.broadcast %19 : vector<1x40xf32> to vector<2x40xf32>
    %84 = arith.mulf %82, %83 : vector<2x40xf32>
    %85 = vector.extract_strided_slice %47 {offsets = [0, 9], sizes = [2, 1], strides = [1, 1]} : vector<2x10xf32> to vector<2x1xf32>
    %86 = vector.broadcast %85 : vector<2x1xf32> to vector<2x40xf32>
    %87 = vector.broadcast %20 : vector<1x40xf32> to vector<2x40xf32>
    %88 = arith.mulf %86, %87 : vector<2x40xf32>
    %89 = arith.addf %52, %56 : vector<2x40xf32>
    %90 = arith.addf %60, %64 : vector<2x40xf32>
    %91 = arith.addf %68, %72 : vector<2x40xf32>
    %92 = arith.addf %76, %80 : vector<2x40xf32>
    %93 = arith.addf %84, %88 : vector<2x40xf32>
    %94 = arith.addf %89, %90 : vector<2x40xf32>
    %95 = arith.addf %91, %92 : vector<2x40xf32>
    %96 = arith.addf %94, %95 : vector<2x40xf32>
    %97 = arith.addf %96, %93 : vector<2x40xf32>
    %98 = arith.addf %48, %97 : vector<2x40xf32>
    %99 = math.tanh %98 : vector<2x40xf32>
    %100 = vector.extract_strided_slice %99 {offsets = [0, 0], sizes = [2, 10], strides = [1, 1]} : vector<2x40xf32> to vector<2x10xf32>
    %cst_13 = arith.constant 1.000000e+00 : f32
    %101 = vector.broadcast %cst_13 : f32 to vector<2x10xf32>
    %102 = arith.addf %100, %101 : vector<2x10xf32>
    %cst_14 = arith.constant 5.000000e-01 : f32
    %103 = vector.broadcast %cst_14 : f32 to vector<2x10xf32>
    %104 = arith.mulf %103, %102 : vector<2x10xf32>
    %105 = vector.extract_strided_slice %99 {offsets = [0, 10], sizes = [2, 10], strides = [1, 1]} : vector<2x40xf32> to vector<2x10xf32>
    %cst_15 = arith.constant 1.000000e+00 : f32
    %106 = vector.broadcast %cst_15 : f32 to vector<2x10xf32>
    %107 = arith.addf %105, %106 : vector<2x10xf32>
    %cst_16 = arith.constant 5.000000e-01 : f32
    %108 = vector.broadcast %cst_16 : f32 to vector<2x10xf32>
    %109 = arith.mulf %108, %107 : vector<2x10xf32>
    %110 = vector.extract_strided_slice %99 {offsets = [0, 20], sizes = [2, 10], strides = [1, 1]} : vector<2x40xf32> to vector<2x10xf32>
    %111 = vector.extract_strided_slice %99 {offsets = [0, 30], sizes = [2, 10], strides = [1, 1]} : vector<2x40xf32> to vector<2x10xf32>
    %cst_17 = arith.constant 1.000000e+00 : f32
    %112 = vector.broadcast %cst_17 : f32 to vector<2x10xf32>
    %113 = arith.addf %111, %112 : vector<2x10xf32>
    %cst_18 = arith.constant 5.000000e-01 : f32
    %114 = vector.broadcast %cst_18 : f32 to vector<2x10xf32>
    %115 = arith.mulf %114, %113 : vector<2x10xf32>
    %116 = arith.mulf %109, %47 : vector<2x10xf32>
    %117 = arith.mulf %104, %110 : vector<2x10xf32>
    %118 = arith.addf %116, %117 : vector<2x10xf32>
    %119 = math.tanh %118 : vector<2x10xf32>
    %120 = arith.mulf %115, %119 : vector<2x10xf32>
    %121 = vector.extract_strided_slice %120 {offsets = [0, 0], sizes = [2, 1], strides = [1, 1]} : vector<2x10xf32> to vector<2x1xf32>
    %122 = vector.broadcast %121 : vector<2x1xf32> to vector<2x40xf32>
    %123 = vector.broadcast %31 : vector<1x40xf32> to vector<2x40xf32>
    %124 = arith.mulf %122, %123 : vector<2x40xf32>
    %125 = vector.extract_strided_slice %120 {offsets = [0, 1], sizes = [2, 1], strides = [1, 1]} : vector<2x10xf32> to vector<2x1xf32>
    %126 = vector.broadcast %125 : vector<2x1xf32> to vector<2x40xf32>
    %127 = vector.broadcast %32 : vector<1x40xf32> to vector<2x40xf32>
    %128 = arith.mulf %126, %127 : vector<2x40xf32>
    %129 = vector.extract_strided_slice %120 {offsets = [0, 2], sizes = [2, 1], strides = [1, 1]} : vector<2x10xf32> to vector<2x1xf32>
    %130 = vector.broadcast %129 : vector<2x1xf32> to vector<2x40xf32>
    %131 = vector.broadcast %33 : vector<1x40xf32> to vector<2x40xf32>
    %132 = arith.mulf %130, %131 : vector<2x40xf32>
    %133 = vector.extract_strided_slice %120 {offsets = [0, 3], sizes = [2, 1], strides = [1, 1]} : vector<2x10xf32> to vector<2x1xf32>
    %134 = vector.broadcast %133 : vector<2x1xf32> to vector<2x40xf32>
    %135 = vector.broadcast %34 : vector<1x40xf32> to vector<2x40xf32>
    %136 = arith.mulf %134, %135 : vector<2x40xf32>
    %137 = vector.extract_strided_slice %120 {offsets = [0, 4], sizes = [2, 1], strides = [1, 1]} : vector<2x10xf32> to vector<2x1xf32>
    %138 = vector.broadcast %137 : vector<2x1xf32> to vector<2x40xf32>
    %139 = vector.broadcast %35 : vector<1x40xf32> to vector<2x40xf32>
    %140 = arith.mulf %138, %139 : vector<2x40xf32>
    %141 = vector.extract_strided_slice %120 {offsets = [0, 5], sizes = [2, 1], strides = [1, 1]} : vector<2x10xf32> to vector<2x1xf32>
    %142 = vector.broadcast %141 : vector<2x1xf32> to vector<2x40xf32>
    %143 = vector.broadcast %36 : vector<1x40xf32> to vector<2x40xf32>
    %144 = arith.mulf %142, %143 : vector<2x40xf32>
    %145 = vector.extract_strided_slice %120 {offsets = [0, 6], sizes = [2, 1], strides = [1, 1]} : vector<2x10xf32> to vector<2x1xf32>
    %146 = vector.broadcast %145 : vector<2x1xf32> to vector<2x40xf32>
    %147 = vector.broadcast %37 : vector<1x40xf32> to vector<2x40xf32>
    %148 = arith.mulf %146, %147 : vector<2x40xf32>
    %149 = vector.extract_strided_slice %120 {offsets = [0, 7], sizes = [2, 1], strides = [1, 1]} : vector<2x10xf32> to vector<2x1xf32>
    %150 = vector.broadcast %149 : vector<2x1xf32> to vector<2x40xf32>
    %151 = vector.broadcast %38 : vector<1x40xf32> to vector<2x40xf32>
    %152 = arith.mulf %150, %151 : vector<2x40xf32>
    %153 = vector.extract_strided_slice %120 {offsets = [0, 8], sizes = [2, 1], strides = [1, 1]} : vector<2x10xf32> to vector<2x1xf32>
    %154 = vector.broadcast %153 : vector<2x1xf32> to vector<2x40xf32>
    %155 = vector.broadcast %39 : vector<1x40xf32> to vector<2x40xf32>
    %156 = arith.mulf %154, %155 : vector<2x40xf32>
    %157 = vector.extract_strided_slice %120 {offsets = [0, 9], sizes = [2, 1], strides = [1, 1]} : vector<2x10xf32> to vector<2x1xf32>
    %158 = vector.broadcast %157 : vector<2x1xf32> to vector<2x40xf32>
    %159 = vector.broadcast %40 : vector<1x40xf32> to vector<2x40xf32>
    %160 = arith.mulf %158, %159 : vector<2x40xf32>
    %161 = arith.addf %124, %128 : vector<2x40xf32>
    %162 = arith.addf %132, %136 : vector<2x40xf32>
    %163 = arith.addf %140, %144 : vector<2x40xf32>
    %164 = arith.addf %148, %152 : vector<2x40xf32>
    %165 = arith.addf %156, %160 : vector<2x40xf32>
    %166 = arith.addf %161, %162 : vector<2x40xf32>
    %167 = arith.addf %163, %164 : vector<2x40xf32>
    %168 = arith.addf %166, %167 : vector<2x40xf32>
    %169 = arith.addf %168, %165 : vector<2x40xf32>
    %170 = vector.broadcast %2 : vector<1x40xf32> to vector<2x40xf32>
    %171 = arith.addf %169, %170 : vector<2x40xf32>
    %172 = vector.extract_strided_slice %47 {offsets = [0, 0], sizes = [2, 1], strides = [1, 1]} : vector<2x10xf32> to vector<2x1xf32>
    %173 = vector.broadcast %172 : vector<2x1xf32> to vector<2x40xf32>
    %174 = vector.broadcast %21 : vector<1x40xf32> to vector<2x40xf32>
    %175 = arith.mulf %173, %174 : vector<2x40xf32>
    %176 = vector.extract_strided_slice %47 {offsets = [0, 1], sizes = [2, 1], strides = [1, 1]} : vector<2x10xf32> to vector<2x1xf32>
    %177 = vector.broadcast %176 : vector<2x1xf32> to vector<2x40xf32>
    %178 = vector.broadcast %22 : vector<1x40xf32> to vector<2x40xf32>
    %179 = arith.mulf %177, %178 : vector<2x40xf32>
    %180 = vector.extract_strided_slice %47 {offsets = [0, 2], sizes = [2, 1], strides = [1, 1]} : vector<2x10xf32> to vector<2x1xf32>
    %181 = vector.broadcast %180 : vector<2x1xf32> to vector<2x40xf32>
    %182 = vector.broadcast %23 : vector<1x40xf32> to vector<2x40xf32>
    %183 = arith.mulf %181, %182 : vector<2x40xf32>
    %184 = vector.extract_strided_slice %47 {offsets = [0, 3], sizes = [2, 1], strides = [1, 1]} : vector<2x10xf32> to vector<2x1xf32>
    %185 = vector.broadcast %184 : vector<2x1xf32> to vector<2x40xf32>
    %186 = vector.broadcast %24 : vector<1x40xf32> to vector<2x40xf32>
    %187 = arith.mulf %185, %186 : vector<2x40xf32>
    %188 = vector.extract_strided_slice %47 {offsets = [0, 4], sizes = [2, 1], strides = [1, 1]} : vector<2x10xf32> to vector<2x1xf32>
    %189 = vector.broadcast %188 : vector<2x1xf32> to vector<2x40xf32>
    %190 = vector.broadcast %25 : vector<1x40xf32> to vector<2x40xf32>
    %191 = arith.mulf %189, %190 : vector<2x40xf32>
    %192 = vector.extract_strided_slice %47 {offsets = [0, 5], sizes = [2, 1], strides = [1, 1]} : vector<2x10xf32> to vector<2x1xf32>
    %193 = vector.broadcast %192 : vector<2x1xf32> to vector<2x40xf32>
    %194 = vector.broadcast %26 : vector<1x40xf32> to vector<2x40xf32>
    %195 = arith.mulf %193, %194 : vector<2x40xf32>
    %196 = vector.extract_strided_slice %47 {offsets = [0, 6], sizes = [2, 1], strides = [1, 1]} : vector<2x10xf32> to vector<2x1xf32>
    %197 = vector.broadcast %196 : vector<2x1xf32> to vector<2x40xf32>
    %198 = vector.broadcast %27 : vector<1x40xf32> to vector<2x40xf32>
    %199 = arith.mulf %197, %198 : vector<2x40xf32>
    %200 = vector.extract_strided_slice %47 {offsets = [0, 7], sizes = [2, 1], strides = [1, 1]} : vector<2x10xf32> to vector<2x1xf32>
    %201 = vector.broadcast %200 : vector<2x1xf32> to vector<2x40xf32>
    %202 = vector.broadcast %28 : vector<1x40xf32> to vector<2x40xf32>
    %203 = arith.mulf %201, %202 : vector<2x40xf32>
    %204 = vector.extract_strided_slice %47 {offsets = [0, 8], sizes = [2, 1], strides = [1, 1]} : vector<2x10xf32> to vector<2x1xf32>
    %205 = vector.broadcast %204 : vector<2x1xf32> to vector<2x40xf32>
    %206 = vector.broadcast %29 : vector<1x40xf32> to vector<2x40xf32>
    %207 = arith.mulf %205, %206 : vector<2x40xf32>
    %208 = vector.extract_strided_slice %47 {offsets = [0, 9], sizes = [2, 1], strides = [1, 1]} : vector<2x10xf32> to vector<2x1xf32>
    %209 = vector.broadcast %208 : vector<2x1xf32> to vector<2x40xf32>
    %210 = vector.broadcast %30 : vector<1x40xf32> to vector<2x40xf32>
    %211 = arith.mulf %209, %210 : vector<2x40xf32>
    %212 = arith.addf %175, %179 : vector<2x40xf32>
    %213 = arith.addf %183, %187 : vector<2x40xf32>
    %214 = arith.addf %191, %195 : vector<2x40xf32>
    %215 = arith.addf %199, %203 : vector<2x40xf32>
    %216 = arith.addf %207, %211 : vector<2x40xf32>
    %217 = arith.addf %212, %213 : vector<2x40xf32>
    %218 = arith.addf %214, %215 : vector<2x40xf32>
    %219 = arith.addf %217, %218 : vector<2x40xf32>
    %220 = arith.addf %219, %216 : vector<2x40xf32>
    %221 = arith.addf %171, %220 : vector<2x40xf32>
    %222 = math.tanh %221 : vector<2x40xf32>
    %223 = vector.extract_strided_slice %222 {offsets = [0, 0], sizes = [2, 10], strides = [1, 1]} : vector<2x40xf32> to vector<2x10xf32>
    %cst_19 = arith.constant 1.000000e+00 : f32
    %224 = vector.broadcast %cst_19 : f32 to vector<2x10xf32>
    %225 = arith.addf %223, %224 : vector<2x10xf32>
    %cst_20 = arith.constant 5.000000e-01 : f32
    %226 = vector.broadcast %cst_20 : f32 to vector<2x10xf32>
    %227 = arith.mulf %226, %225 : vector<2x10xf32>
    %228 = vector.extract_strided_slice %222 {offsets = [0, 10], sizes = [2, 10], strides = [1, 1]} : vector<2x40xf32> to vector<2x10xf32>
    %cst_21 = arith.constant 1.000000e+00 : f32
    %229 = vector.broadcast %cst_21 : f32 to vector<2x10xf32>
    %230 = arith.addf %228, %229 : vector<2x10xf32>
    %cst_22 = arith.constant 5.000000e-01 : f32
    %231 = vector.broadcast %cst_22 : f32 to vector<2x10xf32>
    %232 = arith.mulf %231, %230 : vector<2x10xf32>
    %233 = vector.extract_strided_slice %222 {offsets = [0, 20], sizes = [2, 10], strides = [1, 1]} : vector<2x40xf32> to vector<2x10xf32>
    %234 = vector.extract_strided_slice %222 {offsets = [0, 30], sizes = [2, 10], strides = [1, 1]} : vector<2x40xf32> to vector<2x10xf32>
    %cst_23 = arith.constant 1.000000e+00 : f32
    %235 = vector.broadcast %cst_23 : f32 to vector<2x10xf32>
    %236 = arith.addf %234, %235 : vector<2x10xf32>
    %cst_24 = arith.constant 5.000000e-01 : f32
    %237 = vector.broadcast %cst_24 : f32 to vector<2x10xf32>
    %238 = arith.mulf %237, %236 : vector<2x10xf32>
    %239 = arith.mulf %232, %47 : vector<2x10xf32>
    %240 = arith.mulf %227, %233 : vector<2x10xf32>
    %241 = arith.addf %239, %240 : vector<2x10xf32>
    %242 = math.tanh %241 : vector<2x10xf32>
    %243 = arith.mulf %238, %242 : vector<2x10xf32>
    %c0_25 = arith.constant 0 : index
    %c0_26 = arith.constant 0 : index
    %244 = vector.load %arg5[%c0_25, %c0_26] : memref<32x10xf32, #tpu.memory_space<vmem>>, vector<2x10xf32>
    tpu.vector_store %arg5[%c0_25, %c0_26], %243 {strides = array<i32>} : memref<32x10xf32, #tpu.memory_space<vmem>>, vector<2x10xf32>,
    %245 = vector.extract_strided_slice %46 {offsets = [2, 0], sizes = [2, 40], strides = [1, 1]} : vector<32x40xf32> to vector<2x40xf32>
    %246 = vector.extract_strided_slice %120 {offsets = [0, 0], sizes = [2, 1], strides = [1, 1]} : vector<2x10xf32> to vector<2x1xf32>
    %247 = vector.broadcast %246 : vector<2x1xf32> to vector<2x40xf32>
    %248 = vector.broadcast %11 : vector<1x40xf32> to vector<2x40xf32>
    %249 = arith.mulf %247, %248 : vector<2x40xf32>
    %250 = vector.extract_strided_slice %120 {offsets = [0, 1], sizes = [2, 1], strides = [1, 1]} : vector<2x10xf32> to vector<2x1xf32>
    %251 = vector.broadcast %250 : vector<2x1xf32> to vector<2x40xf32>
    %252 = vector.broadcast %12 : vector<1x40xf32> to vector<2x40xf32>
    %253 = arith.mulf %251, %252 : vector<2x40xf32>
    %254 = vector.extract_strided_slice %120 {offsets = [0, 2], sizes = [2, 1], strides = [1, 1]} : vector<2x10xf32> to vector<2x1xf32>
    %255 = vector.broadcast %254 : vector<2x1xf32> to vector<2x40xf32>
    %256 = vector.broadcast %13 : vector<1x40xf32> to vector<2x40xf32>
    %257 = arith.mulf %255, %256 : vector<2x40xf32>
    %258 = vector.extract_strided_slice %120 {offsets = [0, 3], sizes = [2, 1], strides = [1, 1]} : vector<2x10xf32> to vector<2x1xf32>
    %259 = vector.broadcast %258 : vector<2x1xf32> to vector<2x40xf32>
    %260 = vector.broadcast %14 : vector<1x40xf32> to vector<2x40xf32>
    %261 = arith.mulf %259, %260 : vector<2x40xf32>
    %262 = vector.extract_strided_slice %120 {offsets = [0, 4], sizes = [2, 1], strides = [1, 1]} : vector<2x10xf32> to vector<2x1xf32>
    %263 = vector.broadcast %262 : vector<2x1xf32> to vector<2x40xf32>
    %264 = vector.broadcast %15 : vector<1x40xf32> to vector<2x40xf32>
    %265 = arith.mulf %263, %264 : vector<2x40xf32>
    %266 = vector.extract_strided_slice %120 {offsets = [0, 5], sizes = [2, 1], strides = [1, 1]} : vector<2x10xf32> to vector<2x1xf32>
    %267 = vector.broadcast %266 : vector<2x1xf32> to vector<2x40xf32>
    %268 = vector.broadcast %16 : vector<1x40xf32> to vector<2x40xf32>
    %269 = arith.mulf %267, %268 : vector<2x40xf32>
    %270 = vector.extract_strided_slice %120 {offsets = [0, 6], sizes = [2, 1], strides = [1, 1]} : vector<2x10xf32> to vector<2x1xf32>
    %271 = vector.broadcast %270 : vector<2x1xf32> to vector<2x40xf32>
    %272 = vector.broadcast %17 : vector<1x40xf32> to vector<2x40xf32>
    %273 = arith.mulf %271, %272 : vector<2x40xf32>
    %274 = vector.extract_strided_slice %120 {offsets = [0, 7], sizes = [2, 1], strides = [1, 1]} : vector<2x10xf32> to vector<2x1xf32>
    %275 = vector.broadcast %274 : vector<2x1xf32> to vector<2x40xf32>
    %276 = vector.broadcast %18 : vector<1x40xf32> to vector<2x40xf32>
    %277 = arith.mulf %275, %276 : vector<2x40xf32>
    %278 = vector.extract_strided_slice %120 {offsets = [0, 8], sizes = [2, 1], strides = [1, 1]} : vector<2x10xf32> to vector<2x1xf32>
    %279 = vector.broadcast %278 : vector<2x1xf32> to vector<2x40xf32>
    %280 = vector.broadcast %19 : vector<1x40xf32> to vector<2x40xf32>
    %281 = arith.mulf %279, %280 : vector<2x40xf32>
    %282 = vector.extract_strided_slice %120 {offsets = [0, 9], sizes = [2, 1], strides = [1, 1]} : vector<2x10xf32> to vector<2x1xf32>
    %283 = vector.broadcast %282 : vector<2x1xf32> to vector<2x40xf32>
    %284 = vector.broadcast %20 : vector<1x40xf32> to vector<2x40xf32>
    %285 = arith.mulf %283, %284 : vector<2x40xf32>
    %286 = arith.addf %249, %253 : vector<2x40xf32>
    %287 = arith.addf %257, %261 : vector<2x40xf32>
    %288 = arith.addf %265, %269 : vector<2x40xf32>
    %289 = arith.addf %273, %277 : vector<2x40xf32>
    %290 = arith.addf %281, %285 : vector<2x40xf32>
    %291 = arith.addf %286, %287 : vector<2x40xf32>
    %292 = arith.addf %288, %289 : vector<2x40xf32>
    %293 = arith.addf %291, %292 : vector<2x40xf32>
    %294 = arith.addf %293, %290 : vector<2x40xf32>
    %295 = arith.addf %245, %294 : vector<2x40xf32>
    %296 = math.tanh %295 : vector<2x40xf32>
    %297 = vector.extract_strided_slice %296 {offsets = [0, 0], sizes = [2, 10], strides = [1, 1]} : vector<2x40xf32> to vector<2x10xf32>
    %cst_27 = arith.constant 1.000000e+00 : f32
    %298 = vector.broadcast %cst_27 : f32 to vector<2x10xf32>
    %299 = arith.addf %297, %298 : vector<2x10xf32>
    %cst_28 = arith.constant 5.000000e-01 : f32
    %300 = vector.broadcast %cst_28 : f32 to vector<2x10xf32>
    %301 = arith.mulf %300, %299 : vector<2x10xf32>
    %302 = vector.extract_strided_slice %296 {offsets = [0, 10], sizes = [2, 10], strides = [1, 1]} : vector<2x40xf32> to vector<2x10xf32>
    %cst_29 = arith.constant 1.000000e+00 : f32
    %303 = vector.broadcast %cst_29 : f32 to vector<2x10xf32>
    %304 = arith.addf %302, %303 : vector<2x10xf32>
    %cst_30 = arith.constant 5.000000e-01 : f32
    %305 = vector.broadcast %cst_30 : f32 to vector<2x10xf32>
    %306 = arith.mulf %305, %304 : vector<2x10xf32>
    %307 = vector.extract_strided_slice %296 {offsets = [0, 20], sizes = [2, 10], strides = [1, 1]} : vector<2x40xf32> to vector<2x10xf32>
    %308 = vector.extract_strided_slice %296 {offsets = [0, 30], sizes = [2, 10], strides = [1, 1]} : vector<2x40xf32> to vector<2x10xf32>
    %cst_31 = arith.constant 1.000000e+00 : f32
    %309 = vector.broadcast %cst_31 : f32 to vector<2x10xf32>
    %310 = arith.addf %308, %309 : vector<2x10xf32>
    %cst_32 = arith.constant 5.000000e-01 : f32
    %311 = vector.broadcast %cst_32 : f32 to vector<2x10xf32>
    %312 = arith.mulf %311, %310 : vector<2x10xf32>
    %313 = arith.mulf %306, %118 : vector<2x10xf32>
    %314 = arith.mulf %301, %307 : vector<2x10xf32>
    %315 = arith.addf %313, %314 : vector<2x10xf32>
    %316 = math.tanh %315 : vector<2x10xf32>
    %317 = arith.mulf %312, %316 : vector<2x10xf32>
    %318 = vector.extract_strided_slice %317 {offsets = [0, 0], sizes = [2, 1], strides = [1, 1]} : vector<2x10xf32> to vector<2x1xf32>
    %319 = vector.broadcast %318 : vector<2x1xf32> to vector<2x40xf32>
    %320 = vector.broadcast %31 : vector<1x40xf32> to vector<2x40xf32>
    %321 = arith.mulf %319, %320 : vector<2x40xf32>
    %322 = vector.extract_strided_slice %317 {offsets = [0, 1], sizes = [2, 1], strides = [1, 1]} : vector<2x10xf32> to vector<2x1xf32>
    %323 = vector.broadcast %322 : vector<2x1xf32> to vector<2x40xf32>
    %324 = vector.broadcast %32 : vector<1x40xf32> to vector<2x40xf32>
    %325 = arith.mulf %323, %324 : vector<2x40xf32>
    %326 = vector.extract_strided_slice %317 {offsets = [0, 2], sizes = [2, 1], strides = [1, 1]} : vector<2x10xf32> to vector<2x1xf32>
    %327 = vector.broadcast %326 : vector<2x1xf32> to vector<2x40xf32>
    %328 = vector.broadcast %33 : vector<1x40xf32> to vector<2x40xf32>
    %329 = arith.mulf %327, %328 : vector<2x40xf32>
    %330 = vector.extract_strided_slice %317 {offsets = [0, 3], sizes = [2, 1], strides = [1, 1]} : vector<2x10xf32> to vector<2x1xf32>
    %331 = vector.broadcast %330 : vector<2x1xf32> to vector<2x40xf32>
    %332 = vector.broadcast %34 : vector<1x40xf32> to vector<2x40xf32>
    %333 = arith.mulf %331, %332 : vector<2x40xf32>
    %334 = vector.extract_strided_slice %317 {offsets = [0, 4], sizes = [2, 1], strides = [1, 1]} : vector<2x10xf32> to vector<2x1xf32>
    %335 = vector.broadcast %334 : vector<2x1xf32> to vector<2x40xf32>
    %336 = vector.broadcast %35 : vector<1x40xf32> to vector<2x40xf32>
    %337 = arith.mulf %335, %336 : vector<2x40xf32>
    %338 = vector.extract_strided_slice %317 {offsets = [0, 5], sizes = [2, 1], strides = [1, 1]} : vector<2x10xf32> to vector<2x1xf32>
    %339 = vector.broadcast %338 : vector<2x1xf32> to vector<2x40xf32>
    %340 = vector.broadcast %36 : vector<1x40xf32> to vector<2x40xf32>
    %341 = arith.mulf %339, %340 : vector<2x40xf32>
    %342 = vector.extract_strided_slice %317 {offsets = [0, 6], sizes = [2, 1], strides = [1, 1]} : vector<2x10xf32> to vector<2x1xf32>
    %343 = vector.broadcast %342 : vector<2x1xf32> to vector<2x40xf32>
    %344 = vector.broadcast %37 : vector<1x40xf32> to vector<2x40xf32>
    %345 = arith.mulf %343, %344 : vector<2x40xf32>
    %346 = vector.extract_strided_slice %317 {offsets = [0, 7], sizes = [2, 1], strides = [1, 1]} : vector<2x10xf32> to vector<2x1xf32>
    %347 = vector.broadcast %346 : vector<2x1xf32> to vector<2x40xf32>
    %348 = vector.broadcast %38 : vector<1x40xf32> to vector<2x40xf32>
    %349 = arith.mulf %347, %348 : vector<2x40xf32>
    %350 = vector.extract_strided_slice %317 {offsets = [0, 8], sizes = [2, 1], strides = [1, 1]} : vector<2x10xf32> to vector<2x1xf32>
    %351 = vector.broadcast %350 : vector<2x1xf32> to vector<2x40xf32>
    %352 = vector.broadcast %39 : vector<1x40xf32> to vector<2x40xf32>
    %353 = arith.mulf %351, %352 : vector<2x40xf32>
    %354 = vector.extract_strided_slice %317 {offsets = [0, 9], sizes = [2, 1], strides = [1, 1]} : vector<2x10xf32> to vector<2x1xf32>
    %355 = vector.broadcast %354 : vector<2x1xf32> to vector<2x40xf32>
    %356 = vector.broadcast %40 : vector<1x40xf32> to vector<2x40xf32>
    %357 = arith.mulf %355, %356 : vector<2x40xf32>
    %358 = arith.addf %321, %325 : vector<2x40xf32>
    %359 = arith.addf %329, %333 : vector<2x40xf32>
    %360 = arith.addf %337, %341 : vector<2x40xf32>
    %361 = arith.addf %345, %349 : vector<2x40xf32>
    %362 = arith.addf %353, %357 : vector<2x40xf32>
    %363 = arith.addf %358, %359 : vector<2x40xf32>
    %364 = arith.addf %360, %361 : vector<2x40xf32>
    %365 = arith.addf %363, %364 : vector<2x40xf32>
    %366 = arith.addf %365, %362 : vector<2x40xf32>
    %367 = vector.broadcast %2 : vector<1x40xf32> to vector<2x40xf32>
    %368 = arith.addf %366, %367 : vector<2x40xf32>
    %369 = vector.extract_strided_slice %243 {offsets = [0, 0], sizes = [2, 1], strides = [1, 1]} : vector<2x10xf32> to vector<2x1xf32>
    %370 = vector.broadcast %369 : vector<2x1xf32> to vector<2x40xf32>
    %371 = vector.broadcast %21 : vector<1x40xf32> to vector<2x40xf32>
    %372 = arith.mulf %370, %371 : vector<2x40xf32>
    %373 = vector.extract_strided_slice %243 {offsets = [0, 1], sizes = [2, 1], strides = [1, 1]} : vector<2x10xf32> to vector<2x1xf32>
    %374 = vector.broadcast %373 : vector<2x1xf32> to vector<2x40xf32>
    %375 = vector.broadcast %22 : vector<1x40xf32> to vector<2x40xf32>
    %376 = arith.mulf %374, %375 : vector<2x40xf32>
    %377 = vector.extract_strided_slice %243 {offsets = [0, 2], sizes = [2, 1], strides = [1, 1]} : vector<2x10xf32> to vector<2x1xf32>
    %378 = vector.broadcast %377 : vector<2x1xf32> to vector<2x40xf32>
    %379 = vector.broadcast %23 : vector<1x40xf32> to vector<2x40xf32>
    %380 = arith.mulf %378, %379 : vector<2x40xf32>
    %381 = vector.extract_strided_slice %243 {offsets = [0, 3], sizes = [2, 1], strides = [1, 1]} : vector<2x10xf32> to vector<2x1xf32>
    %382 = vector.broadcast %381 : vector<2x1xf32> to vector<2x40xf32>
    %383 = vector.broadcast %24 : vector<1x40xf32> to vector<2x40xf32>
    %384 = arith.mulf %382, %383 : vector<2x40xf32>
    %385 = vector.extract_strided_slice %243 {offsets = [0, 4], sizes = [2, 1], strides = [1, 1]} : vector<2x10xf32> to vector<2x1xf32>
    %386 = vector.broadcast %385 : vector<2x1xf32> to vector<2x40xf32>
    %387 = vector.broadcast %25 : vector<1x40xf32> to vector<2x40xf32>
    %388 = arith.mulf %386, %387 : vector<2x40xf32>
    %389 = vector.extract_strided_slice %243 {offsets = [0, 5], sizes = [2, 1], strides = [1, 1]} : vector<2x10xf32> to vector<2x1xf32>
    %390 = vector.broadcast %389 : vector<2x1xf32> to vector<2x40xf32>
    %391 = vector.broadcast %26 : vector<1x40xf32> to vector<2x40xf32>
    %392 = arith.mulf %390, %391 : vector<2x40xf32>
    %393 = vector.extract_strided_slice %243 {offsets = [0, 6], sizes = [2, 1], strides = [1, 1]} : vector<2x10xf32> to vector<2x1xf32>
    %394 = vector.broadcast %393 : vector<2x1xf32> to vector<2x40xf32>
    %395 = vector.broadcast %27 : vector<1x40xf32> to vector<2x40xf32>
    %396 = arith.mulf %394, %395 : vector<2x40xf32>
    %397 = vector.extract_strided_slice %243 {offsets = [0, 7], sizes = [2, 1], strides = [1, 1]} : vector<2x10xf32> to vector<2x1xf32>
    %398 = vector.broadcast %397 : vector<2x1xf32> to vector<2x40xf32>
    %399 = vector.broadcast %28 : vector<1x40xf32> to vector<2x40xf32>
    %400 = arith.mulf %398, %399 : vector<2x40xf32>
    %401 = vector.extract_strided_slice %243 {offsets = [0, 8], sizes = [2, 1], strides = [1, 1]} : vector<2x10xf32> to vector<2x1xf32>
    %402 = vector.broadcast %401 : vector<2x1xf32> to vector<2x40xf32>
    %403 = vector.broadcast %29 : vector<1x40xf32> to vector<2x40xf32>
    %404 = arith.mulf %402, %403 : vector<2x40xf32>
    %405 = vector.extract_strided_slice %243 {offsets = [0, 9], sizes = [2, 1], strides = [1, 1]} : vector<2x10xf32> to vector<2x1xf32>
    %406 = vector.broadcast %405 : vector<2x1xf32> to vector<2x40xf32>
    %407 = vector.broadcast %30 : vector<1x40xf32> to vector<2x40xf32>
    %408 = arith.mulf %406, %407 : vector<2x40xf32>
    %409 = arith.addf %372, %376 : vector<2x40xf32>
    %410 = arith.addf %380, %384 : vector<2x40xf32>
    %411 = arith.addf %388, %392 : vector<2x40xf32>
    %412 = arith.addf %396, %400 : vector<2x40xf32>
    %413 = arith.addf %404, %408 : vector<2x40xf32>
    %414 = arith.addf %409, %410 : vector<2x40xf32>
    %415 = arith.addf %411, %412 : vector<2x40xf32>
    %416 = arith.addf %414, %415 : vector<2x40xf32>
    %417 = arith.addf %416, %413 : vector<2x40xf32>
    %418 = arith.addf %368, %417 : vector<2x40xf32>
    %419 = math.tanh %418 : vector<2x40xf32>
    %420 = vector.extract_strided_slice %419 {offsets = [0, 0], sizes = [2, 10], strides = [1, 1]} : vector<2x40xf32> to vector<2x10xf32>
    %cst_33 = arith.constant 1.000000e+00 : f32
    %421 = vector.broadcast %cst_33 : f32 to vector<2x10xf32>
    %422 = arith.addf %420, %421 : vector<2x10xf32>
    %cst_34 = arith.constant 5.000000e-01 : f32
    %423 = vector.broadcast %cst_34 : f32 to vector<2x10xf32>
    %424 = arith.mulf %423, %422 : vector<2x10xf32>
    %425 = vector.extract_strided_slice %419 {offsets = [0, 10], sizes = [2, 10], strides = [1, 1]} : vector<2x40xf32> to vector<2x10xf32>
    %cst_35 = arith.constant 1.000000e+00 : f32
    %426 = vector.broadcast %cst_35 : f32 to vector<2x10xf32>
    %427 = arith.addf %425, %426 : vector<2x10xf32>
    %cst_36 = arith.constant 5.000000e-01 : f32
    %428 = vector.broadcast %cst_36 : f32 to vector<2x10xf32>
    %429 = arith.mulf %428, %427 : vector<2x10xf32>
    %430 = vector.extract_strided_slice %419 {offsets = [0, 20], sizes = [2, 10], strides = [1, 1]} : vector<2x40xf32> to vector<2x10xf32>
    %431 = vector.extract_strided_slice %419 {offsets = [0, 30], sizes = [2, 10], strides = [1, 1]} : vector<2x40xf32> to vector<2x10xf32>
    %cst_37 = arith.constant 1.000000e+00 : f32
    %432 = vector.broadcast %cst_37 : f32 to vector<2x10xf32>
    %433 = arith.addf %431, %432 : vector<2x10xf32>
    %cst_38 = arith.constant 5.000000e-01 : f32
    %434 = vector.broadcast %cst_38 : f32 to vector<2x10xf32>
    %435 = arith.mulf %434, %433 : vector<2x10xf32>
    %436 = arith.mulf %429, %241 : vector<2x10xf32>
    %437 = arith.mulf %424, %430 : vector<2x10xf32>
    %438 = arith.addf %436, %437 : vector<2x10xf32>
    %439 = math.tanh %438 : vector<2x10xf32>
    %440 = arith.mulf %435, %439 : vector<2x10xf32>
    %c2_39 = arith.constant 2 : index
    %c0_40 = arith.constant 0 : index
    %441 = vector.load %arg5[%c2_39, %c0_40] : memref<32x10xf32, #tpu.memory_space<vmem>>, vector<2x10xf32>
    tpu.vector_store %arg5[%c2_39, %c0_40], %440 {strides = array<i32>} : memref<32x10xf32, #tpu.memory_space<vmem>>, vector<2x10xf32>,
    %442 = vector.extract_strided_slice %46 {offsets = [4, 0], sizes = [2, 40], strides = [1, 1]} : vector<32x40xf32> to vector<2x40xf32>
    %443 = vector.extract_strided_slice %317 {offsets = [0, 0], sizes = [2, 1], strides = [1, 1]} : vector<2x10xf32> to vector<2x1xf32>
    %444 = vector.broadcast %443 : vector<2x1xf32> to vector<2x40xf32>
    %445 = vector.broadcast %11 : vector<1x40xf32> to vector<2x40xf32>
    %446 = arith.mulf %444, %445 : vector<2x40xf32>
    %447 = vector.extract_strided_slice %317 {offsets = [0, 1], sizes = [2, 1], strides = [1, 1]} : vector<2x10xf32> to vector<2x1xf32>
    %448 = vector.broadcast %447 : vector<2x1xf32> to vector<2x40xf32>
    %449 = vector.broadcast %12 : vector<1x40xf32> to vector<2x40xf32>
    %450 = arith.mulf %448, %449 : vector<2x40xf32>
    %451 = vector.extract_strided_slice %317 {offsets = [0, 2], sizes = [2, 1], strides = [1, 1]} : vector<2x10xf32> to vector<2x1xf32>
    %452 = vector.broadcast %451 : vector<2x1xf32> to vector<2x40xf32>
    %453 = vector.broadcast %13 : vector<1x40xf32> to vector<2x40xf32>
    %454 = arith.mulf %452, %453 : vector<2x40xf32>
    %455 = vector.extract_strided_slice %317 {offsets = [0, 3], sizes = [2, 1], strides = [1, 1]} : vector<2x10xf32> to vector<2x1xf32>
    %456 = vector.broadcast %455 : vector<2x1xf32> to vector<2x40xf32>
    %457 = vector.broadcast %14 : vector<1x40xf32> to vector<2x40xf32>
    %458 = arith.mulf %456, %457 : vector<2x40xf32>
    %459 = vector.extract_strided_slice %317 {offsets = [0, 4], sizes = [2, 1], strides = [1, 1]} : vector<2x10xf32> to vector<2x1xf32>
    %460 = vector.broadcast %459 : vector<2x1xf32> to vector<2x40xf32>
    %461 = vector.broadcast %15 : vector<1x40xf32> to vector<2x40xf32>
    %462 = arith.mulf %460, %461 : vector<2x40xf32>
    %463 = vector.extract_strided_slice %317 {offsets = [0, 5], sizes = [2, 1], strides = [1, 1]} : vector<2x10xf32> to vector<2x1xf32>
    %464 = vector.broadcast %463 : vector<2x1xf32> to vector<2x40xf32>
    %465 = vector.broadcast %16 : vector<1x40xf32> to vector<2x40xf32>
    %466 = arith.mulf %464, %465 : vector<2x40xf32>
    %467 = vector.extract_strided_slice %317 {offsets = [0, 6], sizes = [2, 1], strides = [1, 1]} : vector<2x10xf32> to vector<2x1xf32>
    %468 = vector.broadcast %467 : vector<2x1xf32> to vector<2x40xf32>
    %469 = vector.broadcast %17 : vector<1x40xf32> to vector<2x40xf32>
    %470 = arith.mulf %468, %469 : vector<2x40xf32>
    %471 = vector.extract_strided_slice %317 {offsets = [0, 7], sizes = [2, 1], strides = [1, 1]} : vector<2x10xf32> to vector<2x1xf32>
    %472 = vector.broadcast %471 : vector<2x1xf32> to vector<2x40xf32>
    %473 = vector.broadcast %18 : vector<1x40xf32> to vector<2x40xf32>
    %474 = arith.mulf %472, %473 : vector<2x40xf32>
    %475 = vector.extract_strided_slice %317 {offsets = [0, 8], sizes = [2, 1], strides = [1, 1]} : vector<2x10xf32> to vector<2x1xf32>
    %476 = vector.broadcast %475 : vector<2x1xf32> to vector<2x40xf32>
    %477 = vector.broadcast %19 : vector<1x40xf32> to vector<2x40xf32>
    %478 = arith.mulf %476, %477 : vector<2x40xf32>
    %479 = vector.extract_strided_slice %317 {offsets = [0, 9], sizes = [2, 1], strides = [1, 1]} : vector<2x10xf32> to vector<2x1xf32>
    %480 = vector.broadcast %479 : vector<2x1xf32> to vector<2x40xf32>
    %481 = vector.broadcast %20 : vector<1x40xf32> to vector<2x40xf32>
    %482 = arith.mulf %480, %481 : vector<2x40xf32>
    %483 = arith.addf %446, %450 : vector<2x40xf32>
    %484 = arith.addf %454, %458 : vector<2x40xf32>
    %485 = arith.addf %462, %466 : vector<2x40xf32>
    %486 = arith.addf %470, %474 : vector<2x40xf32>
    %487 = arith.addf %478, %482 : vector<2x40xf32>
    %488 = arith.addf %483, %484 : vector<2x40xf32>
    %489 = arith.addf %485, %486 : vector<2x40xf32>
    %490 = arith.addf %488, %489 : vector<2x40xf32>
    %491 = arith.addf %490, %487 : vector<2x40xf32>
    %492 = arith.addf %442, %491 : vector<2x40xf32>
    %493 = math.tanh %492 : vector<2x40xf32>
    %494 = vector.extract_strided_slice %493 {offsets = [0, 0], sizes = [2, 10], strides = [1, 1]} : vector<2x40xf32> to vector<2x10xf32>
    %cst_41 = arith.constant 1.000000e+00 : f32
    %495 = vector.broadcast %cst_41 : f32 to vector<2x10xf32>
    %496 = arith.addf %494, %495 : vector<2x10xf32>
    %cst_42 = arith.constant 5.000000e-01 : f32
    %497 = vector.broadcast %cst_42 : f32 to vector<2x10xf32>
    %498 = arith.mulf %497, %496 : vector<2x10xf32>
    %499 = vector.extract_strided_slice %493 {offsets = [0, 10], sizes = [2, 10], strides = [1, 1]} : vector<2x40xf32> to vector<2x10xf32>
    %cst_43 = arith.constant 1.000000e+00 : f32
    %500 = vector.broadcast %cst_43 : f32 to vector<2x10xf32>
    %501 = arith.addf %499, %500 : vector<2x10xf32>
    %cst_44 = arith.constant 5.000000e-01 : f32
    %502 = vector.broadcast %cst_44 : f32 to vector<2x10xf32>
    %503 = arith.mulf %502, %501 : vector<2x10xf32>
    %504 = vector.extract_strided_slice %493 {offsets = [0, 20], sizes = [2, 10], strides = [1, 1]} : vector<2x40xf32> to vector<2x10xf32>
    %505 = vector.extract_strided_slice %493 {offsets = [0, 30], sizes = [2, 10], strides = [1, 1]} : vector<2x40xf32> to vector<2x10xf32>
    %cst_45 = arith.constant 1.000000e+00 : f32
    %506 = vector.broadcast %cst_45 : f32 to vector<2x10xf32>
    %507 = arith.addf %505, %506 : vector<2x10xf32>
    %cst_46 = arith.constant 5.000000e-01 : f32
    %508 = vector.broadcast %cst_46 : f32 to vector<2x10xf32>
    %509 = arith.mulf %508, %507 : vector<2x10xf32>
    %510 = arith.mulf %503, %315 : vector<2x10xf32>
    %511 = arith.mulf %498, %504 : vector<2x10xf32>
    %512 = arith.addf %510, %511 : vector<2x10xf32>
    %513 = math.tanh %512 : vector<2x10xf32>
    %514 = arith.mulf %509, %513 : vector<2x10xf32>
    %515 = vector.extract_strided_slice %514 {offsets = [0, 0], sizes = [2, 1], strides = [1, 1]} : vector<2x10xf32> to vector<2x1xf32>
    %516 = vector.broadcast %515 : vector<2x1xf32> to vector<2x40xf32>
    %517 = vector.broadcast %31 : vector<1x40xf32> to vector<2x40xf32>
    %518 = arith.mulf %516, %517 : vector<2x40xf32>
    %519 = vector.extract_strided_slice %514 {offsets = [0, 1], sizes = [2, 1], strides = [1, 1]} : vector<2x10xf32> to vector<2x1xf32>
    %520 = vector.broadcast %519 : vector<2x1xf32> to vector<2x40xf32>
    %521 = vector.broadcast %32 : vector<1x40xf32> to vector<2x40xf32>
    %522 = arith.mulf %520, %521 : vector<2x40xf32>
    %523 = vector.extract_strided_slice %514 {offsets = [0, 2], sizes = [2, 1], strides = [1, 1]} : vector<2x10xf32> to vector<2x1xf32>
    %524 = vector.broadcast %523 : vector<2x1xf32> to vector<2x40xf32>
    %525 = vector.broadcast %33 : vector<1x40xf32> to vector<2x40xf32>
    %526 = arith.mulf %524, %525 : vector<2x40xf32>
    %527 = vector.extract_strided_slice %514 {offsets = [0, 3], sizes = [2, 1], strides = [1, 1]} : vector<2x10xf32> to vector<2x1xf32>
    %528 = vector.broadcast %527 : vector<2x1xf32> to vector<2x40xf32>
    %529 = vector.broadcast %34 : vector<1x40xf32> to vector<2x40xf32>
    %530 = arith.mulf %528, %529 : vector<2x40xf32>
    %531 = vector.extract_strided_slice %514 {offsets = [0, 4], sizes = [2, 1], strides = [1, 1]} : vector<2x10xf32> to vector<2x1xf32>
    %532 = vector.broadcast %531 : vector<2x1xf32> to vector<2x40xf32>
    %533 = vector.broadcast %35 : vector<1x40xf32> to vector<2x40xf32>
    %534 = arith.mulf %532, %533 : vector<2x40xf32>
    %535 = vector.extract_strided_slice %514 {offsets = [0, 5], sizes = [2, 1], strides = [1, 1]} : vector<2x10xf32> to vector<2x1xf32>
    %536 = vector.broadcast %535 : vector<2x1xf32> to vector<2x40xf32>
    %537 = vector.broadcast %36 : vector<1x40xf32> to vector<2x40xf32>
    %538 = arith.mulf %536, %537 : vector<2x40xf32>
    %539 = vector.extract_strided_slice %514 {offsets = [0, 6], sizes = [2, 1], strides = [1, 1]} : vector<2x10xf32> to vector<2x1xf32>
    %540 = vector.broadcast %539 : vector<2x1xf32> to vector<2x40xf32>
    %541 = vector.broadcast %37 : vector<1x40xf32> to vector<2x40xf32>
    %542 = arith.mulf %540, %541 : vector<2x40xf32>
    %543 = vector.extract_strided_slice %514 {offsets = [0, 7], sizes = [2, 1], strides = [1, 1]} : vector<2x10xf32> to vector<2x1xf32>
    %544 = vector.broadcast %543 : vector<2x1xf32> to vector<2x40xf32>
    %545 = vector.broadcast %38 : vector<1x40xf32> to vector<2x40xf32>
    %546 = arith.mulf %544, %545 : vector<2x40xf32>
    %547 = vector.extract_strided_slice %514 {offsets = [0, 8], sizes = [2, 1], strides = [1, 1]} : vector<2x10xf32> to vector<2x1xf32>
    %548 = vector.broadcast %547 : vector<2x1xf32> to vector<2x40xf32>
    %549 = vector.broadcast %39 : vector<1x40xf32> to vector<2x40xf32>
    %550 = arith.mulf %548, %549 : vector<2x40xf32>
    %551 = vector.extract_strided_slice %514 {offsets = [0, 9], sizes = [2, 1], strides = [1, 1]} : vector<2x10xf32> to vector<2x1xf32>
    %552 = vector.broadcast %551 : vector<2x1xf32> to vector<2x40xf32>
    %553 = vector.broadcast %40 : vector<1x40xf32> to vector<2x40xf32>
    %554 = arith.mulf %552, %553 : vector<2x40xf32>
    %555 = arith.addf %518, %522 : vector<2x40xf32>
    %556 = arith.addf %526, %530 : vector<2x40xf32>
    %557 = arith.addf %534, %538 : vector<2x40xf32>
    %558 = arith.addf %542, %546 : vector<2x40xf32>
    %559 = arith.addf %550, %554 : vector<2x40xf32>
    %560 = arith.addf %555, %556 : vector<2x40xf32>
    %561 = arith.addf %557, %558 : vector<2x40xf32>
    %562 = arith.addf %560, %561 : vector<2x40xf32>
    %563 = arith.addf %562, %559 : vector<2x40xf32>
    %564 = vector.broadcast %2 : vector<1x40xf32> to vector<2x40xf32>
    %565 = arith.addf %563, %564 : vector<2x40xf32>
    %566 = vector.extract_strided_slice %440 {offsets = [0, 0], sizes = [2, 1], strides = [1, 1]} : vector<2x10xf32> to vector<2x1xf32>
    %567 = vector.broadcast %566 : vector<2x1xf32> to vector<2x40xf32>
    %568 = vector.broadcast %21 : vector<1x40xf32> to vector<2x40xf32>
    %569 = arith.mulf %567, %568 : vector<2x40xf32>
    %570 = vector.extract_strided_slice %440 {offsets = [0, 1], sizes = [2, 1], strides = [1, 1]} : vector<2x10xf32> to vector<2x1xf32>
    %571 = vector.broadcast %570 : vector<2x1xf32> to vector<2x40xf32>
    %572 = vector.broadcast %22 : vector<1x40xf32> to vector<2x40xf32>
    %573 = arith.mulf %571, %572 : vector<2x40xf32>
    %574 = vector.extract_strided_slice %440 {offsets = [0, 2], sizes = [2, 1], strides = [1, 1]} : vector<2x10xf32> to vector<2x1xf32>
    %575 = vector.broadcast %574 : vector<2x1xf32> to vector<2x40xf32>
    %576 = vector.broadcast %23 : vector<1x40xf32> to vector<2x40xf32>
    %577 = arith.mulf %575, %576 : vector<2x40xf32>
    %578 = vector.extract_strided_slice %440 {offsets = [0, 3], sizes = [2, 1], strides = [1, 1]} : vector<2x10xf32> to vector<2x1xf32>
    %579 = vector.broadcast %578 : vector<2x1xf32> to vector<2x40xf32>
    %580 = vector.broadcast %24 : vector<1x40xf32> to vector<2x40xf32>
    %581 = arith.mulf %579, %580 : vector<2x40xf32>
    %582 = vector.extract_strided_slice %440 {offsets = [0, 4], sizes = [2, 1], strides = [1, 1]} : vector<2x10xf32> to vector<2x1xf32>
    %583 = vector.broadcast %582 : vector<2x1xf32> to vector<2x40xf32>
    %584 = vector.broadcast %25 : vector<1x40xf32> to vector<2x40xf32>
    %585 = arith.mulf %583, %584 : vector<2x40xf32>
    %586 = vector.extract_strided_slice %440 {offsets = [0, 5], sizes = [2, 1], strides = [1, 1]} : vector<2x10xf32> to vector<2x1xf32>
    %587 = vector.broadcast %586 : vector<2x1xf32> to vector<2x40xf32>
    %588 = vector.broadcast %26 : vector<1x40xf32> to vector<2x40xf32>
    %589 = arith.mulf %587, %588 : vector<2x40xf32>
    %590 = vector.extract_strided_slice %440 {offsets = [0, 6], sizes = [2, 1], strides = [1, 1]} : vector<2x10xf32> to vector<2x1xf32>
    %591 = vector.broadcast %590 : vector<2x1xf32> to vector<2x40xf32>
    %592 = vector.broadcast %27 : vector<1x40xf32> to vector<2x40xf32>
    %593 = arith.mulf %591, %592 : vector<2x40xf32>
    %594 = vector.extract_strided_slice %440 {offsets = [0, 7], sizes = [2, 1], strides = [1, 1]} : vector<2x10xf32> to vector<2x1xf32>
    %595 = vector.broadcast %594 : vector<2x1xf32> to vector<2x40xf32>
    %596 = vector.broadcast %28 : vector<1x40xf32> to vector<2x40xf32>
    %597 = arith.mulf %595, %596 : vector<2x40xf32>
    %598 = vector.extract_strided_slice %440 {offsets = [0, 8], sizes = [2, 1], strides = [1, 1]} : vector<2x10xf32> to vector<2x1xf32>
    %599 = vector.broadcast %598 : vector<2x1xf32> to vector<2x40xf32>
    %600 = vector.broadcast %29 : vector<1x40xf32> to vector<2x40xf32>
    %601 = arith.mulf %599, %600 : vector<2x40xf32>
    %602 = vector.extract_strided_slice %440 {offsets = [0, 9], sizes = [2, 1], strides = [1, 1]} : vector<2x10xf32> to vector<2x1xf32>
    %603 = vector.broadcast %602 : vector<2x1xf32> to vector<2x40xf32>
    %604 = vector.broadcast %30 : vector<1x40xf32> to vector<2x40xf32>
    %605 = arith.mulf %603, %604 : vector<2x40xf32>
    %606 = arith.addf %569, %573 : vector<2x40xf32>
    %607 = arith.addf %577, %581 : vector<2x40xf32>
    %608 = arith.addf %585, %589 : vector<2x40xf32>
    %609 = arith.addf %593, %597 : vector<2x40xf32>
    %610 = arith.addf %601, %605 : vector<2x40xf32>
    %611 = arith.addf %606, %607 : vector<2x40xf32>
    %612 = arith.addf %608, %609 : vector<2x40xf32>
    %613 = arith.addf %611, %612 : vector<2x40xf32>
    %614 = arith.addf %613, %610 : vector<2x40xf32>
    %615 = arith.addf %565, %614 : vector<2x40xf32>
    %616 = math.tanh %615 : vector<2x40xf32>
    %617 = vector.extract_strided_slice %616 {offsets = [0, 0], sizes = [2, 10], strides = [1, 1]} : vector<2x40xf32> to vector<2x10xf32>
    %cst_47 = arith.constant 1.000000e+00 : f32
    %618 = vector.broadcast %cst_47 : f32 to vector<2x10xf32>
    %619 = arith.addf %617, %618 : vector<2x10xf32>
    %cst_48 = arith.constant 5.000000e-01 : f32
    %620 = vector.broadcast %cst_48 : f32 to vector<2x10xf32>
    %621 = arith.mulf %620, %619 : vector<2x10xf32>
    %622 = vector.extract_strided_slice %616 {offsets = [0, 10], sizes = [2, 10], strides = [1, 1]} : vector<2x40xf32> to vector<2x10xf32>
    %cst_49 = arith.constant 1.000000e+00 : f32
    %623 = vector.broadcast %cst_49 : f32 to vector<2x10xf32>
    %624 = arith.addf %622, %623 : vector<2x10xf32>
    %cst_50 = arith.constant 5.000000e-01 : f32
    %625 = vector.broadcast %cst_50 : f32 to vector<2x10xf32>
    %626 = arith.mulf %625, %624 : vector<2x10xf32>
    %627 = vector.extract_strided_slice %616 {offsets = [0, 20], sizes = [2, 10], strides = [1, 1]} : vector<2x40xf32> to vector<2x10xf32>
    %628 = vector.extract_strided_slice %616 {offsets = [0, 30], sizes = [2, 10], strides = [1, 1]} : vector<2x40xf32> to vector<2x10xf32>
    %cst_51 = arith.constant 1.000000e+00 : f32
    %629 = vector.broadcast %cst_51 : f32 to vector<2x10xf32>
    %630 = arith.addf %628, %629 : vector<2x10xf32>
    %cst_52 = arith.constant 5.000000e-01 : f32
    %631 = vector.broadcast %cst_52 : f32 to vector<2x10xf32>
    %632 = arith.mulf %631, %630 : vector<2x10xf32>
    %633 = arith.mulf %626, %438 : vector<2x10xf32>
    %634 = arith.mulf %621, %627 : vector<2x10xf32>
    %635 = arith.addf %633, %634 : vector<2x10xf32>
    %636 = math.tanh %635 : vector<2x10xf32>
    %637 = arith.mulf %632, %636 : vector<2x10xf32>
    %c4 = arith.constant 4 : index
    %c0_53 = arith.constant 0 : index
    %638 = vector.load %arg5[%c4, %c0_53] : memref<32x10xf32, #tpu.memory_space<vmem>>, vector<2x10xf32>
    tpu.vector_store %arg5[%c4, %c0_53], %637 {strides = array<i32>} : memref<32x10xf32, #tpu.memory_space<vmem>>, vector<2x10xf32>,
    %639 = vector.extract_strided_slice %46 {offsets = [6, 0], sizes = [2, 40], strides = [1, 1]} : vector<32x40xf32> to vector<2x40xf32>
    %640 = vector.extract_strided_slice %514 {offsets = [0, 0], sizes = [2, 1], strides = [1, 1]} : vector<2x10xf32> to vector<2x1xf32>
    %641 = vector.broadcast %640 : vector<2x1xf32> to vector<2x40xf32>
    %642 = vector.broadcast %11 : vector<1x40xf32> to vector<2x40xf32>
    %643 = arith.mulf %641, %642 : vector<2x40xf32>
    %644 = vector.extract_strided_slice %514 {offsets = [0, 1], sizes = [2, 1], strides = [1, 1]} : vector<2x10xf32> to vector<2x1xf32>
    %645 = vector.broadcast %644 : vector<2x1xf32> to vector<2x40xf32>
    %646 = vector.broadcast %12 : vector<1x40xf32> to vector<2x40xf32>
    %647 = arith.mulf %645, %646 : vector<2x40xf32>
    %648 = vector.extract_strided_slice %514 {offsets = [0, 2], sizes = [2, 1], strides = [1, 1]} : vector<2x10xf32> to vector<2x1xf32>
    %649 = vector.broadcast %648 : vector<2x1xf32> to vector<2x40xf32>
    %650 = vector.broadcast %13 : vector<1x40xf32> to vector<2x40xf32>
    %651 = arith.mulf %649, %650 : vector<2x40xf32>
    %652 = vector.extract_strided_slice %514 {offsets = [0, 3], sizes = [2, 1], strides = [1, 1]} : vector<2x10xf32> to vector<2x1xf32>
    %653 = vector.broadcast %652 : vector<2x1xf32> to vector<2x40xf32>
    %654 = vector.broadcast %14 : vector<1x40xf32> to vector<2x40xf32>
    %655 = arith.mulf %653, %654 : vector<2x40xf32>
    %656 = vector.extract_strided_slice %514 {offsets = [0, 4], sizes = [2, 1], strides = [1, 1]} : vector<2x10xf32> to vector<2x1xf32>
    %657 = vector.broadcast %656 : vector<2x1xf32> to vector<2x40xf32>
    %658 = vector.broadcast %15 : vector<1x40xf32> to vector<2x40xf32>
    %659 = arith.mulf %657, %658 : vector<2x40xf32>
    %660 = vector.extract_strided_slice %514 {offsets = [0, 5], sizes = [2, 1], strides = [1, 1]} : vector<2x10xf32> to vector<2x1xf32>
    %661 = vector.broadcast %660 : vector<2x1xf32> to vector<2x40xf32>
    %662 = vector.broadcast %16 : vector<1x40xf32> to vector<2x40xf32>
    %663 = arith.mulf %661, %662 : vector<2x40xf32>
    %664 = vector.extract_strided_slice %514 {offsets = [0, 6], sizes = [2, 1], strides = [1, 1]} : vector<2x10xf32> to vector<2x1xf32>
    %665 = vector.broadcast %664 : vector<2x1xf32> to vector<2x40xf32>
    %666 = vector.broadcast %17 : vector<1x40xf32> to vector<2x40xf32>
    %667 = arith.mulf %665, %666 : vector<2x40xf32>
    %668 = vector.extract_strided_slice %514 {offsets = [0, 7], sizes = [2, 1], strides = [1, 1]} : vector<2x10xf32> to vector<2x1xf32>
    %669 = vector.broadcast %668 : vector<2x1xf32> to vector<2x40xf32>
    %670 = vector.broadcast %18 : vector<1x40xf32> to vector<2x40xf32>
    %671 = arith.mulf %669, %670 : vector<2x40xf32>
    %672 = vector.extract_strided_slice %514 {offsets = [0, 8], sizes = [2, 1], strides = [1, 1]} : vector<2x10xf32> to vector<2x1xf32>
    %673 = vector.broadcast %672 : vector<2x1xf32> to vector<2x40xf32>
    %674 = vector.broadcast %19 : vector<1x40xf32> to vector<2x40xf32>
    %675 = arith.mulf %673, %674 : vector<2x40xf32>
    %676 = vector.extract_strided_slice %514 {offsets = [0, 9], sizes = [2, 1], strides = [1, 1]} : vector<2x10xf32> to vector<2x1xf32>
    %677 = vector.broadcast %676 : vector<2x1xf32> to vector<2x40xf32>
    %678 = vector.broadcast %20 : vector<1x40xf32> to vector<2x40xf32>
    %679 = arith.mulf %677, %678 : vector<2x40xf32>
    %680 = arith.addf %643, %647 : vector<2x40xf32>
    %681 = arith.addf %651, %655 : vector<2x40xf32>
    %682 = arith.addf %659, %663 : vector<2x40xf32>
    %683 = arith.addf %667, %671 : vector<2x40xf32>
    %684 = arith.addf %675, %679 : vector<2x40xf32>
    %685 = arith.addf %680, %681 : vector<2x40xf32>
    %686 = arith.addf %682, %683 : vector<2x40xf32>
    %687 = arith.addf %685, %686 : vector<2x40xf32>
    %688 = arith.addf %687, %684 : vector<2x40xf32>
    %689 = arith.addf %639, %688 : vector<2x40xf32>
    %690 = math.tanh %689 : vector<2x40xf32>
    %691 = vector.extract_strided_slice %690 {offsets = [0, 0], sizes = [2, 10], strides = [1, 1]} : vector<2x40xf32> to vector<2x10xf32>
    %cst_54 = arith.constant 1.000000e+00 : f32
    %692 = vector.broadcast %cst_54 : f32 to vector<2x10xf32>
    %693 = arith.addf %691, %692 : vector<2x10xf32>
    %cst_55 = arith.constant 5.000000e-01 : f32
    %694 = vector.broadcast %cst_55 : f32 to vector<2x10xf32>
    %695 = arith.mulf %694, %693 : vector<2x10xf32>
    %696 = vector.extract_strided_slice %690 {offsets = [0, 10], sizes = [2, 10], strides = [1, 1]} : vector<2x40xf32> to vector<2x10xf32>
    %cst_56 = arith.constant 1.000000e+00 : f32
    %697 = vector.broadcast %cst_56 : f32 to vector<2x10xf32>
    %698 = arith.addf %696, %697 : vector<2x10xf32>
    %cst_57 = arith.constant 5.000000e-01 : f32
    %699 = vector.broadcast %cst_57 : f32 to vector<2x10xf32>
    %700 = arith.mulf %699, %698 : vector<2x10xf32>
    %701 = vector.extract_strided_slice %690 {offsets = [0, 20], sizes = [2, 10], strides = [1, 1]} : vector<2x40xf32> to vector<2x10xf32>
    %702 = vector.extract_strided_slice %690 {offsets = [0, 30], sizes = [2, 10], strides = [1, 1]} : vector<2x40xf32> to vector<2x10xf32>
    %cst_58 = arith.constant 1.000000e+00 : f32
    %703 = vector.broadcast %cst_58 : f32 to vector<2x10xf32>
    %704 = arith.addf %702, %703 : vector<2x10xf32>
    %cst_59 = arith.constant 5.000000e-01 : f32
    %705 = vector.broadcast %cst_59 : f32 to vector<2x10xf32>
    %706 = arith.mulf %705, %704 : vector<2x10xf32>
    %707 = arith.mulf %700, %512 : vector<2x10xf32>
    %708 = arith.mulf %695, %701 : vector<2x10xf32>
    %709 = arith.addf %707, %708 : vector<2x10xf32>
    %710 = math.tanh %709 : vector<2x10xf32>
    %711 = arith.mulf %706, %710 : vector<2x10xf32>
    %712 = vector.extract_strided_slice %711 {offsets = [0, 0], sizes = [2, 1], strides = [1, 1]} : vector<2x10xf32> to vector<2x1xf32>
    %713 = vector.broadcast %712 : vector<2x1xf32> to vector<2x40xf32>
    %714 = vector.broadcast %31 : vector<1x40xf32> to vector<2x40xf32>
    %715 = arith.mulf %713, %714 : vector<2x40xf32>
    %716 = vector.extract_strided_slice %711 {offsets = [0, 1], sizes = [2, 1], strides = [1, 1]} : vector<2x10xf32> to vector<2x1xf32>
    %717 = vector.broadcast %716 : vector<2x1xf32> to vector<2x40xf32>
    %718 = vector.broadcast %32 : vector<1x40xf32> to vector<2x40xf32>
    %719 = arith.mulf %717, %718 : vector<2x40xf32>
    %720 = vector.extract_strided_slice %711 {offsets = [0, 2], sizes = [2, 1], strides = [1, 1]} : vector<2x10xf32> to vector<2x1xf32>
    %721 = vector.broadcast %720 : vector<2x1xf32> to vector<2x40xf32>
    %722 = vector.broadcast %33 : vector<1x40xf32> to vector<2x40xf32>
    %723 = arith.mulf %721, %722 : vector<2x40xf32>
    %724 = vector.extract_strided_slice %711 {offsets = [0, 3], sizes = [2, 1], strides = [1, 1]} : vector<2x10xf32> to vector<2x1xf32>
    %725 = vector.broadcast %724 : vector<2x1xf32> to vector<2x40xf32>
    %726 = vector.broadcast %34 : vector<1x40xf32> to vector<2x40xf32>
    %727 = arith.mulf %725, %726 : vector<2x40xf32>
    %728 = vector.extract_strided_slice %711 {offsets = [0, 4], sizes = [2, 1], strides = [1, 1]} : vector<2x10xf32> to vector<2x1xf32>
    %729 = vector.broadcast %728 : vector<2x1xf32> to vector<2x40xf32>
    %730 = vector.broadcast %35 : vector<1x40xf32> to vector<2x40xf32>
    %731 = arith.mulf %729, %730 : vector<2x40xf32>
    %732 = vector.extract_strided_slice %711 {offsets = [0, 5], sizes = [2, 1], strides = [1, 1]} : vector<2x10xf32> to vector<2x1xf32>
    %733 = vector.broadcast %732 : vector<2x1xf32> to vector<2x40xf32>
    %734 = vector.broadcast %36 : vector<1x40xf32> to vector<2x40xf32>
    %735 = arith.mulf %733, %734 : vector<2x40xf32>
    %736 = vector.extract_strided_slice %711 {offsets = [0, 6], sizes = [2, 1], strides = [1, 1]} : vector<2x10xf32> to vector<2x1xf32>
    %737 = vector.broadcast %736 : vector<2x1xf32> to vector<2x40xf32>
    %738 = vector.broadcast %37 : vector<1x40xf32> to vector<2x40xf32>
    %739 = arith.mulf %737, %738 : vector<2x40xf32>
    %740 = vector.extract_strided_slice %711 {offsets = [0, 7], sizes = [2, 1], strides = [1, 1]} : vector<2x10xf32> to vector<2x1xf32>
    %741 = vector.broadcast %740 : vector<2x1xf32> to vector<2x40xf32>
    %742 = vector.broadcast %38 : vector<1x40xf32> to vector<2x40xf32>
    %743 = arith.mulf %741, %742 : vector<2x40xf32>
    %744 = vector.extract_strided_slice %711 {offsets = [0, 8], sizes = [2, 1], strides = [1, 1]} : vector<2x10xf32> to vector<2x1xf32>
    %745 = vector.broadcast %744 : vector<2x1xf32> to vector<2x40xf32>
    %746 = vector.broadcast %39 : vector<1x40xf32> to vector<2x40xf32>
    %747 = arith.mulf %745, %746 : vector<2x40xf32>
    %748 = vector.extract_strided_slice %711 {offsets = [0, 9], sizes = [2, 1], strides = [1, 1]} : vector<2x10xf32> to vector<2x1xf32>
    %749 = vector.broadcast %748 : vector<2x1xf32> to vector<2x40xf32>
    %750 = vector.broadcast %40 : vector<1x40xf32> to vector<2x40xf32>
    %751 = arith.mulf %749, %750 : vector<2x40xf32>
    %752 = arith.addf %715, %719 : vector<2x40xf32>
    %753 = arith.addf %723, %727 : vector<2x40xf32>
    %754 = arith.addf %731, %735 : vector<2x40xf32>
    %755 = arith.addf %739, %743 : vector<2x40xf32>
    %756 = arith.addf %747, %751 : vector<2x40xf32>
    %757 = arith.addf %752, %753 : vector<2x40xf32>
    %758 = arith.addf %754, %755 : vector<2x40xf32>
    %759 = arith.addf %757, %758 : vector<2x40xf32>
    %760 = arith.addf %759, %756 : vector<2x40xf32>
    %761 = vector.broadcast %2 : vector<1x40xf32> to vector<2x40xf32>
    %762 = arith.addf %760, %761 : vector<2x40xf32>
    %763 = vector.extract_strided_slice %637 {offsets = [0, 0], sizes = [2, 1], strides = [1, 1]} : vector<2x10xf32> to vector<2x1xf32>
    %764 = vector.broadcast %763 : vector<2x1xf32> to vector<2x40xf32>
    %765 = vector.broadcast %21 : vector<1x40xf32> to vector<2x40xf32>
    %766 = arith.mulf %764, %765 : vector<2x40xf32>
    %767 = vector.extract_strided_slice %637 {offsets = [0, 1], sizes = [2, 1], strides = [1, 1]} : vector<2x10xf32> to vector<2x1xf32>
    %768 = vector.broadcast %767 : vector<2x1xf32> to vector<2x40xf32>
    %769 = vector.broadcast %22 : vector<1x40xf32> to vector<2x40xf32>
    %770 = arith.mulf %768, %769 : vector<2x40xf32>
    %771 = vector.extract_strided_slice %637 {offsets = [0, 2], sizes = [2, 1], strides = [1, 1]} : vector<2x10xf32> to vector<2x1xf32>
    %772 = vector.broadcast %771 : vector<2x1xf32> to vector<2x40xf32>
    %773 = vector.broadcast %23 : vector<1x40xf32> to vector<2x40xf32>
    %774 = arith.mulf %772, %773 : vector<2x40xf32>
    %775 = vector.extract_strided_slice %637 {offsets = [0, 3], sizes = [2, 1], strides = [1, 1]} : vector<2x10xf32> to vector<2x1xf32>
    %776 = vector.broadcast %775 : vector<2x1xf32> to vector<2x40xf32>
    %777 = vector.broadcast %24 : vector<1x40xf32> to vector<2x40xf32>
    %778 = arith.mulf %776, %777 : vector<2x40xf32>
    %779 = vector.extract_strided_slice %637 {offsets = [0, 4], sizes = [2, 1], strides = [1, 1]} : vector<2x10xf32> to vector<2x1xf32>
    %780 = vector.broadcast %779 : vector<2x1xf32> to vector<2x40xf32>
    %781 = vector.broadcast %25 : vector<1x40xf32> to vector<2x40xf32>
    %782 = arith.mulf %780, %781 : vector<2x40xf32>
    %783 = vector.extract_strided_slice %637 {offsets = [0, 5], sizes = [2, 1], strides = [1, 1]} : vector<2x10xf32> to vector<2x1xf32>
    %784 = vector.broadcast %783 : vector<2x1xf32> to vector<2x40xf32>
    %785 = vector.broadcast %26 : vector<1x40xf32> to vector<2x40xf32>
    %786 = arith.mulf %784, %785 : vector<2x40xf32>
    %787 = vector.extract_strided_slice %637 {offsets = [0, 6], sizes = [2, 1], strides = [1, 1]} : vector<2x10xf32> to vector<2x1xf32>
    %788 = vector.broadcast %787 : vector<2x1xf32> to vector<2x40xf32>
    %789 = vector.broadcast %27 : vector<1x40xf32> to vector<2x40xf32>
    %790 = arith.mulf %788, %789 : vector<2x40xf32>
    %791 = vector.extract_strided_slice %637 {offsets = [0, 7], sizes = [2, 1], strides = [1, 1]} : vector<2x10xf32> to vector<2x1xf32>
    %792 = vector.broadcast %791 : vector<2x1xf32> to vector<2x40xf32>
    %793 = vector.broadcast %28 : vector<1x40xf32> to vector<2x40xf32>
    %794 = arith.mulf %792, %793 : vector<2x40xf32>
    %795 = vector.extract_strided_slice %637 {offsets = [0, 8], sizes = [2, 1], strides = [1, 1]} : vector<2x10xf32> to vector<2x1xf32>
    %796 = vector.broadcast %795 : vector<2x1xf32> to vector<2x40xf32>
    %797 = vector.broadcast %29 : vector<1x40xf32> to vector<2x40xf32>
    %798 = arith.mulf %796, %797 : vector<2x40xf32>
    %799 = vector.extract_strided_slice %637 {offsets = [0, 9], sizes = [2, 1], strides = [1, 1]} : vector<2x10xf32> to vector<2x1xf32>
    %800 = vector.broadcast %799 : vector<2x1xf32> to vector<2x40xf32>
    %801 = vector.broadcast %30 : vector<1x40xf32> to vector<2x40xf32>
    %802 = arith.mulf %800, %801 : vector<2x40xf32>
    %803 = arith.addf %766, %770 : vector<2x40xf32>
    %804 = arith.addf %774, %778 : vector<2x40xf32>
    %805 = arith.addf %782, %786 : vector<2x40xf32>
    %806 = arith.addf %790, %794 : vector<2x40xf32>
    %807 = arith.addf %798, %802 : vector<2x40xf32>
    %808 = arith.addf %803, %804 : vector<2x40xf32>
    %809 = arith.addf %805, %806 : vector<2x40xf32>
    %810 = arith.addf %808, %809 : vector<2x40xf32>
    %811 = arith.addf %810, %807 : vector<2x40xf32>
    %812 = arith.addf %762, %811 : vector<2x40xf32>
    %813 = math.tanh %812 : vector<2x40xf32>
    %814 = vector.extract_strided_slice %813 {offsets = [0, 0], sizes = [2, 10], strides = [1, 1]} : vector<2x40xf32> to vector<2x10xf32>
    %cst_60 = arith.constant 1.000000e+00 : f32
    %815 = vector.broadcast %cst_60 : f32 to vector<2x10xf32>
    %816 = arith.addf %814, %815 : vector<2x10xf32>
    %cst_61 = arith.constant 5.000000e-01 : f32
    %817 = vector.broadcast %cst_61 : f32 to vector<2x10xf32>
    %818 = arith.mulf %817, %816 : vector<2x10xf32>
    %819 = vector.extract_strided_slice %813 {offsets = [0, 10], sizes = [2, 10], strides = [1, 1]} : vector<2x40xf32> to vector<2x10xf32>
    %cst_62 = arith.constant 1.000000e+00 : f32
    %820 = vector.broadcast %cst_62 : f32 to vector<2x10xf32>
    %821 = arith.addf %819, %820 : vector<2x10xf32>
    %cst_63 = arith.constant 5.000000e-01 : f32
    %822 = vector.broadcast %cst_63 : f32 to vector<2x10xf32>
    %823 = arith.mulf %822, %821 : vector<2x10xf32>
    %824 = vector.extract_strided_slice %813 {offsets = [0, 20], sizes = [2, 10], strides = [1, 1]} : vector<2x40xf32> to vector<2x10xf32>
    %825 = vector.extract_strided_slice %813 {offsets = [0, 30], sizes = [2, 10], strides = [1, 1]} : vector<2x40xf32> to vector<2x10xf32>
    %cst_64 = arith.constant 1.000000e+00 : f32
    %826 = vector.broadcast %cst_64 : f32 to vector<2x10xf32>
    %827 = arith.addf %825, %826 : vector<2x10xf32>
    %cst_65 = arith.constant 5.000000e-01 : f32
    %828 = vector.broadcast %cst_65 : f32 to vector<2x10xf32>
    %829 = arith.mulf %828, %827 : vector<2x10xf32>
    %830 = arith.mulf %823, %635 : vector<2x10xf32>
    %831 = arith.mulf %818, %824 : vector<2x10xf32>
    %832 = arith.addf %830, %831 : vector<2x10xf32>
    %833 = math.tanh %832 : vector<2x10xf32>
    %834 = arith.mulf %829, %833 : vector<2x10xf32>
    %c6 = arith.constant 6 : index
    %c0_66 = arith.constant 0 : index
    %835 = vector.load %arg5[%c6, %c0_66] : memref<32x10xf32, #tpu.memory_space<vmem>>, vector<2x10xf32>
    tpu.vector_store %arg5[%c6, %c0_66], %834 {strides = array<i32>} : memref<32x10xf32, #tpu.memory_space<vmem>>, vector<2x10xf32>,
    %836 = vector.extract_strided_slice %46 {offsets = [8, 0], sizes = [2, 40], strides = [1, 1]} : vector<32x40xf32> to vector<2x40xf32>
    %837 = vector.extract_strided_slice %711 {offsets = [0, 0], sizes = [2, 1], strides = [1, 1]} : vector<2x10xf32> to vector<2x1xf32>
    %838 = vector.broadcast %837 : vector<2x1xf32> to vector<2x40xf32>
    %839 = vector.broadcast %11 : vector<1x40xf32> to vector<2x40xf32>
    %840 = arith.mulf %838, %839 : vector<2x40xf32>
    %841 = vector.extract_strided_slice %711 {offsets = [0, 1], sizes = [2, 1], strides = [1, 1]} : vector<2x10xf32> to vector<2x1xf32>
    %842 = vector.broadcast %841 : vector<2x1xf32> to vector<2x40xf32>
    %843 = vector.broadcast %12 : vector<1x40xf32> to vector<2x40xf32>
    %844 = arith.mulf %842, %843 : vector<2x40xf32>
    %845 = vector.extract_strided_slice %711 {offsets = [0, 2], sizes = [2, 1], strides = [1, 1]} : vector<2x10xf32> to vector<2x1xf32>
    %846 = vector.broadcast %845 : vector<2x1xf32> to vector<2x40xf32>
    %847 = vector.broadcast %13 : vector<1x40xf32> to vector<2x40xf32>
    %848 = arith.mulf %846, %847 : vector<2x40xf32>
    %849 = vector.extract_strided_slice %711 {offsets = [0, 3], sizes = [2, 1], strides = [1, 1]} : vector<2x10xf32> to vector<2x1xf32>
    %850 = vector.broadcast %849 : vector<2x1xf32> to vector<2x40xf32>
    %851 = vector.broadcast %14 : vector<1x40xf32> to vector<2x40xf32>
    %852 = arith.mulf %850, %851 : vector<2x40xf32>
    %853 = vector.extract_strided_slice %711 {offsets = [0, 4], sizes = [2, 1], strides = [1, 1]} : vector<2x10xf32> to vector<2x1xf32>
    %854 = vector.broadcast %853 : vector<2x1xf32> to vector<2x40xf32>
    %855 = vector.broadcast %15 : vector<1x40xf32> to vector<2x40xf32>
    %856 = arith.mulf %854, %855 : vector<2x40xf32>
    %857 = vector.extract_strided_slice %711 {offsets = [0, 5], sizes = [2, 1], strides = [1, 1]} : vector<2x10xf32> to vector<2x1xf32>
    %858 = vector.broadcast %857 : vector<2x1xf32> to vector<2x40xf32>
    %859 = vector.broadcast %16 : vector<1x40xf32> to vector<2x40xf32>
    %860 = arith.mulf %858, %859 : vector<2x40xf32>
    %861 = vector.extract_strided_slice %711 {offsets = [0, 6], sizes = [2, 1], strides = [1, 1]} : vector<2x10xf32> to vector<2x1xf32>
    %862 = vector.broadcast %861 : vector<2x1xf32> to vector<2x40xf32>
    %863 = vector.broadcast %17 : vector<1x40xf32> to vector<2x40xf32>
    %864 = arith.mulf %862, %863 : vector<2x40xf32>
    %865 = vector.extract_strided_slice %711 {offsets = [0, 7], sizes = [2, 1], strides = [1, 1]} : vector<2x10xf32> to vector<2x1xf32>
    %866 = vector.broadcast %865 : vector<2x1xf32> to vector<2x40xf32>
    %867 = vector.broadcast %18 : vector<1x40xf32> to vector<2x40xf32>
    %868 = arith.mulf %866, %867 : vector<2x40xf32>
    %869 = vector.extract_strided_slice %711 {offsets = [0, 8], sizes = [2, 1], strides = [1, 1]} : vector<2x10xf32> to vector<2x1xf32>
    %870 = vector.broadcast %869 : vector<2x1xf32> to vector<2x40xf32>
    %871 = vector.broadcast %19 : vector<1x40xf32> to vector<2x40xf32>
    %872 = arith.mulf %870, %871 : vector<2x40xf32>
    %873 = vector.extract_strided_slice %711 {offsets = [0, 9], sizes = [2, 1], strides = [1, 1]} : vector<2x10xf32> to vector<2x1xf32>
    %874 = vector.broadcast %873 : vector<2x1xf32> to vector<2x40xf32>
    %875 = vector.broadcast %20 : vector<1x40xf32> to vector<2x40xf32>
    %876 = arith.mulf %874, %875 : vector<2x40xf32>
    %877 = arith.addf %840, %844 : vector<2x40xf32>
    %878 = arith.addf %848, %852 : vector<2x40xf32>
    %879 = arith.addf %856, %860 : vector<2x40xf32>
    %880 = arith.addf %864, %868 : vector<2x40xf32>
    %881 = arith.addf %872, %876 : vector<2x40xf32>
    %882 = arith.addf %877, %878 : vector<2x40xf32>
    %883 = arith.addf %879, %880 : vector<2x40xf32>
    %884 = arith.addf %882, %883 : vector<2x40xf32>
    %885 = arith.addf %884, %881 : vector<2x40xf32>
    %886 = arith.addf %836, %885 : vector<2x40xf32>
    %887 = math.tanh %886 : vector<2x40xf32>
    %888 = vector.extract_strided_slice %887 {offsets = [0, 0], sizes = [2, 10], strides = [1, 1]} : vector<2x40xf32> to vector<2x10xf32>
    %cst_67 = arith.constant 1.000000e+00 : f32
    %889 = vector.broadcast %cst_67 : f32 to vector<2x10xf32>
    %890 = arith.addf %888, %889 : vector<2x10xf32>
    %cst_68 = arith.constant 5.000000e-01 : f32
    %891 = vector.broadcast %cst_68 : f32 to vector<2x10xf32>
    %892 = arith.mulf %891, %890 : vector<2x10xf32>
    %893 = vector.extract_strided_slice %887 {offsets = [0, 10], sizes = [2, 10], strides = [1, 1]} : vector<2x40xf32> to vector<2x10xf32>
    %cst_69 = arith.constant 1.000000e+00 : f32
    %894 = vector.broadcast %cst_69 : f32 to vector<2x10xf32>
    %895 = arith.addf %893, %894 : vector<2x10xf32>
    %cst_70 = arith.constant 5.000000e-01 : f32
    %896 = vector.broadcast %cst_70 : f32 to vector<2x10xf32>
    %897 = arith.mulf %896, %895 : vector<2x10xf32>
    %898 = vector.extract_strided_slice %887 {offsets = [0, 20], sizes = [2, 10], strides = [1, 1]} : vector<2x40xf32> to vector<2x10xf32>
    %899 = vector.extract_strided_slice %887 {offsets = [0, 30], sizes = [2, 10], strides = [1, 1]} : vector<2x40xf32> to vector<2x10xf32>
    %cst_71 = arith.constant 1.000000e+00 : f32
    %900 = vector.broadcast %cst_71 : f32 to vector<2x10xf32>
    %901 = arith.addf %899, %900 : vector<2x10xf32>
    %cst_72 = arith.constant 5.000000e-01 : f32
    %902 = vector.broadcast %cst_72 : f32 to vector<2x10xf32>
    %903 = arith.mulf %902, %901 : vector<2x10xf32>
    %904 = arith.mulf %897, %709 : vector<2x10xf32>
    %905 = arith.mulf %892, %898 : vector<2x10xf32>
    %906 = arith.addf %904, %905 : vector<2x10xf32>
    %907 = math.tanh %906 : vector<2x10xf32>
    %908 = arith.mulf %903, %907 : vector<2x10xf32>
    %909 = vector.extract_strided_slice %908 {offsets = [0, 0], sizes = [2, 1], strides = [1, 1]} : vector<2x10xf32> to vector<2x1xf32>
    %910 = vector.broadcast %909 : vector<2x1xf32> to vector<2x40xf32>
    %911 = vector.broadcast %31 : vector<1x40xf32> to vector<2x40xf32>
    %912 = arith.mulf %910, %911 : vector<2x40xf32>
    %913 = vector.extract_strided_slice %908 {offsets = [0, 1], sizes = [2, 1], strides = [1, 1]} : vector<2x10xf32> to vector<2x1xf32>
    %914 = vector.broadcast %913 : vector<2x1xf32> to vector<2x40xf32>
    %915 = vector.broadcast %32 : vector<1x40xf32> to vector<2x40xf32>
    %916 = arith.mulf %914, %915 : vector<2x40xf32>
    %917 = vector.extract_strided_slice %908 {offsets = [0, 2], sizes = [2, 1], strides = [1, 1]} : vector<2x10xf32> to vector<2x1xf32>
    %918 = vector.broadcast %917 : vector<2x1xf32> to vector<2x40xf32>
    %919 = vector.broadcast %33 : vector<1x40xf32> to vector<2x40xf32>
    %920 = arith.mulf %918, %919 : vector<2x40xf32>
    %921 = vector.extract_strided_slice %908 {offsets = [0, 3], sizes = [2, 1], strides = [1, 1]} : vector<2x10xf32> to vector<2x1xf32>
    %922 = vector.broadcast %921 : vector<2x1xf32> to vector<2x40xf32>
    %923 = vector.broadcast %34 : vector<1x40xf32> to vector<2x40xf32>
    %924 = arith.mulf %922, %923 : vector<2x40xf32>
    %925 = vector.extract_strided_slice %908 {offsets = [0, 4], sizes = [2, 1], strides = [1, 1]} : vector<2x10xf32> to vector<2x1xf32>
    %926 = vector.broadcast %925 : vector<2x1xf32> to vector<2x40xf32>
    %927 = vector.broadcast %35 : vector<1x40xf32> to vector<2x40xf32>
    %928 = arith.mulf %926, %927 : vector<2x40xf32>
    %929 = vector.extract_strided_slice %908 {offsets = [0, 5], sizes = [2, 1], strides = [1, 1]} : vector<2x10xf32> to vector<2x1xf32>
    %930 = vector.broadcast %929 : vector<2x1xf32> to vector<2x40xf32>
    %931 = vector.broadcast %36 : vector<1x40xf32> to vector<2x40xf32>
    %932 = arith.mulf %930, %931 : vector<2x40xf32>
    %933 = vector.extract_strided_slice %908 {offsets = [0, 6], sizes = [2, 1], strides = [1, 1]} : vector<2x10xf32> to vector<2x1xf32>
    %934 = vector.broadcast %933 : vector<2x1xf32> to vector<2x40xf32>
    %935 = vector.broadcast %37 : vector<1x40xf32> to vector<2x40xf32>
    %936 = arith.mulf %934, %935 : vector<2x40xf32>
    %937 = vector.extract_strided_slice %908 {offsets = [0, 7], sizes = [2, 1], strides = [1, 1]} : vector<2x10xf32> to vector<2x1xf32>
    %938 = vector.broadcast %937 : vector<2x1xf32> to vector<2x40xf32>
    %939 = vector.broadcast %38 : vector<1x40xf32> to vector<2x40xf32>
    %940 = arith.mulf %938, %939 : vector<2x40xf32>
    %941 = vector.extract_strided_slice %908 {offsets = [0, 8], sizes = [2, 1], strides = [1, 1]} : vector<2x10xf32> to vector<2x1xf32>
    %942 = vector.broadcast %941 : vector<2x1xf32> to vector<2x40xf32>
    %943 = vector.broadcast %39 : vector<1x40xf32> to vector<2x40xf32>
    %944 = arith.mulf %942, %943 : vector<2x40xf32>
    %945 = vector.extract_strided_slice %908 {offsets = [0, 9], sizes = [2, 1], strides = [1, 1]} : vector<2x10xf32> to vector<2x1xf32>
    %946 = vector.broadcast %945 : vector<2x1xf32> to vector<2x40xf32>
    %947 = vector.broadcast %40 : vector<1x40xf32> to vector<2x40xf32>
    %948 = arith.mulf %946, %947 : vector<2x40xf32>
    %949 = arith.addf %912, %916 : vector<2x40xf32>
    %950 = arith.addf %920, %924 : vector<2x40xf32>
    %951 = arith.addf %928, %932 : vector<2x40xf32>
    %952 = arith.addf %936, %940 : vector<2x40xf32>
    %953 = arith.addf %944, %948 : vector<2x40xf32>
    %954 = arith.addf %949, %950 : vector<2x40xf32>
    %955 = arith.addf %951, %952 : vector<2x40xf32>
    %956 = arith.addf %954, %955 : vector<2x40xf32>
    %957 = arith.addf %956, %953 : vector<2x40xf32>
    %958 = vector.broadcast %2 : vector<1x40xf32> to vector<2x40xf32>
    %959 = arith.addf %957, %958 : vector<2x40xf32>
    %960 = vector.extract_strided_slice %834 {offsets = [0, 0], sizes = [2, 1], strides = [1, 1]} : vector<2x10xf32> to vector<2x1xf32>
    %961 = vector.broadcast %960 : vector<2x1xf32> to vector<2x40xf32>
    %962 = vector.broadcast %21 : vector<1x40xf32> to vector<2x40xf32>
    %963 = arith.mulf %961, %962 : vector<2x40xf32>
    %964 = vector.extract_strided_slice %834 {offsets = [0, 1], sizes = [2, 1], strides = [1, 1]} : vector<2x10xf32> to vector<2x1xf32>
    %965 = vector.broadcast %964 : vector<2x1xf32> to vector<2x40xf32>
    %966 = vector.broadcast %22 : vector<1x40xf32> to vector<2x40xf32>
    %967 = arith.mulf %965, %966 : vector<2x40xf32>
    %968 = vector.extract_strided_slice %834 {offsets = [0, 2], sizes = [2, 1], strides = [1, 1]} : vector<2x10xf32> to vector<2x1xf32>
    %969 = vector.broadcast %968 : vector<2x1xf32> to vector<2x40xf32>
    %970 = vector.broadcast %23 : vector<1x40xf32> to vector<2x40xf32>
    %971 = arith.mulf %969, %970 : vector<2x40xf32>
    %972 = vector.extract_strided_slice %834 {offsets = [0, 3], sizes = [2, 1], strides = [1, 1]} : vector<2x10xf32> to vector<2x1xf32>
    %973 = vector.broadcast %972 : vector<2x1xf32> to vector<2x40xf32>
    %974 = vector.broadcast %24 : vector<1x40xf32> to vector<2x40xf32>
    %975 = arith.mulf %973, %974 : vector<2x40xf32>
    %976 = vector.extract_strided_slice %834 {offsets = [0, 4], sizes = [2, 1], strides = [1, 1]} : vector<2x10xf32> to vector<2x1xf32>
    %977 = vector.broadcast %976 : vector<2x1xf32> to vector<2x40xf32>
    %978 = vector.broadcast %25 : vector<1x40xf32> to vector<2x40xf32>
    %979 = arith.mulf %977, %978 : vector<2x40xf32>
    %980 = vector.extract_strided_slice %834 {offsets = [0, 5], sizes = [2, 1], strides = [1, 1]} : vector<2x10xf32> to vector<2x1xf32>
    %981 = vector.broadcast %980 : vector<2x1xf32> to vector<2x40xf32>
    %982 = vector.broadcast %26 : vector<1x40xf32> to vector<2x40xf32>
    %983 = arith.mulf %981, %982 : vector<2x40xf32>
    %984 = vector.extract_strided_slice %834 {offsets = [0, 6], sizes = [2, 1], strides = [1, 1]} : vector<2x10xf32> to vector<2x1xf32>
    %985 = vector.broadcast %984 : vector<2x1xf32> to vector<2x40xf32>
    %986 = vector.broadcast %27 : vector<1x40xf32> to vector<2x40xf32>
    %987 = arith.mulf %985, %986 : vector<2x40xf32>
    %988 = vector.extract_strided_slice %834 {offsets = [0, 7], sizes = [2, 1], strides = [1, 1]} : vector<2x10xf32> to vector<2x1xf32>
    %989 = vector.broadcast %988 : vector<2x1xf32> to vector<2x40xf32>
    %990 = vector.broadcast %28 : vector<1x40xf32> to vector<2x40xf32>
    %991 = arith.mulf %989, %990 : vector<2x40xf32>
    %992 = vector.extract_strided_slice %834 {offsets = [0, 8], sizes = [2, 1], strides = [1, 1]} : vector<2x10xf32> to vector<2x1xf32>
    %993 = vector.broadcast %992 : vector<2x1xf32> to vector<2x40xf32>
    %994 = vector.broadcast %29 : vector<1x40xf32> to vector<2x40xf32>
    %995 = arith.mulf %993, %994 : vector<2x40xf32>
    %996 = vector.extract_strided_slice %834 {offsets = [0, 9], sizes = [2, 1], strides = [1, 1]} : vector<2x10xf32> to vector<2x1xf32>
    %997 = vector.broadcast %996 : vector<2x1xf32> to vector<2x40xf32>
    %998 = vector.broadcast %30 : vector<1x40xf32> to vector<2x40xf32>
    %999 = arith.mulf %997, %998 : vector<2x40xf32>
    %1000 = arith.addf %963, %967 : vector<2x40xf32>
    %1001 = arith.addf %971, %975 : vector<2x40xf32>
    %1002 = arith.addf %979, %983 : vector<2x40xf32>
    %1003 = arith.addf %987, %991 : vector<2x40xf32>
    %1004 = arith.addf %995, %999 : vector<2x40xf32>
    %1005 = arith.addf %1000, %1001 : vector<2x40xf32>
    %1006 = arith.addf %1002, %1003 : vector<2x40xf32>
    %1007 = arith.addf %1005, %1006 : vector<2x40xf32>
    %1008 = arith.addf %1007, %1004 : vector<2x40xf32>
    %1009 = arith.addf %959, %1008 : vector<2x40xf32>
    %1010 = math.tanh %1009 : vector<2x40xf32>
    %1011 = vector.extract_strided_slice %1010 {offsets = [0, 0], sizes = [2, 10], strides = [1, 1]} : vector<2x40xf32> to vector<2x10xf32>
    %cst_73 = arith.constant 1.000000e+00 : f32
    %1012 = vector.broadcast %cst_73 : f32 to vector<2x10xf32>
    %1013 = arith.addf %1011, %1012 : vector<2x10xf32>
    %cst_74 = arith.constant 5.000000e-01 : f32
    %1014 = vector.broadcast %cst_74 : f32 to vector<2x10xf32>
    %1015 = arith.mulf %1014, %1013 : vector<2x10xf32>
    %1016 = vector.extract_strided_slice %1010 {offsets = [0, 10], sizes = [2, 10], strides = [1, 1]} : vector<2x40xf32> to vector<2x10xf32>
    %cst_75 = arith.constant 1.000000e+00 : f32
    %1017 = vector.broadcast %cst_75 : f32 to vector<2x10xf32>
    %1018 = arith.addf %1016, %1017 : vector<2x10xf32>
    %cst_76 = arith.constant 5.000000e-01 : f32
    %1019 = vector.broadcast %cst_76 : f32 to vector<2x10xf32>
    %1020 = arith.mulf %1019, %1018 : vector<2x10xf32>
    %1021 = vector.extract_strided_slice %1010 {offsets = [0, 20], sizes = [2, 10], strides = [1, 1]} : vector<2x40xf32> to vector<2x10xf32>
    %1022 = vector.extract_strided_slice %1010 {offsets = [0, 30], sizes = [2, 10], strides = [1, 1]} : vector<2x40xf32> to vector<2x10xf32>
    %cst_77 = arith.constant 1.000000e+00 : f32
    %1023 = vector.broadcast %cst_77 : f32 to vector<2x10xf32>
    %1024 = arith.addf %1022, %1023 : vector<2x10xf32>
    %cst_78 = arith.constant 5.000000e-01 : f32
    %1025 = vector.broadcast %cst_78 : f32 to vector<2x10xf32>
    %1026 = arith.mulf %1025, %1024 : vector<2x10xf32>
    %1027 = arith.mulf %1020, %832 : vector<2x10xf32>
    %1028 = arith.mulf %1015, %1021 : vector<2x10xf32>
    %1029 = arith.addf %1027, %1028 : vector<2x10xf32>
    %1030 = math.tanh %1029 : vector<2x10xf32>
    %1031 = arith.mulf %1026, %1030 : vector<2x10xf32>
    %c8 = arith.constant 8 : index
    %c0_79 = arith.constant 0 : index
    %1032 = vector.load %arg5[%c8, %c0_79] : memref<32x10xf32, #tpu.memory_space<vmem>>, vector<2x10xf32>
    tpu.vector_store %arg5[%c8, %c0_79], %1031 {strides = array<i32>} : memref<32x10xf32, #tpu.memory_space<vmem>>, vector<2x10xf32>,
    %1033 = vector.extract_strided_slice %46 {offsets = [10, 0], sizes = [2, 40], strides = [1, 1]} : vector<32x40xf32> to vector<2x40xf32>
    %1034 = vector.extract_strided_slice %908 {offsets = [0, 0], sizes = [2, 1], strides = [1, 1]} : vector<2x10xf32> to vector<2x1xf32>
    %1035 = vector.broadcast %1034 : vector<2x1xf32> to vector<2x40xf32>
    %1036 = vector.broadcast %11 : vector<1x40xf32> to vector<2x40xf32>
    %1037 = arith.mulf %1035, %1036 : vector<2x40xf32>
    %1038 = vector.extract_strided_slice %908 {offsets = [0, 1], sizes = [2, 1], strides = [1, 1]} : vector<2x10xf32> to vector<2x1xf32>
    %1039 = vector.broadcast %1038 : vector<2x1xf32> to vector<2x40xf32>
    %1040 = vector.broadcast %12 : vector<1x40xf32> to vector<2x40xf32>
    %1041 = arith.mulf %1039, %1040 : vector<2x40xf32>
    %1042 = vector.extract_strided_slice %908 {offsets = [0, 2], sizes = [2, 1], strides = [1, 1]} : vector<2x10xf32> to vector<2x1xf32>
    %1043 = vector.broadcast %1042 : vector<2x1xf32> to vector<2x40xf32>
    %1044 = vector.broadcast %13 : vector<1x40xf32> to vector<2x40xf32>
    %1045 = arith.mulf %1043, %1044 : vector<2x40xf32>
    %1046 = vector.extract_strided_slice %908 {offsets = [0, 3], sizes = [2, 1], strides = [1, 1]} : vector<2x10xf32> to vector<2x1xf32>
    %1047 = vector.broadcast %1046 : vector<2x1xf32> to vector<2x40xf32>
    %1048 = vector.broadcast %14 : vector<1x40xf32> to vector<2x40xf32>
    %1049 = arith.mulf %1047, %1048 : vector<2x40xf32>
    %1050 = vector.extract_strided_slice %908 {offsets = [0, 4], sizes = [2, 1], strides = [1, 1]} : vector<2x10xf32> to vector<2x1xf32>
    %1051 = vector.broadcast %1050 : vector<2x1xf32> to vector<2x40xf32>
    %1052 = vector.broadcast %15 : vector<1x40xf32> to vector<2x40xf32>
    %1053 = arith.mulf %1051, %1052 : vector<2x40xf32>
    %1054 = vector.extract_strided_slice %908 {offsets = [0, 5], sizes = [2, 1], strides = [1, 1]} : vector<2x10xf32> to vector<2x1xf32>
    %1055 = vector.broadcast %1054 : vector<2x1xf32> to vector<2x40xf32>
    %1056 = vector.broadcast %16 : vector<1x40xf32> to vector<2x40xf32>
    %1057 = arith.mulf %1055, %1056 : vector<2x40xf32>
    %1058 = vector.extract_strided_slice %908 {offsets = [0, 6], sizes = [2, 1], strides = [1, 1]} : vector<2x10xf32> to vector<2x1xf32>
    %1059 = vector.broadcast %1058 : vector<2x1xf32> to vector<2x40xf32>
    %1060 = vector.broadcast %17 : vector<1x40xf32> to vector<2x40xf32>
    %1061 = arith.mulf %1059, %1060 : vector<2x40xf32>
    %1062 = vector.extract_strided_slice %908 {offsets = [0, 7], sizes = [2, 1], strides = [1, 1]} : vector<2x10xf32> to vector<2x1xf32>
    %1063 = vector.broadcast %1062 : vector<2x1xf32> to vector<2x40xf32>
    %1064 = vector.broadcast %18 : vector<1x40xf32> to vector<2x40xf32>
    %1065 = arith.mulf %1063, %1064 : vector<2x40xf32>
    %1066 = vector.extract_strided_slice %908 {offsets = [0, 8], sizes = [2, 1], strides = [1, 1]} : vector<2x10xf32> to vector<2x1xf32>
    %1067 = vector.broadcast %1066 : vector<2x1xf32> to vector<2x40xf32>
    %1068 = vector.broadcast %19 : vector<1x40xf32> to vector<2x40xf32>
    %1069 = arith.mulf %1067, %1068 : vector<2x40xf32>
    %1070 = vector.extract_strided_slice %908 {offsets = [0, 9], sizes = [2, 1], strides = [1, 1]} : vector<2x10xf32> to vector<2x1xf32>
    %1071 = vector.broadcast %1070 : vector<2x1xf32> to vector<2x40xf32>
    %1072 = vector.broadcast %20 : vector<1x40xf32> to vector<2x40xf32>
    %1073 = arith.mulf %1071, %1072 : vector<2x40xf32>
    %1074 = arith.addf %1037, %1041 : vector<2x40xf32>
    %1075 = arith.addf %1045, %1049 : vector<2x40xf32>
    %1076 = arith.addf %1053, %1057 : vector<2x40xf32>
    %1077 = arith.addf %1061, %1065 : vector<2x40xf32>
    %1078 = arith.addf %1069, %1073 : vector<2x40xf32>
    %1079 = arith.addf %1074, %1075 : vector<2x40xf32>
    %1080 = arith.addf %1076, %1077 : vector<2x40xf32>
    %1081 = arith.addf %1079, %1080 : vector<2x40xf32>
    %1082 = arith.addf %1081, %1078 : vector<2x40xf32>
    %1083 = arith.addf %1033, %1082 : vector<2x40xf32>
    %1084 = math.tanh %1083 : vector<2x40xf32>
    %1085 = vector.extract_strided_slice %1084 {offsets = [0, 0], sizes = [2, 10], strides = [1, 1]} : vector<2x40xf32> to vector<2x10xf32>
    %cst_80 = arith.constant 1.000000e+00 : f32
    %1086 = vector.broadcast %cst_80 : f32 to vector<2x10xf32>
    %1087 = arith.addf %1085, %1086 : vector<2x10xf32>
    %cst_81 = arith.constant 5.000000e-01 : f32
    %1088 = vector.broadcast %cst_81 : f32 to vector<2x10xf32>
    %1089 = arith.mulf %1088, %1087 : vector<2x10xf32>
    %1090 = vector.extract_strided_slice %1084 {offsets = [0, 10], sizes = [2, 10], strides = [1, 1]} : vector<2x40xf32> to vector<2x10xf32>
    %cst_82 = arith.constant 1.000000e+00 : f32
    %1091 = vector.broadcast %cst_82 : f32 to vector<2x10xf32>
    %1092 = arith.addf %1090, %1091 : vector<2x10xf32>
    %cst_83 = arith.constant 5.000000e-01 : f32
    %1093 = vector.broadcast %cst_83 : f32 to vector<2x10xf32>
    %1094 = arith.mulf %1093, %1092 : vector<2x10xf32>
    %1095 = vector.extract_strided_slice %1084 {offsets = [0, 20], sizes = [2, 10], strides = [1, 1]} : vector<2x40xf32> to vector<2x10xf32>
    %1096 = vector.extract_strided_slice %1084 {offsets = [0, 30], sizes = [2, 10], strides = [1, 1]} : vector<2x40xf32> to vector<2x10xf32>
    %cst_84 = arith.constant 1.000000e+00 : f32
    %1097 = vector.broadcast %cst_84 : f32 to vector<2x10xf32>
    %1098 = arith.addf %1096, %1097 : vector<2x10xf32>
    %cst_85 = arith.constant 5.000000e-01 : f32
    %1099 = vector.broadcast %cst_85 : f32 to vector<2x10xf32>
    %1100 = arith.mulf %1099, %1098 : vector<2x10xf32>
    %1101 = arith.mulf %1094, %906 : vector<2x10xf32>
    %1102 = arith.mulf %1089, %1095 : vector<2x10xf32>
    %1103 = arith.addf %1101, %1102 : vector<2x10xf32>
    %1104 = math.tanh %1103 : vector<2x10xf32>
    %1105 = arith.mulf %1100, %1104 : vector<2x10xf32>
    %1106 = vector.extract_strided_slice %1105 {offsets = [0, 0], sizes = [2, 1], strides = [1, 1]} : vector<2x10xf32> to vector<2x1xf32>
    %1107 = vector.broadcast %1106 : vector<2x1xf32> to vector<2x40xf32>
    %1108 = vector.broadcast %31 : vector<1x40xf32> to vector<2x40xf32>
    %1109 = arith.mulf %1107, %1108 : vector<2x40xf32>
    %1110 = vector.extract_strided_slice %1105 {offsets = [0, 1], sizes = [2, 1], strides = [1, 1]} : vector<2x10xf32> to vector<2x1xf32>
    %1111 = vector.broadcast %1110 : vector<2x1xf32> to vector<2x40xf32>
    %1112 = vector.broadcast %32 : vector<1x40xf32> to vector<2x40xf32>
    %1113 = arith.mulf %1111, %1112 : vector<2x40xf32>
    %1114 = vector.extract_strided_slice %1105 {offsets = [0, 2], sizes = [2, 1], strides = [1, 1]} : vector<2x10xf32> to vector<2x1xf32>
    %1115 = vector.broadcast %1114 : vector<2x1xf32> to vector<2x40xf32>
    %1116 = vector.broadcast %33 : vector<1x40xf32> to vector<2x40xf32>
    %1117 = arith.mulf %1115, %1116 : vector<2x40xf32>
    %1118 = vector.extract_strided_slice %1105 {offsets = [0, 3], sizes = [2, 1], strides = [1, 1]} : vector<2x10xf32> to vector<2x1xf32>
    %1119 = vector.broadcast %1118 : vector<2x1xf32> to vector<2x40xf32>
    %1120 = vector.broadcast %34 : vector<1x40xf32> to vector<2x40xf32>
    %1121 = arith.mulf %1119, %1120 : vector<2x40xf32>
    %1122 = vector.extract_strided_slice %1105 {offsets = [0, 4], sizes = [2, 1], strides = [1, 1]} : vector<2x10xf32> to vector<2x1xf32>
    %1123 = vector.broadcast %1122 : vector<2x1xf32> to vector<2x40xf32>
    %1124 = vector.broadcast %35 : vector<1x40xf32> to vector<2x40xf32>
    %1125 = arith.mulf %1123, %1124 : vector<2x40xf32>
    %1126 = vector.extract_strided_slice %1105 {offsets = [0, 5], sizes = [2, 1], strides = [1, 1]} : vector<2x10xf32> to vector<2x1xf32>
    %1127 = vector.broadcast %1126 : vector<2x1xf32> to vector<2x40xf32>
    %1128 = vector.broadcast %36 : vector<1x40xf32> to vector<2x40xf32>
    %1129 = arith.mulf %1127, %1128 : vector<2x40xf32>
    %1130 = vector.extract_strided_slice %1105 {offsets = [0, 6], sizes = [2, 1], strides = [1, 1]} : vector<2x10xf32> to vector<2x1xf32>
    %1131 = vector.broadcast %1130 : vector<2x1xf32> to vector<2x40xf32>
    %1132 = vector.broadcast %37 : vector<1x40xf32> to vector<2x40xf32>
    %1133 = arith.mulf %1131, %1132 : vector<2x40xf32>
    %1134 = vector.extract_strided_slice %1105 {offsets = [0, 7], sizes = [2, 1], strides = [1, 1]} : vector<2x10xf32> to vector<2x1xf32>
    %1135 = vector.broadcast %1134 : vector<2x1xf32> to vector<2x40xf32>
    %1136 = vector.broadcast %38 : vector<1x40xf32> to vector<2x40xf32>
    %1137 = arith.mulf %1135, %1136 : vector<2x40xf32>
    %1138 = vector.extract_strided_slice %1105 {offsets = [0, 8], sizes = [2, 1], strides = [1, 1]} : vector<2x10xf32> to vector<2x1xf32>
    %1139 = vector.broadcast %1138 : vector<2x1xf32> to vector<2x40xf32>
    %1140 = vector.broadcast %39 : vector<1x40xf32> to vector<2x40xf32>
    %1141 = arith.mulf %1139, %1140 : vector<2x40xf32>
    %1142 = vector.extract_strided_slice %1105 {offsets = [0, 9], sizes = [2, 1], strides = [1, 1]} : vector<2x10xf32> to vector<2x1xf32>
    %1143 = vector.broadcast %1142 : vector<2x1xf32> to vector<2x40xf32>
    %1144 = vector.broadcast %40 : vector<1x40xf32> to vector<2x40xf32>
    %1145 = arith.mulf %1143, %1144 : vector<2x40xf32>
    %1146 = arith.addf %1109, %1113 : vector<2x40xf32>
    %1147 = arith.addf %1117, %1121 : vector<2x40xf32>
    %1148 = arith.addf %1125, %1129 : vector<2x40xf32>
    %1149 = arith.addf %1133, %1137 : vector<2x40xf32>
    %1150 = arith.addf %1141, %1145 : vector<2x40xf32>
    %1151 = arith.addf %1146, %1147 : vector<2x40xf32>
    %1152 = arith.addf %1148, %1149 : vector<2x40xf32>
    %1153 = arith.addf %1151, %1152 : vector<2x40xf32>
    %1154 = arith.addf %1153, %1150 : vector<2x40xf32>
    %1155 = vector.broadcast %2 : vector<1x40xf32> to vector<2x40xf32>
    %1156 = arith.addf %1154, %1155 : vector<2x40xf32>
    %1157 = vector.extract_strided_slice %1031 {offsets = [0, 0], sizes = [2, 1], strides = [1, 1]} : vector<2x10xf32> to vector<2x1xf32>
    %1158 = vector.broadcast %1157 : vector<2x1xf32> to vector<2x40xf32>
    %1159 = vector.broadcast %21 : vector<1x40xf32> to vector<2x40xf32>
    %1160 = arith.mulf %1158, %1159 : vector<2x40xf32>
    %1161 = vector.extract_strided_slice %1031 {offsets = [0, 1], sizes = [2, 1], strides = [1, 1]} : vector<2x10xf32> to vector<2x1xf32>
    %1162 = vector.broadcast %1161 : vector<2x1xf32> to vector<2x40xf32>
    %1163 = vector.broadcast %22 : vector<1x40xf32> to vector<2x40xf32>
    %1164 = arith.mulf %1162, %1163 : vector<2x40xf32>
    %1165 = vector.extract_strided_slice %1031 {offsets = [0, 2], sizes = [2, 1], strides = [1, 1]} : vector<2x10xf32> to vector<2x1xf32>
    %1166 = vector.broadcast %1165 : vector<2x1xf32> to vector<2x40xf32>
    %1167 = vector.broadcast %23 : vector<1x40xf32> to vector<2x40xf32>
    %1168 = arith.mulf %1166, %1167 : vector<2x40xf32>
    %1169 = vector.extract_strided_slice %1031 {offsets = [0, 3], sizes = [2, 1], strides = [1, 1]} : vector<2x10xf32> to vector<2x1xf32>
    %1170 = vector.broadcast %1169 : vector<2x1xf32> to vector<2x40xf32>
    %1171 = vector.broadcast %24 : vector<1x40xf32> to vector<2x40xf32>
    %1172 = arith.mulf %1170, %1171 : vector<2x40xf32>
    %1173 = vector.extract_strided_slice %1031 {offsets = [0, 4], sizes = [2, 1], strides = [1, 1]} : vector<2x10xf32> to vector<2x1xf32>
    %1174 = vector.broadcast %1173 : vector<2x1xf32> to vector<2x40xf32>
    %1175 = vector.broadcast %25 : vector<1x40xf32> to vector<2x40xf32>
    %1176 = arith.mulf %1174, %1175 : vector<2x40xf32>
    %1177 = vector.extract_strided_slice %1031 {offsets = [0, 5], sizes = [2, 1], strides = [1, 1]} : vector<2x10xf32> to vector<2x1xf32>
    %1178 = vector.broadcast %1177 : vector<2x1xf32> to vector<2x40xf32>
    %1179 = vector.broadcast %26 : vector<1x40xf32> to vector<2x40xf32>
    %1180 = arith.mulf %1178, %1179 : vector<2x40xf32>
    %1181 = vector.extract_strided_slice %1031 {offsets = [0, 6], sizes = [2, 1], strides = [1, 1]} : vector<2x10xf32> to vector<2x1xf32>
    %1182 = vector.broadcast %1181 : vector<2x1xf32> to vector<2x40xf32>
    %1183 = vector.broadcast %27 : vector<1x40xf32> to vector<2x40xf32>
    %1184 = arith.mulf %1182, %1183 : vector<2x40xf32>
    %1185 = vector.extract_strided_slice %1031 {offsets = [0, 7], sizes = [2, 1], strides = [1, 1]} : vector<2x10xf32> to vector<2x1xf32>
    %1186 = vector.broadcast %1185 : vector<2x1xf32> to vector<2x40xf32>
    %1187 = vector.broadcast %28 : vector<1x40xf32> to vector<2x40xf32>
    %1188 = arith.mulf %1186, %1187 : vector<2x40xf32>
    %1189 = vector.extract_strided_slice %1031 {offsets = [0, 8], sizes = [2, 1], strides = [1, 1]} : vector<2x10xf32> to vector<2x1xf32>
    %1190 = vector.broadcast %1189 : vector<2x1xf32> to vector<2x40xf32>
    %1191 = vector.broadcast %29 : vector<1x40xf32> to vector<2x40xf32>
    %1192 = arith.mulf %1190, %1191 : vector<2x40xf32>
    %1193 = vector.extract_strided_slice %1031 {offsets = [0, 9], sizes = [2, 1], strides = [1, 1]} : vector<2x10xf32> to vector<2x1xf32>
    %1194 = vector.broadcast %1193 : vector<2x1xf32> to vector<2x40xf32>
    %1195 = vector.broadcast %30 : vector<1x40xf32> to vector<2x40xf32>
    %1196 = arith.mulf %1194, %1195 : vector<2x40xf32>
    %1197 = arith.addf %1160, %1164 : vector<2x40xf32>
    %1198 = arith.addf %1168, %1172 : vector<2x40xf32>
    %1199 = arith.addf %1176, %1180 : vector<2x40xf32>
    %1200 = arith.addf %1184, %1188 : vector<2x40xf32>
    %1201 = arith.addf %1192, %1196 : vector<2x40xf32>
    %1202 = arith.addf %1197, %1198 : vector<2x40xf32>
    %1203 = arith.addf %1199, %1200 : vector<2x40xf32>
    %1204 = arith.addf %1202, %1203 : vector<2x40xf32>
    %1205 = arith.addf %1204, %1201 : vector<2x40xf32>
    %1206 = arith.addf %1156, %1205 : vector<2x40xf32>
    %1207 = math.tanh %1206 : vector<2x40xf32>
    %1208 = vector.extract_strided_slice %1207 {offsets = [0, 0], sizes = [2, 10], strides = [1, 1]} : vector<2x40xf32> to vector<2x10xf32>
    %cst_86 = arith.constant 1.000000e+00 : f32
    %1209 = vector.broadcast %cst_86 : f32 to vector<2x10xf32>
    %1210 = arith.addf %1208, %1209 : vector<2x10xf32>
    %cst_87 = arith.constant 5.000000e-01 : f32
    %1211 = vector.broadcast %cst_87 : f32 to vector<2x10xf32>
    %1212 = arith.mulf %1211, %1210 : vector<2x10xf32>
    %1213 = vector.extract_strided_slice %1207 {offsets = [0, 10], sizes = [2, 10], strides = [1, 1]} : vector<2x40xf32> to vector<2x10xf32>
    %cst_88 = arith.constant 1.000000e+00 : f32
    %1214 = vector.broadcast %cst_88 : f32 to vector<2x10xf32>
    %1215 = arith.addf %1213, %1214 : vector<2x10xf32>
    %cst_89 = arith.constant 5.000000e-01 : f32
    %1216 = vector.broadcast %cst_89 : f32 to vector<2x10xf32>
    %1217 = arith.mulf %1216, %1215 : vector<2x10xf32>
    %1218 = vector.extract_strided_slice %1207 {offsets = [0, 20], sizes = [2, 10], strides = [1, 1]} : vector<2x40xf32> to vector<2x10xf32>
    %1219 = vector.extract_strided_slice %1207 {offsets = [0, 30], sizes = [2, 10], strides = [1, 1]} : vector<2x40xf32> to vector<2x10xf32>
    %cst_90 = arith.constant 1.000000e+00 : f32
    %1220 = vector.broadcast %cst_90 : f32 to vector<2x10xf32>
    %1221 = arith.addf %1219, %1220 : vector<2x10xf32>
    %cst_91 = arith.constant 5.000000e-01 : f32
    %1222 = vector.broadcast %cst_91 : f32 to vector<2x10xf32>
    %1223 = arith.mulf %1222, %1221 : vector<2x10xf32>
    %1224 = arith.mulf %1217, %1029 : vector<2x10xf32>
    %1225 = arith.mulf %1212, %1218 : vector<2x10xf32>
    %1226 = arith.addf %1224, %1225 : vector<2x10xf32>
    %1227 = math.tanh %1226 : vector<2x10xf32>
    %1228 = arith.mulf %1223, %1227 : vector<2x10xf32>
    %c10 = arith.constant 10 : index
    %c0_92 = arith.constant 0 : index
    %1229 = vector.load %arg5[%c10, %c0_92] : memref<32x10xf32, #tpu.memory_space<vmem>>, vector<2x10xf32>
    tpu.vector_store %arg5[%c10, %c0_92], %1228 {strides = array<i32>} : memref<32x10xf32, #tpu.memory_space<vmem>>, vector<2x10xf32>,
    %1230 = vector.extract_strided_slice %46 {offsets = [12, 0], sizes = [2, 40], strides = [1, 1]} : vector<32x40xf32> to vector<2x40xf32>
    %1231 = vector.extract_strided_slice %1105 {offsets = [0, 0], sizes = [2, 1], strides = [1, 1]} : vector<2x10xf32> to vector<2x1xf32>
    %1232 = vector.broadcast %1231 : vector<2x1xf32> to vector<2x40xf32>
    %1233 = vector.broadcast %11 : vector<1x40xf32> to vector<2x40xf32>
    %1234 = arith.mulf %1232, %1233 : vector<2x40xf32>
    %1235 = vector.extract_strided_slice %1105 {offsets = [0, 1], sizes = [2, 1], strides = [1, 1]} : vector<2x10xf32> to vector<2x1xf32>
    %1236 = vector.broadcast %1235 : vector<2x1xf32> to vector<2x40xf32>
    %1237 = vector.broadcast %12 : vector<1x40xf32> to vector<2x40xf32>
    %1238 = arith.mulf %1236, %1237 : vector<2x40xf32>
    %1239 = vector.extract_strided_slice %1105 {offsets = [0, 2], sizes = [2, 1], strides = [1, 1]} : vector<2x10xf32> to vector<2x1xf32>
    %1240 = vector.broadcast %1239 : vector<2x1xf32> to vector<2x40xf32>
    %1241 = vector.broadcast %13 : vector<1x40xf32> to vector<2x40xf32>
    %1242 = arith.mulf %1240, %1241 : vector<2x40xf32>
    %1243 = vector.extract_strided_slice %1105 {offsets = [0, 3], sizes = [2, 1], strides = [1, 1]} : vector<2x10xf32> to vector<2x1xf32>
    %1244 = vector.broadcast %1243 : vector<2x1xf32> to vector<2x40xf32>
    %1245 = vector.broadcast %14 : vector<1x40xf32> to vector<2x40xf32>
    %1246 = arith.mulf %1244, %1245 : vector<2x40xf32>
    %1247 = vector.extract_strided_slice %1105 {offsets = [0, 4], sizes = [2, 1], strides = [1, 1]} : vector<2x10xf32> to vector<2x1xf32>
    %1248 = vector.broadcast %1247 : vector<2x1xf32> to vector<2x40xf32>
    %1249 = vector.broadcast %15 : vector<1x40xf32> to vector<2x40xf32>
    %1250 = arith.mulf %1248, %1249 : vector<2x40xf32>
    %1251 = vector.extract_strided_slice %1105 {offsets = [0, 5], sizes = [2, 1], strides = [1, 1]} : vector<2x10xf32> to vector<2x1xf32>
    %1252 = vector.broadcast %1251 : vector<2x1xf32> to vector<2x40xf32>
    %1253 = vector.broadcast %16 : vector<1x40xf32> to vector<2x40xf32>
    %1254 = arith.mulf %1252, %1253 : vector<2x40xf32>
    %1255 = vector.extract_strided_slice %1105 {offsets = [0, 6], sizes = [2, 1], strides = [1, 1]} : vector<2x10xf32> to vector<2x1xf32>
    %1256 = vector.broadcast %1255 : vector<2x1xf32> to vector<2x40xf32>
    %1257 = vector.broadcast %17 : vector<1x40xf32> to vector<2x40xf32>
    %1258 = arith.mulf %1256, %1257 : vector<2x40xf32>
    %1259 = vector.extract_strided_slice %1105 {offsets = [0, 7], sizes = [2, 1], strides = [1, 1]} : vector<2x10xf32> to vector<2x1xf32>
    %1260 = vector.broadcast %1259 : vector<2x1xf32> to vector<2x40xf32>
    %1261 = vector.broadcast %18 : vector<1x40xf32> to vector<2x40xf32>
    %1262 = arith.mulf %1260, %1261 : vector<2x40xf32>
    %1263 = vector.extract_strided_slice %1105 {offsets = [0, 8], sizes = [2, 1], strides = [1, 1]} : vector<2x10xf32> to vector<2x1xf32>
    %1264 = vector.broadcast %1263 : vector<2x1xf32> to vector<2x40xf32>
    %1265 = vector.broadcast %19 : vector<1x40xf32> to vector<2x40xf32>
    %1266 = arith.mulf %1264, %1265 : vector<2x40xf32>
    %1267 = vector.extract_strided_slice %1105 {offsets = [0, 9], sizes = [2, 1], strides = [1, 1]} : vector<2x10xf32> to vector<2x1xf32>
    %1268 = vector.broadcast %1267 : vector<2x1xf32> to vector<2x40xf32>
    %1269 = vector.broadcast %20 : vector<1x40xf32> to vector<2x40xf32>
    %1270 = arith.mulf %1268, %1269 : vector<2x40xf32>
    %1271 = arith.addf %1234, %1238 : vector<2x40xf32>
    %1272 = arith.addf %1242, %1246 : vector<2x40xf32>
    %1273 = arith.addf %1250, %1254 : vector<2x40xf32>
    %1274 = arith.addf %1258, %1262 : vector<2x40xf32>
    %1275 = arith.addf %1266, %1270 : vector<2x40xf32>
    %1276 = arith.addf %1271, %1272 : vector<2x40xf32>
    %1277 = arith.addf %1273, %1274 : vector<2x40xf32>
    %1278 = arith.addf %1276, %1277 : vector<2x40xf32>
    %1279 = arith.addf %1278, %1275 : vector<2x40xf32>
    %1280 = arith.addf %1230, %1279 : vector<2x40xf32>
    %1281 = math.tanh %1280 : vector<2x40xf32>
    %1282 = vector.extract_strided_slice %1281 {offsets = [0, 0], sizes = [2, 10], strides = [1, 1]} : vector<2x40xf32> to vector<2x10xf32>
    %cst_93 = arith.constant 1.000000e+00 : f32
    %1283 = vector.broadcast %cst_93 : f32 to vector<2x10xf32>
    %1284 = arith.addf %1282, %1283 : vector<2x10xf32>
    %cst_94 = arith.constant 5.000000e-01 : f32
    %1285 = vector.broadcast %cst_94 : f32 to vector<2x10xf32>
    %1286 = arith.mulf %1285, %1284 : vector<2x10xf32>
    %1287 = vector.extract_strided_slice %1281 {offsets = [0, 10], sizes = [2, 10], strides = [1, 1]} : vector<2x40xf32> to vector<2x10xf32>
    %cst_95 = arith.constant 1.000000e+00 : f32
    %1288 = vector.broadcast %cst_95 : f32 to vector<2x10xf32>
    %1289 = arith.addf %1287, %1288 : vector<2x10xf32>
    %cst_96 = arith.constant 5.000000e-01 : f32
    %1290 = vector.broadcast %cst_96 : f32 to vector<2x10xf32>
    %1291 = arith.mulf %1290, %1289 : vector<2x10xf32>
    %1292 = vector.extract_strided_slice %1281 {offsets = [0, 20], sizes = [2, 10], strides = [1, 1]} : vector<2x40xf32> to vector<2x10xf32>
    %1293 = vector.extract_strided_slice %1281 {offsets = [0, 30], sizes = [2, 10], strides = [1, 1]} : vector<2x40xf32> to vector<2x10xf32>
    %cst_97 = arith.constant 1.000000e+00 : f32
    %1294 = vector.broadcast %cst_97 : f32 to vector<2x10xf32>
    %1295 = arith.addf %1293, %1294 : vector<2x10xf32>
    %cst_98 = arith.constant 5.000000e-01 : f32
    %1296 = vector.broadcast %cst_98 : f32 to vector<2x10xf32>
    %1297 = arith.mulf %1296, %1295 : vector<2x10xf32>
    %1298 = arith.mulf %1291, %1103 : vector<2x10xf32>
    %1299 = arith.mulf %1286, %1292 : vector<2x10xf32>
    %1300 = arith.addf %1298, %1299 : vector<2x10xf32>
    %1301 = math.tanh %1300 : vector<2x10xf32>
    %1302 = arith.mulf %1297, %1301 : vector<2x10xf32>
    %1303 = vector.extract_strided_slice %1302 {offsets = [0, 0], sizes = [2, 1], strides = [1, 1]} : vector<2x10xf32> to vector<2x1xf32>
    %1304 = vector.broadcast %1303 : vector<2x1xf32> to vector<2x40xf32>
    %1305 = vector.broadcast %31 : vector<1x40xf32> to vector<2x40xf32>
    %1306 = arith.mulf %1304, %1305 : vector<2x40xf32>
    %1307 = vector.extract_strided_slice %1302 {offsets = [0, 1], sizes = [2, 1], strides = [1, 1]} : vector<2x10xf32> to vector<2x1xf32>
    %1308 = vector.broadcast %1307 : vector<2x1xf32> to vector<2x40xf32>
    %1309 = vector.broadcast %32 : vector<1x40xf32> to vector<2x40xf32>
    %1310 = arith.mulf %1308, %1309 : vector<2x40xf32>
    %1311 = vector.extract_strided_slice %1302 {offsets = [0, 2], sizes = [2, 1], strides = [1, 1]} : vector<2x10xf32> to vector<2x1xf32>
    %1312 = vector.broadcast %1311 : vector<2x1xf32> to vector<2x40xf32>
    %1313 = vector.broadcast %33 : vector<1x40xf32> to vector<2x40xf32>
    %1314 = arith.mulf %1312, %1313 : vector<2x40xf32>
    %1315 = vector.extract_strided_slice %1302 {offsets = [0, 3], sizes = [2, 1], strides = [1, 1]} : vector<2x10xf32> to vector<2x1xf32>
    %1316 = vector.broadcast %1315 : vector<2x1xf32> to vector<2x40xf32>
    %1317 = vector.broadcast %34 : vector<1x40xf32> to vector<2x40xf32>
    %1318 = arith.mulf %1316, %1317 : vector<2x40xf32>
    %1319 = vector.extract_strided_slice %1302 {offsets = [0, 4], sizes = [2, 1], strides = [1, 1]} : vector<2x10xf32> to vector<2x1xf32>
    %1320 = vector.broadcast %1319 : vector<2x1xf32> to vector<2x40xf32>
    %1321 = vector.broadcast %35 : vector<1x40xf32> to vector<2x40xf32>
    %1322 = arith.mulf %1320, %1321 : vector<2x40xf32>
    %1323 = vector.extract_strided_slice %1302 {offsets = [0, 5], sizes = [2, 1], strides = [1, 1]} : vector<2x10xf32> to vector<2x1xf32>
    %1324 = vector.broadcast %1323 : vector<2x1xf32> to vector<2x40xf32>
    %1325 = vector.broadcast %36 : vector<1x40xf32> to vector<2x40xf32>
    %1326 = arith.mulf %1324, %1325 : vector<2x40xf32>
    %1327 = vector.extract_strided_slice %1302 {offsets = [0, 6], sizes = [2, 1], strides = [1, 1]} : vector<2x10xf32> to vector<2x1xf32>
    %1328 = vector.broadcast %1327 : vector<2x1xf32> to vector<2x40xf32>
    %1329 = vector.broadcast %37 : vector<1x40xf32> to vector<2x40xf32>
    %1330 = arith.mulf %1328, %1329 : vector<2x40xf32>
    %1331 = vector.extract_strided_slice %1302 {offsets = [0, 7], sizes = [2, 1], strides = [1, 1]} : vector<2x10xf32> to vector<2x1xf32>
    %1332 = vector.broadcast %1331 : vector<2x1xf32> to vector<2x40xf32>
    %1333 = vector.broadcast %38 : vector<1x40xf32> to vector<2x40xf32>
    %1334 = arith.mulf %1332, %1333 : vector<2x40xf32>
    %1335 = vector.extract_strided_slice %1302 {offsets = [0, 8], sizes = [2, 1], strides = [1, 1]} : vector<2x10xf32> to vector<2x1xf32>
    %1336 = vector.broadcast %1335 : vector<2x1xf32> to vector<2x40xf32>
    %1337 = vector.broadcast %39 : vector<1x40xf32> to vector<2x40xf32>
    %1338 = arith.mulf %1336, %1337 : vector<2x40xf32>
    %1339 = vector.extract_strided_slice %1302 {offsets = [0, 9], sizes = [2, 1], strides = [1, 1]} : vector<2x10xf32> to vector<2x1xf32>
    %1340 = vector.broadcast %1339 : vector<2x1xf32> to vector<2x40xf32>
    %1341 = vector.broadcast %40 : vector<1x40xf32> to vector<2x40xf32>
    %1342 = arith.mulf %1340, %1341 : vector<2x40xf32>
    %1343 = arith.addf %1306, %1310 : vector<2x40xf32>
    %1344 = arith.addf %1314, %1318 : vector<2x40xf32>
    %1345 = arith.addf %1322, %1326 : vector<2x40xf32>
    %1346 = arith.addf %1330, %1334 : vector<2x40xf32>
    %1347 = arith.addf %1338, %1342 : vector<2x40xf32>
    %1348 = arith.addf %1343, %1344 : vector<2x40xf32>
    %1349 = arith.addf %1345, %1346 : vector<2x40xf32>
    %1350 = arith.addf %1348, %1349 : vector<2x40xf32>
    %1351 = arith.addf %1350, %1347 : vector<2x40xf32>
    %1352 = vector.broadcast %2 : vector<1x40xf32> to vector<2x40xf32>
    %1353 = arith.addf %1351, %1352 : vector<2x40xf32>
    %1354 = vector.extract_strided_slice %1228 {offsets = [0, 0], sizes = [2, 1], strides = [1, 1]} : vector<2x10xf32> to vector<2x1xf32>
    %1355 = vector.broadcast %1354 : vector<2x1xf32> to vector<2x40xf32>
    %1356 = vector.broadcast %21 : vector<1x40xf32> to vector<2x40xf32>
    %1357 = arith.mulf %1355, %1356 : vector<2x40xf32>
    %1358 = vector.extract_strided_slice %1228 {offsets = [0, 1], sizes = [2, 1], strides = [1, 1]} : vector<2x10xf32> to vector<2x1xf32>
    %1359 = vector.broadcast %1358 : vector<2x1xf32> to vector<2x40xf32>
    %1360 = vector.broadcast %22 : vector<1x40xf32> to vector<2x40xf32>
    %1361 = arith.mulf %1359, %1360 : vector<2x40xf32>
    %1362 = vector.extract_strided_slice %1228 {offsets = [0, 2], sizes = [2, 1], strides = [1, 1]} : vector<2x10xf32> to vector<2x1xf32>
    %1363 = vector.broadcast %1362 : vector<2x1xf32> to vector<2x40xf32>
    %1364 = vector.broadcast %23 : vector<1x40xf32> to vector<2x40xf32>
    %1365 = arith.mulf %1363, %1364 : vector<2x40xf32>
    %1366 = vector.extract_strided_slice %1228 {offsets = [0, 3], sizes = [2, 1], strides = [1, 1]} : vector<2x10xf32> to vector<2x1xf32>
    %1367 = vector.broadcast %1366 : vector<2x1xf32> to vector<2x40xf32>
    %1368 = vector.broadcast %24 : vector<1x40xf32> to vector<2x40xf32>
    %1369 = arith.mulf %1367, %1368 : vector<2x40xf32>
    %1370 = vector.extract_strided_slice %1228 {offsets = [0, 4], sizes = [2, 1], strides = [1, 1]} : vector<2x10xf32> to vector<2x1xf32>
    %1371 = vector.broadcast %1370 : vector<2x1xf32> to vector<2x40xf32>
    %1372 = vector.broadcast %25 : vector<1x40xf32> to vector<2x40xf32>
    %1373 = arith.mulf %1371, %1372 : vector<2x40xf32>
    %1374 = vector.extract_strided_slice %1228 {offsets = [0, 5], sizes = [2, 1], strides = [1, 1]} : vector<2x10xf32> to vector<2x1xf32>
    %1375 = vector.broadcast %1374 : vector<2x1xf32> to vector<2x40xf32>
    %1376 = vector.broadcast %26 : vector<1x40xf32> to vector<2x40xf32>
    %1377 = arith.mulf %1375, %1376 : vector<2x40xf32>
    %1378 = vector.extract_strided_slice %1228 {offsets = [0, 6], sizes = [2, 1], strides = [1, 1]} : vector<2x10xf32> to vector<2x1xf32>
    %1379 = vector.broadcast %1378 : vector<2x1xf32> to vector<2x40xf32>
    %1380 = vector.broadcast %27 : vector<1x40xf32> to vector<2x40xf32>
    %1381 = arith.mulf %1379, %1380 : vector<2x40xf32>
    %1382 = vector.extract_strided_slice %1228 {offsets = [0, 7], sizes = [2, 1], strides = [1, 1]} : vector<2x10xf32> to vector<2x1xf32>
    %1383 = vector.broadcast %1382 : vector<2x1xf32> to vector<2x40xf32>
    %1384 = vector.broadcast %28 : vector<1x40xf32> to vector<2x40xf32>
    %1385 = arith.mulf %1383, %1384 : vector<2x40xf32>
    %1386 = vector.extract_strided_slice %1228 {offsets = [0, 8], sizes = [2, 1], strides = [1, 1]} : vector<2x10xf32> to vector<2x1xf32>
    %1387 = vector.broadcast %1386 : vector<2x1xf32> to vector<2x40xf32>
    %1388 = vector.broadcast %29 : vector<1x40xf32> to vector<2x40xf32>
    %1389 = arith.mulf %1387, %1388 : vector<2x40xf32>
    %1390 = vector.extract_strided_slice %1228 {offsets = [0, 9], sizes = [2, 1], strides = [1, 1]} : vector<2x10xf32> to vector<2x1xf32>
    %1391 = vector.broadcast %1390 : vector<2x1xf32> to vector<2x40xf32>
    %1392 = vector.broadcast %30 : vector<1x40xf32> to vector<2x40xf32>
    %1393 = arith.mulf %1391, %1392 : vector<2x40xf32>
    %1394 = arith.addf %1357, %1361 : vector<2x40xf32>
    %1395 = arith.addf %1365, %1369 : vector<2x40xf32>
    %1396 = arith.addf %1373, %1377 : vector<2x40xf32>
    %1397 = arith.addf %1381, %1385 : vector<2x40xf32>
    %1398 = arith.addf %1389, %1393 : vector<2x40xf32>
    %1399 = arith.addf %1394, %1395 : vector<2x40xf32>
    %1400 = arith.addf %1396, %1397 : vector<2x40xf32>
    %1401 = arith.addf %1399, %1400 : vector<2x40xf32>
    %1402 = arith.addf %1401, %1398 : vector<2x40xf32>
    %1403 = arith.addf %1353, %1402 : vector<2x40xf32>
    %1404 = math.tanh %1403 : vector<2x40xf32>
    %1405 = vector.extract_strided_slice %1404 {offsets = [0, 0], sizes = [2, 10], strides = [1, 1]} : vector<2x40xf32> to vector<2x10xf32>
    %cst_99 = arith.constant 1.000000e+00 : f32
    %1406 = vector.broadcast %cst_99 : f32 to vector<2x10xf32>
    %1407 = arith.addf %1405, %1406 : vector<2x10xf32>
    %cst_100 = arith.constant 5.000000e-01 : f32
    %1408 = vector.broadcast %cst_100 : f32 to vector<2x10xf32>
    %1409 = arith.mulf %1408, %1407 : vector<2x10xf32>
    %1410 = vector.extract_strided_slice %1404 {offsets = [0, 10], sizes = [2, 10], strides = [1, 1]} : vector<2x40xf32> to vector<2x10xf32>
    %cst_101 = arith.constant 1.000000e+00 : f32
    %1411 = vector.broadcast %cst_101 : f32 to vector<2x10xf32>
    %1412 = arith.addf %1410, %1411 : vector<2x10xf32>
    %cst_102 = arith.constant 5.000000e-01 : f32
    %1413 = vector.broadcast %cst_102 : f32 to vector<2x10xf32>
    %1414 = arith.mulf %1413, %1412 : vector<2x10xf32>
    %1415 = vector.extract_strided_slice %1404 {offsets = [0, 20], sizes = [2, 10], strides = [1, 1]} : vector<2x40xf32> to vector<2x10xf32>
    %1416 = vector.extract_strided_slice %1404 {offsets = [0, 30], sizes = [2, 10], strides = [1, 1]} : vector<2x40xf32> to vector<2x10xf32>
    %cst_103 = arith.constant 1.000000e+00 : f32
    %1417 = vector.broadcast %cst_103 : f32 to vector<2x10xf32>
    %1418 = arith.addf %1416, %1417 : vector<2x10xf32>
    %cst_104 = arith.constant 5.000000e-01 : f32
    %1419 = vector.broadcast %cst_104 : f32 to vector<2x10xf32>
    %1420 = arith.mulf %1419, %1418 : vector<2x10xf32>
    %1421 = arith.mulf %1414, %1226 : vector<2x10xf32>
    %1422 = arith.mulf %1409, %1415 : vector<2x10xf32>
    %1423 = arith.addf %1421, %1422 : vector<2x10xf32>
    %1424 = math.tanh %1423 : vector<2x10xf32>
    %1425 = arith.mulf %1420, %1424 : vector<2x10xf32>
    %c12 = arith.constant 12 : index
    %c0_105 = arith.constant 0 : index
    %1426 = vector.load %arg5[%c12, %c0_105] : memref<32x10xf32, #tpu.memory_space<vmem>>, vector<2x10xf32>
    tpu.vector_store %arg5[%c12, %c0_105], %1425 {strides = array<i32>} : memref<32x10xf32, #tpu.memory_space<vmem>>, vector<2x10xf32>,
    %1427 = vector.extract_strided_slice %46 {offsets = [14, 0], sizes = [2, 40], strides = [1, 1]} : vector<32x40xf32> to vector<2x40xf32>
    %1428 = vector.extract_strided_slice %1302 {offsets = [0, 0], sizes = [2, 1], strides = [1, 1]} : vector<2x10xf32> to vector<2x1xf32>
    %1429 = vector.broadcast %1428 : vector<2x1xf32> to vector<2x40xf32>
    %1430 = vector.broadcast %11 : vector<1x40xf32> to vector<2x40xf32>
    %1431 = arith.mulf %1429, %1430 : vector<2x40xf32>
    %1432 = vector.extract_strided_slice %1302 {offsets = [0, 1], sizes = [2, 1], strides = [1, 1]} : vector<2x10xf32> to vector<2x1xf32>
    %1433 = vector.broadcast %1432 : vector<2x1xf32> to vector<2x40xf32>
    %1434 = vector.broadcast %12 : vector<1x40xf32> to vector<2x40xf32>
    %1435 = arith.mulf %1433, %1434 : vector<2x40xf32>
    %1436 = vector.extract_strided_slice %1302 {offsets = [0, 2], sizes = [2, 1], strides = [1, 1]} : vector<2x10xf32> to vector<2x1xf32>
    %1437 = vector.broadcast %1436 : vector<2x1xf32> to vector<2x40xf32>
    %1438 = vector.broadcast %13 : vector<1x40xf32> to vector<2x40xf32>
    %1439 = arith.mulf %1437, %1438 : vector<2x40xf32>
    %1440 = vector.extract_strided_slice %1302 {offsets = [0, 3], sizes = [2, 1], strides = [1, 1]} : vector<2x10xf32> to vector<2x1xf32>
    %1441 = vector.broadcast %1440 : vector<2x1xf32> to vector<2x40xf32>
    %1442 = vector.broadcast %14 : vector<1x40xf32> to vector<2x40xf32>
    %1443 = arith.mulf %1441, %1442 : vector<2x40xf32>
    %1444 = vector.extract_strided_slice %1302 {offsets = [0, 4], sizes = [2, 1], strides = [1, 1]} : vector<2x10xf32> to vector<2x1xf32>
    %1445 = vector.broadcast %1444 : vector<2x1xf32> to vector<2x40xf32>
    %1446 = vector.broadcast %15 : vector<1x40xf32> to vector<2x40xf32>
    %1447 = arith.mulf %1445, %1446 : vector<2x40xf32>
    %1448 = vector.extract_strided_slice %1302 {offsets = [0, 5], sizes = [2, 1], strides = [1, 1]} : vector<2x10xf32> to vector<2x1xf32>
    %1449 = vector.broadcast %1448 : vector<2x1xf32> to vector<2x40xf32>
    %1450 = vector.broadcast %16 : vector<1x40xf32> to vector<2x40xf32>
    %1451 = arith.mulf %1449, %1450 : vector<2x40xf32>
    %1452 = vector.extract_strided_slice %1302 {offsets = [0, 6], sizes = [2, 1], strides = [1, 1]} : vector<2x10xf32> to vector<2x1xf32>
    %1453 = vector.broadcast %1452 : vector<2x1xf32> to vector<2x40xf32>
    %1454 = vector.broadcast %17 : vector<1x40xf32> to vector<2x40xf32>
    %1455 = arith.mulf %1453, %1454 : vector<2x40xf32>
    %1456 = vector.extract_strided_slice %1302 {offsets = [0, 7], sizes = [2, 1], strides = [1, 1]} : vector<2x10xf32> to vector<2x1xf32>
    %1457 = vector.broadcast %1456 : vector<2x1xf32> to vector<2x40xf32>
    %1458 = vector.broadcast %18 : vector<1x40xf32> to vector<2x40xf32>
    %1459 = arith.mulf %1457, %1458 : vector<2x40xf32>
    %1460 = vector.extract_strided_slice %1302 {offsets = [0, 8], sizes = [2, 1], strides = [1, 1]} : vector<2x10xf32> to vector<2x1xf32>
    %1461 = vector.broadcast %1460 : vector<2x1xf32> to vector<2x40xf32>
    %1462 = vector.broadcast %19 : vector<1x40xf32> to vector<2x40xf32>
    %1463 = arith.mulf %1461, %1462 : vector<2x40xf32>
    %1464 = vector.extract_strided_slice %1302 {offsets = [0, 9], sizes = [2, 1], strides = [1, 1]} : vector<2x10xf32> to vector<2x1xf32>
    %1465 = vector.broadcast %1464 : vector<2x1xf32> to vector<2x40xf32>
    %1466 = vector.broadcast %20 : vector<1x40xf32> to vector<2x40xf32>
    %1467 = arith.mulf %1465, %1466 : vector<2x40xf32>
    %1468 = arith.addf %1431, %1435 : vector<2x40xf32>
    %1469 = arith.addf %1439, %1443 : vector<2x40xf32>
    %1470 = arith.addf %1447, %1451 : vector<2x40xf32>
    %1471 = arith.addf %1455, %1459 : vector<2x40xf32>
    %1472 = arith.addf %1463, %1467 : vector<2x40xf32>
    %1473 = arith.addf %1468, %1469 : vector<2x40xf32>
    %1474 = arith.addf %1470, %1471 : vector<2x40xf32>
    %1475 = arith.addf %1473, %1474 : vector<2x40xf32>
    %1476 = arith.addf %1475, %1472 : vector<2x40xf32>
    %1477 = arith.addf %1427, %1476 : vector<2x40xf32>
    %1478 = math.tanh %1477 : vector<2x40xf32>
    %1479 = vector.extract_strided_slice %1478 {offsets = [0, 0], sizes = [2, 10], strides = [1, 1]} : vector<2x40xf32> to vector<2x10xf32>
    %cst_106 = arith.constant 1.000000e+00 : f32
    %1480 = vector.broadcast %cst_106 : f32 to vector<2x10xf32>
    %1481 = arith.addf %1479, %1480 : vector<2x10xf32>
    %cst_107 = arith.constant 5.000000e-01 : f32
    %1482 = vector.broadcast %cst_107 : f32 to vector<2x10xf32>
    %1483 = arith.mulf %1482, %1481 : vector<2x10xf32>
    %1484 = vector.extract_strided_slice %1478 {offsets = [0, 10], sizes = [2, 10], strides = [1, 1]} : vector<2x40xf32> to vector<2x10xf32>
    %cst_108 = arith.constant 1.000000e+00 : f32
    %1485 = vector.broadcast %cst_108 : f32 to vector<2x10xf32>
    %1486 = arith.addf %1484, %1485 : vector<2x10xf32>
    %cst_109 = arith.constant 5.000000e-01 : f32
    %1487 = vector.broadcast %cst_109 : f32 to vector<2x10xf32>
    %1488 = arith.mulf %1487, %1486 : vector<2x10xf32>
    %1489 = vector.extract_strided_slice %1478 {offsets = [0, 20], sizes = [2, 10], strides = [1, 1]} : vector<2x40xf32> to vector<2x10xf32>
    %1490 = vector.extract_strided_slice %1478 {offsets = [0, 30], sizes = [2, 10], strides = [1, 1]} : vector<2x40xf32> to vector<2x10xf32>
    %cst_110 = arith.constant 1.000000e+00 : f32
    %1491 = vector.broadcast %cst_110 : f32 to vector<2x10xf32>
    %1492 = arith.addf %1490, %1491 : vector<2x10xf32>
    %cst_111 = arith.constant 5.000000e-01 : f32
    %1493 = vector.broadcast %cst_111 : f32 to vector<2x10xf32>
    %1494 = arith.mulf %1493, %1492 : vector<2x10xf32>
    %1495 = arith.mulf %1488, %1300 : vector<2x10xf32>
    %1496 = arith.mulf %1483, %1489 : vector<2x10xf32>
    %1497 = arith.addf %1495, %1496 : vector<2x10xf32>
    %1498 = math.tanh %1497 : vector<2x10xf32>
    %1499 = arith.mulf %1494, %1498 : vector<2x10xf32>
    %1500 = vector.extract_strided_slice %1499 {offsets = [0, 0], sizes = [2, 1], strides = [1, 1]} : vector<2x10xf32> to vector<2x1xf32>
    %1501 = vector.broadcast %1500 : vector<2x1xf32> to vector<2x40xf32>
    %1502 = vector.broadcast %31 : vector<1x40xf32> to vector<2x40xf32>
    %1503 = arith.mulf %1501, %1502 : vector<2x40xf32>
    %1504 = vector.extract_strided_slice %1499 {offsets = [0, 1], sizes = [2, 1], strides = [1, 1]} : vector<2x10xf32> to vector<2x1xf32>
    %1505 = vector.broadcast %1504 : vector<2x1xf32> to vector<2x40xf32>
    %1506 = vector.broadcast %32 : vector<1x40xf32> to vector<2x40xf32>
    %1507 = arith.mulf %1505, %1506 : vector<2x40xf32>
    %1508 = vector.extract_strided_slice %1499 {offsets = [0, 2], sizes = [2, 1], strides = [1, 1]} : vector<2x10xf32> to vector<2x1xf32>
    %1509 = vector.broadcast %1508 : vector<2x1xf32> to vector<2x40xf32>
    %1510 = vector.broadcast %33 : vector<1x40xf32> to vector<2x40xf32>
    %1511 = arith.mulf %1509, %1510 : vector<2x40xf32>
    %1512 = vector.extract_strided_slice %1499 {offsets = [0, 3], sizes = [2, 1], strides = [1, 1]} : vector<2x10xf32> to vector<2x1xf32>
    %1513 = vector.broadcast %1512 : vector<2x1xf32> to vector<2x40xf32>
    %1514 = vector.broadcast %34 : vector<1x40xf32> to vector<2x40xf32>
    %1515 = arith.mulf %1513, %1514 : vector<2x40xf32>
    %1516 = vector.extract_strided_slice %1499 {offsets = [0, 4], sizes = [2, 1], strides = [1, 1]} : vector<2x10xf32> to vector<2x1xf32>
    %1517 = vector.broadcast %1516 : vector<2x1xf32> to vector<2x40xf32>
    %1518 = vector.broadcast %35 : vector<1x40xf32> to vector<2x40xf32>
    %1519 = arith.mulf %1517, %1518 : vector<2x40xf32>
    %1520 = vector.extract_strided_slice %1499 {offsets = [0, 5], sizes = [2, 1], strides = [1, 1]} : vector<2x10xf32> to vector<2x1xf32>
    %1521 = vector.broadcast %1520 : vector<2x1xf32> to vector<2x40xf32>
    %1522 = vector.broadcast %36 : vector<1x40xf32> to vector<2x40xf32>
    %1523 = arith.mulf %1521, %1522 : vector<2x40xf32>
    %1524 = vector.extract_strided_slice %1499 {offsets = [0, 6], sizes = [2, 1], strides = [1, 1]} : vector<2x10xf32> to vector<2x1xf32>
    %1525 = vector.broadcast %1524 : vector<2x1xf32> to vector<2x40xf32>
    %1526 = vector.broadcast %37 : vector<1x40xf32> to vector<2x40xf32>
    %1527 = arith.mulf %1525, %1526 : vector<2x40xf32>
    %1528 = vector.extract_strided_slice %1499 {offsets = [0, 7], sizes = [2, 1], strides = [1, 1]} : vector<2x10xf32> to vector<2x1xf32>
    %1529 = vector.broadcast %1528 : vector<2x1xf32> to vector<2x40xf32>
    %1530 = vector.broadcast %38 : vector<1x40xf32> to vector<2x40xf32>
    %1531 = arith.mulf %1529, %1530 : vector<2x40xf32>
    %1532 = vector.extract_strided_slice %1499 {offsets = [0, 8], sizes = [2, 1], strides = [1, 1]} : vector<2x10xf32> to vector<2x1xf32>
    %1533 = vector.broadcast %1532 : vector<2x1xf32> to vector<2x40xf32>
    %1534 = vector.broadcast %39 : vector<1x40xf32> to vector<2x40xf32>
    %1535 = arith.mulf %1533, %1534 : vector<2x40xf32>
    %1536 = vector.extract_strided_slice %1499 {offsets = [0, 9], sizes = [2, 1], strides = [1, 1]} : vector<2x10xf32> to vector<2x1xf32>
    %1537 = vector.broadcast %1536 : vector<2x1xf32> to vector<2x40xf32>
    %1538 = vector.broadcast %40 : vector<1x40xf32> to vector<2x40xf32>
    %1539 = arith.mulf %1537, %1538 : vector<2x40xf32>
    %1540 = arith.addf %1503, %1507 : vector<2x40xf32>
    %1541 = arith.addf %1511, %1515 : vector<2x40xf32>
    %1542 = arith.addf %1519, %1523 : vector<2x40xf32>
    %1543 = arith.addf %1527, %1531 : vector<2x40xf32>
    %1544 = arith.addf %1535, %1539 : vector<2x40xf32>
    %1545 = arith.addf %1540, %1541 : vector<2x40xf32>
    %1546 = arith.addf %1542, %1543 : vector<2x40xf32>
    %1547 = arith.addf %1545, %1546 : vector<2x40xf32>
    %1548 = arith.addf %1547, %1544 : vector<2x40xf32>
    %1549 = vector.broadcast %2 : vector<1x40xf32> to vector<2x40xf32>
    %1550 = arith.addf %1548, %1549 : vector<2x40xf32>
    %1551 = vector.extract_strided_slice %1425 {offsets = [0, 0], sizes = [2, 1], strides = [1, 1]} : vector<2x10xf32> to vector<2x1xf32>
    %1552 = vector.broadcast %1551 : vector<2x1xf32> to vector<2x40xf32>
    %1553 = vector.broadcast %21 : vector<1x40xf32> to vector<2x40xf32>
    %1554 = arith.mulf %1552, %1553 : vector<2x40xf32>
    %1555 = vector.extract_strided_slice %1425 {offsets = [0, 1], sizes = [2, 1], strides = [1, 1]} : vector<2x10xf32> to vector<2x1xf32>
    %1556 = vector.broadcast %1555 : vector<2x1xf32> to vector<2x40xf32>
    %1557 = vector.broadcast %22 : vector<1x40xf32> to vector<2x40xf32>
    %1558 = arith.mulf %1556, %1557 : vector<2x40xf32>
    %1559 = vector.extract_strided_slice %1425 {offsets = [0, 2], sizes = [2, 1], strides = [1, 1]} : vector<2x10xf32> to vector<2x1xf32>
    %1560 = vector.broadcast %1559 : vector<2x1xf32> to vector<2x40xf32>
    %1561 = vector.broadcast %23 : vector<1x40xf32> to vector<2x40xf32>
    %1562 = arith.mulf %1560, %1561 : vector<2x40xf32>
    %1563 = vector.extract_strided_slice %1425 {offsets = [0, 3], sizes = [2, 1], strides = [1, 1]} : vector<2x10xf32> to vector<2x1xf32>
    %1564 = vector.broadcast %1563 : vector<2x1xf32> to vector<2x40xf32>
    %1565 = vector.broadcast %24 : vector<1x40xf32> to vector<2x40xf32>
    %1566 = arith.mulf %1564, %1565 : vector<2x40xf32>
    %1567 = vector.extract_strided_slice %1425 {offsets = [0, 4], sizes = [2, 1], strides = [1, 1]} : vector<2x10xf32> to vector<2x1xf32>
    %1568 = vector.broadcast %1567 : vector<2x1xf32> to vector<2x40xf32>
    %1569 = vector.broadcast %25 : vector<1x40xf32> to vector<2x40xf32>
    %1570 = arith.mulf %1568, %1569 : vector<2x40xf32>
    %1571 = vector.extract_strided_slice %1425 {offsets = [0, 5], sizes = [2, 1], strides = [1, 1]} : vector<2x10xf32> to vector<2x1xf32>
    %1572 = vector.broadcast %1571 : vector<2x1xf32> to vector<2x40xf32>
    %1573 = vector.broadcast %26 : vector<1x40xf32> to vector<2x40xf32>
    %1574 = arith.mulf %1572, %1573 : vector<2x40xf32>
    %1575 = vector.extract_strided_slice %1425 {offsets = [0, 6], sizes = [2, 1], strides = [1, 1]} : vector<2x10xf32> to vector<2x1xf32>
    %1576 = vector.broadcast %1575 : vector<2x1xf32> to vector<2x40xf32>
    %1577 = vector.broadcast %27 : vector<1x40xf32> to vector<2x40xf32>
    %1578 = arith.mulf %1576, %1577 : vector<2x40xf32>
    %1579 = vector.extract_strided_slice %1425 {offsets = [0, 7], sizes = [2, 1], strides = [1, 1]} : vector<2x10xf32> to vector<2x1xf32>
    %1580 = vector.broadcast %1579 : vector<2x1xf32> to vector<2x40xf32>
    %1581 = vector.broadcast %28 : vector<1x40xf32> to vector<2x40xf32>
    %1582 = arith.mulf %1580, %1581 : vector<2x40xf32>
    %1583 = vector.extract_strided_slice %1425 {offsets = [0, 8], sizes = [2, 1], strides = [1, 1]} : vector<2x10xf32> to vector<2x1xf32>
    %1584 = vector.broadcast %1583 : vector<2x1xf32> to vector<2x40xf32>
    %1585 = vector.broadcast %29 : vector<1x40xf32> to vector<2x40xf32>
    %1586 = arith.mulf %1584, %1585 : vector<2x40xf32>
    %1587 = vector.extract_strided_slice %1425 {offsets = [0, 9], sizes = [2, 1], strides = [1, 1]} : vector<2x10xf32> to vector<2x1xf32>
    %1588 = vector.broadcast %1587 : vector<2x1xf32> to vector<2x40xf32>
    %1589 = vector.broadcast %30 : vector<1x40xf32> to vector<2x40xf32>
    %1590 = arith.mulf %1588, %1589 : vector<2x40xf32>
    %1591 = arith.addf %1554, %1558 : vector<2x40xf32>
    %1592 = arith.addf %1562, %1566 : vector<2x40xf32>
    %1593 = arith.addf %1570, %1574 : vector<2x40xf32>
    %1594 = arith.addf %1578, %1582 : vector<2x40xf32>
    %1595 = arith.addf %1586, %1590 : vector<2x40xf32>
    %1596 = arith.addf %1591, %1592 : vector<2x40xf32>
    %1597 = arith.addf %1593, %1594 : vector<2x40xf32>
    %1598 = arith.addf %1596, %1597 : vector<2x40xf32>
    %1599 = arith.addf %1598, %1595 : vector<2x40xf32>
    %1600 = arith.addf %1550, %1599 : vector<2x40xf32>
    %1601 = math.tanh %1600 : vector<2x40xf32>
    %1602 = vector.extract_strided_slice %1601 {offsets = [0, 0], sizes = [2, 10], strides = [1, 1]} : vector<2x40xf32> to vector<2x10xf32>
    %cst_112 = arith.constant 1.000000e+00 : f32
    %1603 = vector.broadcast %cst_112 : f32 to vector<2x10xf32>
    %1604 = arith.addf %1602, %1603 : vector<2x10xf32>
    %cst_113 = arith.constant 5.000000e-01 : f32
    %1605 = vector.broadcast %cst_113 : f32 to vector<2x10xf32>
    %1606 = arith.mulf %1605, %1604 : vector<2x10xf32>
    %1607 = vector.extract_strided_slice %1601 {offsets = [0, 10], sizes = [2, 10], strides = [1, 1]} : vector<2x40xf32> to vector<2x10xf32>
    %cst_114 = arith.constant 1.000000e+00 : f32
    %1608 = vector.broadcast %cst_114 : f32 to vector<2x10xf32>
    %1609 = arith.addf %1607, %1608 : vector<2x10xf32>
    %cst_115 = arith.constant 5.000000e-01 : f32
    %1610 = vector.broadcast %cst_115 : f32 to vector<2x10xf32>
    %1611 = arith.mulf %1610, %1609 : vector<2x10xf32>
    %1612 = vector.extract_strided_slice %1601 {offsets = [0, 20], sizes = [2, 10], strides = [1, 1]} : vector<2x40xf32> to vector<2x10xf32>
    %1613 = vector.extract_strided_slice %1601 {offsets = [0, 30], sizes = [2, 10], strides = [1, 1]} : vector<2x40xf32> to vector<2x10xf32>
    %cst_116 = arith.constant 1.000000e+00 : f32
    %1614 = vector.broadcast %cst_116 : f32 to vector<2x10xf32>
    %1615 = arith.addf %1613, %1614 : vector<2x10xf32>
    %cst_117 = arith.constant 5.000000e-01 : f32
    %1616 = vector.broadcast %cst_117 : f32 to vector<2x10xf32>
    %1617 = arith.mulf %1616, %1615 : vector<2x10xf32>
    %1618 = arith.mulf %1611, %1423 : vector<2x10xf32>
    %1619 = arith.mulf %1606, %1612 : vector<2x10xf32>
    %1620 = arith.addf %1618, %1619 : vector<2x10xf32>
    %1621 = math.tanh %1620 : vector<2x10xf32>
    %1622 = arith.mulf %1617, %1621 : vector<2x10xf32>
    %c14 = arith.constant 14 : index
    %c0_118 = arith.constant 0 : index
    %1623 = vector.load %arg5[%c14, %c0_118] : memref<32x10xf32, #tpu.memory_space<vmem>>, vector<2x10xf32>
    tpu.vector_store %arg5[%c14, %c0_118], %1622 {strides = array<i32>} : memref<32x10xf32, #tpu.memory_space<vmem>>, vector<2x10xf32>,
    %1624 = vector.extract_strided_slice %46 {offsets = [16, 0], sizes = [2, 40], strides = [1, 1]} : vector<32x40xf32> to vector<2x40xf32>
    %1625 = vector.extract_strided_slice %1499 {offsets = [0, 0], sizes = [2, 1], strides = [1, 1]} : vector<2x10xf32> to vector<2x1xf32>
    %1626 = vector.broadcast %1625 : vector<2x1xf32> to vector<2x40xf32>
    %1627 = vector.broadcast %11 : vector<1x40xf32> to vector<2x40xf32>
    %1628 = arith.mulf %1626, %1627 : vector<2x40xf32>
    %1629 = vector.extract_strided_slice %1499 {offsets = [0, 1], sizes = [2, 1], strides = [1, 1]} : vector<2x10xf32> to vector<2x1xf32>
    %1630 = vector.broadcast %1629 : vector<2x1xf32> to vector<2x40xf32>
    %1631 = vector.broadcast %12 : vector<1x40xf32> to vector<2x40xf32>
    %1632 = arith.mulf %1630, %1631 : vector<2x40xf32>
    %1633 = vector.extract_strided_slice %1499 {offsets = [0, 2], sizes = [2, 1], strides = [1, 1]} : vector<2x10xf32> to vector<2x1xf32>
    %1634 = vector.broadcast %1633 : vector<2x1xf32> to vector<2x40xf32>
    %1635 = vector.broadcast %13 : vector<1x40xf32> to vector<2x40xf32>
    %1636 = arith.mulf %1634, %1635 : vector<2x40xf32>
    %1637 = vector.extract_strided_slice %1499 {offsets = [0, 3], sizes = [2, 1], strides = [1, 1]} : vector<2x10xf32> to vector<2x1xf32>
    %1638 = vector.broadcast %1637 : vector<2x1xf32> to vector<2x40xf32>
    %1639 = vector.broadcast %14 : vector<1x40xf32> to vector<2x40xf32>
    %1640 = arith.mulf %1638, %1639 : vector<2x40xf32>
    %1641 = vector.extract_strided_slice %1499 {offsets = [0, 4], sizes = [2, 1], strides = [1, 1]} : vector<2x10xf32> to vector<2x1xf32>
    %1642 = vector.broadcast %1641 : vector<2x1xf32> to vector<2x40xf32>
    %1643 = vector.broadcast %15 : vector<1x40xf32> to vector<2x40xf32>
    %1644 = arith.mulf %1642, %1643 : vector<2x40xf32>
    %1645 = vector.extract_strided_slice %1499 {offsets = [0, 5], sizes = [2, 1], strides = [1, 1]} : vector<2x10xf32> to vector<2x1xf32>
    %1646 = vector.broadcast %1645 : vector<2x1xf32> to vector<2x40xf32>
    %1647 = vector.broadcast %16 : vector<1x40xf32> to vector<2x40xf32>
    %1648 = arith.mulf %1646, %1647 : vector<2x40xf32>
    %1649 = vector.extract_strided_slice %1499 {offsets = [0, 6], sizes = [2, 1], strides = [1, 1]} : vector<2x10xf32> to vector<2x1xf32>
    %1650 = vector.broadcast %1649 : vector<2x1xf32> to vector<2x40xf32>
    %1651 = vector.broadcast %17 : vector<1x40xf32> to vector<2x40xf32>
    %1652 = arith.mulf %1650, %1651 : vector<2x40xf32>
    %1653 = vector.extract_strided_slice %1499 {offsets = [0, 7], sizes = [2, 1], strides = [1, 1]} : vector<2x10xf32> to vector<2x1xf32>
    %1654 = vector.broadcast %1653 : vector<2x1xf32> to vector<2x40xf32>
    %1655 = vector.broadcast %18 : vector<1x40xf32> to vector<2x40xf32>
    %1656 = arith.mulf %1654, %1655 : vector<2x40xf32>
    %1657 = vector.extract_strided_slice %1499 {offsets = [0, 8], sizes = [2, 1], strides = [1, 1]} : vector<2x10xf32> to vector<2x1xf32>
    %1658 = vector.broadcast %1657 : vector<2x1xf32> to vector<2x40xf32>
    %1659 = vector.broadcast %19 : vector<1x40xf32> to vector<2x40xf32>
    %1660 = arith.mulf %1658, %1659 : vector<2x40xf32>
    %1661 = vector.extract_strided_slice %1499 {offsets = [0, 9], sizes = [2, 1], strides = [1, 1]} : vector<2x10xf32> to vector<2x1xf32>
    %1662 = vector.broadcast %1661 : vector<2x1xf32> to vector<2x40xf32>
    %1663 = vector.broadcast %20 : vector<1x40xf32> to vector<2x40xf32>
    %1664 = arith.mulf %1662, %1663 : vector<2x40xf32>
    %1665 = arith.addf %1628, %1632 : vector<2x40xf32>
    %1666 = arith.addf %1636, %1640 : vector<2x40xf32>
    %1667 = arith.addf %1644, %1648 : vector<2x40xf32>
    %1668 = arith.addf %1652, %1656 : vector<2x40xf32>
    %1669 = arith.addf %1660, %1664 : vector<2x40xf32>
    %1670 = arith.addf %1665, %1666 : vector<2x40xf32>
    %1671 = arith.addf %1667, %1668 : vector<2x40xf32>
    %1672 = arith.addf %1670, %1671 : vector<2x40xf32>
    %1673 = arith.addf %1672, %1669 : vector<2x40xf32>
    %1674 = arith.addf %1624, %1673 : vector<2x40xf32>
    %1675 = math.tanh %1674 : vector<2x40xf32>
    %1676 = vector.extract_strided_slice %1675 {offsets = [0, 0], sizes = [2, 10], strides = [1, 1]} : vector<2x40xf32> to vector<2x10xf32>
    %cst_119 = arith.constant 1.000000e+00 : f32
    %1677 = vector.broadcast %cst_119 : f32 to vector<2x10xf32>
    %1678 = arith.addf %1676, %1677 : vector<2x10xf32>
    %cst_120 = arith.constant 5.000000e-01 : f32
    %1679 = vector.broadcast %cst_120 : f32 to vector<2x10xf32>
    %1680 = arith.mulf %1679, %1678 : vector<2x10xf32>
    %1681 = vector.extract_strided_slice %1675 {offsets = [0, 10], sizes = [2, 10], strides = [1, 1]} : vector<2x40xf32> to vector<2x10xf32>
    %cst_121 = arith.constant 1.000000e+00 : f32
    %1682 = vector.broadcast %cst_121 : f32 to vector<2x10xf32>
    %1683 = arith.addf %1681, %1682 : vector<2x10xf32>
    %cst_122 = arith.constant 5.000000e-01 : f32
    %1684 = vector.broadcast %cst_122 : f32 to vector<2x10xf32>
    %1685 = arith.mulf %1684, %1683 : vector<2x10xf32>
    %1686 = vector.extract_strided_slice %1675 {offsets = [0, 20], sizes = [2, 10], strides = [1, 1]} : vector<2x40xf32> to vector<2x10xf32>
    %1687 = vector.extract_strided_slice %1675 {offsets = [0, 30], sizes = [2, 10], strides = [1, 1]} : vector<2x40xf32> to vector<2x10xf32>
    %cst_123 = arith.constant 1.000000e+00 : f32
    %1688 = vector.broadcast %cst_123 : f32 to vector<2x10xf32>
    %1689 = arith.addf %1687, %1688 : vector<2x10xf32>
    %cst_124 = arith.constant 5.000000e-01 : f32
    %1690 = vector.broadcast %cst_124 : f32 to vector<2x10xf32>
    %1691 = arith.mulf %1690, %1689 : vector<2x10xf32>
    %1692 = arith.mulf %1685, %1497 : vector<2x10xf32>
    %1693 = arith.mulf %1680, %1686 : vector<2x10xf32>
    %1694 = arith.addf %1692, %1693 : vector<2x10xf32>
    %1695 = math.tanh %1694 : vector<2x10xf32>
    %1696 = arith.mulf %1691, %1695 : vector<2x10xf32>
    %1697 = vector.extract_strided_slice %1696 {offsets = [0, 0], sizes = [2, 1], strides = [1, 1]} : vector<2x10xf32> to vector<2x1xf32>
    %1698 = vector.broadcast %1697 : vector<2x1xf32> to vector<2x40xf32>
    %1699 = vector.broadcast %31 : vector<1x40xf32> to vector<2x40xf32>
    %1700 = arith.mulf %1698, %1699 : vector<2x40xf32>
    %1701 = vector.extract_strided_slice %1696 {offsets = [0, 1], sizes = [2, 1], strides = [1, 1]} : vector<2x10xf32> to vector<2x1xf32>
    %1702 = vector.broadcast %1701 : vector<2x1xf32> to vector<2x40xf32>
    %1703 = vector.broadcast %32 : vector<1x40xf32> to vector<2x40xf32>
    %1704 = arith.mulf %1702, %1703 : vector<2x40xf32>
    %1705 = vector.extract_strided_slice %1696 {offsets = [0, 2], sizes = [2, 1], strides = [1, 1]} : vector<2x10xf32> to vector<2x1xf32>
    %1706 = vector.broadcast %1705 : vector<2x1xf32> to vector<2x40xf32>
    %1707 = vector.broadcast %33 : vector<1x40xf32> to vector<2x40xf32>
    %1708 = arith.mulf %1706, %1707 : vector<2x40xf32>
    %1709 = vector.extract_strided_slice %1696 {offsets = [0, 3], sizes = [2, 1], strides = [1, 1]} : vector<2x10xf32> to vector<2x1xf32>
    %1710 = vector.broadcast %1709 : vector<2x1xf32> to vector<2x40xf32>
    %1711 = vector.broadcast %34 : vector<1x40xf32> to vector<2x40xf32>
    %1712 = arith.mulf %1710, %1711 : vector<2x40xf32>
    %1713 = vector.extract_strided_slice %1696 {offsets = [0, 4], sizes = [2, 1], strides = [1, 1]} : vector<2x10xf32> to vector<2x1xf32>
    %1714 = vector.broadcast %1713 : vector<2x1xf32> to vector<2x40xf32>
    %1715 = vector.broadcast %35 : vector<1x40xf32> to vector<2x40xf32>
    %1716 = arith.mulf %1714, %1715 : vector<2x40xf32>
    %1717 = vector.extract_strided_slice %1696 {offsets = [0, 5], sizes = [2, 1], strides = [1, 1]} : vector<2x10xf32> to vector<2x1xf32>
    %1718 = vector.broadcast %1717 : vector<2x1xf32> to vector<2x40xf32>
    %1719 = vector.broadcast %36 : vector<1x40xf32> to vector<2x40xf32>
    %1720 = arith.mulf %1718, %1719 : vector<2x40xf32>
    %1721 = vector.extract_strided_slice %1696 {offsets = [0, 6], sizes = [2, 1], strides = [1, 1]} : vector<2x10xf32> to vector<2x1xf32>
    %1722 = vector.broadcast %1721 : vector<2x1xf32> to vector<2x40xf32>
    %1723 = vector.broadcast %37 : vector<1x40xf32> to vector<2x40xf32>
    %1724 = arith.mulf %1722, %1723 : vector<2x40xf32>
    %1725 = vector.extract_strided_slice %1696 {offsets = [0, 7], sizes = [2, 1], strides = [1, 1]} : vector<2x10xf32> to vector<2x1xf32>
    %1726 = vector.broadcast %1725 : vector<2x1xf32> to vector<2x40xf32>
    %1727 = vector.broadcast %38 : vector<1x40xf32> to vector<2x40xf32>
    %1728 = arith.mulf %1726, %1727 : vector<2x40xf32>
    %1729 = vector.extract_strided_slice %1696 {offsets = [0, 8], sizes = [2, 1], strides = [1, 1]} : vector<2x10xf32> to vector<2x1xf32>
    %1730 = vector.broadcast %1729 : vector<2x1xf32> to vector<2x40xf32>
    %1731 = vector.broadcast %39 : vector<1x40xf32> to vector<2x40xf32>
    %1732 = arith.mulf %1730, %1731 : vector<2x40xf32>
    %1733 = vector.extract_strided_slice %1696 {offsets = [0, 9], sizes = [2, 1], strides = [1, 1]} : vector<2x10xf32> to vector<2x1xf32>
    %1734 = vector.broadcast %1733 : vector<2x1xf32> to vector<2x40xf32>
    %1735 = vector.broadcast %40 : vector<1x40xf32> to vector<2x40xf32>
    %1736 = arith.mulf %1734, %1735 : vector<2x40xf32>
    %1737 = arith.addf %1700, %1704 : vector<2x40xf32>
    %1738 = arith.addf %1708, %1712 : vector<2x40xf32>
    %1739 = arith.addf %1716, %1720 : vector<2x40xf32>
    %1740 = arith.addf %1724, %1728 : vector<2x40xf32>
    %1741 = arith.addf %1732, %1736 : vector<2x40xf32>
    %1742 = arith.addf %1737, %1738 : vector<2x40xf32>
    %1743 = arith.addf %1739, %1740 : vector<2x40xf32>
    %1744 = arith.addf %1742, %1743 : vector<2x40xf32>
    %1745 = arith.addf %1744, %1741 : vector<2x40xf32>
    %1746 = vector.broadcast %2 : vector<1x40xf32> to vector<2x40xf32>
    %1747 = arith.addf %1745, %1746 : vector<2x40xf32>
    %1748 = vector.extract_strided_slice %1622 {offsets = [0, 0], sizes = [2, 1], strides = [1, 1]} : vector<2x10xf32> to vector<2x1xf32>
    %1749 = vector.broadcast %1748 : vector<2x1xf32> to vector<2x40xf32>
    %1750 = vector.broadcast %21 : vector<1x40xf32> to vector<2x40xf32>
    %1751 = arith.mulf %1749, %1750 : vector<2x40xf32>
    %1752 = vector.extract_strided_slice %1622 {offsets = [0, 1], sizes = [2, 1], strides = [1, 1]} : vector<2x10xf32> to vector<2x1xf32>
    %1753 = vector.broadcast %1752 : vector<2x1xf32> to vector<2x40xf32>
    %1754 = vector.broadcast %22 : vector<1x40xf32> to vector<2x40xf32>
    %1755 = arith.mulf %1753, %1754 : vector<2x40xf32>
    %1756 = vector.extract_strided_slice %1622 {offsets = [0, 2], sizes = [2, 1], strides = [1, 1]} : vector<2x10xf32> to vector<2x1xf32>
    %1757 = vector.broadcast %1756 : vector<2x1xf32> to vector<2x40xf32>
    %1758 = vector.broadcast %23 : vector<1x40xf32> to vector<2x40xf32>
    %1759 = arith.mulf %1757, %1758 : vector<2x40xf32>
    %1760 = vector.extract_strided_slice %1622 {offsets = [0, 3], sizes = [2, 1], strides = [1, 1]} : vector<2x10xf32> to vector<2x1xf32>
    %1761 = vector.broadcast %1760 : vector<2x1xf32> to vector<2x40xf32>
    %1762 = vector.broadcast %24 : vector<1x40xf32> to vector<2x40xf32>
    %1763 = arith.mulf %1761, %1762 : vector<2x40xf32>
    %1764 = vector.extract_strided_slice %1622 {offsets = [0, 4], sizes = [2, 1], strides = [1, 1]} : vector<2x10xf32> to vector<2x1xf32>
    %1765 = vector.broadcast %1764 : vector<2x1xf32> to vector<2x40xf32>
    %1766 = vector.broadcast %25 : vector<1x40xf32> to vector<2x40xf32>
    %1767 = arith.mulf %1765, %1766 : vector<2x40xf32>
    %1768 = vector.extract_strided_slice %1622 {offsets = [0, 5], sizes = [2, 1], strides = [1, 1]} : vector<2x10xf32> to vector<2x1xf32>
    %1769 = vector.broadcast %1768 : vector<2x1xf32> to vector<2x40xf32>
    %1770 = vector.broadcast %26 : vector<1x40xf32> to vector<2x40xf32>
    %1771 = arith.mulf %1769, %1770 : vector<2x40xf32>
    %1772 = vector.extract_strided_slice %1622 {offsets = [0, 6], sizes = [2, 1], strides = [1, 1]} : vector<2x10xf32> to vector<2x1xf32>
    %1773 = vector.broadcast %1772 : vector<2x1xf32> to vector<2x40xf32>
    %1774 = vector.broadcast %27 : vector<1x40xf32> to vector<2x40xf32>
    %1775 = arith.mulf %1773, %1774 : vector<2x40xf32>
    %1776 = vector.extract_strided_slice %1622 {offsets = [0, 7], sizes = [2, 1], strides = [1, 1]} : vector<2x10xf32> to vector<2x1xf32>
    %1777 = vector.broadcast %1776 : vector<2x1xf32> to vector<2x40xf32>
    %1778 = vector.broadcast %28 : vector<1x40xf32> to vector<2x40xf32>
    %1779 = arith.mulf %1777, %1778 : vector<2x40xf32>
    %1780 = vector.extract_strided_slice %1622 {offsets = [0, 8], sizes = [2, 1], strides = [1, 1]} : vector<2x10xf32> to vector<2x1xf32>
    %1781 = vector.broadcast %1780 : vector<2x1xf32> to vector<2x40xf32>
    %1782 = vector.broadcast %29 : vector<1x40xf32> to vector<2x40xf32>
    %1783 = arith.mulf %1781, %1782 : vector<2x40xf32>
    %1784 = vector.extract_strided_slice %1622 {offsets = [0, 9], sizes = [2, 1], strides = [1, 1]} : vector<2x10xf32> to vector<2x1xf32>
    %1785 = vector.broadcast %1784 : vector<2x1xf32> to vector<2x40xf32>
    %1786 = vector.broadcast %30 : vector<1x40xf32> to vector<2x40xf32>
    %1787 = arith.mulf %1785, %1786 : vector<2x40xf32>
    %1788 = arith.addf %1751, %1755 : vector<2x40xf32>
    %1789 = arith.addf %1759, %1763 : vector<2x40xf32>
    %1790 = arith.addf %1767, %1771 : vector<2x40xf32>
    %1791 = arith.addf %1775, %1779 : vector<2x40xf32>
    %1792 = arith.addf %1783, %1787 : vector<2x40xf32>
    %1793 = arith.addf %1788, %1789 : vector<2x40xf32>
    %1794 = arith.addf %1790, %1791 : vector<2x40xf32>
    %1795 = arith.addf %1793, %1794 : vector<2x40xf32>
    %1796 = arith.addf %1795, %1792 : vector<2x40xf32>
    %1797 = arith.addf %1747, %1796 : vector<2x40xf32>
    %1798 = math.tanh %1797 : vector<2x40xf32>
    %1799 = vector.extract_strided_slice %1798 {offsets = [0, 0], sizes = [2, 10], strides = [1, 1]} : vector<2x40xf32> to vector<2x10xf32>
    %cst_125 = arith.constant 1.000000e+00 : f32
    %1800 = vector.broadcast %cst_125 : f32 to vector<2x10xf32>
    %1801 = arith.addf %1799, %1800 : vector<2x10xf32>
    %cst_126 = arith.constant 5.000000e-01 : f32
    %1802 = vector.broadcast %cst_126 : f32 to vector<2x10xf32>
    %1803 = arith.mulf %1802, %1801 : vector<2x10xf32>
    %1804 = vector.extract_strided_slice %1798 {offsets = [0, 10], sizes = [2, 10], strides = [1, 1]} : vector<2x40xf32> to vector<2x10xf32>
    %cst_127 = arith.constant 1.000000e+00 : f32
    %1805 = vector.broadcast %cst_127 : f32 to vector<2x10xf32>
    %1806 = arith.addf %1804, %1805 : vector<2x10xf32>
    %cst_128 = arith.constant 5.000000e-01 : f32
    %1807 = vector.broadcast %cst_128 : f32 to vector<2x10xf32>
    %1808 = arith.mulf %1807, %1806 : vector<2x10xf32>
    %1809 = vector.extract_strided_slice %1798 {offsets = [0, 20], sizes = [2, 10], strides = [1, 1]} : vector<2x40xf32> to vector<2x10xf32>
    %1810 = vector.extract_strided_slice %1798 {offsets = [0, 30], sizes = [2, 10], strides = [1, 1]} : vector<2x40xf32> to vector<2x10xf32>
    %cst_129 = arith.constant 1.000000e+00 : f32
    %1811 = vector.broadcast %cst_129 : f32 to vector<2x10xf32>
    %1812 = arith.addf %1810, %1811 : vector<2x10xf32>
    %cst_130 = arith.constant 5.000000e-01 : f32
    %1813 = vector.broadcast %cst_130 : f32 to vector<2x10xf32>
    %1814 = arith.mulf %1813, %1812 : vector<2x10xf32>
    %1815 = arith.mulf %1808, %1620 : vector<2x10xf32>
    %1816 = arith.mulf %1803, %1809 : vector<2x10xf32>
    %1817 = arith.addf %1815, %1816 : vector<2x10xf32>
    %1818 = math.tanh %1817 : vector<2x10xf32>
    %1819 = arith.mulf %1814, %1818 : vector<2x10xf32>
    %c16 = arith.constant 16 : index
    %c0_131 = arith.constant 0 : index
    %1820 = vector.load %arg5[%c16, %c0_131] : memref<32x10xf32, #tpu.memory_space<vmem>>, vector<2x10xf32>
    tpu.vector_store %arg5[%c16, %c0_131], %1819 {strides = array<i32>} : memref<32x10xf32, #tpu.memory_space<vmem>>, vector<2x10xf32>,
    %1821 = vector.extract_strided_slice %46 {offsets = [18, 0], sizes = [2, 40], strides = [1, 1]} : vector<32x40xf32> to vector<2x40xf32>
    %1822 = vector.extract_strided_slice %1696 {offsets = [0, 0], sizes = [2, 1], strides = [1, 1]} : vector<2x10xf32> to vector<2x1xf32>
    %1823 = vector.broadcast %1822 : vector<2x1xf32> to vector<2x40xf32>
    %1824 = vector.broadcast %11 : vector<1x40xf32> to vector<2x40xf32>
    %1825 = arith.mulf %1823, %1824 : vector<2x40xf32>
    %1826 = vector.extract_strided_slice %1696 {offsets = [0, 1], sizes = [2, 1], strides = [1, 1]} : vector<2x10xf32> to vector<2x1xf32>
    %1827 = vector.broadcast %1826 : vector<2x1xf32> to vector<2x40xf32>
    %1828 = vector.broadcast %12 : vector<1x40xf32> to vector<2x40xf32>
    %1829 = arith.mulf %1827, %1828 : vector<2x40xf32>
    %1830 = vector.extract_strided_slice %1696 {offsets = [0, 2], sizes = [2, 1], strides = [1, 1]} : vector<2x10xf32> to vector<2x1xf32>
    %1831 = vector.broadcast %1830 : vector<2x1xf32> to vector<2x40xf32>
    %1832 = vector.broadcast %13 : vector<1x40xf32> to vector<2x40xf32>
    %1833 = arith.mulf %1831, %1832 : vector<2x40xf32>
    %1834 = vector.extract_strided_slice %1696 {offsets = [0, 3], sizes = [2, 1], strides = [1, 1]} : vector<2x10xf32> to vector<2x1xf32>
    %1835 = vector.broadcast %1834 : vector<2x1xf32> to vector<2x40xf32>
    %1836 = vector.broadcast %14 : vector<1x40xf32> to vector<2x40xf32>
    %1837 = arith.mulf %1835, %1836 : vector<2x40xf32>
    %1838 = vector.extract_strided_slice %1696 {offsets = [0, 4], sizes = [2, 1], strides = [1, 1]} : vector<2x10xf32> to vector<2x1xf32>
    %1839 = vector.broadcast %1838 : vector<2x1xf32> to vector<2x40xf32>
    %1840 = vector.broadcast %15 : vector<1x40xf32> to vector<2x40xf32>
    %1841 = arith.mulf %1839, %1840 : vector<2x40xf32>
    %1842 = vector.extract_strided_slice %1696 {offsets = [0, 5], sizes = [2, 1], strides = [1, 1]} : vector<2x10xf32> to vector<2x1xf32>
    %1843 = vector.broadcast %1842 : vector<2x1xf32> to vector<2x40xf32>
    %1844 = vector.broadcast %16 : vector<1x40xf32> to vector<2x40xf32>
    %1845 = arith.mulf %1843, %1844 : vector<2x40xf32>
    %1846 = vector.extract_strided_slice %1696 {offsets = [0, 6], sizes = [2, 1], strides = [1, 1]} : vector<2x10xf32> to vector<2x1xf32>
    %1847 = vector.broadcast %1846 : vector<2x1xf32> to vector<2x40xf32>
    %1848 = vector.broadcast %17 : vector<1x40xf32> to vector<2x40xf32>
    %1849 = arith.mulf %1847, %1848 : vector<2x40xf32>
    %1850 = vector.extract_strided_slice %1696 {offsets = [0, 7], sizes = [2, 1], strides = [1, 1]} : vector<2x10xf32> to vector<2x1xf32>
    %1851 = vector.broadcast %1850 : vector<2x1xf32> to vector<2x40xf32>
    %1852 = vector.broadcast %18 : vector<1x40xf32> to vector<2x40xf32>
    %1853 = arith.mulf %1851, %1852 : vector<2x40xf32>
    %1854 = vector.extract_strided_slice %1696 {offsets = [0, 8], sizes = [2, 1], strides = [1, 1]} : vector<2x10xf32> to vector<2x1xf32>
    %1855 = vector.broadcast %1854 : vector<2x1xf32> to vector<2x40xf32>
    %1856 = vector.broadcast %19 : vector<1x40xf32> to vector<2x40xf32>
    %1857 = arith.mulf %1855, %1856 : vector<2x40xf32>
    %1858 = vector.extract_strided_slice %1696 {offsets = [0, 9], sizes = [2, 1], strides = [1, 1]} : vector<2x10xf32> to vector<2x1xf32>
    %1859 = vector.broadcast %1858 : vector<2x1xf32> to vector<2x40xf32>
    %1860 = vector.broadcast %20 : vector<1x40xf32> to vector<2x40xf32>
    %1861 = arith.mulf %1859, %1860 : vector<2x40xf32>
    %1862 = arith.addf %1825, %1829 : vector<2x40xf32>
    %1863 = arith.addf %1833, %1837 : vector<2x40xf32>
    %1864 = arith.addf %1841, %1845 : vector<2x40xf32>
    %1865 = arith.addf %1849, %1853 : vector<2x40xf32>
    %1866 = arith.addf %1857, %1861 : vector<2x40xf32>
    %1867 = arith.addf %1862, %1863 : vector<2x40xf32>
    %1868 = arith.addf %1864, %1865 : vector<2x40xf32>
    %1869 = arith.addf %1867, %1868 : vector<2x40xf32>
    %1870 = arith.addf %1869, %1866 : vector<2x40xf32>
    %1871 = arith.addf %1821, %1870 : vector<2x40xf32>
    %1872 = math.tanh %1871 : vector<2x40xf32>
    %1873 = vector.extract_strided_slice %1872 {offsets = [0, 0], sizes = [2, 10], strides = [1, 1]} : vector<2x40xf32> to vector<2x10xf32>
    %cst_132 = arith.constant 1.000000e+00 : f32
    %1874 = vector.broadcast %cst_132 : f32 to vector<2x10xf32>
    %1875 = arith.addf %1873, %1874 : vector<2x10xf32>
    %cst_133 = arith.constant 5.000000e-01 : f32
    %1876 = vector.broadcast %cst_133 : f32 to vector<2x10xf32>
    %1877 = arith.mulf %1876, %1875 : vector<2x10xf32>
    %1878 = vector.extract_strided_slice %1872 {offsets = [0, 10], sizes = [2, 10], strides = [1, 1]} : vector<2x40xf32> to vector<2x10xf32>
    %cst_134 = arith.constant 1.000000e+00 : f32
    %1879 = vector.broadcast %cst_134 : f32 to vector<2x10xf32>
    %1880 = arith.addf %1878, %1879 : vector<2x10xf32>
    %cst_135 = arith.constant 5.000000e-01 : f32
    %1881 = vector.broadcast %cst_135 : f32 to vector<2x10xf32>
    %1882 = arith.mulf %1881, %1880 : vector<2x10xf32>
    %1883 = vector.extract_strided_slice %1872 {offsets = [0, 20], sizes = [2, 10], strides = [1, 1]} : vector<2x40xf32> to vector<2x10xf32>
    %1884 = vector.extract_strided_slice %1872 {offsets = [0, 30], sizes = [2, 10], strides = [1, 1]} : vector<2x40xf32> to vector<2x10xf32>
    %cst_136 = arith.constant 1.000000e+00 : f32
    %1885 = vector.broadcast %cst_136 : f32 to vector<2x10xf32>
    %1886 = arith.addf %1884, %1885 : vector<2x10xf32>
    %cst_137 = arith.constant 5.000000e-01 : f32
    %1887 = vector.broadcast %cst_137 : f32 to vector<2x10xf32>
    %1888 = arith.mulf %1887, %1886 : vector<2x10xf32>
    %1889 = arith.mulf %1882, %1694 : vector<2x10xf32>
    %1890 = arith.mulf %1877, %1883 : vector<2x10xf32>
    %1891 = arith.addf %1889, %1890 : vector<2x10xf32>
    %1892 = math.tanh %1891 : vector<2x10xf32>
    %1893 = arith.mulf %1888, %1892 : vector<2x10xf32>
    %1894 = vector.extract_strided_slice %1893 {offsets = [0, 0], sizes = [2, 1], strides = [1, 1]} : vector<2x10xf32> to vector<2x1xf32>
    %1895 = vector.broadcast %1894 : vector<2x1xf32> to vector<2x40xf32>
    %1896 = vector.broadcast %31 : vector<1x40xf32> to vector<2x40xf32>
    %1897 = arith.mulf %1895, %1896 : vector<2x40xf32>
    %1898 = vector.extract_strided_slice %1893 {offsets = [0, 1], sizes = [2, 1], strides = [1, 1]} : vector<2x10xf32> to vector<2x1xf32>
    %1899 = vector.broadcast %1898 : vector<2x1xf32> to vector<2x40xf32>
    %1900 = vector.broadcast %32 : vector<1x40xf32> to vector<2x40xf32>
    %1901 = arith.mulf %1899, %1900 : vector<2x40xf32>
    %1902 = vector.extract_strided_slice %1893 {offsets = [0, 2], sizes = [2, 1], strides = [1, 1]} : vector<2x10xf32> to vector<2x1xf32>
    %1903 = vector.broadcast %1902 : vector<2x1xf32> to vector<2x40xf32>
    %1904 = vector.broadcast %33 : vector<1x40xf32> to vector<2x40xf32>
    %1905 = arith.mulf %1903, %1904 : vector<2x40xf32>
    %1906 = vector.extract_strided_slice %1893 {offsets = [0, 3], sizes = [2, 1], strides = [1, 1]} : vector<2x10xf32> to vector<2x1xf32>
    %1907 = vector.broadcast %1906 : vector<2x1xf32> to vector<2x40xf32>
    %1908 = vector.broadcast %34 : vector<1x40xf32> to vector<2x40xf32>
    %1909 = arith.mulf %1907, %1908 : vector<2x40xf32>
    %1910 = vector.extract_strided_slice %1893 {offsets = [0, 4], sizes = [2, 1], strides = [1, 1]} : vector<2x10xf32> to vector<2x1xf32>
    %1911 = vector.broadcast %1910 : vector<2x1xf32> to vector<2x40xf32>
    %1912 = vector.broadcast %35 : vector<1x40xf32> to vector<2x40xf32>
    %1913 = arith.mulf %1911, %1912 : vector<2x40xf32>
    %1914 = vector.extract_strided_slice %1893 {offsets = [0, 5], sizes = [2, 1], strides = [1, 1]} : vector<2x10xf32> to vector<2x1xf32>
    %1915 = vector.broadcast %1914 : vector<2x1xf32> to vector<2x40xf32>
    %1916 = vector.broadcast %36 : vector<1x40xf32> to vector<2x40xf32>
    %1917 = arith.mulf %1915, %1916 : vector<2x40xf32>
    %1918 = vector.extract_strided_slice %1893 {offsets = [0, 6], sizes = [2, 1], strides = [1, 1]} : vector<2x10xf32> to vector<2x1xf32>
    %1919 = vector.broadcast %1918 : vector<2x1xf32> to vector<2x40xf32>
    %1920 = vector.broadcast %37 : vector<1x40xf32> to vector<2x40xf32>
    %1921 = arith.mulf %1919, %1920 : vector<2x40xf32>
    %1922 = vector.extract_strided_slice %1893 {offsets = [0, 7], sizes = [2, 1], strides = [1, 1]} : vector<2x10xf32> to vector<2x1xf32>
    %1923 = vector.broadcast %1922 : vector<2x1xf32> to vector<2x40xf32>
    %1924 = vector.broadcast %38 : vector<1x40xf32> to vector<2x40xf32>
    %1925 = arith.mulf %1923, %1924 : vector<2x40xf32>
    %1926 = vector.extract_strided_slice %1893 {offsets = [0, 8], sizes = [2, 1], strides = [1, 1]} : vector<2x10xf32> to vector<2x1xf32>
    %1927 = vector.broadcast %1926 : vector<2x1xf32> to vector<2x40xf32>
    %1928 = vector.broadcast %39 : vector<1x40xf32> to vector<2x40xf32>
    %1929 = arith.mulf %1927, %1928 : vector<2x40xf32>
    %1930 = vector.extract_strided_slice %1893 {offsets = [0, 9], sizes = [2, 1], strides = [1, 1]} : vector<2x10xf32> to vector<2x1xf32>
    %1931 = vector.broadcast %1930 : vector<2x1xf32> to vector<2x40xf32>
    %1932 = vector.broadcast %40 : vector<1x40xf32> to vector<2x40xf32>
    %1933 = arith.mulf %1931, %1932 : vector<2x40xf32>
    %1934 = arith.addf %1897, %1901 : vector<2x40xf32>
    %1935 = arith.addf %1905, %1909 : vector<2x40xf32>
    %1936 = arith.addf %1913, %1917 : vector<2x40xf32>
    %1937 = arith.addf %1921, %1925 : vector<2x40xf32>
    %1938 = arith.addf %1929, %1933 : vector<2x40xf32>
    %1939 = arith.addf %1934, %1935 : vector<2x40xf32>
    %1940 = arith.addf %1936, %1937 : vector<2x40xf32>
    %1941 = arith.addf %1939, %1940 : vector<2x40xf32>
    %1942 = arith.addf %1941, %1938 : vector<2x40xf32>
    %1943 = vector.broadcast %2 : vector<1x40xf32> to vector<2x40xf32>
    %1944 = arith.addf %1942, %1943 : vector<2x40xf32>
    %1945 = vector.extract_strided_slice %1819 {offsets = [0, 0], sizes = [2, 1], strides = [1, 1]} : vector<2x10xf32> to vector<2x1xf32>
    %1946 = vector.broadcast %1945 : vector<2x1xf32> to vector<2x40xf32>
    %1947 = vector.broadcast %21 : vector<1x40xf32> to vector<2x40xf32>
    %1948 = arith.mulf %1946, %1947 : vector<2x40xf32>
    %1949 = vector.extract_strided_slice %1819 {offsets = [0, 1], sizes = [2, 1], strides = [1, 1]} : vector<2x10xf32> to vector<2x1xf32>
    %1950 = vector.broadcast %1949 : vector<2x1xf32> to vector<2x40xf32>
    %1951 = vector.broadcast %22 : vector<1x40xf32> to vector<2x40xf32>
    %1952 = arith.mulf %1950, %1951 : vector<2x40xf32>
    %1953 = vector.extract_strided_slice %1819 {offsets = [0, 2], sizes = [2, 1], strides = [1, 1]} : vector<2x10xf32> to vector<2x1xf32>
    %1954 = vector.broadcast %1953 : vector<2x1xf32> to vector<2x40xf32>
    %1955 = vector.broadcast %23 : vector<1x40xf32> to vector<2x40xf32>
    %1956 = arith.mulf %1954, %1955 : vector<2x40xf32>
    %1957 = vector.extract_strided_slice %1819 {offsets = [0, 3], sizes = [2, 1], strides = [1, 1]} : vector<2x10xf32> to vector<2x1xf32>
    %1958 = vector.broadcast %1957 : vector<2x1xf32> to vector<2x40xf32>
    %1959 = vector.broadcast %24 : vector<1x40xf32> to vector<2x40xf32>
    %1960 = arith.mulf %1958, %1959 : vector<2x40xf32>
    %1961 = vector.extract_strided_slice %1819 {offsets = [0, 4], sizes = [2, 1], strides = [1, 1]} : vector<2x10xf32> to vector<2x1xf32>
    %1962 = vector.broadcast %1961 : vector<2x1xf32> to vector<2x40xf32>
    %1963 = vector.broadcast %25 : vector<1x40xf32> to vector<2x40xf32>
    %1964 = arith.mulf %1962, %1963 : vector<2x40xf32>
    %1965 = vector.extract_strided_slice %1819 {offsets = [0, 5], sizes = [2, 1], strides = [1, 1]} : vector<2x10xf32> to vector<2x1xf32>
    %1966 = vector.broadcast %1965 : vector<2x1xf32> to vector<2x40xf32>
    %1967 = vector.broadcast %26 : vector<1x40xf32> to vector<2x40xf32>
    %1968 = arith.mulf %1966, %1967 : vector<2x40xf32>
    %1969 = vector.extract_strided_slice %1819 {offsets = [0, 6], sizes = [2, 1], strides = [1, 1]} : vector<2x10xf32> to vector<2x1xf32>
    %1970 = vector.broadcast %1969 : vector<2x1xf32> to vector<2x40xf32>
    %1971 = vector.broadcast %27 : vector<1x40xf32> to vector<2x40xf32>
    %1972 = arith.mulf %1970, %1971 : vector<2x40xf32>
    %1973 = vector.extract_strided_slice %1819 {offsets = [0, 7], sizes = [2, 1], strides = [1, 1]} : vector<2x10xf32> to vector<2x1xf32>
    %1974 = vector.broadcast %1973 : vector<2x1xf32> to vector<2x40xf32>
    %1975 = vector.broadcast %28 : vector<1x40xf32> to vector<2x40xf32>
    %1976 = arith.mulf %1974, %1975 : vector<2x40xf32>
    %1977 = vector.extract_strided_slice %1819 {offsets = [0, 8], sizes = [2, 1], strides = [1, 1]} : vector<2x10xf32> to vector<2x1xf32>
    %1978 = vector.broadcast %1977 : vector<2x1xf32> to vector<2x40xf32>
    %1979 = vector.broadcast %29 : vector<1x40xf32> to vector<2x40xf32>
    %1980 = arith.mulf %1978, %1979 : vector<2x40xf32>
    %1981 = vector.extract_strided_slice %1819 {offsets = [0, 9], sizes = [2, 1], strides = [1, 1]} : vector<2x10xf32> to vector<2x1xf32>
    %1982 = vector.broadcast %1981 : vector<2x1xf32> to vector<2x40xf32>
    %1983 = vector.broadcast %30 : vector<1x40xf32> to vector<2x40xf32>
    %1984 = arith.mulf %1982, %1983 : vector<2x40xf32>
    %1985 = arith.addf %1948, %1952 : vector<2x40xf32>
    %1986 = arith.addf %1956, %1960 : vector<2x40xf32>
    %1987 = arith.addf %1964, %1968 : vector<2x40xf32>
    %1988 = arith.addf %1972, %1976 : vector<2x40xf32>
    %1989 = arith.addf %1980, %1984 : vector<2x40xf32>
    %1990 = arith.addf %1985, %1986 : vector<2x40xf32>
    %1991 = arith.addf %1987, %1988 : vector<2x40xf32>
    %1992 = arith.addf %1990, %1991 : vector<2x40xf32>
    %1993 = arith.addf %1992, %1989 : vector<2x40xf32>
    %1994 = arith.addf %1944, %1993 : vector<2x40xf32>
    %1995 = math.tanh %1994 : vector<2x40xf32>
    %1996 = vector.extract_strided_slice %1995 {offsets = [0, 0], sizes = [2, 10], strides = [1, 1]} : vector<2x40xf32> to vector<2x10xf32>
    %cst_138 = arith.constant 1.000000e+00 : f32
    %1997 = vector.broadcast %cst_138 : f32 to vector<2x10xf32>
    %1998 = arith.addf %1996, %1997 : vector<2x10xf32>
    %cst_139 = arith.constant 5.000000e-01 : f32
    %1999 = vector.broadcast %cst_139 : f32 to vector<2x10xf32>
    %2000 = arith.mulf %1999, %1998 : vector<2x10xf32>
    %2001 = vector.extract_strided_slice %1995 {offsets = [0, 10], sizes = [2, 10], strides = [1, 1]} : vector<2x40xf32> to vector<2x10xf32>
    %cst_140 = arith.constant 1.000000e+00 : f32
    %2002 = vector.broadcast %cst_140 : f32 to vector<2x10xf32>
    %2003 = arith.addf %2001, %2002 : vector<2x10xf32>
    %cst_141 = arith.constant 5.000000e-01 : f32
    %2004 = vector.broadcast %cst_141 : f32 to vector<2x10xf32>
    %2005 = arith.mulf %2004, %2003 : vector<2x10xf32>
    %2006 = vector.extract_strided_slice %1995 {offsets = [0, 20], sizes = [2, 10], strides = [1, 1]} : vector<2x40xf32> to vector<2x10xf32>
    %2007 = vector.extract_strided_slice %1995 {offsets = [0, 30], sizes = [2, 10], strides = [1, 1]} : vector<2x40xf32> to vector<2x10xf32>
    %cst_142 = arith.constant 1.000000e+00 : f32
    %2008 = vector.broadcast %cst_142 : f32 to vector<2x10xf32>
    %2009 = arith.addf %2007, %2008 : vector<2x10xf32>
    %cst_143 = arith.constant 5.000000e-01 : f32
    %2010 = vector.broadcast %cst_143 : f32 to vector<2x10xf32>
    %2011 = arith.mulf %2010, %2009 : vector<2x10xf32>
    %2012 = arith.mulf %2005, %1817 : vector<2x10xf32>
    %2013 = arith.mulf %2000, %2006 : vector<2x10xf32>
    %2014 = arith.addf %2012, %2013 : vector<2x10xf32>
    %2015 = math.tanh %2014 : vector<2x10xf32>
    %2016 = arith.mulf %2011, %2015 : vector<2x10xf32>
    %c18 = arith.constant 18 : index
    %c0_144 = arith.constant 0 : index
    %2017 = vector.load %arg5[%c18, %c0_144] : memref<32x10xf32, #tpu.memory_space<vmem>>, vector<2x10xf32>
    tpu.vector_store %arg5[%c18, %c0_144], %2016 {strides = array<i32>} : memref<32x10xf32, #tpu.memory_space<vmem>>, vector<2x10xf32>,
    %2018 = vector.extract_strided_slice %46 {offsets = [20, 0], sizes = [2, 40], strides = [1, 1]} : vector<32x40xf32> to vector<2x40xf32>
    %2019 = vector.extract_strided_slice %1893 {offsets = [0, 0], sizes = [2, 1], strides = [1, 1]} : vector<2x10xf32> to vector<2x1xf32>
    %2020 = vector.broadcast %2019 : vector<2x1xf32> to vector<2x40xf32>
    %2021 = vector.broadcast %11 : vector<1x40xf32> to vector<2x40xf32>
    %2022 = arith.mulf %2020, %2021 : vector<2x40xf32>
    %2023 = vector.extract_strided_slice %1893 {offsets = [0, 1], sizes = [2, 1], strides = [1, 1]} : vector<2x10xf32> to vector<2x1xf32>
    %2024 = vector.broadcast %2023 : vector<2x1xf32> to vector<2x40xf32>
    %2025 = vector.broadcast %12 : vector<1x40xf32> to vector<2x40xf32>
    %2026 = arith.mulf %2024, %2025 : vector<2x40xf32>
    %2027 = vector.extract_strided_slice %1893 {offsets = [0, 2], sizes = [2, 1], strides = [1, 1]} : vector<2x10xf32> to vector<2x1xf32>
    %2028 = vector.broadcast %2027 : vector<2x1xf32> to vector<2x40xf32>
    %2029 = vector.broadcast %13 : vector<1x40xf32> to vector<2x40xf32>
    %2030 = arith.mulf %2028, %2029 : vector<2x40xf32>
    %2031 = vector.extract_strided_slice %1893 {offsets = [0, 3], sizes = [2, 1], strides = [1, 1]} : vector<2x10xf32> to vector<2x1xf32>
    %2032 = vector.broadcast %2031 : vector<2x1xf32> to vector<2x40xf32>
    %2033 = vector.broadcast %14 : vector<1x40xf32> to vector<2x40xf32>
    %2034 = arith.mulf %2032, %2033 : vector<2x40xf32>
    %2035 = vector.extract_strided_slice %1893 {offsets = [0, 4], sizes = [2, 1], strides = [1, 1]} : vector<2x10xf32> to vector<2x1xf32>
    %2036 = vector.broadcast %2035 : vector<2x1xf32> to vector<2x40xf32>
    %2037 = vector.broadcast %15 : vector<1x40xf32> to vector<2x40xf32>
    %2038 = arith.mulf %2036, %2037 : vector<2x40xf32>
    %2039 = vector.extract_strided_slice %1893 {offsets = [0, 5], sizes = [2, 1], strides = [1, 1]} : vector<2x10xf32> to vector<2x1xf32>
    %2040 = vector.broadcast %2039 : vector<2x1xf32> to vector<2x40xf32>
    %2041 = vector.broadcast %16 : vector<1x40xf32> to vector<2x40xf32>
    %2042 = arith.mulf %2040, %2041 : vector<2x40xf32>
    %2043 = vector.extract_strided_slice %1893 {offsets = [0, 6], sizes = [2, 1], strides = [1, 1]} : vector<2x10xf32> to vector<2x1xf32>
    %2044 = vector.broadcast %2043 : vector<2x1xf32> to vector<2x40xf32>
    %2045 = vector.broadcast %17 : vector<1x40xf32> to vector<2x40xf32>
    %2046 = arith.mulf %2044, %2045 : vector<2x40xf32>
    %2047 = vector.extract_strided_slice %1893 {offsets = [0, 7], sizes = [2, 1], strides = [1, 1]} : vector<2x10xf32> to vector<2x1xf32>
    %2048 = vector.broadcast %2047 : vector<2x1xf32> to vector<2x40xf32>
    %2049 = vector.broadcast %18 : vector<1x40xf32> to vector<2x40xf32>
    %2050 = arith.mulf %2048, %2049 : vector<2x40xf32>
    %2051 = vector.extract_strided_slice %1893 {offsets = [0, 8], sizes = [2, 1], strides = [1, 1]} : vector<2x10xf32> to vector<2x1xf32>
    %2052 = vector.broadcast %2051 : vector<2x1xf32> to vector<2x40xf32>
    %2053 = vector.broadcast %19 : vector<1x40xf32> to vector<2x40xf32>
    %2054 = arith.mulf %2052, %2053 : vector<2x40xf32>
    %2055 = vector.extract_strided_slice %1893 {offsets = [0, 9], sizes = [2, 1], strides = [1, 1]} : vector<2x10xf32> to vector<2x1xf32>
    %2056 = vector.broadcast %2055 : vector<2x1xf32> to vector<2x40xf32>
    %2057 = vector.broadcast %20 : vector<1x40xf32> to vector<2x40xf32>
    %2058 = arith.mulf %2056, %2057 : vector<2x40xf32>
    %2059 = arith.addf %2022, %2026 : vector<2x40xf32>
    %2060 = arith.addf %2030, %2034 : vector<2x40xf32>
    %2061 = arith.addf %2038, %2042 : vector<2x40xf32>
    %2062 = arith.addf %2046, %2050 : vector<2x40xf32>
    %2063 = arith.addf %2054, %2058 : vector<2x40xf32>
    %2064 = arith.addf %2059, %2060 : vector<2x40xf32>
    %2065 = arith.addf %2061, %2062 : vector<2x40xf32>
    %2066 = arith.addf %2064, %2065 : vector<2x40xf32>
    %2067 = arith.addf %2066, %2063 : vector<2x40xf32>
    %2068 = arith.addf %2018, %2067 : vector<2x40xf32>
    %2069 = math.tanh %2068 : vector<2x40xf32>
    %2070 = vector.extract_strided_slice %2069 {offsets = [0, 0], sizes = [2, 10], strides = [1, 1]} : vector<2x40xf32> to vector<2x10xf32>
    %cst_145 = arith.constant 1.000000e+00 : f32
    %2071 = vector.broadcast %cst_145 : f32 to vector<2x10xf32>
    %2072 = arith.addf %2070, %2071 : vector<2x10xf32>
    %cst_146 = arith.constant 5.000000e-01 : f32
    %2073 = vector.broadcast %cst_146 : f32 to vector<2x10xf32>
    %2074 = arith.mulf %2073, %2072 : vector<2x10xf32>
    %2075 = vector.extract_strided_slice %2069 {offsets = [0, 10], sizes = [2, 10], strides = [1, 1]} : vector<2x40xf32> to vector<2x10xf32>
    %cst_147 = arith.constant 1.000000e+00 : f32
    %2076 = vector.broadcast %cst_147 : f32 to vector<2x10xf32>
    %2077 = arith.addf %2075, %2076 : vector<2x10xf32>
    %cst_148 = arith.constant 5.000000e-01 : f32
    %2078 = vector.broadcast %cst_148 : f32 to vector<2x10xf32>
    %2079 = arith.mulf %2078, %2077 : vector<2x10xf32>
    %2080 = vector.extract_strided_slice %2069 {offsets = [0, 20], sizes = [2, 10], strides = [1, 1]} : vector<2x40xf32> to vector<2x10xf32>
    %2081 = vector.extract_strided_slice %2069 {offsets = [0, 30], sizes = [2, 10], strides = [1, 1]} : vector<2x40xf32> to vector<2x10xf32>
    %cst_149 = arith.constant 1.000000e+00 : f32
    %2082 = vector.broadcast %cst_149 : f32 to vector<2x10xf32>
    %2083 = arith.addf %2081, %2082 : vector<2x10xf32>
    %cst_150 = arith.constant 5.000000e-01 : f32
    %2084 = vector.broadcast %cst_150 : f32 to vector<2x10xf32>
    %2085 = arith.mulf %2084, %2083 : vector<2x10xf32>
    %2086 = arith.mulf %2079, %1891 : vector<2x10xf32>
    %2087 = arith.mulf %2074, %2080 : vector<2x10xf32>
    %2088 = arith.addf %2086, %2087 : vector<2x10xf32>
    %2089 = math.tanh %2088 : vector<2x10xf32>
    %2090 = arith.mulf %2085, %2089 : vector<2x10xf32>
    %2091 = vector.extract_strided_slice %2090 {offsets = [0, 0], sizes = [2, 1], strides = [1, 1]} : vector<2x10xf32> to vector<2x1xf32>
    %2092 = vector.broadcast %2091 : vector<2x1xf32> to vector<2x40xf32>
    %2093 = vector.broadcast %31 : vector<1x40xf32> to vector<2x40xf32>
    %2094 = arith.mulf %2092, %2093 : vector<2x40xf32>
    %2095 = vector.extract_strided_slice %2090 {offsets = [0, 1], sizes = [2, 1], strides = [1, 1]} : vector<2x10xf32> to vector<2x1xf32>
    %2096 = vector.broadcast %2095 : vector<2x1xf32> to vector<2x40xf32>
    %2097 = vector.broadcast %32 : vector<1x40xf32> to vector<2x40xf32>
    %2098 = arith.mulf %2096, %2097 : vector<2x40xf32>
    %2099 = vector.extract_strided_slice %2090 {offsets = [0, 2], sizes = [2, 1], strides = [1, 1]} : vector<2x10xf32> to vector<2x1xf32>
    %2100 = vector.broadcast %2099 : vector<2x1xf32> to vector<2x40xf32>
    %2101 = vector.broadcast %33 : vector<1x40xf32> to vector<2x40xf32>
    %2102 = arith.mulf %2100, %2101 : vector<2x40xf32>
    %2103 = vector.extract_strided_slice %2090 {offsets = [0, 3], sizes = [2, 1], strides = [1, 1]} : vector<2x10xf32> to vector<2x1xf32>
    %2104 = vector.broadcast %2103 : vector<2x1xf32> to vector<2x40xf32>
    %2105 = vector.broadcast %34 : vector<1x40xf32> to vector<2x40xf32>
    %2106 = arith.mulf %2104, %2105 : vector<2x40xf32>
    %2107 = vector.extract_strided_slice %2090 {offsets = [0, 4], sizes = [2, 1], strides = [1, 1]} : vector<2x10xf32> to vector<2x1xf32>
    %2108 = vector.broadcast %2107 : vector<2x1xf32> to vector<2x40xf32>
    %2109 = vector.broadcast %35 : vector<1x40xf32> to vector<2x40xf32>
    %2110 = arith.mulf %2108, %2109 : vector<2x40xf32>
    %2111 = vector.extract_strided_slice %2090 {offsets = [0, 5], sizes = [2, 1], strides = [1, 1]} : vector<2x10xf32> to vector<2x1xf32>
    %2112 = vector.broadcast %2111 : vector<2x1xf32> to vector<2x40xf32>
    %2113 = vector.broadcast %36 : vector<1x40xf32> to vector<2x40xf32>
    %2114 = arith.mulf %2112, %2113 : vector<2x40xf32>
    %2115 = vector.extract_strided_slice %2090 {offsets = [0, 6], sizes = [2, 1], strides = [1, 1]} : vector<2x10xf32> to vector<2x1xf32>
    %2116 = vector.broadcast %2115 : vector<2x1xf32> to vector<2x40xf32>
    %2117 = vector.broadcast %37 : vector<1x40xf32> to vector<2x40xf32>
    %2118 = arith.mulf %2116, %2117 : vector<2x40xf32>
    %2119 = vector.extract_strided_slice %2090 {offsets = [0, 7], sizes = [2, 1], strides = [1, 1]} : vector<2x10xf32> to vector<2x1xf32>
    %2120 = vector.broadcast %2119 : vector<2x1xf32> to vector<2x40xf32>
    %2121 = vector.broadcast %38 : vector<1x40xf32> to vector<2x40xf32>
    %2122 = arith.mulf %2120, %2121 : vector<2x40xf32>
    %2123 = vector.extract_strided_slice %2090 {offsets = [0, 8], sizes = [2, 1], strides = [1, 1]} : vector<2x10xf32> to vector<2x1xf32>
    %2124 = vector.broadcast %2123 : vector<2x1xf32> to vector<2x40xf32>
    %2125 = vector.broadcast %39 : vector<1x40xf32> to vector<2x40xf32>
    %2126 = arith.mulf %2124, %2125 : vector<2x40xf32>
    %2127 = vector.extract_strided_slice %2090 {offsets = [0, 9], sizes = [2, 1], strides = [1, 1]} : vector<2x10xf32> to vector<2x1xf32>
    %2128 = vector.broadcast %2127 : vector<2x1xf32> to vector<2x40xf32>
    %2129 = vector.broadcast %40 : vector<1x40xf32> to vector<2x40xf32>
    %2130 = arith.mulf %2128, %2129 : vector<2x40xf32>
    %2131 = arith.addf %2094, %2098 : vector<2x40xf32>
    %2132 = arith.addf %2102, %2106 : vector<2x40xf32>
    %2133 = arith.addf %2110, %2114 : vector<2x40xf32>
    %2134 = arith.addf %2118, %2122 : vector<2x40xf32>
    %2135 = arith.addf %2126, %2130 : vector<2x40xf32>
    %2136 = arith.addf %2131, %2132 : vector<2x40xf32>
    %2137 = arith.addf %2133, %2134 : vector<2x40xf32>
    %2138 = arith.addf %2136, %2137 : vector<2x40xf32>
    %2139 = arith.addf %2138, %2135 : vector<2x40xf32>
    %2140 = vector.broadcast %2 : vector<1x40xf32> to vector<2x40xf32>
    %2141 = arith.addf %2139, %2140 : vector<2x40xf32>
    %2142 = vector.extract_strided_slice %2016 {offsets = [0, 0], sizes = [2, 1], strides = [1, 1]} : vector<2x10xf32> to vector<2x1xf32>
    %2143 = vector.broadcast %2142 : vector<2x1xf32> to vector<2x40xf32>
    %2144 = vector.broadcast %21 : vector<1x40xf32> to vector<2x40xf32>
    %2145 = arith.mulf %2143, %2144 : vector<2x40xf32>
    %2146 = vector.extract_strided_slice %2016 {offsets = [0, 1], sizes = [2, 1], strides = [1, 1]} : vector<2x10xf32> to vector<2x1xf32>
    %2147 = vector.broadcast %2146 : vector<2x1xf32> to vector<2x40xf32>
    %2148 = vector.broadcast %22 : vector<1x40xf32> to vector<2x40xf32>
    %2149 = arith.mulf %2147, %2148 : vector<2x40xf32>
    %2150 = vector.extract_strided_slice %2016 {offsets = [0, 2], sizes = [2, 1], strides = [1, 1]} : vector<2x10xf32> to vector<2x1xf32>
    %2151 = vector.broadcast %2150 : vector<2x1xf32> to vector<2x40xf32>
    %2152 = vector.broadcast %23 : vector<1x40xf32> to vector<2x40xf32>
    %2153 = arith.mulf %2151, %2152 : vector<2x40xf32>
    %2154 = vector.extract_strided_slice %2016 {offsets = [0, 3], sizes = [2, 1], strides = [1, 1]} : vector<2x10xf32> to vector<2x1xf32>
    %2155 = vector.broadcast %2154 : vector<2x1xf32> to vector<2x40xf32>
    %2156 = vector.broadcast %24 : vector<1x40xf32> to vector<2x40xf32>
    %2157 = arith.mulf %2155, %2156 : vector<2x40xf32>
    %2158 = vector.extract_strided_slice %2016 {offsets = [0, 4], sizes = [2, 1], strides = [1, 1]} : vector<2x10xf32> to vector<2x1xf32>
    %2159 = vector.broadcast %2158 : vector<2x1xf32> to vector<2x40xf32>
    %2160 = vector.broadcast %25 : vector<1x40xf32> to vector<2x40xf32>
    %2161 = arith.mulf %2159, %2160 : vector<2x40xf32>
    %2162 = vector.extract_strided_slice %2016 {offsets = [0, 5], sizes = [2, 1], strides = [1, 1]} : vector<2x10xf32> to vector<2x1xf32>
    %2163 = vector.broadcast %2162 : vector<2x1xf32> to vector<2x40xf32>
    %2164 = vector.broadcast %26 : vector<1x40xf32> to vector<2x40xf32>
    %2165 = arith.mulf %2163, %2164 : vector<2x40xf32>
    %2166 = vector.extract_strided_slice %2016 {offsets = [0, 6], sizes = [2, 1], strides = [1, 1]} : vector<2x10xf32> to vector<2x1xf32>
    %2167 = vector.broadcast %2166 : vector<2x1xf32> to vector<2x40xf32>
    %2168 = vector.broadcast %27 : vector<1x40xf32> to vector<2x40xf32>
    %2169 = arith.mulf %2167, %2168 : vector<2x40xf32>
    %2170 = vector.extract_strided_slice %2016 {offsets = [0, 7], sizes = [2, 1], strides = [1, 1]} : vector<2x10xf32> to vector<2x1xf32>
    %2171 = vector.broadcast %2170 : vector<2x1xf32> to vector<2x40xf32>
    %2172 = vector.broadcast %28 : vector<1x40xf32> to vector<2x40xf32>
    %2173 = arith.mulf %2171, %2172 : vector<2x40xf32>
    %2174 = vector.extract_strided_slice %2016 {offsets = [0, 8], sizes = [2, 1], strides = [1, 1]} : vector<2x10xf32> to vector<2x1xf32>
    %2175 = vector.broadcast %2174 : vector<2x1xf32> to vector<2x40xf32>
    %2176 = vector.broadcast %29 : vector<1x40xf32> to vector<2x40xf32>
    %2177 = arith.mulf %2175, %2176 : vector<2x40xf32>
    %2178 = vector.extract_strided_slice %2016 {offsets = [0, 9], sizes = [2, 1], strides = [1, 1]} : vector<2x10xf32> to vector<2x1xf32>
    %2179 = vector.broadcast %2178 : vector<2x1xf32> to vector<2x40xf32>
    %2180 = vector.broadcast %30 : vector<1x40xf32> to vector<2x40xf32>
    %2181 = arith.mulf %2179, %2180 : vector<2x40xf32>
    %2182 = arith.addf %2145, %2149 : vector<2x40xf32>
    %2183 = arith.addf %2153, %2157 : vector<2x40xf32>
    %2184 = arith.addf %2161, %2165 : vector<2x40xf32>
    %2185 = arith.addf %2169, %2173 : vector<2x40xf32>
    %2186 = arith.addf %2177, %2181 : vector<2x40xf32>
    %2187 = arith.addf %2182, %2183 : vector<2x40xf32>
    %2188 = arith.addf %2184, %2185 : vector<2x40xf32>
    %2189 = arith.addf %2187, %2188 : vector<2x40xf32>
    %2190 = arith.addf %2189, %2186 : vector<2x40xf32>
    %2191 = arith.addf %2141, %2190 : vector<2x40xf32>
    %2192 = math.tanh %2191 : vector<2x40xf32>
    %2193 = vector.extract_strided_slice %2192 {offsets = [0, 0], sizes = [2, 10], strides = [1, 1]} : vector<2x40xf32> to vector<2x10xf32>
    %cst_151 = arith.constant 1.000000e+00 : f32
    %2194 = vector.broadcast %cst_151 : f32 to vector<2x10xf32>
    %2195 = arith.addf %2193, %2194 : vector<2x10xf32>
    %cst_152 = arith.constant 5.000000e-01 : f32
    %2196 = vector.broadcast %cst_152 : f32 to vector<2x10xf32>
    %2197 = arith.mulf %2196, %2195 : vector<2x10xf32>
    %2198 = vector.extract_strided_slice %2192 {offsets = [0, 10], sizes = [2, 10], strides = [1, 1]} : vector<2x40xf32> to vector<2x10xf32>
    %cst_153 = arith.constant 1.000000e+00 : f32
    %2199 = vector.broadcast %cst_153 : f32 to vector<2x10xf32>
    %2200 = arith.addf %2198, %2199 : vector<2x10xf32>
    %cst_154 = arith.constant 5.000000e-01 : f32
    %2201 = vector.broadcast %cst_154 : f32 to vector<2x10xf32>
    %2202 = arith.mulf %2201, %2200 : vector<2x10xf32>
    %2203 = vector.extract_strided_slice %2192 {offsets = [0, 20], sizes = [2, 10], strides = [1, 1]} : vector<2x40xf32> to vector<2x10xf32>
    %2204 = vector.extract_strided_slice %2192 {offsets = [0, 30], sizes = [2, 10], strides = [1, 1]} : vector<2x40xf32> to vector<2x10xf32>
    %cst_155 = arith.constant 1.000000e+00 : f32
    %2205 = vector.broadcast %cst_155 : f32 to vector<2x10xf32>
    %2206 = arith.addf %2204, %2205 : vector<2x10xf32>
    %cst_156 = arith.constant 5.000000e-01 : f32
    %2207 = vector.broadcast %cst_156 : f32 to vector<2x10xf32>
    %2208 = arith.mulf %2207, %2206 : vector<2x10xf32>
    %2209 = arith.mulf %2202, %2014 : vector<2x10xf32>
    %2210 = arith.mulf %2197, %2203 : vector<2x10xf32>
    %2211 = arith.addf %2209, %2210 : vector<2x10xf32>
    %2212 = math.tanh %2211 : vector<2x10xf32>
    %2213 = arith.mulf %2208, %2212 : vector<2x10xf32>
    %c20 = arith.constant 20 : index
    %c0_157 = arith.constant 0 : index
    %2214 = vector.load %arg5[%c20, %c0_157] : memref<32x10xf32, #tpu.memory_space<vmem>>, vector<2x10xf32>
    tpu.vector_store %arg5[%c20, %c0_157], %2213 {strides = array<i32>} : memref<32x10xf32, #tpu.memory_space<vmem>>, vector<2x10xf32>,
    %2215 = vector.extract_strided_slice %46 {offsets = [22, 0], sizes = [2, 40], strides = [1, 1]} : vector<32x40xf32> to vector<2x40xf32>
    %2216 = vector.extract_strided_slice %2090 {offsets = [0, 0], sizes = [2, 1], strides = [1, 1]} : vector<2x10xf32> to vector<2x1xf32>
    %2217 = vector.broadcast %2216 : vector<2x1xf32> to vector<2x40xf32>
    %2218 = vector.broadcast %11 : vector<1x40xf32> to vector<2x40xf32>
    %2219 = arith.mulf %2217, %2218 : vector<2x40xf32>
    %2220 = vector.extract_strided_slice %2090 {offsets = [0, 1], sizes = [2, 1], strides = [1, 1]} : vector<2x10xf32> to vector<2x1xf32>
    %2221 = vector.broadcast %2220 : vector<2x1xf32> to vector<2x40xf32>
    %2222 = vector.broadcast %12 : vector<1x40xf32> to vector<2x40xf32>
    %2223 = arith.mulf %2221, %2222 : vector<2x40xf32>
    %2224 = vector.extract_strided_slice %2090 {offsets = [0, 2], sizes = [2, 1], strides = [1, 1]} : vector<2x10xf32> to vector<2x1xf32>
    %2225 = vector.broadcast %2224 : vector<2x1xf32> to vector<2x40xf32>
    %2226 = vector.broadcast %13 : vector<1x40xf32> to vector<2x40xf32>
    %2227 = arith.mulf %2225, %2226 : vector<2x40xf32>
    %2228 = vector.extract_strided_slice %2090 {offsets = [0, 3], sizes = [2, 1], strides = [1, 1]} : vector<2x10xf32> to vector<2x1xf32>
    %2229 = vector.broadcast %2228 : vector<2x1xf32> to vector<2x40xf32>
    %2230 = vector.broadcast %14 : vector<1x40xf32> to vector<2x40xf32>
    %2231 = arith.mulf %2229, %2230 : vector<2x40xf32>
    %2232 = vector.extract_strided_slice %2090 {offsets = [0, 4], sizes = [2, 1], strides = [1, 1]} : vector<2x10xf32> to vector<2x1xf32>
    %2233 = vector.broadcast %2232 : vector<2x1xf32> to vector<2x40xf32>
    %2234 = vector.broadcast %15 : vector<1x40xf32> to vector<2x40xf32>
    %2235 = arith.mulf %2233, %2234 : vector<2x40xf32>
    %2236 = vector.extract_strided_slice %2090 {offsets = [0, 5], sizes = [2, 1], strides = [1, 1]} : vector<2x10xf32> to vector<2x1xf32>
    %2237 = vector.broadcast %2236 : vector<2x1xf32> to vector<2x40xf32>
    %2238 = vector.broadcast %16 : vector<1x40xf32> to vector<2x40xf32>
    %2239 = arith.mulf %2237, %2238 : vector<2x40xf32>
    %2240 = vector.extract_strided_slice %2090 {offsets = [0, 6], sizes = [2, 1], strides = [1, 1]} : vector<2x10xf32> to vector<2x1xf32>
    %2241 = vector.broadcast %2240 : vector<2x1xf32> to vector<2x40xf32>
    %2242 = vector.broadcast %17 : vector<1x40xf32> to vector<2x40xf32>
    %2243 = arith.mulf %2241, %2242 : vector<2x40xf32>
    %2244 = vector.extract_strided_slice %2090 {offsets = [0, 7], sizes = [2, 1], strides = [1, 1]} : vector<2x10xf32> to vector<2x1xf32>
    %2245 = vector.broadcast %2244 : vector<2x1xf32> to vector<2x40xf32>
    %2246 = vector.broadcast %18 : vector<1x40xf32> to vector<2x40xf32>
    %2247 = arith.mulf %2245, %2246 : vector<2x40xf32>
    %2248 = vector.extract_strided_slice %2090 {offsets = [0, 8], sizes = [2, 1], strides = [1, 1]} : vector<2x10xf32> to vector<2x1xf32>
    %2249 = vector.broadcast %2248 : vector<2x1xf32> to vector<2x40xf32>
    %2250 = vector.broadcast %19 : vector<1x40xf32> to vector<2x40xf32>
    %2251 = arith.mulf %2249, %2250 : vector<2x40xf32>
    %2252 = vector.extract_strided_slice %2090 {offsets = [0, 9], sizes = [2, 1], strides = [1, 1]} : vector<2x10xf32> to vector<2x1xf32>
    %2253 = vector.broadcast %2252 : vector<2x1xf32> to vector<2x40xf32>
    %2254 = vector.broadcast %20 : vector<1x40xf32> to vector<2x40xf32>
    %2255 = arith.mulf %2253, %2254 : vector<2x40xf32>
    %2256 = arith.addf %2219, %2223 : vector<2x40xf32>
    %2257 = arith.addf %2227, %2231 : vector<2x40xf32>
    %2258 = arith.addf %2235, %2239 : vector<2x40xf32>
    %2259 = arith.addf %2243, %2247 : vector<2x40xf32>
    %2260 = arith.addf %2251, %2255 : vector<2x40xf32>
    %2261 = arith.addf %2256, %2257 : vector<2x40xf32>
    %2262 = arith.addf %2258, %2259 : vector<2x40xf32>
    %2263 = arith.addf %2261, %2262 : vector<2x40xf32>
    %2264 = arith.addf %2263, %2260 : vector<2x40xf32>
    %2265 = arith.addf %2215, %2264 : vector<2x40xf32>
    %2266 = math.tanh %2265 : vector<2x40xf32>
    %2267 = vector.extract_strided_slice %2266 {offsets = [0, 0], sizes = [2, 10], strides = [1, 1]} : vector<2x40xf32> to vector<2x10xf32>
    %cst_158 = arith.constant 1.000000e+00 : f32
    %2268 = vector.broadcast %cst_158 : f32 to vector<2x10xf32>
    %2269 = arith.addf %2267, %2268 : vector<2x10xf32>
    %cst_159 = arith.constant 5.000000e-01 : f32
    %2270 = vector.broadcast %cst_159 : f32 to vector<2x10xf32>
    %2271 = arith.mulf %2270, %2269 : vector<2x10xf32>
    %2272 = vector.extract_strided_slice %2266 {offsets = [0, 10], sizes = [2, 10], strides = [1, 1]} : vector<2x40xf32> to vector<2x10xf32>
    %cst_160 = arith.constant 1.000000e+00 : f32
    %2273 = vector.broadcast %cst_160 : f32 to vector<2x10xf32>
    %2274 = arith.addf %2272, %2273 : vector<2x10xf32>
    %cst_161 = arith.constant 5.000000e-01 : f32
    %2275 = vector.broadcast %cst_161 : f32 to vector<2x10xf32>
    %2276 = arith.mulf %2275, %2274 : vector<2x10xf32>
    %2277 = vector.extract_strided_slice %2266 {offsets = [0, 20], sizes = [2, 10], strides = [1, 1]} : vector<2x40xf32> to vector<2x10xf32>
    %2278 = vector.extract_strided_slice %2266 {offsets = [0, 30], sizes = [2, 10], strides = [1, 1]} : vector<2x40xf32> to vector<2x10xf32>
    %cst_162 = arith.constant 1.000000e+00 : f32
    %2279 = vector.broadcast %cst_162 : f32 to vector<2x10xf32>
    %2280 = arith.addf %2278, %2279 : vector<2x10xf32>
    %cst_163 = arith.constant 5.000000e-01 : f32
    %2281 = vector.broadcast %cst_163 : f32 to vector<2x10xf32>
    %2282 = arith.mulf %2281, %2280 : vector<2x10xf32>
    %2283 = arith.mulf %2276, %2088 : vector<2x10xf32>
    %2284 = arith.mulf %2271, %2277 : vector<2x10xf32>
    %2285 = arith.addf %2283, %2284 : vector<2x10xf32>
    %2286 = math.tanh %2285 : vector<2x10xf32>
    %2287 = arith.mulf %2282, %2286 : vector<2x10xf32>
    %2288 = vector.extract_strided_slice %2287 {offsets = [0, 0], sizes = [2, 1], strides = [1, 1]} : vector<2x10xf32> to vector<2x1xf32>
    %2289 = vector.broadcast %2288 : vector<2x1xf32> to vector<2x40xf32>
    %2290 = vector.broadcast %31 : vector<1x40xf32> to vector<2x40xf32>
    %2291 = arith.mulf %2289, %2290 : vector<2x40xf32>
    %2292 = vector.extract_strided_slice %2287 {offsets = [0, 1], sizes = [2, 1], strides = [1, 1]} : vector<2x10xf32> to vector<2x1xf32>
    %2293 = vector.broadcast %2292 : vector<2x1xf32> to vector<2x40xf32>
    %2294 = vector.broadcast %32 : vector<1x40xf32> to vector<2x40xf32>
    %2295 = arith.mulf %2293, %2294 : vector<2x40xf32>
    %2296 = vector.extract_strided_slice %2287 {offsets = [0, 2], sizes = [2, 1], strides = [1, 1]} : vector<2x10xf32> to vector<2x1xf32>
    %2297 = vector.broadcast %2296 : vector<2x1xf32> to vector<2x40xf32>
    %2298 = vector.broadcast %33 : vector<1x40xf32> to vector<2x40xf32>
    %2299 = arith.mulf %2297, %2298 : vector<2x40xf32>
    %2300 = vector.extract_strided_slice %2287 {offsets = [0, 3], sizes = [2, 1], strides = [1, 1]} : vector<2x10xf32> to vector<2x1xf32>
    %2301 = vector.broadcast %2300 : vector<2x1xf32> to vector<2x40xf32>
    %2302 = vector.broadcast %34 : vector<1x40xf32> to vector<2x40xf32>
    %2303 = arith.mulf %2301, %2302 : vector<2x40xf32>
    %2304 = vector.extract_strided_slice %2287 {offsets = [0, 4], sizes = [2, 1], strides = [1, 1]} : vector<2x10xf32> to vector<2x1xf32>
    %2305 = vector.broadcast %2304 : vector<2x1xf32> to vector<2x40xf32>
    %2306 = vector.broadcast %35 : vector<1x40xf32> to vector<2x40xf32>
    %2307 = arith.mulf %2305, %2306 : vector<2x40xf32>
    %2308 = vector.extract_strided_slice %2287 {offsets = [0, 5], sizes = [2, 1], strides = [1, 1]} : vector<2x10xf32> to vector<2x1xf32>
    %2309 = vector.broadcast %2308 : vector<2x1xf32> to vector<2x40xf32>
    %2310 = vector.broadcast %36 : vector<1x40xf32> to vector<2x40xf32>
    %2311 = arith.mulf %2309, %2310 : vector<2x40xf32>
    %2312 = vector.extract_strided_slice %2287 {offsets = [0, 6], sizes = [2, 1], strides = [1, 1]} : vector<2x10xf32> to vector<2x1xf32>
    %2313 = vector.broadcast %2312 : vector<2x1xf32> to vector<2x40xf32>
    %2314 = vector.broadcast %37 : vector<1x40xf32> to vector<2x40xf32>
    %2315 = arith.mulf %2313, %2314 : vector<2x40xf32>
    %2316 = vector.extract_strided_slice %2287 {offsets = [0, 7], sizes = [2, 1], strides = [1, 1]} : vector<2x10xf32> to vector<2x1xf32>
    %2317 = vector.broadcast %2316 : vector<2x1xf32> to vector<2x40xf32>
    %2318 = vector.broadcast %38 : vector<1x40xf32> to vector<2x40xf32>
    %2319 = arith.mulf %2317, %2318 : vector<2x40xf32>
    %2320 = vector.extract_strided_slice %2287 {offsets = [0, 8], sizes = [2, 1], strides = [1, 1]} : vector<2x10xf32> to vector<2x1xf32>
    %2321 = vector.broadcast %2320 : vector<2x1xf32> to vector<2x40xf32>
    %2322 = vector.broadcast %39 : vector<1x40xf32> to vector<2x40xf32>
    %2323 = arith.mulf %2321, %2322 : vector<2x40xf32>
    %2324 = vector.extract_strided_slice %2287 {offsets = [0, 9], sizes = [2, 1], strides = [1, 1]} : vector<2x10xf32> to vector<2x1xf32>
    %2325 = vector.broadcast %2324 : vector<2x1xf32> to vector<2x40xf32>
    %2326 = vector.broadcast %40 : vector<1x40xf32> to vector<2x40xf32>
    %2327 = arith.mulf %2325, %2326 : vector<2x40xf32>
    %2328 = arith.addf %2291, %2295 : vector<2x40xf32>
    %2329 = arith.addf %2299, %2303 : vector<2x40xf32>
    %2330 = arith.addf %2307, %2311 : vector<2x40xf32>
    %2331 = arith.addf %2315, %2319 : vector<2x40xf32>
    %2332 = arith.addf %2323, %2327 : vector<2x40xf32>
    %2333 = arith.addf %2328, %2329 : vector<2x40xf32>
    %2334 = arith.addf %2330, %2331 : vector<2x40xf32>
    %2335 = arith.addf %2333, %2334 : vector<2x40xf32>
    %2336 = arith.addf %2335, %2332 : vector<2x40xf32>
    %2337 = vector.broadcast %2 : vector<1x40xf32> to vector<2x40xf32>
    %2338 = arith.addf %2336, %2337 : vector<2x40xf32>
    %2339 = vector.extract_strided_slice %2213 {offsets = [0, 0], sizes = [2, 1], strides = [1, 1]} : vector<2x10xf32> to vector<2x1xf32>
    %2340 = vector.broadcast %2339 : vector<2x1xf32> to vector<2x40xf32>
    %2341 = vector.broadcast %21 : vector<1x40xf32> to vector<2x40xf32>
    %2342 = arith.mulf %2340, %2341 : vector<2x40xf32>
    %2343 = vector.extract_strided_slice %2213 {offsets = [0, 1], sizes = [2, 1], strides = [1, 1]} : vector<2x10xf32> to vector<2x1xf32>
    %2344 = vector.broadcast %2343 : vector<2x1xf32> to vector<2x40xf32>
    %2345 = vector.broadcast %22 : vector<1x40xf32> to vector<2x40xf32>
    %2346 = arith.mulf %2344, %2345 : vector<2x40xf32>
    %2347 = vector.extract_strided_slice %2213 {offsets = [0, 2], sizes = [2, 1], strides = [1, 1]} : vector<2x10xf32> to vector<2x1xf32>
    %2348 = vector.broadcast %2347 : vector<2x1xf32> to vector<2x40xf32>
    %2349 = vector.broadcast %23 : vector<1x40xf32> to vector<2x40xf32>
    %2350 = arith.mulf %2348, %2349 : vector<2x40xf32>
    %2351 = vector.extract_strided_slice %2213 {offsets = [0, 3], sizes = [2, 1], strides = [1, 1]} : vector<2x10xf32> to vector<2x1xf32>
    %2352 = vector.broadcast %2351 : vector<2x1xf32> to vector<2x40xf32>
    %2353 = vector.broadcast %24 : vector<1x40xf32> to vector<2x40xf32>
    %2354 = arith.mulf %2352, %2353 : vector<2x40xf32>
    %2355 = vector.extract_strided_slice %2213 {offsets = [0, 4], sizes = [2, 1], strides = [1, 1]} : vector<2x10xf32> to vector<2x1xf32>
    %2356 = vector.broadcast %2355 : vector<2x1xf32> to vector<2x40xf32>
    %2357 = vector.broadcast %25 : vector<1x40xf32> to vector<2x40xf32>
    %2358 = arith.mulf %2356, %2357 : vector<2x40xf32>
    %2359 = vector.extract_strided_slice %2213 {offsets = [0, 5], sizes = [2, 1], strides = [1, 1]} : vector<2x10xf32> to vector<2x1xf32>
    %2360 = vector.broadcast %2359 : vector<2x1xf32> to vector<2x40xf32>
    %2361 = vector.broadcast %26 : vector<1x40xf32> to vector<2x40xf32>
    %2362 = arith.mulf %2360, %2361 : vector<2x40xf32>
    %2363 = vector.extract_strided_slice %2213 {offsets = [0, 6], sizes = [2, 1], strides = [1, 1]} : vector<2x10xf32> to vector<2x1xf32>
    %2364 = vector.broadcast %2363 : vector<2x1xf32> to vector<2x40xf32>
    %2365 = vector.broadcast %27 : vector<1x40xf32> to vector<2x40xf32>
    %2366 = arith.mulf %2364, %2365 : vector<2x40xf32>
    %2367 = vector.extract_strided_slice %2213 {offsets = [0, 7], sizes = [2, 1], strides = [1, 1]} : vector<2x10xf32> to vector<2x1xf32>
    %2368 = vector.broadcast %2367 : vector<2x1xf32> to vector<2x40xf32>
    %2369 = vector.broadcast %28 : vector<1x40xf32> to vector<2x40xf32>
    %2370 = arith.mulf %2368, %2369 : vector<2x40xf32>
    %2371 = vector.extract_strided_slice %2213 {offsets = [0, 8], sizes = [2, 1], strides = [1, 1]} : vector<2x10xf32> to vector<2x1xf32>
    %2372 = vector.broadcast %2371 : vector<2x1xf32> to vector<2x40xf32>
    %2373 = vector.broadcast %29 : vector<1x40xf32> to vector<2x40xf32>
    %2374 = arith.mulf %2372, %2373 : vector<2x40xf32>
    %2375 = vector.extract_strided_slice %2213 {offsets = [0, 9], sizes = [2, 1], strides = [1, 1]} : vector<2x10xf32> to vector<2x1xf32>
    %2376 = vector.broadcast %2375 : vector<2x1xf32> to vector<2x40xf32>
    %2377 = vector.broadcast %30 : vector<1x40xf32> to vector<2x40xf32>
    %2378 = arith.mulf %2376, %2377 : vector<2x40xf32>
    %2379 = arith.addf %2342, %2346 : vector<2x40xf32>
    %2380 = arith.addf %2350, %2354 : vector<2x40xf32>
    %2381 = arith.addf %2358, %2362 : vector<2x40xf32>
    %2382 = arith.addf %2366, %2370 : vector<2x40xf32>
    %2383 = arith.addf %2374, %2378 : vector<2x40xf32>
    %2384 = arith.addf %2379, %2380 : vector<2x40xf32>
    %2385 = arith.addf %2381, %2382 : vector<2x40xf32>
    %2386 = arith.addf %2384, %2385 : vector<2x40xf32>
    %2387 = arith.addf %2386, %2383 : vector<2x40xf32>
    %2388 = arith.addf %2338, %2387 : vector<2x40xf32>
    %2389 = math.tanh %2388 : vector<2x40xf32>
    %2390 = vector.extract_strided_slice %2389 {offsets = [0, 0], sizes = [2, 10], strides = [1, 1]} : vector<2x40xf32> to vector<2x10xf32>
    %cst_164 = arith.constant 1.000000e+00 : f32
    %2391 = vector.broadcast %cst_164 : f32 to vector<2x10xf32>
    %2392 = arith.addf %2390, %2391 : vector<2x10xf32>
    %cst_165 = arith.constant 5.000000e-01 : f32
    %2393 = vector.broadcast %cst_165 : f32 to vector<2x10xf32>
    %2394 = arith.mulf %2393, %2392 : vector<2x10xf32>
    %2395 = vector.extract_strided_slice %2389 {offsets = [0, 10], sizes = [2, 10], strides = [1, 1]} : vector<2x40xf32> to vector<2x10xf32>
    %cst_166 = arith.constant 1.000000e+00 : f32
    %2396 = vector.broadcast %cst_166 : f32 to vector<2x10xf32>
    %2397 = arith.addf %2395, %2396 : vector<2x10xf32>
    %cst_167 = arith.constant 5.000000e-01 : f32
    %2398 = vector.broadcast %cst_167 : f32 to vector<2x10xf32>
    %2399 = arith.mulf %2398, %2397 : vector<2x10xf32>
    %2400 = vector.extract_strided_slice %2389 {offsets = [0, 20], sizes = [2, 10], strides = [1, 1]} : vector<2x40xf32> to vector<2x10xf32>
    %2401 = vector.extract_strided_slice %2389 {offsets = [0, 30], sizes = [2, 10], strides = [1, 1]} : vector<2x40xf32> to vector<2x10xf32>
    %cst_168 = arith.constant 1.000000e+00 : f32
    %2402 = vector.broadcast %cst_168 : f32 to vector<2x10xf32>
    %2403 = arith.addf %2401, %2402 : vector<2x10xf32>
    %cst_169 = arith.constant 5.000000e-01 : f32
    %2404 = vector.broadcast %cst_169 : f32 to vector<2x10xf32>
    %2405 = arith.mulf %2404, %2403 : vector<2x10xf32>
    %2406 = arith.mulf %2399, %2211 : vector<2x10xf32>
    %2407 = arith.mulf %2394, %2400 : vector<2x10xf32>
    %2408 = arith.addf %2406, %2407 : vector<2x10xf32>
    %2409 = math.tanh %2408 : vector<2x10xf32>
    %2410 = arith.mulf %2405, %2409 : vector<2x10xf32>
    %c22 = arith.constant 22 : index
    %c0_170 = arith.constant 0 : index
    %2411 = vector.load %arg5[%c22, %c0_170] : memref<32x10xf32, #tpu.memory_space<vmem>>, vector<2x10xf32>
    tpu.vector_store %arg5[%c22, %c0_170], %2410 {strides = array<i32>} : memref<32x10xf32, #tpu.memory_space<vmem>>, vector<2x10xf32>,
    %2412 = vector.extract_strided_slice %46 {offsets = [24, 0], sizes = [2, 40], strides = [1, 1]} : vector<32x40xf32> to vector<2x40xf32>
    %2413 = vector.extract_strided_slice %2287 {offsets = [0, 0], sizes = [2, 1], strides = [1, 1]} : vector<2x10xf32> to vector<2x1xf32>
    %2414 = vector.broadcast %2413 : vector<2x1xf32> to vector<2x40xf32>
    %2415 = vector.broadcast %11 : vector<1x40xf32> to vector<2x40xf32>
    %2416 = arith.mulf %2414, %2415 : vector<2x40xf32>
    %2417 = vector.extract_strided_slice %2287 {offsets = [0, 1], sizes = [2, 1], strides = [1, 1]} : vector<2x10xf32> to vector<2x1xf32>
    %2418 = vector.broadcast %2417 : vector<2x1xf32> to vector<2x40xf32>
    %2419 = vector.broadcast %12 : vector<1x40xf32> to vector<2x40xf32>
    %2420 = arith.mulf %2418, %2419 : vector<2x40xf32>
    %2421 = vector.extract_strided_slice %2287 {offsets = [0, 2], sizes = [2, 1], strides = [1, 1]} : vector<2x10xf32> to vector<2x1xf32>
    %2422 = vector.broadcast %2421 : vector<2x1xf32> to vector<2x40xf32>
    %2423 = vector.broadcast %13 : vector<1x40xf32> to vector<2x40xf32>
    %2424 = arith.mulf %2422, %2423 : vector<2x40xf32>
    %2425 = vector.extract_strided_slice %2287 {offsets = [0, 3], sizes = [2, 1], strides = [1, 1]} : vector<2x10xf32> to vector<2x1xf32>
    %2426 = vector.broadcast %2425 : vector<2x1xf32> to vector<2x40xf32>
    %2427 = vector.broadcast %14 : vector<1x40xf32> to vector<2x40xf32>
    %2428 = arith.mulf %2426, %2427 : vector<2x40xf32>
    %2429 = vector.extract_strided_slice %2287 {offsets = [0, 4], sizes = [2, 1], strides = [1, 1]} : vector<2x10xf32> to vector<2x1xf32>
    %2430 = vector.broadcast %2429 : vector<2x1xf32> to vector<2x40xf32>
    %2431 = vector.broadcast %15 : vector<1x40xf32> to vector<2x40xf32>
    %2432 = arith.mulf %2430, %2431 : vector<2x40xf32>
    %2433 = vector.extract_strided_slice %2287 {offsets = [0, 5], sizes = [2, 1], strides = [1, 1]} : vector<2x10xf32> to vector<2x1xf32>
    %2434 = vector.broadcast %2433 : vector<2x1xf32> to vector<2x40xf32>
    %2435 = vector.broadcast %16 : vector<1x40xf32> to vector<2x40xf32>
    %2436 = arith.mulf %2434, %2435 : vector<2x40xf32>
    %2437 = vector.extract_strided_slice %2287 {offsets = [0, 6], sizes = [2, 1], strides = [1, 1]} : vector<2x10xf32> to vector<2x1xf32>
    %2438 = vector.broadcast %2437 : vector<2x1xf32> to vector<2x40xf32>
    %2439 = vector.broadcast %17 : vector<1x40xf32> to vector<2x40xf32>
    %2440 = arith.mulf %2438, %2439 : vector<2x40xf32>
    %2441 = vector.extract_strided_slice %2287 {offsets = [0, 7], sizes = [2, 1], strides = [1, 1]} : vector<2x10xf32> to vector<2x1xf32>
    %2442 = vector.broadcast %2441 : vector<2x1xf32> to vector<2x40xf32>
    %2443 = vector.broadcast %18 : vector<1x40xf32> to vector<2x40xf32>
    %2444 = arith.mulf %2442, %2443 : vector<2x40xf32>
    %2445 = vector.extract_strided_slice %2287 {offsets = [0, 8], sizes = [2, 1], strides = [1, 1]} : vector<2x10xf32> to vector<2x1xf32>
    %2446 = vector.broadcast %2445 : vector<2x1xf32> to vector<2x40xf32>
    %2447 = vector.broadcast %19 : vector<1x40xf32> to vector<2x40xf32>
    %2448 = arith.mulf %2446, %2447 : vector<2x40xf32>
    %2449 = vector.extract_strided_slice %2287 {offsets = [0, 9], sizes = [2, 1], strides = [1, 1]} : vector<2x10xf32> to vector<2x1xf32>
    %2450 = vector.broadcast %2449 : vector<2x1xf32> to vector<2x40xf32>
    %2451 = vector.broadcast %20 : vector<1x40xf32> to vector<2x40xf32>
    %2452 = arith.mulf %2450, %2451 : vector<2x40xf32>
    %2453 = arith.addf %2416, %2420 : vector<2x40xf32>
    %2454 = arith.addf %2424, %2428 : vector<2x40xf32>
    %2455 = arith.addf %2432, %2436 : vector<2x40xf32>
    %2456 = arith.addf %2440, %2444 : vector<2x40xf32>
    %2457 = arith.addf %2448, %2452 : vector<2x40xf32>
    %2458 = arith.addf %2453, %2454 : vector<2x40xf32>
    %2459 = arith.addf %2455, %2456 : vector<2x40xf32>
    %2460 = arith.addf %2458, %2459 : vector<2x40xf32>
    %2461 = arith.addf %2460, %2457 : vector<2x40xf32>
    %2462 = arith.addf %2412, %2461 : vector<2x40xf32>
    %2463 = math.tanh %2462 : vector<2x40xf32>
    %2464 = vector.extract_strided_slice %2463 {offsets = [0, 0], sizes = [2, 10], strides = [1, 1]} : vector<2x40xf32> to vector<2x10xf32>
    %cst_171 = arith.constant 1.000000e+00 : f32
    %2465 = vector.broadcast %cst_171 : f32 to vector<2x10xf32>
    %2466 = arith.addf %2464, %2465 : vector<2x10xf32>
    %cst_172 = arith.constant 5.000000e-01 : f32
    %2467 = vector.broadcast %cst_172 : f32 to vector<2x10xf32>
    %2468 = arith.mulf %2467, %2466 : vector<2x10xf32>
    %2469 = vector.extract_strided_slice %2463 {offsets = [0, 10], sizes = [2, 10], strides = [1, 1]} : vector<2x40xf32> to vector<2x10xf32>
    %cst_173 = arith.constant 1.000000e+00 : f32
    %2470 = vector.broadcast %cst_173 : f32 to vector<2x10xf32>
    %2471 = arith.addf %2469, %2470 : vector<2x10xf32>
    %cst_174 = arith.constant 5.000000e-01 : f32
    %2472 = vector.broadcast %cst_174 : f32 to vector<2x10xf32>
    %2473 = arith.mulf %2472, %2471 : vector<2x10xf32>
    %2474 = vector.extract_strided_slice %2463 {offsets = [0, 20], sizes = [2, 10], strides = [1, 1]} : vector<2x40xf32> to vector<2x10xf32>
    %2475 = vector.extract_strided_slice %2463 {offsets = [0, 30], sizes = [2, 10], strides = [1, 1]} : vector<2x40xf32> to vector<2x10xf32>
    %cst_175 = arith.constant 1.000000e+00 : f32
    %2476 = vector.broadcast %cst_175 : f32 to vector<2x10xf32>
    %2477 = arith.addf %2475, %2476 : vector<2x10xf32>
    %cst_176 = arith.constant 5.000000e-01 : f32
    %2478 = vector.broadcast %cst_176 : f32 to vector<2x10xf32>
    %2479 = arith.mulf %2478, %2477 : vector<2x10xf32>
    %2480 = arith.mulf %2473, %2285 : vector<2x10xf32>
    %2481 = arith.mulf %2468, %2474 : vector<2x10xf32>
    %2482 = arith.addf %2480, %2481 : vector<2x10xf32>
    %2483 = math.tanh %2482 : vector<2x10xf32>
    %2484 = arith.mulf %2479, %2483 : vector<2x10xf32>
    %2485 = vector.extract_strided_slice %2484 {offsets = [0, 0], sizes = [2, 1], strides = [1, 1]} : vector<2x10xf32> to vector<2x1xf32>
    %2486 = vector.broadcast %2485 : vector<2x1xf32> to vector<2x40xf32>
    %2487 = vector.broadcast %31 : vector<1x40xf32> to vector<2x40xf32>
    %2488 = arith.mulf %2486, %2487 : vector<2x40xf32>
    %2489 = vector.extract_strided_slice %2484 {offsets = [0, 1], sizes = [2, 1], strides = [1, 1]} : vector<2x10xf32> to vector<2x1xf32>
    %2490 = vector.broadcast %2489 : vector<2x1xf32> to vector<2x40xf32>
    %2491 = vector.broadcast %32 : vector<1x40xf32> to vector<2x40xf32>
    %2492 = arith.mulf %2490, %2491 : vector<2x40xf32>
    %2493 = vector.extract_strided_slice %2484 {offsets = [0, 2], sizes = [2, 1], strides = [1, 1]} : vector<2x10xf32> to vector<2x1xf32>
    %2494 = vector.broadcast %2493 : vector<2x1xf32> to vector<2x40xf32>
    %2495 = vector.broadcast %33 : vector<1x40xf32> to vector<2x40xf32>
    %2496 = arith.mulf %2494, %2495 : vector<2x40xf32>
    %2497 = vector.extract_strided_slice %2484 {offsets = [0, 3], sizes = [2, 1], strides = [1, 1]} : vector<2x10xf32> to vector<2x1xf32>
    %2498 = vector.broadcast %2497 : vector<2x1xf32> to vector<2x40xf32>
    %2499 = vector.broadcast %34 : vector<1x40xf32> to vector<2x40xf32>
    %2500 = arith.mulf %2498, %2499 : vector<2x40xf32>
    %2501 = vector.extract_strided_slice %2484 {offsets = [0, 4], sizes = [2, 1], strides = [1, 1]} : vector<2x10xf32> to vector<2x1xf32>
    %2502 = vector.broadcast %2501 : vector<2x1xf32> to vector<2x40xf32>
    %2503 = vector.broadcast %35 : vector<1x40xf32> to vector<2x40xf32>
    %2504 = arith.mulf %2502, %2503 : vector<2x40xf32>
    %2505 = vector.extract_strided_slice %2484 {offsets = [0, 5], sizes = [2, 1], strides = [1, 1]} : vector<2x10xf32> to vector<2x1xf32>
    %2506 = vector.broadcast %2505 : vector<2x1xf32> to vector<2x40xf32>
    %2507 = vector.broadcast %36 : vector<1x40xf32> to vector<2x40xf32>
    %2508 = arith.mulf %2506, %2507 : vector<2x40xf32>
    %2509 = vector.extract_strided_slice %2484 {offsets = [0, 6], sizes = [2, 1], strides = [1, 1]} : vector<2x10xf32> to vector<2x1xf32>
    %2510 = vector.broadcast %2509 : vector<2x1xf32> to vector<2x40xf32>
    %2511 = vector.broadcast %37 : vector<1x40xf32> to vector<2x40xf32>
    %2512 = arith.mulf %2510, %2511 : vector<2x40xf32>
    %2513 = vector.extract_strided_slice %2484 {offsets = [0, 7], sizes = [2, 1], strides = [1, 1]} : vector<2x10xf32> to vector<2x1xf32>
    %2514 = vector.broadcast %2513 : vector<2x1xf32> to vector<2x40xf32>
    %2515 = vector.broadcast %38 : vector<1x40xf32> to vector<2x40xf32>
    %2516 = arith.mulf %2514, %2515 : vector<2x40xf32>
    %2517 = vector.extract_strided_slice %2484 {offsets = [0, 8], sizes = [2, 1], strides = [1, 1]} : vector<2x10xf32> to vector<2x1xf32>
    %2518 = vector.broadcast %2517 : vector<2x1xf32> to vector<2x40xf32>
    %2519 = vector.broadcast %39 : vector<1x40xf32> to vector<2x40xf32>
    %2520 = arith.mulf %2518, %2519 : vector<2x40xf32>
    %2521 = vector.extract_strided_slice %2484 {offsets = [0, 9], sizes = [2, 1], strides = [1, 1]} : vector<2x10xf32> to vector<2x1xf32>
    %2522 = vector.broadcast %2521 : vector<2x1xf32> to vector<2x40xf32>
    %2523 = vector.broadcast %40 : vector<1x40xf32> to vector<2x40xf32>
    %2524 = arith.mulf %2522, %2523 : vector<2x40xf32>
    %2525 = arith.addf %2488, %2492 : vector<2x40xf32>
    %2526 = arith.addf %2496, %2500 : vector<2x40xf32>
    %2527 = arith.addf %2504, %2508 : vector<2x40xf32>
    %2528 = arith.addf %2512, %2516 : vector<2x40xf32>
    %2529 = arith.addf %2520, %2524 : vector<2x40xf32>
    %2530 = arith.addf %2525, %2526 : vector<2x40xf32>
    %2531 = arith.addf %2527, %2528 : vector<2x40xf32>
    %2532 = arith.addf %2530, %2531 : vector<2x40xf32>
    %2533 = arith.addf %2532, %2529 : vector<2x40xf32>
    %2534 = vector.broadcast %2 : vector<1x40xf32> to vector<2x40xf32>
    %2535 = arith.addf %2533, %2534 : vector<2x40xf32>
    %2536 = vector.extract_strided_slice %2410 {offsets = [0, 0], sizes = [2, 1], strides = [1, 1]} : vector<2x10xf32> to vector<2x1xf32>
    %2537 = vector.broadcast %2536 : vector<2x1xf32> to vector<2x40xf32>
    %2538 = vector.broadcast %21 : vector<1x40xf32> to vector<2x40xf32>
    %2539 = arith.mulf %2537, %2538 : vector<2x40xf32>
    %2540 = vector.extract_strided_slice %2410 {offsets = [0, 1], sizes = [2, 1], strides = [1, 1]} : vector<2x10xf32> to vector<2x1xf32>
    %2541 = vector.broadcast %2540 : vector<2x1xf32> to vector<2x40xf32>
    %2542 = vector.broadcast %22 : vector<1x40xf32> to vector<2x40xf32>
    %2543 = arith.mulf %2541, %2542 : vector<2x40xf32>
    %2544 = vector.extract_strided_slice %2410 {offsets = [0, 2], sizes = [2, 1], strides = [1, 1]} : vector<2x10xf32> to vector<2x1xf32>
    %2545 = vector.broadcast %2544 : vector<2x1xf32> to vector<2x40xf32>
    %2546 = vector.broadcast %23 : vector<1x40xf32> to vector<2x40xf32>
    %2547 = arith.mulf %2545, %2546 : vector<2x40xf32>
    %2548 = vector.extract_strided_slice %2410 {offsets = [0, 3], sizes = [2, 1], strides = [1, 1]} : vector<2x10xf32> to vector<2x1xf32>
    %2549 = vector.broadcast %2548 : vector<2x1xf32> to vector<2x40xf32>
    %2550 = vector.broadcast %24 : vector<1x40xf32> to vector<2x40xf32>
    %2551 = arith.mulf %2549, %2550 : vector<2x40xf32>
    %2552 = vector.extract_strided_slice %2410 {offsets = [0, 4], sizes = [2, 1], strides = [1, 1]} : vector<2x10xf32> to vector<2x1xf32>
    %2553 = vector.broadcast %2552 : vector<2x1xf32> to vector<2x40xf32>
    %2554 = vector.broadcast %25 : vector<1x40xf32> to vector<2x40xf32>
    %2555 = arith.mulf %2553, %2554 : vector<2x40xf32>
    %2556 = vector.extract_strided_slice %2410 {offsets = [0, 5], sizes = [2, 1], strides = [1, 1]} : vector<2x10xf32> to vector<2x1xf32>
    %2557 = vector.broadcast %2556 : vector<2x1xf32> to vector<2x40xf32>
    %2558 = vector.broadcast %26 : vector<1x40xf32> to vector<2x40xf32>
    %2559 = arith.mulf %2557, %2558 : vector<2x40xf32>
    %2560 = vector.extract_strided_slice %2410 {offsets = [0, 6], sizes = [2, 1], strides = [1, 1]} : vector<2x10xf32> to vector<2x1xf32>
    %2561 = vector.broadcast %2560 : vector<2x1xf32> to vector<2x40xf32>
    %2562 = vector.broadcast %27 : vector<1x40xf32> to vector<2x40xf32>
    %2563 = arith.mulf %2561, %2562 : vector<2x40xf32>
    %2564 = vector.extract_strided_slice %2410 {offsets = [0, 7], sizes = [2, 1], strides = [1, 1]} : vector<2x10xf32> to vector<2x1xf32>
    %2565 = vector.broadcast %2564 : vector<2x1xf32> to vector<2x40xf32>
    %2566 = vector.broadcast %28 : vector<1x40xf32> to vector<2x40xf32>
    %2567 = arith.mulf %2565, %2566 : vector<2x40xf32>
    %2568 = vector.extract_strided_slice %2410 {offsets = [0, 8], sizes = [2, 1], strides = [1, 1]} : vector<2x10xf32> to vector<2x1xf32>
    %2569 = vector.broadcast %2568 : vector<2x1xf32> to vector<2x40xf32>
    %2570 = vector.broadcast %29 : vector<1x40xf32> to vector<2x40xf32>
    %2571 = arith.mulf %2569, %2570 : vector<2x40xf32>
    %2572 = vector.extract_strided_slice %2410 {offsets = [0, 9], sizes = [2, 1], strides = [1, 1]} : vector<2x10xf32> to vector<2x1xf32>
    %2573 = vector.broadcast %2572 : vector<2x1xf32> to vector<2x40xf32>
    %2574 = vector.broadcast %30 : vector<1x40xf32> to vector<2x40xf32>
    %2575 = arith.mulf %2573, %2574 : vector<2x40xf32>
    %2576 = arith.addf %2539, %2543 : vector<2x40xf32>
    %2577 = arith.addf %2547, %2551 : vector<2x40xf32>
    %2578 = arith.addf %2555, %2559 : vector<2x40xf32>
    %2579 = arith.addf %2563, %2567 : vector<2x40xf32>
    %2580 = arith.addf %2571, %2575 : vector<2x40xf32>
    %2581 = arith.addf %2576, %2577 : vector<2x40xf32>
    %2582 = arith.addf %2578, %2579 : vector<2x40xf32>
    %2583 = arith.addf %2581, %2582 : vector<2x40xf32>
    %2584 = arith.addf %2583, %2580 : vector<2x40xf32>
    %2585 = arith.addf %2535, %2584 : vector<2x40xf32>
    %2586 = math.tanh %2585 : vector<2x40xf32>
    %2587 = vector.extract_strided_slice %2586 {offsets = [0, 0], sizes = [2, 10], strides = [1, 1]} : vector<2x40xf32> to vector<2x10xf32>
    %cst_177 = arith.constant 1.000000e+00 : f32
    %2588 = vector.broadcast %cst_177 : f32 to vector<2x10xf32>
    %2589 = arith.addf %2587, %2588 : vector<2x10xf32>
    %cst_178 = arith.constant 5.000000e-01 : f32
    %2590 = vector.broadcast %cst_178 : f32 to vector<2x10xf32>
    %2591 = arith.mulf %2590, %2589 : vector<2x10xf32>
    %2592 = vector.extract_strided_slice %2586 {offsets = [0, 10], sizes = [2, 10], strides = [1, 1]} : vector<2x40xf32> to vector<2x10xf32>
    %cst_179 = arith.constant 1.000000e+00 : f32
    %2593 = vector.broadcast %cst_179 : f32 to vector<2x10xf32>
    %2594 = arith.addf %2592, %2593 : vector<2x10xf32>
    %cst_180 = arith.constant 5.000000e-01 : f32
    %2595 = vector.broadcast %cst_180 : f32 to vector<2x10xf32>
    %2596 = arith.mulf %2595, %2594 : vector<2x10xf32>
    %2597 = vector.extract_strided_slice %2586 {offsets = [0, 20], sizes = [2, 10], strides = [1, 1]} : vector<2x40xf32> to vector<2x10xf32>
    %2598 = vector.extract_strided_slice %2586 {offsets = [0, 30], sizes = [2, 10], strides = [1, 1]} : vector<2x40xf32> to vector<2x10xf32>
    %cst_181 = arith.constant 1.000000e+00 : f32
    %2599 = vector.broadcast %cst_181 : f32 to vector<2x10xf32>
    %2600 = arith.addf %2598, %2599 : vector<2x10xf32>
    %cst_182 = arith.constant 5.000000e-01 : f32
    %2601 = vector.broadcast %cst_182 : f32 to vector<2x10xf32>
    %2602 = arith.mulf %2601, %2600 : vector<2x10xf32>
    %2603 = arith.mulf %2596, %2408 : vector<2x10xf32>
    %2604 = arith.mulf %2591, %2597 : vector<2x10xf32>
    %2605 = arith.addf %2603, %2604 : vector<2x10xf32>
    %2606 = math.tanh %2605 : vector<2x10xf32>
    %2607 = arith.mulf %2602, %2606 : vector<2x10xf32>
    %c24 = arith.constant 24 : index
    %c0_183 = arith.constant 0 : index
    %2608 = vector.load %arg5[%c24, %c0_183] : memref<32x10xf32, #tpu.memory_space<vmem>>, vector<2x10xf32>
    tpu.vector_store %arg5[%c24, %c0_183], %2607 {strides = array<i32>} : memref<32x10xf32, #tpu.memory_space<vmem>>, vector<2x10xf32>,
    %2609 = vector.extract_strided_slice %46 {offsets = [26, 0], sizes = [2, 40], strides = [1, 1]} : vector<32x40xf32> to vector<2x40xf32>
    %2610 = vector.extract_strided_slice %2484 {offsets = [0, 0], sizes = [2, 1], strides = [1, 1]} : vector<2x10xf32> to vector<2x1xf32>
    %2611 = vector.broadcast %2610 : vector<2x1xf32> to vector<2x40xf32>
    %2612 = vector.broadcast %11 : vector<1x40xf32> to vector<2x40xf32>
    %2613 = arith.mulf %2611, %2612 : vector<2x40xf32>
    %2614 = vector.extract_strided_slice %2484 {offsets = [0, 1], sizes = [2, 1], strides = [1, 1]} : vector<2x10xf32> to vector<2x1xf32>
    %2615 = vector.broadcast %2614 : vector<2x1xf32> to vector<2x40xf32>
    %2616 = vector.broadcast %12 : vector<1x40xf32> to vector<2x40xf32>
    %2617 = arith.mulf %2615, %2616 : vector<2x40xf32>
    %2618 = vector.extract_strided_slice %2484 {offsets = [0, 2], sizes = [2, 1], strides = [1, 1]} : vector<2x10xf32> to vector<2x1xf32>
    %2619 = vector.broadcast %2618 : vector<2x1xf32> to vector<2x40xf32>
    %2620 = vector.broadcast %13 : vector<1x40xf32> to vector<2x40xf32>
    %2621 = arith.mulf %2619, %2620 : vector<2x40xf32>
    %2622 = vector.extract_strided_slice %2484 {offsets = [0, 3], sizes = [2, 1], strides = [1, 1]} : vector<2x10xf32> to vector<2x1xf32>
    %2623 = vector.broadcast %2622 : vector<2x1xf32> to vector<2x40xf32>
    %2624 = vector.broadcast %14 : vector<1x40xf32> to vector<2x40xf32>
    %2625 = arith.mulf %2623, %2624 : vector<2x40xf32>
    %2626 = vector.extract_strided_slice %2484 {offsets = [0, 4], sizes = [2, 1], strides = [1, 1]} : vector<2x10xf32> to vector<2x1xf32>
    %2627 = vector.broadcast %2626 : vector<2x1xf32> to vector<2x40xf32>
    %2628 = vector.broadcast %15 : vector<1x40xf32> to vector<2x40xf32>
    %2629 = arith.mulf %2627, %2628 : vector<2x40xf32>
    %2630 = vector.extract_strided_slice %2484 {offsets = [0, 5], sizes = [2, 1], strides = [1, 1]} : vector<2x10xf32> to vector<2x1xf32>
    %2631 = vector.broadcast %2630 : vector<2x1xf32> to vector<2x40xf32>
    %2632 = vector.broadcast %16 : vector<1x40xf32> to vector<2x40xf32>
    %2633 = arith.mulf %2631, %2632 : vector<2x40xf32>
    %2634 = vector.extract_strided_slice %2484 {offsets = [0, 6], sizes = [2, 1], strides = [1, 1]} : vector<2x10xf32> to vector<2x1xf32>
    %2635 = vector.broadcast %2634 : vector<2x1xf32> to vector<2x40xf32>
    %2636 = vector.broadcast %17 : vector<1x40xf32> to vector<2x40xf32>
    %2637 = arith.mulf %2635, %2636 : vector<2x40xf32>
    %2638 = vector.extract_strided_slice %2484 {offsets = [0, 7], sizes = [2, 1], strides = [1, 1]} : vector<2x10xf32> to vector<2x1xf32>
    %2639 = vector.broadcast %2638 : vector<2x1xf32> to vector<2x40xf32>
    %2640 = vector.broadcast %18 : vector<1x40xf32> to vector<2x40xf32>
    %2641 = arith.mulf %2639, %2640 : vector<2x40xf32>
    %2642 = vector.extract_strided_slice %2484 {offsets = [0, 8], sizes = [2, 1], strides = [1, 1]} : vector<2x10xf32> to vector<2x1xf32>
    %2643 = vector.broadcast %2642 : vector<2x1xf32> to vector<2x40xf32>
    %2644 = vector.broadcast %19 : vector<1x40xf32> to vector<2x40xf32>
    %2645 = arith.mulf %2643, %2644 : vector<2x40xf32>
    %2646 = vector.extract_strided_slice %2484 {offsets = [0, 9], sizes = [2, 1], strides = [1, 1]} : vector<2x10xf32> to vector<2x1xf32>
    %2647 = vector.broadcast %2646 : vector<2x1xf32> to vector<2x40xf32>
    %2648 = vector.broadcast %20 : vector<1x40xf32> to vector<2x40xf32>
    %2649 = arith.mulf %2647, %2648 : vector<2x40xf32>
    %2650 = arith.addf %2613, %2617 : vector<2x40xf32>
    %2651 = arith.addf %2621, %2625 : vector<2x40xf32>
    %2652 = arith.addf %2629, %2633 : vector<2x40xf32>
    %2653 = arith.addf %2637, %2641 : vector<2x40xf32>
    %2654 = arith.addf %2645, %2649 : vector<2x40xf32>
    %2655 = arith.addf %2650, %2651 : vector<2x40xf32>
    %2656 = arith.addf %2652, %2653 : vector<2x40xf32>
    %2657 = arith.addf %2655, %2656 : vector<2x40xf32>
    %2658 = arith.addf %2657, %2654 : vector<2x40xf32>
    %2659 = arith.addf %2609, %2658 : vector<2x40xf32>
    %2660 = math.tanh %2659 : vector<2x40xf32>
    %2661 = vector.extract_strided_slice %2660 {offsets = [0, 0], sizes = [2, 10], strides = [1, 1]} : vector<2x40xf32> to vector<2x10xf32>
    %cst_184 = arith.constant 1.000000e+00 : f32
    %2662 = vector.broadcast %cst_184 : f32 to vector<2x10xf32>
    %2663 = arith.addf %2661, %2662 : vector<2x10xf32>
    %cst_185 = arith.constant 5.000000e-01 : f32
    %2664 = vector.broadcast %cst_185 : f32 to vector<2x10xf32>
    %2665 = arith.mulf %2664, %2663 : vector<2x10xf32>
    %2666 = vector.extract_strided_slice %2660 {offsets = [0, 10], sizes = [2, 10], strides = [1, 1]} : vector<2x40xf32> to vector<2x10xf32>
    %cst_186 = arith.constant 1.000000e+00 : f32
    %2667 = vector.broadcast %cst_186 : f32 to vector<2x10xf32>
    %2668 = arith.addf %2666, %2667 : vector<2x10xf32>
    %cst_187 = arith.constant 5.000000e-01 : f32
    %2669 = vector.broadcast %cst_187 : f32 to vector<2x10xf32>
    %2670 = arith.mulf %2669, %2668 : vector<2x10xf32>
    %2671 = vector.extract_strided_slice %2660 {offsets = [0, 20], sizes = [2, 10], strides = [1, 1]} : vector<2x40xf32> to vector<2x10xf32>
    %2672 = vector.extract_strided_slice %2660 {offsets = [0, 30], sizes = [2, 10], strides = [1, 1]} : vector<2x40xf32> to vector<2x10xf32>
    %cst_188 = arith.constant 1.000000e+00 : f32
    %2673 = vector.broadcast %cst_188 : f32 to vector<2x10xf32>
    %2674 = arith.addf %2672, %2673 : vector<2x10xf32>
    %cst_189 = arith.constant 5.000000e-01 : f32
    %2675 = vector.broadcast %cst_189 : f32 to vector<2x10xf32>
    %2676 = arith.mulf %2675, %2674 : vector<2x10xf32>
    %2677 = arith.mulf %2670, %2482 : vector<2x10xf32>
    %2678 = arith.mulf %2665, %2671 : vector<2x10xf32>
    %2679 = arith.addf %2677, %2678 : vector<2x10xf32>
    %2680 = math.tanh %2679 : vector<2x10xf32>
    %2681 = arith.mulf %2676, %2680 : vector<2x10xf32>
    %2682 = vector.extract_strided_slice %2681 {offsets = [0, 0], sizes = [2, 1], strides = [1, 1]} : vector<2x10xf32> to vector<2x1xf32>
    %2683 = vector.broadcast %2682 : vector<2x1xf32> to vector<2x40xf32>
    %2684 = vector.broadcast %31 : vector<1x40xf32> to vector<2x40xf32>
    %2685 = arith.mulf %2683, %2684 : vector<2x40xf32>
    %2686 = vector.extract_strided_slice %2681 {offsets = [0, 1], sizes = [2, 1], strides = [1, 1]} : vector<2x10xf32> to vector<2x1xf32>
    %2687 = vector.broadcast %2686 : vector<2x1xf32> to vector<2x40xf32>
    %2688 = vector.broadcast %32 : vector<1x40xf32> to vector<2x40xf32>
    %2689 = arith.mulf %2687, %2688 : vector<2x40xf32>
    %2690 = vector.extract_strided_slice %2681 {offsets = [0, 2], sizes = [2, 1], strides = [1, 1]} : vector<2x10xf32> to vector<2x1xf32>
    %2691 = vector.broadcast %2690 : vector<2x1xf32> to vector<2x40xf32>
    %2692 = vector.broadcast %33 : vector<1x40xf32> to vector<2x40xf32>
    %2693 = arith.mulf %2691, %2692 : vector<2x40xf32>
    %2694 = vector.extract_strided_slice %2681 {offsets = [0, 3], sizes = [2, 1], strides = [1, 1]} : vector<2x10xf32> to vector<2x1xf32>
    %2695 = vector.broadcast %2694 : vector<2x1xf32> to vector<2x40xf32>
    %2696 = vector.broadcast %34 : vector<1x40xf32> to vector<2x40xf32>
    %2697 = arith.mulf %2695, %2696 : vector<2x40xf32>
    %2698 = vector.extract_strided_slice %2681 {offsets = [0, 4], sizes = [2, 1], strides = [1, 1]} : vector<2x10xf32> to vector<2x1xf32>
    %2699 = vector.broadcast %2698 : vector<2x1xf32> to vector<2x40xf32>
    %2700 = vector.broadcast %35 : vector<1x40xf32> to vector<2x40xf32>
    %2701 = arith.mulf %2699, %2700 : vector<2x40xf32>
    %2702 = vector.extract_strided_slice %2681 {offsets = [0, 5], sizes = [2, 1], strides = [1, 1]} : vector<2x10xf32> to vector<2x1xf32>
    %2703 = vector.broadcast %2702 : vector<2x1xf32> to vector<2x40xf32>
    %2704 = vector.broadcast %36 : vector<1x40xf32> to vector<2x40xf32>
    %2705 = arith.mulf %2703, %2704 : vector<2x40xf32>
    %2706 = vector.extract_strided_slice %2681 {offsets = [0, 6], sizes = [2, 1], strides = [1, 1]} : vector<2x10xf32> to vector<2x1xf32>
    %2707 = vector.broadcast %2706 : vector<2x1xf32> to vector<2x40xf32>
    %2708 = vector.broadcast %37 : vector<1x40xf32> to vector<2x40xf32>
    %2709 = arith.mulf %2707, %2708 : vector<2x40xf32>
    %2710 = vector.extract_strided_slice %2681 {offsets = [0, 7], sizes = [2, 1], strides = [1, 1]} : vector<2x10xf32> to vector<2x1xf32>
    %2711 = vector.broadcast %2710 : vector<2x1xf32> to vector<2x40xf32>
    %2712 = vector.broadcast %38 : vector<1x40xf32> to vector<2x40xf32>
    %2713 = arith.mulf %2711, %2712 : vector<2x40xf32>
    %2714 = vector.extract_strided_slice %2681 {offsets = [0, 8], sizes = [2, 1], strides = [1, 1]} : vector<2x10xf32> to vector<2x1xf32>
    %2715 = vector.broadcast %2714 : vector<2x1xf32> to vector<2x40xf32>
    %2716 = vector.broadcast %39 : vector<1x40xf32> to vector<2x40xf32>
    %2717 = arith.mulf %2715, %2716 : vector<2x40xf32>
    %2718 = vector.extract_strided_slice %2681 {offsets = [0, 9], sizes = [2, 1], strides = [1, 1]} : vector<2x10xf32> to vector<2x1xf32>
    %2719 = vector.broadcast %2718 : vector<2x1xf32> to vector<2x40xf32>
    %2720 = vector.broadcast %40 : vector<1x40xf32> to vector<2x40xf32>
    %2721 = arith.mulf %2719, %2720 : vector<2x40xf32>
    %2722 = arith.addf %2685, %2689 : vector<2x40xf32>
    %2723 = arith.addf %2693, %2697 : vector<2x40xf32>
    %2724 = arith.addf %2701, %2705 : vector<2x40xf32>
    %2725 = arith.addf %2709, %2713 : vector<2x40xf32>
    %2726 = arith.addf %2717, %2721 : vector<2x40xf32>
    %2727 = arith.addf %2722, %2723 : vector<2x40xf32>
    %2728 = arith.addf %2724, %2725 : vector<2x40xf32>
    %2729 = arith.addf %2727, %2728 : vector<2x40xf32>
    %2730 = arith.addf %2729, %2726 : vector<2x40xf32>
    %2731 = vector.broadcast %2 : vector<1x40xf32> to vector<2x40xf32>
    %2732 = arith.addf %2730, %2731 : vector<2x40xf32>
    %2733 = vector.extract_strided_slice %2607 {offsets = [0, 0], sizes = [2, 1], strides = [1, 1]} : vector<2x10xf32> to vector<2x1xf32>
    %2734 = vector.broadcast %2733 : vector<2x1xf32> to vector<2x40xf32>
    %2735 = vector.broadcast %21 : vector<1x40xf32> to vector<2x40xf32>
    %2736 = arith.mulf %2734, %2735 : vector<2x40xf32>
    %2737 = vector.extract_strided_slice %2607 {offsets = [0, 1], sizes = [2, 1], strides = [1, 1]} : vector<2x10xf32> to vector<2x1xf32>
    %2738 = vector.broadcast %2737 : vector<2x1xf32> to vector<2x40xf32>
    %2739 = vector.broadcast %22 : vector<1x40xf32> to vector<2x40xf32>
    %2740 = arith.mulf %2738, %2739 : vector<2x40xf32>
    %2741 = vector.extract_strided_slice %2607 {offsets = [0, 2], sizes = [2, 1], strides = [1, 1]} : vector<2x10xf32> to vector<2x1xf32>
    %2742 = vector.broadcast %2741 : vector<2x1xf32> to vector<2x40xf32>
    %2743 = vector.broadcast %23 : vector<1x40xf32> to vector<2x40xf32>
    %2744 = arith.mulf %2742, %2743 : vector<2x40xf32>
    %2745 = vector.extract_strided_slice %2607 {offsets = [0, 3], sizes = [2, 1], strides = [1, 1]} : vector<2x10xf32> to vector<2x1xf32>
    %2746 = vector.broadcast %2745 : vector<2x1xf32> to vector<2x40xf32>
    %2747 = vector.broadcast %24 : vector<1x40xf32> to vector<2x40xf32>
    %2748 = arith.mulf %2746, %2747 : vector<2x40xf32>
    %2749 = vector.extract_strided_slice %2607 {offsets = [0, 4], sizes = [2, 1], strides = [1, 1]} : vector<2x10xf32> to vector<2x1xf32>
    %2750 = vector.broadcast %2749 : vector<2x1xf32> to vector<2x40xf32>
    %2751 = vector.broadcast %25 : vector<1x40xf32> to vector<2x40xf32>
    %2752 = arith.mulf %2750, %2751 : vector<2x40xf32>
    %2753 = vector.extract_strided_slice %2607 {offsets = [0, 5], sizes = [2, 1], strides = [1, 1]} : vector<2x10xf32> to vector<2x1xf32>
    %2754 = vector.broadcast %2753 : vector<2x1xf32> to vector<2x40xf32>
    %2755 = vector.broadcast %26 : vector<1x40xf32> to vector<2x40xf32>
    %2756 = arith.mulf %2754, %2755 : vector<2x40xf32>
    %2757 = vector.extract_strided_slice %2607 {offsets = [0, 6], sizes = [2, 1], strides = [1, 1]} : vector<2x10xf32> to vector<2x1xf32>
    %2758 = vector.broadcast %2757 : vector<2x1xf32> to vector<2x40xf32>
    %2759 = vector.broadcast %27 : vector<1x40xf32> to vector<2x40xf32>
    %2760 = arith.mulf %2758, %2759 : vector<2x40xf32>
    %2761 = vector.extract_strided_slice %2607 {offsets = [0, 7], sizes = [2, 1], strides = [1, 1]} : vector<2x10xf32> to vector<2x1xf32>
    %2762 = vector.broadcast %2761 : vector<2x1xf32> to vector<2x40xf32>
    %2763 = vector.broadcast %28 : vector<1x40xf32> to vector<2x40xf32>
    %2764 = arith.mulf %2762, %2763 : vector<2x40xf32>
    %2765 = vector.extract_strided_slice %2607 {offsets = [0, 8], sizes = [2, 1], strides = [1, 1]} : vector<2x10xf32> to vector<2x1xf32>
    %2766 = vector.broadcast %2765 : vector<2x1xf32> to vector<2x40xf32>
    %2767 = vector.broadcast %29 : vector<1x40xf32> to vector<2x40xf32>
    %2768 = arith.mulf %2766, %2767 : vector<2x40xf32>
    %2769 = vector.extract_strided_slice %2607 {offsets = [0, 9], sizes = [2, 1], strides = [1, 1]} : vector<2x10xf32> to vector<2x1xf32>
    %2770 = vector.broadcast %2769 : vector<2x1xf32> to vector<2x40xf32>
    %2771 = vector.broadcast %30 : vector<1x40xf32> to vector<2x40xf32>
    %2772 = arith.mulf %2770, %2771 : vector<2x40xf32>
    %2773 = arith.addf %2736, %2740 : vector<2x40xf32>
    %2774 = arith.addf %2744, %2748 : vector<2x40xf32>
    %2775 = arith.addf %2752, %2756 : vector<2x40xf32>
    %2776 = arith.addf %2760, %2764 : vector<2x40xf32>
    %2777 = arith.addf %2768, %2772 : vector<2x40xf32>
    %2778 = arith.addf %2773, %2774 : vector<2x40xf32>
    %2779 = arith.addf %2775, %2776 : vector<2x40xf32>
    %2780 = arith.addf %2778, %2779 : vector<2x40xf32>
    %2781 = arith.addf %2780, %2777 : vector<2x40xf32>
    %2782 = arith.addf %2732, %2781 : vector<2x40xf32>
    %2783 = math.tanh %2782 : vector<2x40xf32>
    %2784 = vector.extract_strided_slice %2783 {offsets = [0, 0], sizes = [2, 10], strides = [1, 1]} : vector<2x40xf32> to vector<2x10xf32>
    %cst_190 = arith.constant 1.000000e+00 : f32
    %2785 = vector.broadcast %cst_190 : f32 to vector<2x10xf32>
    %2786 = arith.addf %2784, %2785 : vector<2x10xf32>
    %cst_191 = arith.constant 5.000000e-01 : f32
    %2787 = vector.broadcast %cst_191 : f32 to vector<2x10xf32>
    %2788 = arith.mulf %2787, %2786 : vector<2x10xf32>
    %2789 = vector.extract_strided_slice %2783 {offsets = [0, 10], sizes = [2, 10], strides = [1, 1]} : vector<2x40xf32> to vector<2x10xf32>
    %cst_192 = arith.constant 1.000000e+00 : f32
    %2790 = vector.broadcast %cst_192 : f32 to vector<2x10xf32>
    %2791 = arith.addf %2789, %2790 : vector<2x10xf32>
    %cst_193 = arith.constant 5.000000e-01 : f32
    %2792 = vector.broadcast %cst_193 : f32 to vector<2x10xf32>
    %2793 = arith.mulf %2792, %2791 : vector<2x10xf32>
    %2794 = vector.extract_strided_slice %2783 {offsets = [0, 20], sizes = [2, 10], strides = [1, 1]} : vector<2x40xf32> to vector<2x10xf32>
    %2795 = vector.extract_strided_slice %2783 {offsets = [0, 30], sizes = [2, 10], strides = [1, 1]} : vector<2x40xf32> to vector<2x10xf32>
    %cst_194 = arith.constant 1.000000e+00 : f32
    %2796 = vector.broadcast %cst_194 : f32 to vector<2x10xf32>
    %2797 = arith.addf %2795, %2796 : vector<2x10xf32>
    %cst_195 = arith.constant 5.000000e-01 : f32
    %2798 = vector.broadcast %cst_195 : f32 to vector<2x10xf32>
    %2799 = arith.mulf %2798, %2797 : vector<2x10xf32>
    %2800 = arith.mulf %2793, %2605 : vector<2x10xf32>
    %2801 = arith.mulf %2788, %2794 : vector<2x10xf32>
    %2802 = arith.addf %2800, %2801 : vector<2x10xf32>
    %2803 = math.tanh %2802 : vector<2x10xf32>
    %2804 = arith.mulf %2799, %2803 : vector<2x10xf32>
    %c26 = arith.constant 26 : index
    %c0_196 = arith.constant 0 : index
    %2805 = vector.load %arg5[%c26, %c0_196] : memref<32x10xf32, #tpu.memory_space<vmem>>, vector<2x10xf32>
    tpu.vector_store %arg5[%c26, %c0_196], %2804 {strides = array<i32>} : memref<32x10xf32, #tpu.memory_space<vmem>>, vector<2x10xf32>,
    %2806 = vector.extract_strided_slice %46 {offsets = [28, 0], sizes = [2, 40], strides = [1, 1]} : vector<32x40xf32> to vector<2x40xf32>
    %2807 = vector.extract_strided_slice %2681 {offsets = [0, 0], sizes = [2, 1], strides = [1, 1]} : vector<2x10xf32> to vector<2x1xf32>
    %2808 = vector.broadcast %2807 : vector<2x1xf32> to vector<2x40xf32>
    %2809 = vector.broadcast %11 : vector<1x40xf32> to vector<2x40xf32>
    %2810 = arith.mulf %2808, %2809 : vector<2x40xf32>
    %2811 = vector.extract_strided_slice %2681 {offsets = [0, 1], sizes = [2, 1], strides = [1, 1]} : vector<2x10xf32> to vector<2x1xf32>
    %2812 = vector.broadcast %2811 : vector<2x1xf32> to vector<2x40xf32>
    %2813 = vector.broadcast %12 : vector<1x40xf32> to vector<2x40xf32>
    %2814 = arith.mulf %2812, %2813 : vector<2x40xf32>
    %2815 = vector.extract_strided_slice %2681 {offsets = [0, 2], sizes = [2, 1], strides = [1, 1]} : vector<2x10xf32> to vector<2x1xf32>
    %2816 = vector.broadcast %2815 : vector<2x1xf32> to vector<2x40xf32>
    %2817 = vector.broadcast %13 : vector<1x40xf32> to vector<2x40xf32>
    %2818 = arith.mulf %2816, %2817 : vector<2x40xf32>
    %2819 = vector.extract_strided_slice %2681 {offsets = [0, 3], sizes = [2, 1], strides = [1, 1]} : vector<2x10xf32> to vector<2x1xf32>
    %2820 = vector.broadcast %2819 : vector<2x1xf32> to vector<2x40xf32>
    %2821 = vector.broadcast %14 : vector<1x40xf32> to vector<2x40xf32>
    %2822 = arith.mulf %2820, %2821 : vector<2x40xf32>
    %2823 = vector.extract_strided_slice %2681 {offsets = [0, 4], sizes = [2, 1], strides = [1, 1]} : vector<2x10xf32> to vector<2x1xf32>
    %2824 = vector.broadcast %2823 : vector<2x1xf32> to vector<2x40xf32>
    %2825 = vector.broadcast %15 : vector<1x40xf32> to vector<2x40xf32>
    %2826 = arith.mulf %2824, %2825 : vector<2x40xf32>
    %2827 = vector.extract_strided_slice %2681 {offsets = [0, 5], sizes = [2, 1], strides = [1, 1]} : vector<2x10xf32> to vector<2x1xf32>
    %2828 = vector.broadcast %2827 : vector<2x1xf32> to vector<2x40xf32>
    %2829 = vector.broadcast %16 : vector<1x40xf32> to vector<2x40xf32>
    %2830 = arith.mulf %2828, %2829 : vector<2x40xf32>
    %2831 = vector.extract_strided_slice %2681 {offsets = [0, 6], sizes = [2, 1], strides = [1, 1]} : vector<2x10xf32> to vector<2x1xf32>
    %2832 = vector.broadcast %2831 : vector<2x1xf32> to vector<2x40xf32>
    %2833 = vector.broadcast %17 : vector<1x40xf32> to vector<2x40xf32>
    %2834 = arith.mulf %2832, %2833 : vector<2x40xf32>
    %2835 = vector.extract_strided_slice %2681 {offsets = [0, 7], sizes = [2, 1], strides = [1, 1]} : vector<2x10xf32> to vector<2x1xf32>
    %2836 = vector.broadcast %2835 : vector<2x1xf32> to vector<2x40xf32>
    %2837 = vector.broadcast %18 : vector<1x40xf32> to vector<2x40xf32>
    %2838 = arith.mulf %2836, %2837 : vector<2x40xf32>
    %2839 = vector.extract_strided_slice %2681 {offsets = [0, 8], sizes = [2, 1], strides = [1, 1]} : vector<2x10xf32> to vector<2x1xf32>
    %2840 = vector.broadcast %2839 : vector<2x1xf32> to vector<2x40xf32>
    %2841 = vector.broadcast %19 : vector<1x40xf32> to vector<2x40xf32>
    %2842 = arith.mulf %2840, %2841 : vector<2x40xf32>
    %2843 = vector.extract_strided_slice %2681 {offsets = [0, 9], sizes = [2, 1], strides = [1, 1]} : vector<2x10xf32> to vector<2x1xf32>
    %2844 = vector.broadcast %2843 : vector<2x1xf32> to vector<2x40xf32>
    %2845 = vector.broadcast %20 : vector<1x40xf32> to vector<2x40xf32>
    %2846 = arith.mulf %2844, %2845 : vector<2x40xf32>
    %2847 = arith.addf %2810, %2814 : vector<2x40xf32>
    %2848 = arith.addf %2818, %2822 : vector<2x40xf32>
    %2849 = arith.addf %2826, %2830 : vector<2x40xf32>
    %2850 = arith.addf %2834, %2838 : vector<2x40xf32>
    %2851 = arith.addf %2842, %2846 : vector<2x40xf32>
    %2852 = arith.addf %2847, %2848 : vector<2x40xf32>
    %2853 = arith.addf %2849, %2850 : vector<2x40xf32>
    %2854 = arith.addf %2852, %2853 : vector<2x40xf32>
    %2855 = arith.addf %2854, %2851 : vector<2x40xf32>
    %2856 = arith.addf %2806, %2855 : vector<2x40xf32>
    %2857 = math.tanh %2856 : vector<2x40xf32>
    %2858 = vector.extract_strided_slice %2857 {offsets = [0, 0], sizes = [2, 10], strides = [1, 1]} : vector<2x40xf32> to vector<2x10xf32>
    %cst_197 = arith.constant 1.000000e+00 : f32
    %2859 = vector.broadcast %cst_197 : f32 to vector<2x10xf32>
    %2860 = arith.addf %2858, %2859 : vector<2x10xf32>
    %cst_198 = arith.constant 5.000000e-01 : f32
    %2861 = vector.broadcast %cst_198 : f32 to vector<2x10xf32>
    %2862 = arith.mulf %2861, %2860 : vector<2x10xf32>
    %2863 = vector.extract_strided_slice %2857 {offsets = [0, 10], sizes = [2, 10], strides = [1, 1]} : vector<2x40xf32> to vector<2x10xf32>
    %cst_199 = arith.constant 1.000000e+00 : f32
    %2864 = vector.broadcast %cst_199 : f32 to vector<2x10xf32>
    %2865 = arith.addf %2863, %2864 : vector<2x10xf32>
    %cst_200 = arith.constant 5.000000e-01 : f32
    %2866 = vector.broadcast %cst_200 : f32 to vector<2x10xf32>
    %2867 = arith.mulf %2866, %2865 : vector<2x10xf32>
    %2868 = vector.extract_strided_slice %2857 {offsets = [0, 20], sizes = [2, 10], strides = [1, 1]} : vector<2x40xf32> to vector<2x10xf32>
    %2869 = vector.extract_strided_slice %2857 {offsets = [0, 30], sizes = [2, 10], strides = [1, 1]} : vector<2x40xf32> to vector<2x10xf32>
    %cst_201 = arith.constant 1.000000e+00 : f32
    %2870 = vector.broadcast %cst_201 : f32 to vector<2x10xf32>
    %2871 = arith.addf %2869, %2870 : vector<2x10xf32>
    %cst_202 = arith.constant 5.000000e-01 : f32
    %2872 = vector.broadcast %cst_202 : f32 to vector<2x10xf32>
    %2873 = arith.mulf %2872, %2871 : vector<2x10xf32>
    %2874 = arith.mulf %2867, %2679 : vector<2x10xf32>
    %2875 = arith.mulf %2862, %2868 : vector<2x10xf32>
    %2876 = arith.addf %2874, %2875 : vector<2x10xf32>
    %2877 = math.tanh %2876 : vector<2x10xf32>
    %2878 = arith.mulf %2873, %2877 : vector<2x10xf32>
    %2879 = vector.extract_strided_slice %2878 {offsets = [0, 0], sizes = [2, 1], strides = [1, 1]} : vector<2x10xf32> to vector<2x1xf32>
    %2880 = vector.broadcast %2879 : vector<2x1xf32> to vector<2x40xf32>
    %2881 = vector.broadcast %31 : vector<1x40xf32> to vector<2x40xf32>
    %2882 = arith.mulf %2880, %2881 : vector<2x40xf32>
    %2883 = vector.extract_strided_slice %2878 {offsets = [0, 1], sizes = [2, 1], strides = [1, 1]} : vector<2x10xf32> to vector<2x1xf32>
    %2884 = vector.broadcast %2883 : vector<2x1xf32> to vector<2x40xf32>
    %2885 = vector.broadcast %32 : vector<1x40xf32> to vector<2x40xf32>
    %2886 = arith.mulf %2884, %2885 : vector<2x40xf32>
    %2887 = vector.extract_strided_slice %2878 {offsets = [0, 2], sizes = [2, 1], strides = [1, 1]} : vector<2x10xf32> to vector<2x1xf32>
    %2888 = vector.broadcast %2887 : vector<2x1xf32> to vector<2x40xf32>
    %2889 = vector.broadcast %33 : vector<1x40xf32> to vector<2x40xf32>
    %2890 = arith.mulf %2888, %2889 : vector<2x40xf32>
    %2891 = vector.extract_strided_slice %2878 {offsets = [0, 3], sizes = [2, 1], strides = [1, 1]} : vector<2x10xf32> to vector<2x1xf32>
    %2892 = vector.broadcast %2891 : vector<2x1xf32> to vector<2x40xf32>
    %2893 = vector.broadcast %34 : vector<1x40xf32> to vector<2x40xf32>
    %2894 = arith.mulf %2892, %2893 : vector<2x40xf32>
    %2895 = vector.extract_strided_slice %2878 {offsets = [0, 4], sizes = [2, 1], strides = [1, 1]} : vector<2x10xf32> to vector<2x1xf32>
    %2896 = vector.broadcast %2895 : vector<2x1xf32> to vector<2x40xf32>
    %2897 = vector.broadcast %35 : vector<1x40xf32> to vector<2x40xf32>
    %2898 = arith.mulf %2896, %2897 : vector<2x40xf32>
    %2899 = vector.extract_strided_slice %2878 {offsets = [0, 5], sizes = [2, 1], strides = [1, 1]} : vector<2x10xf32> to vector<2x1xf32>
    %2900 = vector.broadcast %2899 : vector<2x1xf32> to vector<2x40xf32>
    %2901 = vector.broadcast %36 : vector<1x40xf32> to vector<2x40xf32>
    %2902 = arith.mulf %2900, %2901 : vector<2x40xf32>
    %2903 = vector.extract_strided_slice %2878 {offsets = [0, 6], sizes = [2, 1], strides = [1, 1]} : vector<2x10xf32> to vector<2x1xf32>
    %2904 = vector.broadcast %2903 : vector<2x1xf32> to vector<2x40xf32>
    %2905 = vector.broadcast %37 : vector<1x40xf32> to vector<2x40xf32>
    %2906 = arith.mulf %2904, %2905 : vector<2x40xf32>
    %2907 = vector.extract_strided_slice %2878 {offsets = [0, 7], sizes = [2, 1], strides = [1, 1]} : vector<2x10xf32> to vector<2x1xf32>
    %2908 = vector.broadcast %2907 : vector<2x1xf32> to vector<2x40xf32>
    %2909 = vector.broadcast %38 : vector<1x40xf32> to vector<2x40xf32>
    %2910 = arith.mulf %2908, %2909 : vector<2x40xf32>
    %2911 = vector.extract_strided_slice %2878 {offsets = [0, 8], sizes = [2, 1], strides = [1, 1]} : vector<2x10xf32> to vector<2x1xf32>
    %2912 = vector.broadcast %2911 : vector<2x1xf32> to vector<2x40xf32>
    %2913 = vector.broadcast %39 : vector<1x40xf32> to vector<2x40xf32>
    %2914 = arith.mulf %2912, %2913 : vector<2x40xf32>
    %2915 = vector.extract_strided_slice %2878 {offsets = [0, 9], sizes = [2, 1], strides = [1, 1]} : vector<2x10xf32> to vector<2x1xf32>
    %2916 = vector.broadcast %2915 : vector<2x1xf32> to vector<2x40xf32>
    %2917 = vector.broadcast %40 : vector<1x40xf32> to vector<2x40xf32>
    %2918 = arith.mulf %2916, %2917 : vector<2x40xf32>
    %2919 = arith.addf %2882, %2886 : vector<2x40xf32>
    %2920 = arith.addf %2890, %2894 : vector<2x40xf32>
    %2921 = arith.addf %2898, %2902 : vector<2x40xf32>
    %2922 = arith.addf %2906, %2910 : vector<2x40xf32>
    %2923 = arith.addf %2914, %2918 : vector<2x40xf32>
    %2924 = arith.addf %2919, %2920 : vector<2x40xf32>
    %2925 = arith.addf %2921, %2922 : vector<2x40xf32>
    %2926 = arith.addf %2924, %2925 : vector<2x40xf32>
    %2927 = arith.addf %2926, %2923 : vector<2x40xf32>
    %2928 = vector.broadcast %2 : vector<1x40xf32> to vector<2x40xf32>
    %2929 = arith.addf %2927, %2928 : vector<2x40xf32>
    %2930 = vector.extract_strided_slice %2804 {offsets = [0, 0], sizes = [2, 1], strides = [1, 1]} : vector<2x10xf32> to vector<2x1xf32>
    %2931 = vector.broadcast %2930 : vector<2x1xf32> to vector<2x40xf32>
    %2932 = vector.broadcast %21 : vector<1x40xf32> to vector<2x40xf32>
    %2933 = arith.mulf %2931, %2932 : vector<2x40xf32>
    %2934 = vector.extract_strided_slice %2804 {offsets = [0, 1], sizes = [2, 1], strides = [1, 1]} : vector<2x10xf32> to vector<2x1xf32>
    %2935 = vector.broadcast %2934 : vector<2x1xf32> to vector<2x40xf32>
    %2936 = vector.broadcast %22 : vector<1x40xf32> to vector<2x40xf32>
    %2937 = arith.mulf %2935, %2936 : vector<2x40xf32>
    %2938 = vector.extract_strided_slice %2804 {offsets = [0, 2], sizes = [2, 1], strides = [1, 1]} : vector<2x10xf32> to vector<2x1xf32>
    %2939 = vector.broadcast %2938 : vector<2x1xf32> to vector<2x40xf32>
    %2940 = vector.broadcast %23 : vector<1x40xf32> to vector<2x40xf32>
    %2941 = arith.mulf %2939, %2940 : vector<2x40xf32>
    %2942 = vector.extract_strided_slice %2804 {offsets = [0, 3], sizes = [2, 1], strides = [1, 1]} : vector<2x10xf32> to vector<2x1xf32>
    %2943 = vector.broadcast %2942 : vector<2x1xf32> to vector<2x40xf32>
    %2944 = vector.broadcast %24 : vector<1x40xf32> to vector<2x40xf32>
    %2945 = arith.mulf %2943, %2944 : vector<2x40xf32>
    %2946 = vector.extract_strided_slice %2804 {offsets = [0, 4], sizes = [2, 1], strides = [1, 1]} : vector<2x10xf32> to vector<2x1xf32>
    %2947 = vector.broadcast %2946 : vector<2x1xf32> to vector<2x40xf32>
    %2948 = vector.broadcast %25 : vector<1x40xf32> to vector<2x40xf32>
    %2949 = arith.mulf %2947, %2948 : vector<2x40xf32>
    %2950 = vector.extract_strided_slice %2804 {offsets = [0, 5], sizes = [2, 1], strides = [1, 1]} : vector<2x10xf32> to vector<2x1xf32>
    %2951 = vector.broadcast %2950 : vector<2x1xf32> to vector<2x40xf32>
    %2952 = vector.broadcast %26 : vector<1x40xf32> to vector<2x40xf32>
    %2953 = arith.mulf %2951, %2952 : vector<2x40xf32>
    %2954 = vector.extract_strided_slice %2804 {offsets = [0, 6], sizes = [2, 1], strides = [1, 1]} : vector<2x10xf32> to vector<2x1xf32>
    %2955 = vector.broadcast %2954 : vector<2x1xf32> to vector<2x40xf32>
    %2956 = vector.broadcast %27 : vector<1x40xf32> to vector<2x40xf32>
    %2957 = arith.mulf %2955, %2956 : vector<2x40xf32>
    %2958 = vector.extract_strided_slice %2804 {offsets = [0, 7], sizes = [2, 1], strides = [1, 1]} : vector<2x10xf32> to vector<2x1xf32>
    %2959 = vector.broadcast %2958 : vector<2x1xf32> to vector<2x40xf32>
    %2960 = vector.broadcast %28 : vector<1x40xf32> to vector<2x40xf32>
    %2961 = arith.mulf %2959, %2960 : vector<2x40xf32>
    %2962 = vector.extract_strided_slice %2804 {offsets = [0, 8], sizes = [2, 1], strides = [1, 1]} : vector<2x10xf32> to vector<2x1xf32>
    %2963 = vector.broadcast %2962 : vector<2x1xf32> to vector<2x40xf32>
    %2964 = vector.broadcast %29 : vector<1x40xf32> to vector<2x40xf32>
    %2965 = arith.mulf %2963, %2964 : vector<2x40xf32>
    %2966 = vector.extract_strided_slice %2804 {offsets = [0, 9], sizes = [2, 1], strides = [1, 1]} : vector<2x10xf32> to vector<2x1xf32>
    %2967 = vector.broadcast %2966 : vector<2x1xf32> to vector<2x40xf32>
    %2968 = vector.broadcast %30 : vector<1x40xf32> to vector<2x40xf32>
    %2969 = arith.mulf %2967, %2968 : vector<2x40xf32>
    %2970 = arith.addf %2933, %2937 : vector<2x40xf32>
    %2971 = arith.addf %2941, %2945 : vector<2x40xf32>
    %2972 = arith.addf %2949, %2953 : vector<2x40xf32>
    %2973 = arith.addf %2957, %2961 : vector<2x40xf32>
    %2974 = arith.addf %2965, %2969 : vector<2x40xf32>
    %2975 = arith.addf %2970, %2971 : vector<2x40xf32>
    %2976 = arith.addf %2972, %2973 : vector<2x40xf32>
    %2977 = arith.addf %2975, %2976 : vector<2x40xf32>
    %2978 = arith.addf %2977, %2974 : vector<2x40xf32>
    %2979 = arith.addf %2929, %2978 : vector<2x40xf32>
    %2980 = math.tanh %2979 : vector<2x40xf32>
    %2981 = vector.extract_strided_slice %2980 {offsets = [0, 0], sizes = [2, 10], strides = [1, 1]} : vector<2x40xf32> to vector<2x10xf32>
    %cst_203 = arith.constant 1.000000e+00 : f32
    %2982 = vector.broadcast %cst_203 : f32 to vector<2x10xf32>
    %2983 = arith.addf %2981, %2982 : vector<2x10xf32>
    %cst_204 = arith.constant 5.000000e-01 : f32
    %2984 = vector.broadcast %cst_204 : f32 to vector<2x10xf32>
    %2985 = arith.mulf %2984, %2983 : vector<2x10xf32>
    %2986 = vector.extract_strided_slice %2980 {offsets = [0, 10], sizes = [2, 10], strides = [1, 1]} : vector<2x40xf32> to vector<2x10xf32>
    %cst_205 = arith.constant 1.000000e+00 : f32
    %2987 = vector.broadcast %cst_205 : f32 to vector<2x10xf32>
    %2988 = arith.addf %2986, %2987 : vector<2x10xf32>
    %cst_206 = arith.constant 5.000000e-01 : f32
    %2989 = vector.broadcast %cst_206 : f32 to vector<2x10xf32>
    %2990 = arith.mulf %2989, %2988 : vector<2x10xf32>
    %2991 = vector.extract_strided_slice %2980 {offsets = [0, 20], sizes = [2, 10], strides = [1, 1]} : vector<2x40xf32> to vector<2x10xf32>
    %2992 = vector.extract_strided_slice %2980 {offsets = [0, 30], sizes = [2, 10], strides = [1, 1]} : vector<2x40xf32> to vector<2x10xf32>
    %cst_207 = arith.constant 1.000000e+00 : f32
    %2993 = vector.broadcast %cst_207 : f32 to vector<2x10xf32>
    %2994 = arith.addf %2992, %2993 : vector<2x10xf32>
    %cst_208 = arith.constant 5.000000e-01 : f32
    %2995 = vector.broadcast %cst_208 : f32 to vector<2x10xf32>
    %2996 = arith.mulf %2995, %2994 : vector<2x10xf32>
    %2997 = arith.mulf %2990, %2802 : vector<2x10xf32>
    %2998 = arith.mulf %2985, %2991 : vector<2x10xf32>
    %2999 = arith.addf %2997, %2998 : vector<2x10xf32>
    %3000 = math.tanh %2999 : vector<2x10xf32>
    %3001 = arith.mulf %2996, %3000 : vector<2x10xf32>
    %c28 = arith.constant 28 : index
    %c0_209 = arith.constant 0 : index
    %3002 = vector.load %arg5[%c28, %c0_209] : memref<32x10xf32, #tpu.memory_space<vmem>>, vector<2x10xf32>
    tpu.vector_store %arg5[%c28, %c0_209], %3001 {strides = array<i32>} : memref<32x10xf32, #tpu.memory_space<vmem>>, vector<2x10xf32>,
    %3003 = vector.extract_strided_slice %46 {offsets = [30, 0], sizes = [2, 40], strides = [1, 1]} : vector<32x40xf32> to vector<2x40xf32>
    %3004 = vector.extract_strided_slice %2878 {offsets = [0, 0], sizes = [2, 1], strides = [1, 1]} : vector<2x10xf32> to vector<2x1xf32>
    %3005 = vector.broadcast %3004 : vector<2x1xf32> to vector<2x40xf32>
    %3006 = vector.broadcast %11 : vector<1x40xf32> to vector<2x40xf32>
    %3007 = arith.mulf %3005, %3006 : vector<2x40xf32>
    %3008 = vector.extract_strided_slice %2878 {offsets = [0, 1], sizes = [2, 1], strides = [1, 1]} : vector<2x10xf32> to vector<2x1xf32>
    %3009 = vector.broadcast %3008 : vector<2x1xf32> to vector<2x40xf32>
    %3010 = vector.broadcast %12 : vector<1x40xf32> to vector<2x40xf32>
    %3011 = arith.mulf %3009, %3010 : vector<2x40xf32>
    %3012 = vector.extract_strided_slice %2878 {offsets = [0, 2], sizes = [2, 1], strides = [1, 1]} : vector<2x10xf32> to vector<2x1xf32>
    %3013 = vector.broadcast %3012 : vector<2x1xf32> to vector<2x40xf32>
    %3014 = vector.broadcast %13 : vector<1x40xf32> to vector<2x40xf32>
    %3015 = arith.mulf %3013, %3014 : vector<2x40xf32>
    %3016 = vector.extract_strided_slice %2878 {offsets = [0, 3], sizes = [2, 1], strides = [1, 1]} : vector<2x10xf32> to vector<2x1xf32>
    %3017 = vector.broadcast %3016 : vector<2x1xf32> to vector<2x40xf32>
    %3018 = vector.broadcast %14 : vector<1x40xf32> to vector<2x40xf32>
    %3019 = arith.mulf %3017, %3018 : vector<2x40xf32>
    %3020 = vector.extract_strided_slice %2878 {offsets = [0, 4], sizes = [2, 1], strides = [1, 1]} : vector<2x10xf32> to vector<2x1xf32>
    %3021 = vector.broadcast %3020 : vector<2x1xf32> to vector<2x40xf32>
    %3022 = vector.broadcast %15 : vector<1x40xf32> to vector<2x40xf32>
    %3023 = arith.mulf %3021, %3022 : vector<2x40xf32>
    %3024 = vector.extract_strided_slice %2878 {offsets = [0, 5], sizes = [2, 1], strides = [1, 1]} : vector<2x10xf32> to vector<2x1xf32>
    %3025 = vector.broadcast %3024 : vector<2x1xf32> to vector<2x40xf32>
    %3026 = vector.broadcast %16 : vector<1x40xf32> to vector<2x40xf32>
    %3027 = arith.mulf %3025, %3026 : vector<2x40xf32>
    %3028 = vector.extract_strided_slice %2878 {offsets = [0, 6], sizes = [2, 1], strides = [1, 1]} : vector<2x10xf32> to vector<2x1xf32>
    %3029 = vector.broadcast %3028 : vector<2x1xf32> to vector<2x40xf32>
    %3030 = vector.broadcast %17 : vector<1x40xf32> to vector<2x40xf32>
    %3031 = arith.mulf %3029, %3030 : vector<2x40xf32>
    %3032 = vector.extract_strided_slice %2878 {offsets = [0, 7], sizes = [2, 1], strides = [1, 1]} : vector<2x10xf32> to vector<2x1xf32>
    %3033 = vector.broadcast %3032 : vector<2x1xf32> to vector<2x40xf32>
    %3034 = vector.broadcast %18 : vector<1x40xf32> to vector<2x40xf32>
    %3035 = arith.mulf %3033, %3034 : vector<2x40xf32>
    %3036 = vector.extract_strided_slice %2878 {offsets = [0, 8], sizes = [2, 1], strides = [1, 1]} : vector<2x10xf32> to vector<2x1xf32>
    %3037 = vector.broadcast %3036 : vector<2x1xf32> to vector<2x40xf32>
    %3038 = vector.broadcast %19 : vector<1x40xf32> to vector<2x40xf32>
    %3039 = arith.mulf %3037, %3038 : vector<2x40xf32>
    %3040 = vector.extract_strided_slice %2878 {offsets = [0, 9], sizes = [2, 1], strides = [1, 1]} : vector<2x10xf32> to vector<2x1xf32>
    %3041 = vector.broadcast %3040 : vector<2x1xf32> to vector<2x40xf32>
    %3042 = vector.broadcast %20 : vector<1x40xf32> to vector<2x40xf32>
    %3043 = arith.mulf %3041, %3042 : vector<2x40xf32>
    %3044 = arith.addf %3007, %3011 : vector<2x40xf32>
    %3045 = arith.addf %3015, %3019 : vector<2x40xf32>
    %3046 = arith.addf %3023, %3027 : vector<2x40xf32>
    %3047 = arith.addf %3031, %3035 : vector<2x40xf32>
    %3048 = arith.addf %3039, %3043 : vector<2x40xf32>
    %3049 = arith.addf %3044, %3045 : vector<2x40xf32>
    %3050 = arith.addf %3046, %3047 : vector<2x40xf32>
    %3051 = arith.addf %3049, %3050 : vector<2x40xf32>
    %3052 = arith.addf %3051, %3048 : vector<2x40xf32>
    %3053 = arith.addf %3003, %3052 : vector<2x40xf32>
    %3054 = math.tanh %3053 : vector<2x40xf32>
    %3055 = vector.extract_strided_slice %3054 {offsets = [0, 0], sizes = [2, 10], strides = [1, 1]} : vector<2x40xf32> to vector<2x10xf32>
    %cst_210 = arith.constant 1.000000e+00 : f32
    %3056 = vector.broadcast %cst_210 : f32 to vector<2x10xf32>
    %3057 = arith.addf %3055, %3056 : vector<2x10xf32>
    %cst_211 = arith.constant 5.000000e-01 : f32
    %3058 = vector.broadcast %cst_211 : f32 to vector<2x10xf32>
    %3059 = arith.mulf %3058, %3057 : vector<2x10xf32>
    %3060 = vector.extract_strided_slice %3054 {offsets = [0, 10], sizes = [2, 10], strides = [1, 1]} : vector<2x40xf32> to vector<2x10xf32>
    %cst_212 = arith.constant 1.000000e+00 : f32
    %3061 = vector.broadcast %cst_212 : f32 to vector<2x10xf32>
    %3062 = arith.addf %3060, %3061 : vector<2x10xf32>
    %cst_213 = arith.constant 5.000000e-01 : f32
    %3063 = vector.broadcast %cst_213 : f32 to vector<2x10xf32>
    %3064 = arith.mulf %3063, %3062 : vector<2x10xf32>
    %3065 = vector.extract_strided_slice %3054 {offsets = [0, 20], sizes = [2, 10], strides = [1, 1]} : vector<2x40xf32> to vector<2x10xf32>
    %3066 = vector.extract_strided_slice %3054 {offsets = [0, 30], sizes = [2, 10], strides = [1, 1]} : vector<2x40xf32> to vector<2x10xf32>
    %cst_214 = arith.constant 1.000000e+00 : f32
    %3067 = vector.broadcast %cst_214 : f32 to vector<2x10xf32>
    %3068 = arith.addf %3066, %3067 : vector<2x10xf32>
    %cst_215 = arith.constant 5.000000e-01 : f32
    %3069 = vector.broadcast %cst_215 : f32 to vector<2x10xf32>
    %3070 = arith.mulf %3069, %3068 : vector<2x10xf32>
    %3071 = arith.mulf %3064, %2876 : vector<2x10xf32>
    %3072 = arith.mulf %3059, %3065 : vector<2x10xf32>
    %3073 = arith.addf %3071, %3072 : vector<2x10xf32>
    %3074 = math.tanh %3073 : vector<2x10xf32>
    %3075 = arith.mulf %3070, %3074 : vector<2x10xf32>
    %3076 = vector.extract_strided_slice %3075 {offsets = [0, 0], sizes = [2, 1], strides = [1, 1]} : vector<2x10xf32> to vector<2x1xf32>
    %3077 = vector.broadcast %3076 : vector<2x1xf32> to vector<2x40xf32>
    %3078 = vector.broadcast %31 : vector<1x40xf32> to vector<2x40xf32>
    %3079 = arith.mulf %3077, %3078 : vector<2x40xf32>
    %3080 = vector.extract_strided_slice %3075 {offsets = [0, 1], sizes = [2, 1], strides = [1, 1]} : vector<2x10xf32> to vector<2x1xf32>
    %3081 = vector.broadcast %3080 : vector<2x1xf32> to vector<2x40xf32>
    %3082 = vector.broadcast %32 : vector<1x40xf32> to vector<2x40xf32>
    %3083 = arith.mulf %3081, %3082 : vector<2x40xf32>
    %3084 = vector.extract_strided_slice %3075 {offsets = [0, 2], sizes = [2, 1], strides = [1, 1]} : vector<2x10xf32> to vector<2x1xf32>
    %3085 = vector.broadcast %3084 : vector<2x1xf32> to vector<2x40xf32>
    %3086 = vector.broadcast %33 : vector<1x40xf32> to vector<2x40xf32>
    %3087 = arith.mulf %3085, %3086 : vector<2x40xf32>
    %3088 = vector.extract_strided_slice %3075 {offsets = [0, 3], sizes = [2, 1], strides = [1, 1]} : vector<2x10xf32> to vector<2x1xf32>
    %3089 = vector.broadcast %3088 : vector<2x1xf32> to vector<2x40xf32>
    %3090 = vector.broadcast %34 : vector<1x40xf32> to vector<2x40xf32>
    %3091 = arith.mulf %3089, %3090 : vector<2x40xf32>
    %3092 = vector.extract_strided_slice %3075 {offsets = [0, 4], sizes = [2, 1], strides = [1, 1]} : vector<2x10xf32> to vector<2x1xf32>
    %3093 = vector.broadcast %3092 : vector<2x1xf32> to vector<2x40xf32>
    %3094 = vector.broadcast %35 : vector<1x40xf32> to vector<2x40xf32>
    %3095 = arith.mulf %3093, %3094 : vector<2x40xf32>
    %3096 = vector.extract_strided_slice %3075 {offsets = [0, 5], sizes = [2, 1], strides = [1, 1]} : vector<2x10xf32> to vector<2x1xf32>
    %3097 = vector.broadcast %3096 : vector<2x1xf32> to vector<2x40xf32>
    %3098 = vector.broadcast %36 : vector<1x40xf32> to vector<2x40xf32>
    %3099 = arith.mulf %3097, %3098 : vector<2x40xf32>
    %3100 = vector.extract_strided_slice %3075 {offsets = [0, 6], sizes = [2, 1], strides = [1, 1]} : vector<2x10xf32> to vector<2x1xf32>
    %3101 = vector.broadcast %3100 : vector<2x1xf32> to vector<2x40xf32>
    %3102 = vector.broadcast %37 : vector<1x40xf32> to vector<2x40xf32>
    %3103 = arith.mulf %3101, %3102 : vector<2x40xf32>
    %3104 = vector.extract_strided_slice %3075 {offsets = [0, 7], sizes = [2, 1], strides = [1, 1]} : vector<2x10xf32> to vector<2x1xf32>
    %3105 = vector.broadcast %3104 : vector<2x1xf32> to vector<2x40xf32>
    %3106 = vector.broadcast %38 : vector<1x40xf32> to vector<2x40xf32>
    %3107 = arith.mulf %3105, %3106 : vector<2x40xf32>
    %3108 = vector.extract_strided_slice %3075 {offsets = [0, 8], sizes = [2, 1], strides = [1, 1]} : vector<2x10xf32> to vector<2x1xf32>
    %3109 = vector.broadcast %3108 : vector<2x1xf32> to vector<2x40xf32>
    %3110 = vector.broadcast %39 : vector<1x40xf32> to vector<2x40xf32>
    %3111 = arith.mulf %3109, %3110 : vector<2x40xf32>
    %3112 = vector.extract_strided_slice %3075 {offsets = [0, 9], sizes = [2, 1], strides = [1, 1]} : vector<2x10xf32> to vector<2x1xf32>
    %3113 = vector.broadcast %3112 : vector<2x1xf32> to vector<2x40xf32>
    %3114 = vector.broadcast %40 : vector<1x40xf32> to vector<2x40xf32>
    %3115 = arith.mulf %3113, %3114 : vector<2x40xf32>
    %3116 = arith.addf %3079, %3083 : vector<2x40xf32>
    %3117 = arith.addf %3087, %3091 : vector<2x40xf32>
    %3118 = arith.addf %3095, %3099 : vector<2x40xf32>
    %3119 = arith.addf %3103, %3107 : vector<2x40xf32>
    %3120 = arith.addf %3111, %3115 : vector<2x40xf32>
    %3121 = arith.addf %3116, %3117 : vector<2x40xf32>
    %3122 = arith.addf %3118, %3119 : vector<2x40xf32>
    %3123 = arith.addf %3121, %3122 : vector<2x40xf32>
    %3124 = arith.addf %3123, %3120 : vector<2x40xf32>
    %3125 = vector.broadcast %2 : vector<1x40xf32> to vector<2x40xf32>
    %3126 = arith.addf %3124, %3125 : vector<2x40xf32>
    %3127 = vector.extract_strided_slice %3001 {offsets = [0, 0], sizes = [2, 1], strides = [1, 1]} : vector<2x10xf32> to vector<2x1xf32>
    %3128 = vector.broadcast %3127 : vector<2x1xf32> to vector<2x40xf32>
    %3129 = vector.broadcast %21 : vector<1x40xf32> to vector<2x40xf32>
    %3130 = arith.mulf %3128, %3129 : vector<2x40xf32>
    %3131 = vector.extract_strided_slice %3001 {offsets = [0, 1], sizes = [2, 1], strides = [1, 1]} : vector<2x10xf32> to vector<2x1xf32>
    %3132 = vector.broadcast %3131 : vector<2x1xf32> to vector<2x40xf32>
    %3133 = vector.broadcast %22 : vector<1x40xf32> to vector<2x40xf32>
    %3134 = arith.mulf %3132, %3133 : vector<2x40xf32>
    %3135 = vector.extract_strided_slice %3001 {offsets = [0, 2], sizes = [2, 1], strides = [1, 1]} : vector<2x10xf32> to vector<2x1xf32>
    %3136 = vector.broadcast %3135 : vector<2x1xf32> to vector<2x40xf32>
    %3137 = vector.broadcast %23 : vector<1x40xf32> to vector<2x40xf32>
    %3138 = arith.mulf %3136, %3137 : vector<2x40xf32>
    %3139 = vector.extract_strided_slice %3001 {offsets = [0, 3], sizes = [2, 1], strides = [1, 1]} : vector<2x10xf32> to vector<2x1xf32>
    %3140 = vector.broadcast %3139 : vector<2x1xf32> to vector<2x40xf32>
    %3141 = vector.broadcast %24 : vector<1x40xf32> to vector<2x40xf32>
    %3142 = arith.mulf %3140, %3141 : vector<2x40xf32>
    %3143 = vector.extract_strided_slice %3001 {offsets = [0, 4], sizes = [2, 1], strides = [1, 1]} : vector<2x10xf32> to vector<2x1xf32>
    %3144 = vector.broadcast %3143 : vector<2x1xf32> to vector<2x40xf32>
    %3145 = vector.broadcast %25 : vector<1x40xf32> to vector<2x40xf32>
    %3146 = arith.mulf %3144, %3145 : vector<2x40xf32>
    %3147 = vector.extract_strided_slice %3001 {offsets = [0, 5], sizes = [2, 1], strides = [1, 1]} : vector<2x10xf32> to vector<2x1xf32>
    %3148 = vector.broadcast %3147 : vector<2x1xf32> to vector<2x40xf32>
    %3149 = vector.broadcast %26 : vector<1x40xf32> to vector<2x40xf32>
    %3150 = arith.mulf %3148, %3149 : vector<2x40xf32>
    %3151 = vector.extract_strided_slice %3001 {offsets = [0, 6], sizes = [2, 1], strides = [1, 1]} : vector<2x10xf32> to vector<2x1xf32>
    %3152 = vector.broadcast %3151 : vector<2x1xf32> to vector<2x40xf32>
    %3153 = vector.broadcast %27 : vector<1x40xf32> to vector<2x40xf32>
    %3154 = arith.mulf %3152, %3153 : vector<2x40xf32>
    %3155 = vector.extract_strided_slice %3001 {offsets = [0, 7], sizes = [2, 1], strides = [1, 1]} : vector<2x10xf32> to vector<2x1xf32>
    %3156 = vector.broadcast %3155 : vector<2x1xf32> to vector<2x40xf32>
    %3157 = vector.broadcast %28 : vector<1x40xf32> to vector<2x40xf32>
    %3158 = arith.mulf %3156, %3157 : vector<2x40xf32>
    %3159 = vector.extract_strided_slice %3001 {offsets = [0, 8], sizes = [2, 1], strides = [1, 1]} : vector<2x10xf32> to vector<2x1xf32>
    %3160 = vector.broadcast %3159 : vector<2x1xf32> to vector<2x40xf32>
    %3161 = vector.broadcast %29 : vector<1x40xf32> to vector<2x40xf32>
    %3162 = arith.mulf %3160, %3161 : vector<2x40xf32>
    %3163 = vector.extract_strided_slice %3001 {offsets = [0, 9], sizes = [2, 1], strides = [1, 1]} : vector<2x10xf32> to vector<2x1xf32>
    %3164 = vector.broadcast %3163 : vector<2x1xf32> to vector<2x40xf32>
    %3165 = vector.broadcast %30 : vector<1x40xf32> to vector<2x40xf32>
    %3166 = arith.mulf %3164, %3165 : vector<2x40xf32>
    %3167 = arith.addf %3130, %3134 : vector<2x40xf32>
    %3168 = arith.addf %3138, %3142 : vector<2x40xf32>
    %3169 = arith.addf %3146, %3150 : vector<2x40xf32>
    %3170 = arith.addf %3154, %3158 : vector<2x40xf32>
    %3171 = arith.addf %3162, %3166 : vector<2x40xf32>
    %3172 = arith.addf %3167, %3168 : vector<2x40xf32>
    %3173 = arith.addf %3169, %3170 : vector<2x40xf32>
    %3174 = arith.addf %3172, %3173 : vector<2x40xf32>
    %3175 = arith.addf %3174, %3171 : vector<2x40xf32>
    %3176 = arith.addf %3126, %3175 : vector<2x40xf32>
    %3177 = math.tanh %3176 : vector<2x40xf32>
    %3178 = vector.extract_strided_slice %3177 {offsets = [0, 0], sizes = [2, 10], strides = [1, 1]} : vector<2x40xf32> to vector<2x10xf32>
    %cst_216 = arith.constant 1.000000e+00 : f32
    %3179 = vector.broadcast %cst_216 : f32 to vector<2x10xf32>
    %3180 = arith.addf %3178, %3179 : vector<2x10xf32>
    %cst_217 = arith.constant 5.000000e-01 : f32
    %3181 = vector.broadcast %cst_217 : f32 to vector<2x10xf32>
    %3182 = arith.mulf %3181, %3180 : vector<2x10xf32>
    %3183 = vector.extract_strided_slice %3177 {offsets = [0, 10], sizes = [2, 10], strides = [1, 1]} : vector<2x40xf32> to vector<2x10xf32>
    %cst_218 = arith.constant 1.000000e+00 : f32
    %3184 = vector.broadcast %cst_218 : f32 to vector<2x10xf32>
    %3185 = arith.addf %3183, %3184 : vector<2x10xf32>
    %cst_219 = arith.constant 5.000000e-01 : f32
    %3186 = vector.broadcast %cst_219 : f32 to vector<2x10xf32>
    %3187 = arith.mulf %3186, %3185 : vector<2x10xf32>
    %3188 = vector.extract_strided_slice %3177 {offsets = [0, 20], sizes = [2, 10], strides = [1, 1]} : vector<2x40xf32> to vector<2x10xf32>
    %3189 = vector.extract_strided_slice %3177 {offsets = [0, 30], sizes = [2, 10], strides = [1, 1]} : vector<2x40xf32> to vector<2x10xf32>
    %cst_220 = arith.constant 1.000000e+00 : f32
    %3190 = vector.broadcast %cst_220 : f32 to vector<2x10xf32>
    %3191 = arith.addf %3189, %3190 : vector<2x10xf32>
    %cst_221 = arith.constant 5.000000e-01 : f32
    %3192 = vector.broadcast %cst_221 : f32 to vector<2x10xf32>
    %3193 = arith.mulf %3192, %3191 : vector<2x10xf32>
    %3194 = arith.mulf %3187, %2999 : vector<2x10xf32>
    %3195 = arith.mulf %3182, %3188 : vector<2x10xf32>
    %3196 = arith.addf %3194, %3195 : vector<2x10xf32>
    %3197 = math.tanh %3196 : vector<2x10xf32>
    %3198 = arith.mulf %3193, %3197 : vector<2x10xf32>
    %c30 = arith.constant 30 : index
    %c0_222 = arith.constant 0 : index
    %3199 = vector.load %arg5[%c30, %c0_222] : memref<32x10xf32, #tpu.memory_space<vmem>>, vector<2x10xf32>
    tpu.vector_store %arg5[%c30, %c0_222], %3198 {strides = array<i32>} : memref<32x10xf32, #tpu.memory_space<vmem>>, vector<2x10xf32>,
    %c0_223 = arith.constant 0 : index
    %c0_224 = arith.constant 0 : index
    %3200 = vector.load %arg5[%c0_223, %c0_224] : memref<32x10xf32, #tpu.memory_space<vmem>>, vector<32x10xf32>
    %cst_225 = arith.constant dense<0.000000e+00> : vector<32x10xf32>
    %3201 = tpu.matmul %3200, %6, %cst_225 {dimension_numbers = #tpu.dot_dimension_numbers<[1], [0], [0], [1], [0, 0, 1, 1], [], []>} : vector<32x10xf32>, vector<10x10xf32>, vector<32x10xf32> -> vector<32x10xf32>
    %3202 = vector.broadcast %7 : vector<1x10xf32> to vector<32x10xf32>
    %3203 = arith.addf %3201, %3202 : vector<32x10xf32>
    %3204 = math.tanh %3203 : vector<32x10xf32>
    %3205 = vector.broadcast %8 : vector<1x10xf32> to vector<32x10xf32>
    %3206 = arith.mulf %3204, %3205 : vector<32x10xf32>
    %cst_226 = arith.constant dense<0.000000e+00> : vector<32xf32>
    %3207 = vector.multi_reduction <add>, %3206, %cst_226 [1] : vector<32x10xf32> to vector<32xf32>
    %3208 = vector.shape_cast %3207 : vector<32xf32> to vector<32x1xf32>
    %3209 = tpu.iota {dimensions = array<i32: 0>} : vector<32x1xi32>
    %cst_227 = arith.constant dense<0xFF800000> : vector<1xf32>
    %3210 = vector.multi_reduction <maximumf>, %3208, %cst_227 [0] : vector<32x1xf32> to vector<1xf32>
    %3211 = vector.shape_cast %3210 : vector<1xf32> to vector<1x1xf32>
    %3212 = vector.broadcast %3211 : vector<1x1xf32> to vector<32x1xf32>
    %3213 = arith.subf %3208, %3212 : vector<32x1xf32>
    %3214 = math.exp %3213 : vector<32x1xf32>
    %cst_228 = arith.constant 0.000000e+00 : f32
    %3215 = vector.broadcast %cst_228 : f32 to vector<32x1xf32>
    %c2_i32 = arith.constant 2 : i32
    %c0_i32 = arith.constant 0 : i32
    %3216 = arith.cmpi eq, %c2_i32, %c0_i32 : i32
    %c1_i32 = arith.constant 1 : i32
    %3217 = arith.select %3216, %c1_i32, %c2_i32 : i32
    %3218 = vector.broadcast %3217 : i32 to vector<32x1xi32>
    %3219 = arith.remsi %3209, %3218 : vector<32x1xi32>
    %c0_i32_229 = arith.constant 0 : i32
    %3220 = vector.broadcast %c0_i32_229 : i32 to vector<32x1xi32>
    %3221 = arith.cmpi ne, %3219, %3220 : vector<32x1xi32>
    %c0_i32_230 = arith.constant 0 : i32
    %3222 = vector.broadcast %c0_i32_230 : i32 to vector<32x1xi32>
    %3223 = arith.cmpi slt, %3219, %3222 : vector<32x1xi32>
    %c0_i32_231 = arith.constant 0 : i32
    %3224 = arith.cmpi slt, %3217, %c0_i32_231 : i32
    %3225 = vector.broadcast %3224 : i1 to vector<32x1xi1>
    %3226 = vector.broadcast %3225 : vector<32x1xi1> to vector<32x1xi1>
    %3227 = arith.xori %3223, %3226 : vector<32x1xi1>
    %3228 = arith.andi %3227, %3221 : vector<32x1xi1>
    %3229 = vector.broadcast %3217 : i32 to vector<32x1xi32>
    %3230 = arith.addi %3219, %3229 : vector<32x1xi32>
    %3231 = arith.select %3228, %3230, %3219 : vector<32x1xi1>, vector<32x1xi32>
    %c0_i32_232 = arith.constant 0 : i32
    %3232 = vector.broadcast %c0_i32_232 : i32 to vector<32x1xi32>
    %3233 = arith.cmpi eq, %3231, %3232 : vector<32x1xi32>
    %cst_233 = arith.constant 0.000000e+00 : f32
    %3234 = vector.broadcast %cst_233 : f32 to vector<32x1xf32>
    %3235 = arith.select %3233, %3214, %3234 : vector<32x1xi1>, vector<32x1xf32>
    %cst_234 = arith.constant dense<0.000000e+00> : vector<1xf32>
    %3236 = vector.multi_reduction <add>, %3235, %cst_234 [0] : vector<32x1xf32> to vector<1xf32>
    %3237 = vector.shape_cast %3236 : vector<1xf32> to vector<1x1xf32>
    %cst_235 = arith.constant 0.000000e+00 : f32
    %3238 = vector.shape_cast %3237 : vector<1x1xf32> to vector<1x1xf32>
    %3239 = vector.broadcast %3238 : vector<1x1xf32> to vector<32x1xf32>
    %3240 = vector.broadcast %cst_235 : f32 to vector<32x1xf32>
    %3241 = arith.select %3233, %3239, %3240 : vector<32x1xi1>, vector<32x1xf32>
    %3242 = arith.addf %3215, %3241 : vector<32x1xf32>
    %c2_i32_236 = arith.constant 2 : i32
    %c0_i32_237 = arith.constant 0 : i32
    %3243 = arith.cmpi eq, %c2_i32_236, %c0_i32_237 : i32
    %c1_i32_238 = arith.constant 1 : i32
    %3244 = arith.select %3243, %c1_i32_238, %c2_i32_236 : i32
    %3245 = vector.broadcast %3244 : i32 to vector<32x1xi32>
    %3246 = arith.remsi %3209, %3245 : vector<32x1xi32>
    %c0_i32_239 = arith.constant 0 : i32
    %3247 = vector.broadcast %c0_i32_239 : i32 to vector<32x1xi32>
    %3248 = arith.cmpi ne, %3246, %3247 : vector<32x1xi32>
    %c0_i32_240 = arith.constant 0 : i32
    %3249 = vector.broadcast %c0_i32_240 : i32 to vector<32x1xi32>
    %3250 = arith.cmpi slt, %3246, %3249 : vector<32x1xi32>
    %c0_i32_241 = arith.constant 0 : i32
    %3251 = arith.cmpi slt, %3244, %c0_i32_241 : i32
    %3252 = vector.broadcast %3251 : i1 to vector<32x1xi1>
    %3253 = vector.broadcast %3252 : vector<32x1xi1> to vector<32x1xi1>
    %3254 = arith.xori %3250, %3253 : vector<32x1xi1>
    %3255 = arith.andi %3254, %3248 : vector<32x1xi1>
    %3256 = vector.broadcast %3244 : i32 to vector<32x1xi32>
    %3257 = arith.addi %3246, %3256 : vector<32x1xi32>
    %3258 = arith.select %3255, %3257, %3246 : vector<32x1xi1>, vector<32x1xi32>
    %c1_i32_242 = arith.constant 1 : i32
    %3259 = vector.broadcast %c1_i32_242 : i32 to vector<32x1xi32>
    %3260 = arith.cmpi eq, %3258, %3259 : vector<32x1xi32>
    %cst_243 = arith.constant 0.000000e+00 : f32
    %3261 = vector.broadcast %cst_243 : f32 to vector<32x1xf32>
    %3262 = arith.select %3260, %3214, %3261 : vector<32x1xi1>, vector<32x1xf32>
    %cst_244 = arith.constant dense<0.000000e+00> : vector<1xf32>
    %3263 = vector.multi_reduction <add>, %3262, %cst_244 [0] : vector<32x1xf32> to vector<1xf32>
    %3264 = vector.shape_cast %3263 : vector<1xf32> to vector<1x1xf32>
    %cst_245 = arith.constant 0.000000e+00 : f32
    %3265 = vector.shape_cast %3264 : vector<1x1xf32> to vector<1x1xf32>
    %3266 = vector.broadcast %3265 : vector<1x1xf32> to vector<32x1xf32>
    %3267 = vector.broadcast %cst_245 : f32 to vector<32x1xf32>
    %3268 = arith.select %3260, %3266, %3267 : vector<32x1xi1>, vector<32x1xf32>
    %3269 = arith.addf %3242, %3268 : vector<32x1xf32>
    %3270 = arith.divf %3214, %3269 : vector<32x1xf32>
    %c0_246 = arith.constant 0 : index
    %c0_247 = arith.constant 0 : index
    %3271 = vector.load %arg4[%c0_246, %c0_247] : memref<32x1xf32, #tpu.memory_space<vmem>>, vector<32x1xf32>
    tpu.vector_store %arg4[%c0_246, %c0_247], %3270 {strides = array<i32>} : memref<32x1xf32, #tpu.memory_space<vmem>>, vector<32x1xf32>,
    %3272 = vector.broadcast %3270 : vector<32x1xf32> to vector<32x10xf32>
    %3273 = arith.mulf %3272, %3200 : vector<32x10xf32>
    %c2_i32_248 = arith.constant 2 : i32
    %c0_i32_249 = arith.constant 0 : i32
    %3274 = arith.cmpi eq, %c2_i32_248, %c0_i32_249 : i32
    %c1_i32_250 = arith.constant 1 : i32
    %3275 = arith.select %3274, %c1_i32_250, %c2_i32_248 : i32
    %3276 = vector.broadcast %3275 : i32 to vector<32x1xi32>
    %3277 = arith.remsi %3209, %3276 : vector<32x1xi32>
    %c0_i32_251 = arith.constant 0 : i32
    %3278 = vector.broadcast %c0_i32_251 : i32 to vector<32x1xi32>
    %3279 = arith.cmpi ne, %3277, %3278 : vector<32x1xi32>
    %c0_i32_252 = arith.constant 0 : i32
    %3280 = vector.broadcast %c0_i32_252 : i32 to vector<32x1xi32>
    %3281 = arith.cmpi slt, %3277, %3280 : vector<32x1xi32>
    %c0_i32_253 = arith.constant 0 : i32
    %3282 = arith.cmpi slt, %3275, %c0_i32_253 : i32
    %3283 = vector.broadcast %3282 : i1 to vector<32x1xi1>
    %3284 = vector.broadcast %3283 : vector<32x1xi1> to vector<32x1xi1>
    %3285 = arith.xori %3281, %3284 : vector<32x1xi1>
    %3286 = arith.andi %3285, %3279 : vector<32x1xi1>
    %3287 = vector.broadcast %3275 : i32 to vector<32x1xi32>
    %3288 = arith.addi %3277, %3287 : vector<32x1xi32>
    %3289 = arith.select %3286, %3288, %3277 : vector<32x1xi1>, vector<32x1xi32>
    %c0_i32_254 = arith.constant 0 : i32
    %3290 = vector.broadcast %c0_i32_254 : i32 to vector<32x1xi32>
    %3291 = arith.cmpi eq, %3289, %3290 : vector<32x1xi32>
    %cst_255 = arith.constant 0.000000e+00 : f32
    %3292 = vector.shape_cast %3291 : vector<32x1xi1> to vector<32x1xi1>
    %3293 = vector.broadcast %3292 : vector<32x1xi1> to vector<32x10xi1>
    %3294 = vector.broadcast %cst_255 : f32 to vector<32x10xf32>
    %3295 = arith.select %3293, %3273, %3294 : vector<32x10xi1>, vector<32x10xf32>
    %cst_256 = arith.constant dense<0.000000e+00> : vector<10xf32>
    %3296 = vector.multi_reduction <add>, %3295, %cst_256 [0] : vector<32x10xf32> to vector<10xf32>
    %3297 = vector.shape_cast %3296 : vector<10xf32> to vector<1x10xf32>
    %c2_i32_257 = arith.constant 2 : i32
    %c0_i32_258 = arith.constant 0 : i32
    %3298 = arith.cmpi eq, %c2_i32_257, %c0_i32_258 : i32
    %c1_i32_259 = arith.constant 1 : i32
    %3299 = arith.select %3298, %c1_i32_259, %c2_i32_257 : i32
    %3300 = vector.broadcast %3299 : i32 to vector<32x1xi32>
    %3301 = arith.remsi %3209, %3300 : vector<32x1xi32>
    %c0_i32_260 = arith.constant 0 : i32
    %3302 = vector.broadcast %c0_i32_260 : i32 to vector<32x1xi32>
    %3303 = arith.cmpi ne, %3301, %3302 : vector<32x1xi32>
    %c0_i32_261 = arith.constant 0 : i32
    %3304 = vector.broadcast %c0_i32_261 : i32 to vector<32x1xi32>
    %3305 = arith.cmpi slt, %3301, %3304 : vector<32x1xi32>
    %c0_i32_262 = arith.constant 0 : i32
    %3306 = arith.cmpi slt, %3299, %c0_i32_262 : i32
    %3307 = vector.broadcast %3306 : i1 to vector<32x1xi1>
    %3308 = vector.broadcast %3307 : vector<32x1xi1> to vector<32x1xi1>
    %3309 = arith.xori %3305, %3308 : vector<32x1xi1>
    %3310 = arith.andi %3309, %3303 : vector<32x1xi1>
    %3311 = vector.broadcast %3299 : i32 to vector<32x1xi32>
    %3312 = arith.addi %3301, %3311 : vector<32x1xi32>
    %3313 = arith.select %3310, %3312, %3301 : vector<32x1xi1>, vector<32x1xi32>
    %c1_i32_263 = arith.constant 1 : i32
    %3314 = vector.broadcast %c1_i32_263 : i32 to vector<32x1xi32>
    %3315 = arith.cmpi eq, %3313, %3314 : vector<32x1xi32>
    %cst_264 = arith.constant 0.000000e+00 : f32
    %3316 = vector.shape_cast %3315 : vector<32x1xi1> to vector<32x1xi1>
    %3317 = vector.broadcast %3316 : vector<32x1xi1> to vector<32x10xi1>
    %3318 = vector.broadcast %cst_264 : f32 to vector<32x10xf32>
    %3319 = arith.select %3317, %3273, %3318 : vector<32x10xi1>, vector<32x10xf32>
    %cst_265 = arith.constant dense<0.000000e+00> : vector<10xf32>
    %3320 = vector.multi_reduction <add>, %3319, %cst_265 [0] : vector<32x10xf32> to vector<10xf32>
    %3321 = vector.shape_cast %3320 : vector<10xf32> to vector<1x10xf32>
    %3322 = tpu.concatenate %3297, %3321 in 0 : vector<1x10xf32>, vector<1x10xf32> -> vector<2x10xf32>
    %3323 = vector.broadcast %9 : vector<1x10xf32> to vector<2x10xf32>
    %3324 = arith.mulf %3322, %3323 : vector<2x10xf32>
    %cst_266 = arith.constant dense<0.000000e+00> : vector<2xf32>
    %3325 = vector.multi_reduction <add>, %3324, %cst_266 [1] : vector<2x10xf32> to vector<2xf32>
    %3326 = vector.shape_cast %3325 : vector<2xf32> to vector<2x1xf32>
    %3327 = vector.broadcast %10 : vector<1x1xf32> to vector<2x1xf32>
    %3328 = arith.addf %3326, %3327 : vector<2x1xf32>
    %c0_267 = arith.constant 0 : index
    %c0_268 = arith.constant 0 : index
    %3329 = vector.load %arg3[%c0_267, %c0_268] : memref<2x1xf32, #tpu.memory_space<vmem>>, vector<2x1xf32>
    tpu.vector_store %arg3[%c0_267, %c0_268], %3328 {strides = array<i32>} : memref<2x1xf32, #tpu.memory_space<vmem>>, vector<2x1xf32>,
    return
  }
  func.func @transform_0(%arg0: i32) -> (i32, i32) {
    %c0_i32 = arith.constant 0 : i32
    %c0_i32_0 = arith.constant 0 : i32
    %c0_i32_1 = arith.constant 0 : i32
    return %c0_i32, %c0_i32_0 : i32, i32
  }
  func.func @transform_1(%arg0: i32) -> (i32, i32) {
    %c0_i32 = arith.constant 0 : i32
    %c0_i32_0 = arith.constant 0 : i32
    %c0_i32_1 = arith.constant 0 : i32
    return %c0_i32, %c0_i32_0 : i32, i32
  }
  func.func @transform_2(%arg0: i32) -> (i32, i32) {
    %c0_i32 = arith.constant 0 : i32
    %c0_i32_0 = arith.constant 0 : i32
    %c0_i32_1 = arith.constant 0 : i32
    return %c0_i32, %c0_i32_0 : i32, i32
  }
  func.func @transform_3(%arg0: i32) -> (i32, i32) {
    %c0_i32 = arith.constant 0 : i32
    %c0_i32_0 = arith.constant 0 : i32
    %c0_i32_1 = arith.constant 0 : i32
    return %c0_i32, %c0_i32_0 : i32, i32
  }
}

</mosaic_0001>

<llo_original>
// kernel: attention_lstm_forward.1
$region0: #{attention_lstm_forward.1}
  #allocation0 [shape = 'u32[]', space=smem, size = 0x4, offset = 0x4, fixed_abs, tag = 'smem constant byte address 0x4 - core index']
  #allocation1 [shape = 'u32[144,128]{1,0:T(1,128)}', space=vmem, size = 0x12000, scoped, tag = 'internal scratch']
  #allocation2 [shape = 'f32[32,10]{1,0:T(8,128)}', space=vmem, size = 0x4000, scoped, tag = 'scratch operand']
  %s0 = inlined_call_operand.vmem [shape: f32[32,1], index: 0, kind: input, shape index: {}]
  %s1 = inlined_call_operand.vmem [shape: f32[47,40], index: 1, kind: input, shape index: {}]
  %s2 = inlined_call_operand.vmem [shape: f32[2,1], index: 2, kind: output, shape index: {0}]
  %s3 = inlined_call_operand.vmem [shape: f32[32,1], index: 3, kind: output, shape index: {1}]
  %4 = xla_tuple %s2, %s3
  %s5 = sld [smem:[#allocation0]]
  $region26: #{attention_lstm_forward.1} parent=0
    _
  %s7 = ssub.s32 1, %s5
  %s8 = scalar_select 0, %s7, %s5
  // Predicated region
  $region2: #{attention_lstm_forward.1} parent=0 // pred_check
    _
  $region3: #{attention_lstm_forward.1} parent=0 // pred_check_branch
    %10 = sbr.rel (0) target = $region5
  $region4: #{attention_lstm_forward.1} parent=0 // pred_region
    _
  $region5: #{attention_lstm_forward.1} parent=0 // pred_fallthru
    _
  // Predicated region
  $region6: #{attention_lstm_forward.1} parent=0 // pred_check
    _
  $region7: #{attention_lstm_forward.1} parent=0 // pred_check_branch
    %12 = sbr.rel (0) target = $region9
  $region8: #{attention_lstm_forward.1} parent=0 // pred_region
    _
  $region9: #{attention_lstm_forward.1} parent=0 // pred_fallthru
    _
  %v13 = vld [vmem:[%s1] sm:$0x1]
  %v14 = vld [vmem:[%s1 + $0x1] sm:$0x1]
  %v15 = vld [vmem:[%s1 + $0x2] sm:$0x1]
  %v16 = vld [vmem:[%s1 + $0x3] sm:$0xff]
  %v17 = vld [vmem:[%s1 + $0xb] sm:$0x3]
  %v18 = vld [vmem:[%s1 + $0xd] sm:$0xff]
  %v19 = vld [vmem:[%s1 + $0x15] sm:$0x3]
  %v20 = vld [vmem:[%s1 + $0x17] sm:$0xff]
  %v21 = vld [vmem:[%s1 + $0x1f] sm:$0x3]
  %v22 = vld [vmem:[%s1 + $0x21] sm:$0xff]
  %v23 = vld [vmem:[%s1 + $0x29] sm:$0x3]
  %v24 = vld [vmem:[%s1 + $0x2b] sm:$0x1]
  %v25 = vld [vmem:[%s1 + $0x2c] sm:$0x1]
  %v26 = vld [vmem:[%s1 + $0x2d] sm:$0x1]
  %v27 = vld [vmem:[%s1 + $0x2e] sm:$0x1]
  %v28 = vld [vmem:[%s0] sm:$0xff]
  %v29 = vld [vmem:[%s0 + $0x8] sm:$0xff]
  %v30 = vld [vmem:[%s0 + $0x10] sm:$0xff]
  %v31 = vld [vmem:[%s0 + $0x18] sm:$0xff]
  %33 = vset.pattern.permute.xlu0 0
  %34 = vperm.xlu0 %33, %v28
  %v35 = vpop.permute.xlu0 %34
  %38 = vset.pattern.permute.xlu0 0
  %39 = vperm.xlu0 %38, %v29
  %v40 = vpop.permute.xlu0 %39
  %43 = vset.pattern.permute.xlu0 0
  %44 = vperm.xlu0 %43, %v30
  %v45 = vpop.permute.xlu0 %44
  %48 = vset.pattern.permute.xlu0 0
  %49 = vperm.xlu0 %48, %v31
  %v50 = vpop.permute.xlu0 %49
  %v52 = vlaneseq
  %v53 = vshrl.u32 %v52, 7
  %v54 = vsub.s32 0, %v53
  %v55 = vrot.slane %v13, %v54
  %v56 = vmul.f32 %v35, %v55
  %v57 = vmul.f32 %v40, %v55
  %v58 = vmul.f32 %v45, %v55
  %v59 = vmul.f32 %v50, %v55
  %v60 = vlaneseq
  %v61 = vshrl.u32 %v60, 7
  %v62 = vsub.s32 0, %v61
  %v63 = vrot.slane %v14, %v62
  %v64 = vadd.f32 %v56, %v63
  %v65 = vadd.f32 %v57, %v63
  %v66 = vadd.f32 %v58, %v63
  %v67 = vadd.f32 %v59, %v63
  %v68 = vlaneseq
  %v69 = vshrl.u32 %v68, 7
  %v70 = vsub.s32 0, %v69
  %v71 = vrot.slane %v16, %v70
  %v72 = vmul.f32 %v71, 0.0
  %v73 = vlaneseq
  %v74 = vshrl.u32 %v73, 7
  %v75 = vsub.s32 1, %v74
  %v76 = vrot.slane %v16, %v75
  %v77 = vmul.f32 %v76, 0.0
  %v78 = vlaneseq
  %v79 = vshrl.u32 %v78, 7
  %v80 = vsub.s32 2, %v79
  %v81 = vrot.slane %v16, %v80
  %v82 = vmul.f32 %v81, 0.0
  %v83 = vlaneseq
  %v84 = vshrl.u32 %v83, 7
  %v85 = vsub.s32 3, %v84
  %v86 = vrot.slane %v16, %v85
  %v87 = vmul.f32 %v86, 0.0
  %v88 = vlaneseq
  %v89 = vshrl.u32 %v88, 7
  %v90 = vsub.s32 4, %v89
  %v91 = vrot.slane %v16, %v90
  %v92 = vmul.f32 %v91, 0.0
  %v93 = vlaneseq
  %v94 = vshrl.u32 %v93, 7
  %v95 = vsub.s32 5, %v94
  %v96 = vrot.slane %v16, %v95
  %v97 = vmul.f32 %v96, 0.0
  %v98 = vlaneseq
  %v99 = vshrl.u32 %v98, 7
  %v100 = vsub.s32 6, %v99
  %v101 = vrot.slane %v16, %v100
  %v102 = vmul.f32 %v101, 0.0
  %v103 = vlaneseq
  %v104 = vshrl.u32 %v103, 7
  %v105 = vsub.s32 7, %v104
  %v106 = vrot.slane %v16, %v105
  %v107 = vmul.f32 %v106, 0.0
  %v108 = vlaneseq
  %v109 = vshrl.u32 %v108, 7
  %v110 = vsub.s32 0, %v109
  %v111 = vrot.slane %v17, %v110
  %v112 = vmul.f32 %v111, 0.0
  %v113 = vlaneseq
  %v114 = vshrl.u32 %v113, 7
  %v115 = vsub.s32 1, %v114
  %v116 = vrot.slane %v17, %v115
  %v117 = vmul.f32 %v116, 0.0
  %v118 = vadd.f32 %v72, %v77
  %v119 = vadd.f32 %v82, %v87
  %v120 = vadd.f32 %v92, %v97
  %v121 = vadd.f32 %v102, %v107
  %v122 = vadd.f32 %v112, %v117
  %v123 = vadd.f32 %v118, %v119
  %v124 = vadd.f32 %v120, %v121
  %v125 = vadd.f32 %v123, %v124
  %v126 = vadd.f32 %v125, %v122
  %v127 = vadd.f32 %v64, %v126
  %v128 = vtanh.pop %v127
  %v129 = vadd.f32 %v128, 1.0
  %v130 = vmul.f32 %v129, 0.5
  %v131 = vmul.f32 %v130, 0.0
  %133 = vrot.lane.b32.xlu0 %v128, 108
  %v134 = vpop.permute.xlu0 %133
  %v136 = vmul.f32 %v130, %v134
  %138 = vrot.lane.b32.xlu0 %v136, 10
  %v139 = vpop.permute.xlu0 %138
  %v141 = vadd.f32 %v131, %v139
  %v142 = vtanh.pop %v141
  %144 = vrot.lane.b32.xlu0 %v142, 20
  %v145 = vpop.permute.xlu0 %144
  %v147 = vmul.f32 %v130, %v145
  %149 = vset.pattern.permute.xlu0 30
  %150 = vperm.xlu0 %149, %v147
  %v151 = vpop.permute.xlu0 %150
  %v153 = vlaneseq
  %v154 = vshrl.u32 %v153, 7
  %v155 = vsub.s32 0, %v154
  %v156 = vrot.slane %v18, %v155
  %v157 = vmul.f32 %v151, %v156
  %158 = vset.pattern.permute.xlu0 31
  %159 = vperm.xlu0 %158, %v147
  %v160 = vpop.permute.xlu0 %159
  %v162 = vlaneseq
  %v163 = vshrl.u32 %v162, 7
  %v164 = vsub.s32 1, %v163
  %v165 = vrot.slane %v18, %v164
  %v166 = vmul.f32 %v160, %v165
  %167 = vset.pattern.permute.xlu0 32
  %168 = vperm.xlu0 %167, %v147
  %v169 = vpop.permute.xlu0 %168
  %v171 = vlaneseq
  %v172 = vshrl.u32 %v171, 7
  %v173 = vsub.s32 2, %v172
  %v174 = vrot.slane %v18, %v173
  %v175 = vmul.f32 %v169, %v174
  %176 = vset.pattern.permute.xlu0 33
  %177 = vperm.xlu0 %176, %v147
  %v178 = vpop.permute.xlu0 %177
  %v180 = vlaneseq
  %v181 = vshrl.u32 %v180, 7
  %v182 = vsub.s32 3, %v181
  %v183 = vrot.slane %v18, %v182
  %v184 = vmul.f32 %v178, %v183
  %185 = vset.pattern.permute.xlu0 34
  %186 = vperm.xlu0 %185, %v147
  %v187 = vpop.permute.xlu0 %186
  %v189 = vlaneseq
  %v190 = vshrl.u32 %v189, 7
  %v191 = vsub.s32 4, %v190
  %v192 = vrot.slane %v18, %v191
  %v193 = vmul.f32 %v187, %v192
  %194 = vset.pattern.permute.xlu0 35
  %195 = vperm.xlu0 %194, %v147
  %v196 = vpop.permute.xlu0 %195
  %v198 = vlaneseq
  %v199 = vshrl.u32 %v198, 7
  %v200 = vsub.s32 5, %v199
  %v201 = vrot.slane %v18, %v200
  %v202 = vmul.f32 %v196, %v201
  %203 = vset.pattern.permute.xlu0 36
  %204 = vperm.xlu0 %203, %v147
  %v205 = vpop.permute.xlu0 %204
  %v207 = vlaneseq
  %v208 = vshrl.u32 %v207, 7
  %v209 = vsub.s32 6, %v208
  %v210 = vrot.slane %v18, %v209
  %v211 = vmul.f32 %v205, %v210
  %212 = vset.pattern.permute.xlu0 37
  %213 = vperm.xlu0 %212, %v147
  %v214 = vpop.permute.xlu0 %213
  %v216 = vlaneseq
  %v217 = vshrl.u32 %v216, 7
  %v218 = vsub.s32 7, %v217
  %v219 = vrot.slane %v18, %v218
  %v220 = vmul.f32 %v214, %v219
  %221 = vset.pattern.permute.xlu0 38
  %222 = vperm.xlu0 %221, %v147
  %v223 = vpop.permute.xlu0 %222
  %v225 = vlaneseq
  %v226 = vshrl.u32 %v225, 7
  %v227 = vsub.s32 0, %v226
  %v228 = vrot.slane %v19, %v227
  %v229 = vmul.f32 %v223, %v228
  %230 = vset.pattern.permute.xlu0 39
  %231 = vperm.xlu0 %230, %v147
  %v232 = vpop.permute.xlu0 %231
  %v234 = vlaneseq
  %v235 = vshrl.u32 %v234, 7
  %v236 = vsub.s32 1, %v235
  %v237 = vrot.slane %v19, %v236
  %v238 = vmul.f32 %v232, %v237
  %v239 = vadd.f32 %v157, %v166
  %v240 = vadd.f32 %v175, %v184
  %v241 = vadd.f32 %v193, %v202
  %v242 = vadd.f32 %v211, %v220
  %v243 = vadd.f32 %v229, %v238
  %v244 = vadd.f32 %v239, %v240
  %v245 = vadd.f32 %v241, %v242
  %v246 = vadd.f32 %v244, %v245
  %v247 = vadd.f32 %v246, %v243
  %v248 = vlaneseq
  %v249 = vshrl.u32 %v248, 7
  %v250 = vsub.s32 0, %v249
  %v251 = vrot.slane %v15, %v250
  %v252 = vadd.f32 %v247, %v251
  %v253 = vlaneseq
  %v254 = vshrl.u32 %v253, 7
  %v255 = vsub.s32 0, %v254
  %v256 = vrot.slane %v20, %v255
  %v257 = vmul.f32 %v256, 0.0
  %v258 = vlaneseq
  %v259 = vshrl.u32 %v258, 7
  %v260 = vsub.s32 1, %v259
  %v261 = vrot.slane %v20, %v260
  %v262 = vmul.f32 %v261, 0.0
  %v263 = vlaneseq
  %v264 = vshrl.u32 %v263, 7
  %v265 = vsub.s32 2, %v264
  %v266 = vrot.slane %v20, %v265
  %v267 = vmul.f32 %v266, 0.0
  %v268 = vlaneseq
  %v269 = vshrl.u32 %v268, 7
  %v270 = vsub.s32 3, %v269
  %v271 = vrot.slane %v20, %v270
  %v272 = vmul.f32 %v271, 0.0
  %v273 = vlaneseq
  %v274 = vshrl.u32 %v273, 7
  %v275 = vsub.s32 4, %v274
  %v276 = vrot.slane %v20, %v275
  %v277 = vmul.f32 %v276, 0.0
  %v278 = vlaneseq
  %v279 = vshrl.u32 %v278, 7
  %v280 = vsub.s32 5, %v279
  %v281 = vrot.slane %v20, %v280
  %v282 = vmul.f32 %v281, 0.0
  %v283 = vlaneseq
  %v284 = vshrl.u32 %v283, 7
  %v285 = vsub.s32 6, %v284
  %v286 = vrot.slane %v20, %v285
  %v287 = vmul.f32 %v286, 0.0
  %v288 = vlaneseq
  %v289 = vshrl.u32 %v288, 7
  %v290 = vsub.s32 7, %v289
  %v291 = vrot.slane %v20, %v290
  %v292 = vmul.f32 %v291, 0.0
  %v293 = vlaneseq
  %v294 = vshrl.u32 %v293, 7
  %v295 = vsub.s32 0, %v294
  %v296 = vrot.slane %v21, %v295
  %v297 = vmul.f32 %v296, 0.0
  %v298 = vlaneseq
  %v299 = vshrl.u32 %v298, 7
  %v300 = vsub.s32 1, %v299
  %v301 = vrot.slane %v21, %v300
  %v302 = vmul.f32 %v301, 0.0
  %v303 = vadd.f32 %v257, %v262
  %v304 = vadd.f32 %v267, %v272
  %v305 = vadd.f32 %v277, %v282
  %v306 = vadd.f32 %v287, %v292
  %v307 = vadd.f32 %v297, %v302
  %v308 = vadd.f32 %v303, %v304
  %v309 = vadd.f32 %v305, %v306
  %v310 = vadd.f32 %v308, %v309
  %v311 = vadd.f32 %v310, %v307
  %v312 = vadd.f32 %v252, %v311
  %v313 = vtanh.pop %v312
  %v314 = vadd.f32 %v313, 1.0
  %v315 = vmul.f32 %v314, 0.5
  %v316 = vmul.f32 %v315, 0.0
  %318 = vrot.lane.b32.xlu0 %v313, 108
  %v319 = vpop.permute.xlu0 %318
  %v321 = vmul.f32 %v315, %v319
  %323 = vrot.lane.b32.xlu0 %v321, 10
  %v324 = vpop.permute.xlu0 %323
  %v326 = vadd.f32 %v316, %v324
  %v327 = vtanh.pop %v326
  %329 = vrot.lane.b32.xlu0 %v327, 20
  %v330 = vpop.permute.xlu0 %329
  %v332 = vmul.f32 %v315, %v330
  %334 = vrot.lane.b32.xlu0 %v332, 98
  %v335 = vpop.permute.xlu0 %334
  %vm337 = vcmask 74752
  %338 = vst.msk [vmem:[#allocation2] sm:$0x3] %vm337, %v335
  %v339 = vmul.f32 %v151, %v71
  %v340 = vmul.f32 %v160, %v76
  %v341 = vmul.f32 %v169, %v81
  %v342 = vmul.f32 %v178, %v86
  %v343 = vmul.f32 %v187, %v91
  %v344 = vmul.f32 %v196, %v96
  %v345 = vmul.f32 %v205, %v101
  %v346 = vmul.f32 %v214, %v106
  %v347 = vmul.f32 %v223, %v111
  %v348 = vmul.f32 %v232, %v116
  %v349 = vadd.f32 %v339, %v340
  %v350 = vadd.f32 %v341, %v342
  %v351 = vadd.f32 %v343, %v344
  %v352 = vadd.f32 %v345, %v346
  %v353 = vadd.f32 %v347, %v348
  %v354 = vadd.f32 %v349, %v350
  %v355 = vadd.f32 %v351, %v352
  %v356 = vadd.f32 %v354, %v355
  %v357 = vadd.f32 %v356, %v353
  %v359 = vrot.slane %v357, 6
  %v361 = vadd.f32 %v64, %v359
  %v362 = vtanh.pop %v361
  %v363 = vadd.f32 %v362, 1.0
  %v364 = vmul.f32 %v363, 0.5
  %v366 = vrot.slane %v141, 6
  %v368 = vmul.f32 %v364, %v366
  %370 = vrot.lane.b32.xlu0 %v362, 108
  %v371 = vpop.permute.xlu0 %370
  %v373 = vmul.f32 %v364, %v371
  %375 = vrot.lane.b32.xlu0 %v373, 10
  %v376 = vpop.permute.xlu0 %375
  %v378 = vadd.f32 %v368, %v376
  %v379 = vtanh.pop %v378
  %381 = vrot.lane.b32.xlu0 %v379, 20
  %v382 = vpop.permute.xlu0 %381
  %v384 = vmul.f32 %v364, %v382
  %386 = vset.pattern.permute.xlu0 30
  %387 = vperm.xlu0 %386, %v384
  %v388 = vpop.permute.xlu0 %387
  %v390 = vmul.f32 %v388, %v156
  %391 = vset.pattern.permute.xlu0 31
  %392 = vperm.xlu0 %391, %v384
  %v393 = vpop.permute.xlu0 %392
  %v395 = vmul.f32 %v393, %v165
  %396 = vset.pattern.permute.xlu0 32
  %397 = vperm.xlu0 %396, %v384
  %v398 = vpop.permute.xlu0 %397
  %v400 = vmul.f32 %v398, %v174
  %401 = vset.pattern.permute.xlu0 33
  %402 = vperm.xlu0 %401, %v384
  %v403 = vpop.permute.xlu0 %402
  %v405 = vmul.f32 %v403, %v183
  %406 = vset.pattern.permute.xlu0 34
  %407 = vperm.xlu0 %406, %v384
  %v408 = vpop.permute.xlu0 %407
  %v410 = vmul.f32 %v408, %v192
  %411 = vset.pattern.permute.xlu0 35
  %412 = vperm.xlu0 %411, %v384
  %v413 = vpop.permute.xlu0 %412
  %v415 = vmul.f32 %v413, %v201
  %416 = vset.pattern.permute.xlu0 36
  %417 = vperm.xlu0 %416, %v384
  %v418 = vpop.permute.xlu0 %417
  %v420 = vmul.f32 %v418, %v210
  %421 = vset.pattern.permute.xlu0 37
  %422 = vperm.xlu0 %421, %v384
  %v423 = vpop.permute.xlu0 %422
  %v425 = vmul.f32 %v423, %v219
  %426 = vset.pattern.permute.xlu0 38
  %427 = vperm.xlu0 %426, %v384
  %v428 = vpop.permute.xlu0 %427
  %v430 = vmul.f32 %v428, %v228
  %431 = vset.pattern.permute.xlu0 39
  %432 = vperm.xlu0 %431, %v384
  %v433 = vpop.permute.xlu0 %432
  %v435 = vmul.f32 %v433, %v237
  %v436 = vadd.f32 %v390, %v395
  %v437 = vadd.f32 %v400, %v405
  %v438 = vadd.f32 %v410, %v415
  %v439 = vadd.f32 %v420, %v425
  %v440 = vadd.f32 %v430, %v435
  %v441 = vadd.f32 %v436, %v437
  %v442 = vadd.f32 %v438, %v439
  %v443 = vadd.f32 %v441, %v442
  %v444 = vadd.f32 %v443, %v440
  %v445 = vadd.f32 %v444, %v251
  %446 = vset.pattern.permute.xlu0 30
  %447 = vperm.xlu0 %446, %v332
  %v448 = vpop.permute.xlu0 %447
  %v450 = vmul.f32 %v448, %v256
  %451 = vset.pattern.permute.xlu0 31
  %452 = vperm.xlu0 %451, %v332
  %v453 = vpop.permute.xlu0 %452
  %v455 = vmul.f32 %v453, %v261
  %456 = vset.pattern.permute.xlu0 32
  %457 = vperm.xlu0 %456, %v332
  %v458 = vpop.permute.xlu0 %457
  %v460 = vmul.f32 %v458, %v266
  %461 = vset.pattern.permute.xlu0 33
  %462 = vperm.xlu0 %461, %v332
  %v463 = vpop.permute.xlu0 %462
  %v465 = vmul.f32 %v463, %v271
  %466 = vset.pattern.permute.xlu0 34
  %467 = vperm.xlu0 %466, %v332
  %v468 = vpop.permute.xlu0 %467
  %v470 = vmul.f32 %v468, %v276
  %471 = vset.pattern.permute.xlu0 35
  %472 = vperm.xlu0 %471, %v332
  %v473 = vpop.permute.xlu0 %472
  %v475 = vmul.f32 %v473, %v281
  %476 = vset.pattern.permute.xlu0 36
  %477 = vperm.xlu0 %476, %v332
  %v478 = vpop.permute.xlu0 %477
  %v480 = vmul.f32 %v478, %v286
  %481 = vset.pattern.permute.xlu0 37
  %482 = vperm.xlu0 %481, %v332
  %v483 = vpop.permute.xlu0 %482
  %v485 = vmul.f32 %v483, %v291
  %486 = vset.pattern.permute.xlu0 38
  %487 = vperm.xlu0 %486, %v332
  %v488 = vpop.permute.xlu0 %487
  %v490 = vmul.f32 %v488, %v296
  %491 = vset.pattern.permute.xlu0 39
  %492 = vperm.xlu0 %491, %v332
  %v493 = vpop.permute.xlu0 %492
  %v495 = vmul.f32 %v493, %v301
  %v496 = vadd.f32 %v450, %v455
  %v497 = vadd.f32 %v460, %v465
  %v498 = vadd.f32 %v470, %v475
  %v499 = vadd.f32 %v480, %v485
  %v500 = vadd.f32 %v490, %v495
  %v501 = vadd.f32 %v496, %v497
  %v502 = vadd.f32 %v498, %v499
  %v503 = vadd.f32 %v501, %v502
  %v504 = vadd.f32 %v503, %v500
  %v506 = vrot.slane %v504, 6
  %v508 = vadd.f32 %v445, %v506
  %v509 = vtanh.pop %v508
  %v510 = vadd.f32 %v509, 1.0
  %v511 = vmul.f32 %v510, 0.5
  %v513 = vrot.slane %v326, 6
  %v515 = vmul.f32 %v511, %v513
  %517 = vrot.lane.b32.xlu0 %v509, 108
  %v518 = vpop.permute.xlu0 %517
  %v520 = vmul.f32 %v511, %v518
  %522 = vrot.lane.b32.xlu0 %v520, 10
  %v523 = vpop.permute.xlu0 %522
  %v525 = vadd.f32 %v515, %v523
  %v526 = vtanh.pop %v525
  %528 = vrot.lane.b32.xlu0 %v526, 20
  %v529 = vpop.permute.xlu0 %528
  %v531 = vmul.f32 %v511, %v529
  %533 = vrot.lane.b32.xlu0 %v531, 98
  %v534 = vpop.permute.xlu0 %533
  %vm536 = vcmask 76802
  %537 = vst.msk [vmem:[#allocation2] sm:$0xc] %vm536, %v534
  %v538 = vmul.f32 %v388, %v71
  %v539 = vmul.f32 %v393, %v76
  %v540 = vmul.f32 %v398, %v81
  %v541 = vmul.f32 %v403, %v86
  %v542 = vmul.f32 %v408, %v91
  %v543 = vmul.f32 %v413, %v96
  %v544 = vmul.f32 %v418, %v101
  %v545 = vmul.f32 %v423, %v106
  %v546 = vmul.f32 %v428, %v111
  %v547 = vmul.f32 %v433, %v116
  %v548 = vadd.f32 %v538, %v539
  %v549 = vadd.f32 %v540, %v541
  %v550 = vadd.f32 %v542, %v543
  %v551 = vadd.f32 %v544, %v545
  %v552 = vadd.f32 %v546, %v547
  %v553 = vadd.f32 %v548, %v549
  %v554 = vadd.f32 %v550, %v551
  %v555 = vadd.f32 %v553, %v554
  %v556 = vadd.f32 %v555, %v552
  %v558 = vrot.slane %v556, 6
  %v560 = vadd.f32 %v64, %v558
  %v561 = vtanh.pop %v560
  %v562 = vadd.f32 %v561, 1.0
  %v563 = vmul.f32 %v562, 0.5
  %v565 = vrot.slane %v378, 6
  %v567 = vmul.f32 %v563, %v565
  %569 = vrot.lane.b32.xlu0 %v561, 108
  %v570 = vpop.permute.xlu0 %569
  %v572 = vmul.f32 %v563, %v570
  %574 = vrot.lane.b32.xlu0 %v572, 10
  %v575 = vpop.permute.xlu0 %574
  %v577 = vadd.f32 %v567, %v575
  %v578 = vtanh.pop %v577
  %580 = vrot.lane.b32.xlu0 %v578, 20
  %v581 = vpop.permute.xlu0 %580
  %v583 = vmul.f32 %v563, %v581
  %585 = vset.pattern.permute.xlu0 30
  %586 = vperm.xlu0 %585, %v583
  %v587 = vpop.permute.xlu0 %586
  %v589 = vmul.f32 %v587, %v156
  %590 = vset.pattern.permute.xlu0 31
  %591 = vperm.xlu0 %590, %v583
  %v592 = vpop.permute.xlu0 %591
  %v594 = vmul.f32 %v592, %v165
  %595 = vset.pattern.permute.xlu0 32
  %596 = vperm.xlu0 %595, %v583
  %v597 = vpop.permute.xlu0 %596
  %v599 = vmul.f32 %v597, %v174
  %600 = vset.pattern.permute.xlu0 33
  %601 = vperm.xlu0 %600, %v583
  %v602 = vpop.permute.xlu0 %601
  %v604 = vmul.f32 %v602, %v183
  %605 = vset.pattern.permute.xlu0 34
  %606 = vperm.xlu0 %605, %v583
  %v607 = vpop.permute.xlu0 %606
  %v609 = vmul.f32 %v607, %v192
  %610 = vset.pattern.permute.xlu0 35
  %611 = vperm.xlu0 %610, %v583
  %v612 = vpop.permute.xlu0 %611
  %v614 = vmul.f32 %v612, %v201
  %615 = vset.pattern.permute.xlu0 36
  %616 = vperm.xlu0 %615, %v583
  %v617 = vpop.permute.xlu0 %616
  %v619 = vmul.f32 %v617, %v210
  %620 = vset.pattern.permute.xlu0 37
  %621 = vperm.xlu0 %620, %v583
  %v622 = vpop.permute.xlu0 %621
  %v624 = vmul.f32 %v622, %v219
  %625 = vset.pattern.permute.xlu0 38
  %626 = vperm.xlu0 %625, %v583
  %v627 = vpop.permute.xlu0 %626
  %v629 = vmul.f32 %v627, %v228
  %630 = vset.pattern.permute.xlu0 39
  %631 = vperm.xlu0 %630, %v583
  %v632 = vpop.permute.xlu0 %631
  %v634 = vmul.f32 %v632, %v237
  %v635 = vadd.f32 %v589, %v594
  %v636 = vadd.f32 %v599, %v604
  %v637 = vadd.f32 %v609, %v614
  %v638 = vadd.f32 %v619, %v624
  %v639 = vadd.f32 %v629, %v634
  %v640 = vadd.f32 %v635, %v636
  %v641 = vadd.f32 %v637, %v638
  %v642 = vadd.f32 %v640, %v641
  %v643 = vadd.f32 %v642, %v639
  %v644 = vadd.f32 %v643, %v251
  %645 = vset.pattern.permute.xlu0 30
  %646 = vperm.xlu0 %645, %v531
  %v647 = vpop.permute.xlu0 %646
  %v649 = vmul.f32 %v647, %v256
  %650 = vset.pattern.permute.xlu0 31
  %651 = vperm.xlu0 %650, %v531
  %v652 = vpop.permute.xlu0 %651
  %v654 = vmul.f32 %v652, %v261
  %655 = vset.pattern.permute.xlu0 32
  %656 = vperm.xlu0 %655, %v531
  %v657 = vpop.permute.xlu0 %656
  %v659 = vmul.f32 %v657, %v266
  %660 = vset.pattern.permute.xlu0 33
  %661 = vperm.xlu0 %660, %v531
  %v662 = vpop.permute.xlu0 %661
  %v664 = vmul.f32 %v662, %v271
  %665 = vset.pattern.permute.xlu0 34
  %666 = vperm.xlu0 %665, %v531
  %v667 = vpop.permute.xlu0 %666
  %v669 = vmul.f32 %v667, %v276
  %670 = vset.pattern.permute.xlu0 35
  %671 = vperm.xlu0 %670, %v531
  %v672 = vpop.permute.xlu0 %671
  %v674 = vmul.f32 %v672, %v281
  %675 = vset.pattern.permute.xlu0 36
  %676 = vperm.xlu0 %675, %v531
  %v677 = vpop.permute.xlu0 %676
  %v679 = vmul.f32 %v677, %v286
  %680 = vset.pattern.permute.xlu0 37
  %681 = vperm.xlu0 %680, %v531
  %v682 = vpop.permute.xlu0 %681
  %v684 = vmul.f32 %v682, %v291
  %685 = vset.pattern.permute.xlu0 38
  %686 = vperm.xlu0 %685, %v531
  %v687 = vpop.permute.xlu0 %686
  %v689 = vmul.f32 %v687, %v296
  %690 = vset.pattern.permute.xlu0 39
  %691 = vperm.xlu0 %690, %v531
  %v692 = vpop.permute.xlu0 %691
  %v694 = vmul.f32 %v692, %v301
  %v695 = vadd.f32 %v649, %v654
  %v696 = vadd.f32 %v659, %v664
  %v697 = vadd.f32 %v669, %v674
  %v698 = vadd.f32 %v679, %v684
  %v699 = vadd.f32 %v689, %v694
  %v700 = vadd.f32 %v695, %v696
  %v701 = vadd.f32 %v697, %v698
  %v702 = vadd.f32 %v700, %v701
  %v703 = vadd.f32 %v702, %v699
  %v705 = vrot.slane %v703, 6
  %v707 = vadd.f32 %v644, %v705
  %v708 = vtanh.pop %v707
  %v709 = vadd.f32 %v708, 1.0
  %v710 = vmul.f32 %v709, 0.5
  %v712 = vrot.slane %v525, 6
  %v714 = vmul.f32 %v710, %v712
  %716 = vrot.lane.b32.xlu0 %v708, 108
  %v717 = vpop.permute.xlu0 %716
  %v719 = vmul.f32 %v710, %v717
  %721 = vrot.lane.b32.xlu0 %v719, 10
  %v722 = vpop.permute.xlu0 %721
  %v724 = vadd.f32 %v714, %v722
  %v725 = vtanh.pop %v724
  %727 = vrot.lane.b32.xlu0 %v725, 20
  %v728 = vpop.permute.xlu0 %727
  %v730 = vmul.f32 %v710, %v728
  %732 = vrot.lane.b32.xlu0 %v730, 98
  %v733 = vpop.permute.xlu0 %732
  %vm735 = vcmask 78852
  %736 = vst.msk [vmem:[#allocation2] sm:$0x30] %vm735, %v733
  %v737 = vmul.f32 %v587, %v71
  %v738 = vmul.f32 %v592, %v76
  %v739 = vmul.f32 %v597, %v81
  %v740 = vmul.f32 %v602, %v86
  %v741 = vmul.f32 %v607, %v91
  %v742 = vmul.f32 %v612, %v96
  %v743 = vmul.f32 %v617, %v101
  %v744 = vmul.f32 %v622, %v106
  %v745 = vmul.f32 %v627, %v111
  %v746 = vmul.f32 %v632, %v116
  %v747 = vadd.f32 %v737, %v738
  %v748 = vadd.f32 %v739, %v740
  %v749 = vadd.f32 %v741, %v742
  %v750 = vadd.f32 %v743, %v744
  %v751 = vadd.f32 %v745, %v746
  %v752 = vadd.f32 %v747, %v748
  %v753 = vadd.f32 %v749, %v750
  %v754 = vadd.f32 %v752, %v753
  %v755 = vadd.f32 %v754, %v751
  %v757 = vrot.slane %v755, 6
  %v759 = vadd.f32 %v64, %v757
  %v760 = vtanh.pop %v759
  %v761 = vadd.f32 %v760, 1.0
  %v762 = vmul.f32 %v761, 0.5
  %v764 = vrot.slane %v577, 6
  %v766 = vmul.f32 %v762, %v764
  %768 = vrot.lane.b32.xlu0 %v760, 108
  %v769 = vpop.permute.xlu0 %768
  %v771 = vmul.f32 %v762, %v769
  %773 = vrot.lane.b32.xlu0 %v771, 10
  %v774 = vpop.permute.xlu0 %773
  %v776 = vadd.f32 %v766, %v774
  %v777 = vtanh.pop %v776
  %779 = vrot.lane.b32.xlu0 %v777, 20
  %v780 = vpop.permute.xlu0 %779
  %v782 = vmul.f32 %v762, %v780
  %784 = vset.pattern.permute.xlu0 30
  %785 = vperm.xlu0 %784, %v782
  %v786 = vpop.permute.xlu0 %785
  %v788 = vmul.f32 %v786, %v156
  %789 = vset.pattern.permute.xlu0 31
  %790 = vperm.xlu0 %789, %v782
  %v791 = vpop.permute.xlu0 %790
  %v793 = vmul.f32 %v791, %v165
  %794 = vset.pattern.permute.xlu0 32
  %795 = vperm.xlu0 %794, %v782
  %v796 = vpop.permute.xlu0 %795
  %v798 = vmul.f32 %v796, %v174
  %799 = vset.pattern.permute.xlu0 33
  %800 = vperm.xlu0 %799, %v782
  %v801 = vpop.permute.xlu0 %800
  %v803 = vmul.f32 %v801, %v183
  %804 = vset.pattern.permute.xlu0 34
  %805 = vperm.xlu0 %804, %v782
  %v806 = vpop.permute.xlu0 %805
  %v808 = vmul.f32 %v806, %v192
  %809 = vset.pattern.permute.xlu0 35
  %810 = vperm.xlu0 %809, %v782
  %v811 = vpop.permute.xlu0 %810
  %v813 = vmul.f32 %v811, %v201
  %814 = vset.pattern.permute.xlu0 36
  %815 = vperm.xlu0 %814, %v782
  %v816 = vpop.permute.xlu0 %815
  %v818 = vmul.f32 %v816, %v210
  %819 = vset.pattern.permute.xlu0 37
  %820 = vperm.xlu0 %819, %v782
  %v821 = vpop.permute.xlu0 %820
  %v823 = vmul.f32 %v821, %v219
  %824 = vset.pattern.permute.xlu0 38
  %825 = vperm.xlu0 %824, %v782
  %v826 = vpop.permute.xlu0 %825
  %v828 = vmul.f32 %v826, %v228
  %829 = vset.pattern.permute.xlu0 39
  %830 = vperm.xlu0 %829, %v782
  %v831 = vpop.permute.xlu0 %830
  %v833 = vmul.f32 %v831, %v237
  %v834 = vadd.f32 %v788, %v793
  %v835 = vadd.f32 %v798, %v803
  %v836 = vadd.f32 %v808, %v813
  %v837 = vadd.f32 %v818, %v823
  %v838 = vadd.f32 %v828, %v833
  %v839 = vadd.f32 %v834, %v835
  %v840 = vadd.f32 %v836, %v837
  %v841 = vadd.f32 %v839, %v840
  %v842 = vadd.f32 %v841, %v838
  %v843 = vadd.f32 %v842, %v251
  %844 = vset.pattern.permute.xlu0 30
  %845 = vperm.xlu0 %844, %v730
  %v846 = vpop.permute.xlu0 %845
  %v848 = vmul.f32 %v846, %v256
  %849 = vset.pattern.permute.xlu0 31
  %850 = vperm.xlu0 %849, %v730
  %v851 = vpop.permute.xlu0 %850
  %v853 = vmul.f32 %v851, %v261
  %854 = vset.pattern.permute.xlu0 32
  %855 = vperm.xlu0 %854, %v730
  %v856 = vpop.permute.xlu0 %855
  %v858 = vmul.f32 %v856, %v266
  %859 = vset.pattern.permute.xlu0 33
  %860 = vperm.xlu0 %859, %v730
  %v861 = vpop.permute.xlu0 %860
  %v863 = vmul.f32 %v861, %v271
  %864 = vset.pattern.permute.xlu0 34
  %865 = vperm.xlu0 %864, %v730
  %v866 = vpop.permute.xlu0 %865
  %v868 = vmul.f32 %v866, %v276
  %869 = vset.pattern.permute.xlu0 35
  %870 = vperm.xlu0 %869, %v730
  %v871 = vpop.permute.xlu0 %870
  %v873 = vmul.f32 %v871, %v281
  %874 = vset.pattern.permute.xlu0 36
  %875 = vperm.xlu0 %874, %v730
  %v876 = vpop.permute.xlu0 %875
  %v878 = vmul.f32 %v876, %v286
  %879 = vset.pattern.permute.xlu0 37
  %880 = vperm.xlu0 %879, %v730
  %v881 = vpop.permute.xlu0 %880
  %v883 = vmul.f32 %v881, %v291
  %884 = vset.pattern.permute.xlu0 38
  %885 = vperm.xlu0 %884, %v730
  %v886 = vpop.permute.xlu0 %885
  %v888 = vmul.f32 %v886, %v296
  %889 = vset.pattern.permute.xlu0 39
  %890 = vperm.xlu0 %889, %v730
  %v891 = vpop.permute.xlu0 %890
  %v893 = vmul.f32 %v891, %v301
  %v894 = vadd.f32 %v848, %v853
  %v895 = vadd.f32 %v858, %v863
  %v896 = vadd.f32 %v868, %v873
  %v897 = vadd.f32 %v878, %v883
  %v898 = vadd.f32 %v888, %v893
  %v899 = vadd.f32 %v894, %v895
  %v900 = vadd.f32 %v896, %v897
  %v901 = vadd.f32 %v899, %v900
  %v902 = vadd.f32 %v901, %v898
  %v904 = vrot.slane %v902, 6
  %v906 = vadd.f32 %v843, %v904
  %v907 = vtanh.pop %v906
  %v908 = vadd.f32 %v907, 1.0
  %v909 = vmul.f32 %v908, 0.5
  %v911 = vrot.slane %v724, 6
  %v913 = vmul.f32 %v909, %v911
  %915 = vrot.lane.b32.xlu0 %v907, 108
  %v916 = vpop.permute.xlu0 %915
  %v918 = vmul.f32 %v909, %v916
  %920 = vrot.lane.b32.xlu0 %v918, 10
  %v921 = vpop.permute.xlu0 %920
  %v923 = vadd.f32 %v913, %v921
  %v924 = vtanh.pop %v923
  %926 = vrot.lane.b32.xlu0 %v924, 20
  %v927 = vpop.permute.xlu0 %926
  %v929 = vmul.f32 %v909, %v927
  %931 = vrot.lane.b32.xlu0 %v929, 98
  %v932 = vpop.permute.xlu0 %931
  %vm934 = vcmask 80902
  %935 = vst.msk [vmem:[#allocation2] sm:$0xc0] %vm934, %v932
  %v936 = vmul.f32 %v786, %v71
  %v937 = vmul.f32 %v791, %v76
  %v938 = vmul.f32 %v796, %v81
  %v939 = vmul.f32 %v801, %v86
  %v940 = vmul.f32 %v806, %v91
  %v941 = vmul.f32 %v811, %v96
  %v942 = vmul.f32 %v816, %v101
  %v943 = vmul.f32 %v821, %v106
  %v944 = vmul.f32 %v826, %v111
  %v945 = vmul.f32 %v831, %v116
  %v946 = vadd.f32 %v936, %v937
  %v947 = vadd.f32 %v938, %v939
  %v948 = vadd.f32 %v940, %v941
  %v949 = vadd.f32 %v942, %v943
  %v950 = vadd.f32 %v944, %v945
  %v951 = vadd.f32 %v946, %v947
  %v952 = vadd.f32 %v948, %v949
  %v953 = vadd.f32 %v951, %v952
  %v954 = vadd.f32 %v953, %v950
  %v956 = vrot.slane %v954, 6
  %v958 = vadd.f32 %v65, %v956
  %v959 = vtanh.pop %v958
  %v960 = vadd.f32 %v959, 1.0
  %v961 = vmul.f32 %v960, 0.5
  %v963 = vrot.slane %v776, 6
  %v965 = vmul.f32 %v961, %v963
  %967 = vrot.lane.b32.xlu0 %v959, 108
  %v968 = vpop.permute.xlu0 %967
  %v970 = vmul.f32 %v961, %v968
  %972 = vrot.lane.b32.xlu0 %v970, 10
  %v973 = vpop.permute.xlu0 %972
  %v975 = vadd.f32 %v965, %v973
  %v976 = vtanh.pop %v975
  %978 = vrot.lane.b32.xlu0 %v976, 20
  %v979 = vpop.permute.xlu0 %978
  %v981 = vmul.f32 %v961, %v979
  %983 = vset.pattern.permute.xlu0 30
  %984 = vperm.xlu0 %983, %v981
  %v985 = vpop.permute.xlu0 %984
  %v987 = vmul.f32 %v985, %v156
  %988 = vset.pattern.permute.xlu0 31
  %989 = vperm.xlu0 %988, %v981
  %v990 = vpop.permute.xlu0 %989
  %v992 = vmul.f32 %v990, %v165
  %993 = vset.pattern.permute.xlu0 32
  %994 = vperm.xlu0 %993, %v981
  %v995 = vpop.permute.xlu0 %994
  %v997 = vmul.f32 %v995, %v174
  %998 = vset.pattern.permute.xlu0 33
  %999 = vperm.xlu0 %998, %v981
  %v1000 = vpop.permute.xlu0 %999
  %v1002 = vmul.f32 %v1000, %v183
  %1003 = vset.pattern.permute.xlu0 34
  %1004 = vperm.xlu0 %1003, %v981
  %v1005 = vpop.permute.xlu0 %1004
  %v1007 = vmul.f32 %v1005, %v192
  %1008 = vset.pattern.permute.xlu0 35
  %1009 = vperm.xlu0 %1008, %v981
  %v1010 = vpop.permute.xlu0 %1009
  %v1012 = vmul.f32 %v1010, %v201
  %1013 = vset.pattern.permute.xlu0 36
  %1014 = vperm.xlu0 %1013, %v981
  %v1015 = vpop.permute.xlu0 %1014
  %v1017 = vmul.f32 %v1015, %v210
  %1018 = vset.pattern.permute.xlu0 37
  %1019 = vperm.xlu0 %1018, %v981
  %v1020 = vpop.permute.xlu0 %1019
  %v1022 = vmul.f32 %v1020, %v219
  %1023 = vset.pattern.permute.xlu0 38
  %1024 = vperm.xlu0 %1023, %v981
  %v1025 = vpop.permute.xlu0 %1024
  %v1027 = vmul.f32 %v1025, %v228
  %1028 = vset.pattern.permute.xlu0 39
  %1029 = vperm.xlu0 %1028, %v981
  %v1030 = vpop.permute.xlu0 %1029
  %v1032 = vmul.f32 %v1030, %v237
  %v1033 = vadd.f32 %v987, %v992
  %v1034 = vadd.f32 %v997, %v1002
  %v1035 = vadd.f32 %v1007, %v1012
  %v1036 = vadd.f32 %v1017, %v1022
  %v1037 = vadd.f32 %v1027, %v1032
  %v1038 = vadd.f32 %v1033, %v1034
  %v1039 = vadd.f32 %v1035, %v1036
  %v1040 = vadd.f32 %v1038, %v1039
  %v1041 = vadd.f32 %v1040, %v1037
  %v1042 = vadd.f32 %v1041, %v251
  %1043 = vset.pattern.permute.xlu0 30
  %1044 = vperm.xlu0 %1043, %v929
  %v1045 = vpop.permute.xlu0 %1044
  %v1047 = vmul.f32 %v1045, %v256
  %1048 = vset.pattern.permute.xlu0 31
  %1049 = vperm.xlu0 %1048, %v929
  %v1050 = vpop.permute.xlu0 %1049
  %v1052 = vmul.f32 %v1050, %v261
  %1053 = vset.pattern.permute.xlu0 32
  %1054 = vperm.xlu0 %1053, %v929
  %v1055 = vpop.permute.xlu0 %1054
  %v1057 = vmul.f32 %v1055, %v266
  %1058 = vset.pattern.permute.xlu0 33
  %1059 = vperm.xlu0 %1058, %v929
  %v1060 = vpop.permute.xlu0 %1059
  %v1062 = vmul.f32 %v1060, %v271
  %1063 = vset.pattern.permute.xlu0 34
  %1064 = vperm.xlu0 %1063, %v929
  %v1065 = vpop.permute.xlu0 %1064
  %v1067 = vmul.f32 %v1065, %v276
  %1068 = vset.pattern.permute.xlu0 35
  %1069 = vperm.xlu0 %1068, %v929
  %v1070 = vpop.permute.xlu0 %1069
  %v1072 = vmul.f32 %v1070, %v281
  %1073 = vset.pattern.permute.xlu0 36
  %1074 = vperm.xlu0 %1073, %v929
  %v1075 = vpop.permute.xlu0 %1074
  %v1077 = vmul.f32 %v1075, %v286
  %1078 = vset.pattern.permute.xlu0 37
  %1079 = vperm.xlu0 %1078, %v929
  %v1080 = vpop.permute.xlu0 %1079
  %v1082 = vmul.f32 %v1080, %v291
  %1083 = vset.pattern.permute.xlu0 38
  %1084 = vperm.xlu0 %1083, %v929
  %v1085 = vpop.permute.xlu0 %1084
  %v1087 = vmul.f32 %v1085, %v296
  %1088 = vset.pattern.permute.xlu0 39
  %1089 = vperm.xlu0 %1088, %v929
  %v1090 = vpop.permute.xlu0 %1089
  %v1092 = vmul.f32 %v1090, %v301
  %v1093 = vadd.f32 %v1047, %v1052
  %v1094 = vadd.f32 %v1057, %v1062
  %v1095 = vadd.f32 %v1067, %v1072
  %v1096 = vadd.f32 %v1077, %v1082
  %v1097 = vadd.f32 %v1087, %v1092
  %v1098 = vadd.f32 %v1093, %v1094
  %v1099 = vadd.f32 %v1095, %v1096
  %v1100 = vadd.f32 %v1098, %v1099
  %v1101 = vadd.f32 %v1100, %v1097
  %v1103 = vrot.slane %v1101, 6
  %v1105 = vadd.f32 %v1042, %v1103
  %v1106 = vtanh.pop %v1105
  %v1107 = vadd.f32 %v1106, 1.0
  %v1108 = vmul.f32 %v1107, 0.5
  %v1110 = vrot.slane %v923, 6
  %v1112 = vmul.f32 %v1108, %v1110
  %1114 = vrot.lane.b32.xlu0 %v1106, 108
  %v1115 = vpop.permute.xlu0 %1114
  %v1117 = vmul.f32 %v1108, %v1115
  %1119 = vrot.lane.b32.xlu0 %v1117, 10
  %v1120 = vpop.permute.xlu0 %1119
  %v1122 = vadd.f32 %v1112, %v1120
  %v1123 = vtanh.pop %v1122
  %1125 = vrot.lane.b32.xlu0 %v1123, 20
  %v1126 = vpop.permute.xlu0 %1125
  %v1128 = vmul.f32 %v1108, %v1126
  %1130 = vrot.lane.b32.xlu0 %v1128, 98
  %v1131 = vpop.permute.xlu0 %1130
  %1133 = vst.msk [vmem:[#allocation2 + $0x8] sm:$0x3] %vm337, %v1131
  %v1134 = vmul.f32 %v985, %v71
  %v1135 = vmul.f32 %v990, %v76
  %v1136 = vmul.f32 %v995, %v81
  %v1137 = vmul.f32 %v1000, %v86
  %v1138 = vmul.f32 %v1005, %v91
  %v1139 = vmul.f32 %v1010, %v96
  %v1140 = vmul.f32 %v1015, %v101
  %v1141 = vmul.f32 %v1020, %v106
  %v1142 = vmul.f32 %v1025, %v111
  %v1143 = vmul.f32 %v1030, %v116
  %v1144 = vadd.f32 %v1134, %v1135
  %v1145 = vadd.f32 %v1136, %v1137
  %v1146 = vadd.f32 %v1138, %v1139
  %v1147 = vadd.f32 %v1140, %v1141
  %v1148 = vadd.f32 %v1142, %v1143
  %v1149 = vadd.f32 %v1144, %v1145
  %v1150 = vadd.f32 %v1146, %v1147
  %v1151 = vadd.f32 %v1149, %v1150
  %v1152 = vadd.f32 %v1151, %v1148
  %v1154 = vrot.slane %v1152, 6
  %v1156 = vadd.f32 %v65, %v1154
  %v1157 = vtanh.pop %v1156
  %v1158 = vadd.f32 %v1157, 1.0
  %v1159 = vmul.f32 %v1158, 0.5
  %v1161 = vrot.slane %v975, 6
  %v1163 = vmul.f32 %v1159, %v1161
  %1165 = vrot.lane.b32.xlu0 %v1157, 108
  %v1166 = vpop.permute.xlu0 %1165
  %v1168 = vmul.f32 %v1159, %v1166
  %1170 = vrot.lane.b32.xlu0 %v1168, 10
  %v1171 = vpop.permute.xlu0 %1170
  %v1173 = vadd.f32 %v1163, %v1171
  %v1174 = vtanh.pop %v1173
  %1176 = vrot.lane.b32.xlu0 %v1174, 20
  %v1177 = vpop.permute.xlu0 %1176
  %v1179 = vmul.f32 %v1159, %v1177
  %1181 = vset.pattern.permute.xlu0 30
  %1182 = vperm.xlu0 %1181, %v1179
  %v1183 = vpop.permute.xlu0 %1182
  %v1185 = vmul.f32 %v1183, %v156
  %1186 = vset.pattern.permute.xlu0 31
  %1187 = vperm.xlu0 %1186, %v1179
  %v1188 = vpop.permute.xlu0 %1187
  %v1190 = vmul.f32 %v1188, %v165
  %1191 = vset.pattern.permute.xlu0 32
  %1192 = vperm.xlu0 %1191, %v1179
  %v1193 = vpop.permute.xlu0 %1192
  %v1195 = vmul.f32 %v1193, %v174
  %1196 = vset.pattern.permute.xlu0 33
  %1197 = vperm.xlu0 %1196, %v1179
  %v1198 = vpop.permute.xlu0 %1197
  %v1200 = vmul.f32 %v1198, %v183
  %1201 = vset.pattern.permute.xlu0 34
  %1202 = vperm.xlu0 %1201, %v1179
  %v1203 = vpop.permute.xlu0 %1202
  %v1205 = vmul.f32 %v1203, %v192
  %1206 = vset.pattern.permute.xlu0 35
  %1207 = vperm.xlu0 %1206, %v1179
  %v1208 = vpop.permute.xlu0 %1207
  %v1210 = vmul.f32 %v1208, %v201
  %1211 = vset.pattern.permute.xlu0 36
  %1212 = vperm.xlu0 %1211, %v1179
  %v1213 = vpop.permute.xlu0 %1212
  %v1215 = vmul.f32 %v1213, %v210
  %1216 = vset.pattern.permute.xlu0 37
  %1217 = vperm.xlu0 %1216, %v1179
  %v1218 = vpop.permute.xlu0 %1217
  %v1220 = vmul.f32 %v1218, %v219
  %1221 = vset.pattern.permute.xlu0 38
  %1222 = vperm.xlu0 %1221, %v1179
  %v1223 = vpop.permute.xlu0 %1222
  %v1225 = vmul.f32 %v1223, %v228
  %1226 = vset.pattern.permute.xlu0 39
  %1227 = vperm.xlu0 %1226, %v1179
  %v1228 = vpop.permute.xlu0 %1227
  %v1230 = vmul.f32 %v1228, %v237
  %v1231 = vadd.f32 %v1185, %v1190
  %v1232 = vadd.f32 %v1195, %v1200
  %v1233 = vadd.f32 %v1205, %v1210
  %v1234 = vadd.f32 %v1215, %v1220
  %v1235 = vadd.f32 %v1225, %v1230
  %v1236 = vadd.f32 %v1231, %v1232
  %v1237 = vadd.f32 %v1233, %v1234
  %v1238 = vadd.f32 %v1236, %v1237
  %v1239 = vadd.f32 %v1238, %v1235
  %v1240 = vadd.f32 %v1239, %v251
  %1241 = vset.pattern.permute.xlu0 30
  %1242 = vperm.xlu0 %1241, %v1128
  %v1243 = vpop.permute.xlu0 %1242
  %v1245 = vmul.f32 %v1243, %v256
  %1246 = vset.pattern.permute.xlu0 31
  %1247 = vperm.xlu0 %1246, %v1128
  %v1248 = vpop.permute.xlu0 %1247
  %v1250 = vmul.f32 %v1248, %v261
  %1251 = vset.pattern.permute.xlu0 32
  %1252 = vperm.xlu0 %1251, %v1128
  %v1253 = vpop.permute.xlu0 %1252
  %v1255 = vmul.f32 %v1253, %v266
  %1256 = vset.pattern.permute.xlu0 33
  %1257 = vperm.xlu0 %1256, %v1128
  %v1258 = vpop.permute.xlu0 %1257
  %v1260 = vmul.f32 %v1258, %v271
  %1261 = vset.pattern.permute.xlu0 34
  %1262 = vperm.xlu0 %1261, %v1128
  %v1263 = vpop.permute.xlu0 %1262
  %v1265 = vmul.f32 %v1263, %v276
  %1266 = vset.pattern.permute.xlu0 35
  %1267 = vperm.xlu0 %1266, %v1128
  %v1268 = vpop.permute.xlu0 %1267
  %v1270 = vmul.f32 %v1268, %v281
  %1271 = vset.pattern.permute.xlu0 36
  %1272 = vperm.xlu0 %1271, %v1128
  %v1273 = vpop.permute.xlu0 %1272
  %v1275 = vmul.f32 %v1273, %v286
  %1276 = vset.pattern.permute.xlu0 37
  %1277 = vperm.xlu0 %1276, %v1128
  %v1278 = vpop.permute.xlu0 %1277
  %v1280 = vmul.f32 %v1278, %v291
  %1281 = vset.pattern.permute.xlu0 38
  %1282 = vperm.xlu0 %1281, %v1128
  %v1283 = vpop.permute.xlu0 %1282
  %v1285 = vmul.f32 %v1283, %v296
  %1286 = vset.pattern.permute.xlu0 39
  %1287 = vperm.xlu0 %1286, %v1128
  %v1288 = vpop.permute.xlu0 %1287
  %v1290 = vmul.f32 %v1288, %v301
  %v1291 = vadd.f32 %v1245, %v1250
  %v1292 = vadd.f32 %v1255, %v1260
  %v1293 = vadd.f32 %v1265, %v1270
  %v1294 = vadd.f32 %v1275, %v1280
  %v1295 = vadd.f32 %v1285, %v1290
  %v1296 = vadd.f32 %v1291, %v1292
  %v1297 = vadd.f32 %v1293, %v1294
  %v1298 = vadd.f32 %v1296, %v1297
  %v1299 = vadd.f32 %v1298, %v1295
  %v1301 = vrot.slane %v1299, 6
  %v1303 = vadd.f32 %v1240, %v1301
  %v1304 = vtanh.pop %v1303
  %v1305 = vadd.f32 %v1304, 1.0
  %v1306 = vmul.f32 %v1305, 0.5
  %v1308 = vrot.slane %v1122, 6
  %v1310 = vmul.f32 %v1306, %v1308
  %1312 = vrot.lane.b32.xlu0 %v1304, 108
  %v1313 = vpop.permute.xlu0 %1312
  %v1315 = vmul.f32 %v1306, %v1313
  %1317 = vrot.lane.b32.xlu0 %v1315, 10
  %v1318 = vpop.permute.xlu0 %1317
  %v1320 = vadd.f32 %v1310, %v1318
  %v1321 = vtanh.pop %v1320
  %1323 = vrot.lane.b32.xlu0 %v1321, 20
  %v1324 = vpop.permute.xlu0 %1323
  %v1326 = vmul.f32 %v1306, %v1324
  %1328 = vrot.lane.b32.xlu0 %v1326, 98
  %v1329 = vpop.permute.xlu0 %1328
  %1331 = vst.msk [vmem:[#allocation2 + $0x8] sm:$0xc] %vm536, %v1329
  %v1332 = vmul.f32 %v1183, %v71
  %v1333 = vmul.f32 %v1188, %v76
  %v1334 = vmul.f32 %v1193, %v81
  %v1335 = vmul.f32 %v1198, %v86
  %v1336 = vmul.f32 %v1203, %v91
  %v1337 = vmul.f32 %v1208, %v96
  %v1338 = vmul.f32 %v1213, %v101
  %v1339 = vmul.f32 %v1218, %v106
  %v1340 = vmul.f32 %v1223, %v111
  %v1341 = vmul.f32 %v1228, %v116
  %v1342 = vadd.f32 %v1332, %v1333
  %v1343 = vadd.f32 %v1334, %v1335
  %v1344 = vadd.f32 %v1336, %v1337
  %v1345 = vadd.f32 %v1338, %v1339
  %v1346 = vadd.f32 %v1340, %v1341
  %v1347 = vadd.f32 %v1342, %v1343
  %v1348 = vadd.f32 %v1344, %v1345
  %v1349 = vadd.f32 %v1347, %v1348
  %v1350 = vadd.f32 %v1349, %v1346
  %v1352 = vrot.slane %v1350, 6
  %v1354 = vadd.f32 %v65, %v1352
  %v1355 = vtanh.pop %v1354
  %v1356 = vadd.f32 %v1355, 1.0
  %v1357 = vmul.f32 %v1356, 0.5
  %v1359 = vrot.slane %v1173, 6
  %v1361 = vmul.f32 %v1357, %v1359
  %1363 = vrot.lane.b32.xlu0 %v1355, 108
  %v1364 = vpop.permute.xlu0 %1363
  %v1366 = vmul.f32 %v1357, %v1364
  %1368 = vrot.lane.b32.xlu0 %v1366, 10
  %v1369 = vpop.permute.xlu0 %1368
  %v1371 = vadd.f32 %v1361, %v1369
  %v1372 = vtanh.pop %v1371
  %1374 = vrot.lane.b32.xlu0 %v1372, 20
  %v1375 = vpop.permute.xlu0 %1374
  %v1377 = vmul.f32 %v1357, %v1375
  %1379 = vset.pattern.permute.xlu0 30
  %1380 = vperm.xlu0 %1379, %v1377
  %v1381 = vpop.permute.xlu0 %1380
  %v1383 = vmul.f32 %v1381, %v156
  %1384 = vset.pattern.permute.xlu0 31
  %1385 = vperm.xlu0 %1384, %v1377
  %v1386 = vpop.permute.xlu0 %1385
  %v1388 = vmul.f32 %v1386, %v165
  %1389 = vset.pattern.permute.xlu0 32
  %1390 = vperm.xlu0 %1389, %v1377
  %v1391 = vpop.permute.xlu0 %1390
  %v1393 = vmul.f32 %v1391, %v174
  %1394 = vset.pattern.permute.xlu0 33
  %1395 = vperm.xlu0 %1394, %v1377
  %v1396 = vpop.permute.xlu0 %1395
  %v1398 = vmul.f32 %v1396, %v183
  %1399 = vset.pattern.permute.xlu0 34
  %1400 = vperm.xlu0 %1399, %v1377
  %v1401 = vpop.permute.xlu0 %1400
  %v1403 = vmul.f32 %v1401, %v192
  %1404 = vset.pattern.permute.xlu0 35
  %1405 = vperm.xlu0 %1404, %v1377
  %v1406 = vpop.permute.xlu0 %1405
  %v1408 = vmul.f32 %v1406, %v201
  %1409 = vset.pattern.permute.xlu0 36
  %1410 = vperm.xlu0 %1409, %v1377
  %v1411 = vpop.permute.xlu0 %1410
  %v1413 = vmul.f32 %v1411, %v210
  %1414 = vset.pattern.permute.xlu0 37
  %1415 = vperm.xlu0 %1414, %v1377
  %v1416 = vpop.permute.xlu0 %1415
  %v1418 = vmul.f32 %v1416, %v219
  %1419 = vset.pattern.permute.xlu0 38
  %1420 = vperm.xlu0 %1419, %v1377
  %v1421 = vpop.permute.xlu0 %1420
  %v1423 = vmul.f32 %v1421, %v228
  %1424 = vset.pattern.permute.xlu0 39
  %1425 = vperm.xlu0 %1424, %v1377
  %v1426 = vpop.permute.xlu0 %1425
  %v1428 = vmul.f32 %v1426, %v237
  %v1429 = vadd.f32 %v1383, %v1388
  %v1430 = vadd.f32 %v1393, %v1398
  %v1431 = vadd.f32 %v1403, %v1408
  %v1432 = vadd.f32 %v1413, %v1418
  %v1433 = vadd.f32 %v1423, %v1428
  %v1434 = vadd.f32 %v1429, %v1430
  %v1435 = vadd.f32 %v1431, %v1432
  %v1436 = vadd.f32 %v1434, %v1435
  %v1437 = vadd.f32 %v1436, %v1433
  %v1438 = vadd.f32 %v1437, %v251
  %1439 = vset.pattern.permute.xlu0 30
  %1440 = vperm.xlu0 %1439, %v1326
  %v1441 = vpop.permute.xlu0 %1440
  %v1443 = vmul.f32 %v1441, %v256
  %1444 = vset.pattern.permute.xlu0 31
  %1445 = vperm.xlu0 %1444, %v1326
  %v1446 = vpop.permute.xlu0 %1445
  %v1448 = vmul.f32 %v1446, %v261
  %1449 = vset.pattern.permute.xlu0 32
  %1450 = vperm.xlu0 %1449, %v1326
  %v1451 = vpop.permute.xlu0 %1450
  %v1453 = vmul.f32 %v1451, %v266
  %1454 = vset.pattern.permute.xlu0 33
  %1455 = vperm.xlu0 %1454, %v1326
  %v1456 = vpop.permute.xlu0 %1455
  %v1458 = vmul.f32 %v1456, %v271
  %1459 = vset.pattern.permute.xlu0 34
  %1460 = vperm.xlu0 %1459, %v1326
  %v1461 = vpop.permute.xlu0 %1460
  %v1463 = vmul.f32 %v1461, %v276
  %1464 = vset.pattern.permute.xlu0 35
  %1465 = vperm.xlu0 %1464, %v1326
  %v1466 = vpop.permute.xlu0 %1465
  %v1468 = vmul.f32 %v1466, %v281
  %1469 = vset.pattern.permute.xlu0 36
  %1470 = vperm.xlu0 %1469, %v1326
  %v1471 = vpop.permute.xlu0 %1470
  %v1473 = vmul.f32 %v1471, %v286
  %1474 = vset.pattern.permute.xlu0 37
  %1475 = vperm.xlu0 %1474, %v1326
  %v1476 = vpop.permute.xlu0 %1475
  %v1478 = vmul.f32 %v1476, %v291
  %1479 = vset.pattern.permute.xlu0 38
  %1480 = vperm.xlu0 %1479, %v1326
  %v1481 = vpop.permute.xlu0 %1480
  %v1483 = vmul.f32 %v1481, %v296
  %1484 = vset.pattern.permute.xlu0 39
  %1485 = vperm.xlu0 %1484, %v1326
  %v1486 = vpop.permute.xlu0 %1485
  %v1488 = vmul.f32 %v1486, %v301
  %v1489 = vadd.f32 %v1443, %v1448
  %v1490 = vadd.f32 %v1453, %v1458
  %v1491 = vadd.f32 %v1463, %v1468
  %v1492 = vadd.f32 %v1473, %v1478
  %v1493 = vadd.f32 %v1483, %v1488
  %v1494 = vadd.f32 %v1489, %v1490
  %v1495 = vadd.f32 %v1491, %v1492
  %v1496 = vadd.f32 %v1494, %v1495
  %v1497 = vadd.f32 %v1496, %v1493
  %v1499 = vrot.slane %v1497, 6
  %v1501 = vadd.f32 %v1438, %v1499
  %v1502 = vtanh.pop %v1501
  %v1503 = vadd.f32 %v1502, 1.0
  %v1504 = vmul.f32 %v1503, 0.5
  %v1506 = vrot.slane %v1320, 6
  %v1508 = vmul.f32 %v1504, %v1506
  %1510 = vrot.lane.b32.xlu0 %v1502, 108
  %v1511 = vpop.permute.xlu0 %1510
  %v1513 = vmul.f32 %v1504, %v1511
  %1515 = vrot.lane.b32.xlu0 %v1513, 10
  %v1516 = vpop.permute.xlu0 %1515
  %v1518 = vadd.f32 %v1508, %v1516
  %v1519 = vtanh.pop %v1518
  %1521 = vrot.lane.b32.xlu0 %v1519, 20
  %v1522 = vpop.permute.xlu0 %1521
  %v1524 = vmul.f32 %v1504, %v1522
  %1526 = vrot.lane.b32.xlu0 %v1524, 98
  %v1527 = vpop.permute.xlu0 %1526
  %1529 = vst.msk [vmem:[#allocation2 + $0x8] sm:$0x30] %vm735, %v1527
  %v1530 = vmul.f32 %v1381, %v71
  %v1531 = vmul.f32 %v1386, %v76
  %v1532 = vmul.f32 %v1391, %v81
  %v1533 = vmul.f32 %v1396, %v86
  %v1534 = vmul.f32 %v1401, %v91
  %v1535 = vmul.f32 %v1406, %v96
  %v1536 = vmul.f32 %v1411, %v101
  %v1537 = vmul.f32 %v1416, %v106
  %v1538 = vmul.f32 %v1421, %v111
  %v1539 = vmul.f32 %v1426, %v116
  %v1540 = vadd.f32 %v1530, %v1531
  %v1541 = vadd.f32 %v1532, %v1533
  %v1542 = vadd.f32 %v1534, %v1535
  %v1543 = vadd.f32 %v1536, %v1537
  %v1544 = vadd.f32 %v1538, %v1539
  %v1545 = vadd.f32 %v1540, %v1541
  %v1546 = vadd.f32 %v1542, %v1543
  %v1547 = vadd.f32 %v1545, %v1546
  %v1548 = vadd.f32 %v1547, %v1544
  %v1550 = vrot.slane %v1548, 6
  %v1552 = vadd.f32 %v65, %v1550
  %v1553 = vtanh.pop %v1552
  %v1554 = vadd.f32 %v1553, 1.0
  %v1555 = vmul.f32 %v1554, 0.5
  %v1557 = vrot.slane %v1371, 6
  %v1559 = vmul.f32 %v1555, %v1557
  %1561 = vrot.lane.b32.xlu0 %v1553, 108
  %v1562 = vpop.permute.xlu0 %1561
  %v1564 = vmul.f32 %v1555, %v1562
  %1566 = vrot.lane.b32.xlu0 %v1564, 10
  %v1567 = vpop.permute.xlu0 %1566
  %v1569 = vadd.f32 %v1559, %v1567
  %v1570 = vtanh.pop %v1569
  %1572 = vrot.lane.b32.xlu0 %v1570, 20
  %v1573 = vpop.permute.xlu0 %1572
  %v1575 = vmul.f32 %v1555, %v1573
  %1577 = vset.pattern.permute.xlu0 30
  %1578 = vperm.xlu0 %1577, %v1575
  %v1579 = vpop.permute.xlu0 %1578
  %v1581 = vmul.f32 %v1579, %v156
  %1582 = vset.pattern.permute.xlu0 31
  %1583 = vperm.xlu0 %1582, %v1575
  %v1584 = vpop.permute.xlu0 %1583
  %v1586 = vmul.f32 %v1584, %v165
  %1587 = vset.pattern.permute.xlu0 32
  %1588 = vperm.xlu0 %1587, %v1575
  %v1589 = vpop.permute.xlu0 %1588
  %v1591 = vmul.f32 %v1589, %v174
  %1592 = vset.pattern.permute.xlu0 33
  %1593 = vperm.xlu0 %1592, %v1575
  %v1594 = vpop.permute.xlu0 %1593
  %v1596 = vmul.f32 %v1594, %v183
  %1597 = vset.pattern.permute.xlu0 34
  %1598 = vperm.xlu0 %1597, %v1575
  %v1599 = vpop.permute.xlu0 %1598
  %v1601 = vmul.f32 %v1599, %v192
  %1602 = vset.pattern.permute.xlu0 35
  %1603 = vperm.xlu0 %1602, %v1575
  %v1604 = vpop.permute.xlu0 %1603
  %v1606 = vmul.f32 %v1604, %v201
  %1607 = vset.pattern.permute.xlu0 36
  %1608 = vperm.xlu0 %1607, %v1575
  %v1609 = vpop.permute.xlu0 %1608
  %v1611 = vmul.f32 %v1609, %v210
  %1612 = vset.pattern.permute.xlu0 37
  %1613 = vperm.xlu0 %1612, %v1575
  %v1614 = vpop.permute.xlu0 %1613
  %v1616 = vmul.f32 %v1614, %v219
  %1617 = vset.pattern.permute.xlu0 38
  %1618 = vperm.xlu0 %1617, %v1575
  %v1619 = vpop.permute.xlu0 %1618
  %v1621 = vmul.f32 %v1619, %v228
  %1622 = vset.pattern.permute.xlu0 39
  %1623 = vperm.xlu0 %1622, %v1575
  %v1624 = vpop.permute.xlu0 %1623
  %v1626 = vmul.f32 %v1624, %v237
  %v1627 = vadd.f32 %v1581, %v1586
  %v1628 = vadd.f32 %v1591, %v1596
  %v1629 = vadd.f32 %v1601, %v1606
  %v1630 = vadd.f32 %v1611, %v1616
  %v1631 = vadd.f32 %v1621, %v1626
  %v1632 = vadd.f32 %v1627, %v1628
  %v1633 = vadd.f32 %v1629, %v1630
  %v1634 = vadd.f32 %v1632, %v1633
  %v1635 = vadd.f32 %v1634, %v1631
  %v1636 = vadd.f32 %v1635, %v251
  %1637 = vset.pattern.permute.xlu0 30
  %1638 = vperm.xlu0 %1637, %v1524
  %v1639 = vpop.permute.xlu0 %1638
  %v1641 = vmul.f32 %v1639, %v256
  %1642 = vset.pattern.permute.xlu0 31
  %1643 = vperm.xlu0 %1642, %v1524
  %v1644 = vpop.permute.xlu0 %1643
  %v1646 = vmul.f32 %v1644, %v261
  %1647 = vset.pattern.permute.xlu0 32
  %1648 = vperm.xlu0 %1647, %v1524
  %v1649 = vpop.permute.xlu0 %1648
  %v1651 = vmul.f32 %v1649, %v266
  %1652 = vset.pattern.permute.xlu0 33
  %1653 = vperm.xlu0 %1652, %v1524
  %v1654 = vpop.permute.xlu0 %1653
  %v1656 = vmul.f32 %v1654, %v271
  %1657 = vset.pattern.permute.xlu0 34
  %1658 = vperm.xlu0 %1657, %v1524
  %v1659 = vpop.permute.xlu0 %1658
  %v1661 = vmul.f32 %v1659, %v276
  %1662 = vset.pattern.permute.xlu0 35
  %1663 = vperm.xlu0 %1662, %v1524
  %v1664 = vpop.permute.xlu0 %1663
  %v1666 = vmul.f32 %v1664, %v281
  %1667 = vset.pattern.permute.xlu0 36
  %1668 = vperm.xlu0 %1667, %v1524
  %v1669 = vpop.permute.xlu0 %1668
  %v1671 = vmul.f32 %v1669, %v286
  %1672 = vset.pattern.permute.xlu0 37
  %1673 = vperm.xlu0 %1672, %v1524
  %v1674 = vpop.permute.xlu0 %1673
  %v1676 = vmul.f32 %v1674, %v291
  %1677 = vset.pattern.permute.xlu0 38
  %1678 = vperm.xlu0 %1677, %v1524
  %v1679 = vpop.permute.xlu0 %1678
  %v1681 = vmul.f32 %v1679, %v296
  %1682 = vset.pattern.permute.xlu0 39
  %1683 = vperm.xlu0 %1682, %v1524
  %v1684 = vpop.permute.xlu0 %1683
  %v1686 = vmul.f32 %v1684, %v301
  %v1687 = vadd.f32 %v1641, %v1646
  %v1688 = vadd.f32 %v1651, %v1656
  %v1689 = vadd.f32 %v1661, %v1666
  %v1690 = vadd.f32 %v1671, %v1676
  %v1691 = vadd.f32 %v1681, %v1686
  %v1692 = vadd.f32 %v1687, %v1688
  %v1693 = vadd.f32 %v1689, %v1690
  %v1694 = vadd.f32 %v1692, %v1693
  %v1695 = vadd.f32 %v1694, %v1691
  %v1697 = vrot.slane %v1695, 6
  %v1699 = vadd.f32 %v1636, %v1697
  %v1700 = vtanh.pop %v1699
  %v1701 = vadd.f32 %v1700, 1.0
  %v1702 = vmul.f32 %v1701, 0.5
  %v1704 = vrot.slane %v1518, 6
  %v1706 = vmul.f32 %v1702, %v1704
  %1708 = vrot.lane.b32.xlu0 %v1700, 108
  %v1709 = vpop.permute.xlu0 %1708
  %v1711 = vmul.f32 %v1702, %v1709
  %1713 = vrot.lane.b32.xlu0 %v1711, 10
  %v1714 = vpop.permute.xlu0 %1713
  %v1716 = vadd.f32 %v1706, %v1714
  %v1717 = vtanh.pop %v1716
  %1719 = vrot.lane.b32.xlu0 %v1717, 20
  %v1720 = vpop.permute.xlu0 %1719
  %v1722 = vmul.f32 %v1702, %v1720
  %1724 = vrot.lane.b32.xlu0 %v1722, 98
  %v1725 = vpop.permute.xlu0 %1724
  %1727 = vst.msk [vmem:[#allocation2 + $0x8] sm:$0xc0] %vm934, %v1725
  %v1728 = vmul.f32 %v1579, %v71
  %v1729 = vmul.f32 %v1584, %v76
  %v1730 = vmul.f32 %v1589, %v81
  %v1731 = vmul.f32 %v1594, %v86
  %v1732 = vmul.f32 %v1599, %v91
  %v1733 = vmul.f32 %v1604, %v96
  %v1734 = vmul.f32 %v1609, %v101
  %v1735 = vmul.f32 %v1614, %v106
  %v1736 = vmul.f32 %v1619, %v111
  %v1737 = vmul.f32 %v1624, %v116
  %v1738 = vadd.f32 %v1728, %v1729
  %v1739 = vadd.f32 %v1730, %v1731
  %v1740 = vadd.f32 %v1732, %v1733
  %v1741 = vadd.f32 %v1734, %v1735
  %v1742 = vadd.f32 %v1736, %v1737
  %v1743 = vadd.f32 %v1738, %v1739
  %v1744 = vadd.f32 %v1740, %v1741
  %v1745 = vadd.f32 %v1743, %v1744
  %v1746 = vadd.f32 %v1745, %v1742
  %v1748 = vrot.slane %v1746, 6
  %v1750 = vadd.f32 %v66, %v1748
  %v1751 = vtanh.pop %v1750
  %v1752 = vadd.f32 %v1751, 1.0
  %v1753 = vmul.f32 %v1752, 0.5
  %v1755 = vrot.slane %v1569, 6
  %v1757 = vmul.f32 %v1753, %v1755
  %1759 = vrot.lane.b32.xlu0 %v1751, 108
  %v1760 = vpop.permute.xlu0 %1759
  %v1762 = vmul.f32 %v1753, %v1760
  %1764 = vrot.lane.b32.xlu0 %v1762, 10
  %v1765 = vpop.permute.xlu0 %1764
  %v1767 = vadd.f32 %v1757, %v1765
  %v1768 = vtanh.pop %v1767
  %1770 = vrot.lane.b32.xlu0 %v1768, 20
  %v1771 = vpop.permute.xlu0 %1770
  %v1773 = vmul.f32 %v1753, %v1771
  %1775 = vset.pattern.permute.xlu0 30
  %1776 = vperm.xlu0 %1775, %v1773
  %v1777 = vpop.permute.xlu0 %1776
  %v1779 = vmul.f32 %v1777, %v156
  %1780 = vset.pattern.permute.xlu0 31
  %1781 = vperm.xlu0 %1780, %v1773
  %v1782 = vpop.permute.xlu0 %1781
  %v1784 = vmul.f32 %v1782, %v165
  %1785 = vset.pattern.permute.xlu0 32
  %1786 = vperm.xlu0 %1785, %v1773
  %v1787 = vpop.permute.xlu0 %1786
  %v1789 = vmul.f32 %v1787, %v174
  %1790 = vset.pattern.permute.xlu0 33
  %1791 = vperm.xlu0 %1790, %v1773
  %v1792 = vpop.permute.xlu0 %1791
  %v1794 = vmul.f32 %v1792, %v183
  %1795 = vset.pattern.permute.xlu0 34
  %1796 = vperm.xlu0 %1795, %v1773
  %v1797 = vpop.permute.xlu0 %1796
  %v1799 = vmul.f32 %v1797, %v192
  %1800 = vset.pattern.permute.xlu0 35
  %1801 = vperm.xlu0 %1800, %v1773
  %v1802 = vpop.permute.xlu0 %1801
  %v1804 = vmul.f32 %v1802, %v201
  %1805 = vset.pattern.permute.xlu0 36
  %1806 = vperm.xlu0 %1805, %v1773
  %v1807 = vpop.permute.xlu0 %1806
  %v1809 = vmul.f32 %v1807, %v210
  %1810 = vset.pattern.permute.xlu0 37
  %1811 = vperm.xlu0 %1810, %v1773
  %v1812 = vpop.permute.xlu0 %1811
  %v1814 = vmul.f32 %v1812, %v219
  %1815 = vset.pattern.permute.xlu0 38
  %1816 = vperm.xlu0 %1815, %v1773
  %v1817 = vpop.permute.xlu0 %1816
  %v1819 = vmul.f32 %v1817, %v228
  %1820 = vset.pattern.permute.xlu0 39
  %1821 = vperm.xlu0 %1820, %v1773
  %v1822 = vpop.permute.xlu0 %1821
  %v1824 = vmul.f32 %v1822, %v237
  %v1825 = vadd.f32 %v1779, %v1784
  %v1826 = vadd.f32 %v1789, %v1794
  %v1827 = vadd.f32 %v1799, %v1804
  %v1828 = vadd.f32 %v1809, %v1814
  %v1829 = vadd.f32 %v1819, %v1824
  %v1830 = vadd.f32 %v1825, %v1826
  %v1831 = vadd.f32 %v1827, %v1828
  %v1832 = vadd.f32 %v1830, %v1831
  %v1833 = vadd.f32 %v1832, %v1829
  %v1834 = vadd.f32 %v1833, %v251
  %1835 = vset.pattern.permute.xlu0 30
  %1836 = vperm.xlu0 %1835, %v1722
  %v1837 = vpop.permute.xlu0 %1836
  %v1839 = vmul.f32 %v1837, %v256
  %1840 = vset.pattern.permute.xlu0 31
  %1841 = vperm.xlu0 %1840, %v1722
  %v1842 = vpop.permute.xlu0 %1841
  %v1844 = vmul.f32 %v1842, %v261
  %1845 = vset.pattern.permute.xlu0 32
  %1846 = vperm.xlu0 %1845, %v1722
  %v1847 = vpop.permute.xlu0 %1846
  %v1849 = vmul.f32 %v1847, %v266
  %1850 = vset.pattern.permute.xlu0 33
  %1851 = vperm.xlu0 %1850, %v1722
  %v1852 = vpop.permute.xlu0 %1851
  %v1854 = vmul.f32 %v1852, %v271
  %1855 = vset.pattern.permute.xlu0 34
  %1856 = vperm.xlu0 %1855, %v1722
  %v1857 = vpop.permute.xlu0 %1856
  %v1859 = vmul.f32 %v1857, %v276
  %1860 = vset.pattern.permute.xlu0 35
  %1861 = vperm.xlu0 %1860, %v1722
  %v1862 = vpop.permute.xlu0 %1861
  %v1864 = vmul.f32 %v1862, %v281
  %1865 = vset.pattern.permute.xlu0 36
  %1866 = vperm.xlu0 %1865, %v1722
  %v1867 = vpop.permute.xlu0 %1866
  %v1869 = vmul.f32 %v1867, %v286
  %1870 = vset.pattern.permute.xlu0 37
  %1871 = vperm.xlu0 %1870, %v1722
  %v1872 = vpop.permute.xlu0 %1871
  %v1874 = vmul.f32 %v1872, %v291
  %1875 = vset.pattern.permute.xlu0 38
  %1876 = vperm.xlu0 %1875, %v1722
  %v1877 = vpop.permute.xlu0 %1876
  %v1879 = vmul.f32 %v1877, %v296
  %1880 = vset.pattern.permute.xlu0 39
  %1881 = vperm.xlu0 %1880, %v1722
  %v1882 = vpop.permute.xlu0 %1881
  %v1884 = vmul.f32 %v1882, %v301
  %v1885 = vadd.f32 %v1839, %v1844
  %v1886 = vadd.f32 %v1849, %v1854
  %v1887 = vadd.f32 %v1859, %v1864
  %v1888 = vadd.f32 %v1869, %v1874
  %v1889 = vadd.f32 %v1879, %v1884
  %v1890 = vadd.f32 %v1885, %v1886
  %v1891 = vadd.f32 %v1887, %v1888
  %v1892 = vadd.f32 %v1890, %v1891
  %v1893 = vadd.f32 %v1892, %v1889
  %v1895 = vrot.slane %v1893, 6
  %v1897 = vadd.f32 %v1834, %v1895
  %v1898 = vtanh.pop %v1897
  %v1899 = vadd.f32 %v1898, 1.0
  %v1900 = vmul.f32 %v1899, 0.5
  %v1902 = vrot.slane %v1716, 6
  %v1904 = vmul.f32 %v1900, %v1902
  %1906 = vrot.lane.b32.xlu0 %v1898, 108
  %v1907 = vpop.permute.xlu0 %1906
  %v1909 = vmul.f32 %v1900, %v1907
  %1911 = vrot.lane.b32.xlu0 %v1909, 10
  %v1912 = vpop.permute.xlu0 %1911
  %v1914 = vadd.f32 %v1904, %v1912
  %v1915 = vtanh.pop %v1914
  %1917 = vrot.lane.b32.xlu0 %v1915, 20
  %v1918 = vpop.permute.xlu0 %1917
  %v1920 = vmul.f32 %v1900, %v1918
  %1922 = vrot.lane.b32.xlu0 %v1920, 98
  %v1923 = vpop.permute.xlu0 %1922
  %1925 = vst.msk [vmem:[#allocation2 + $0x10] sm:$0x3] %vm337, %v1923
  %v1926 = vmul.f32 %v1777, %v71
  %v1927 = vmul.f32 %v1782, %v76
  %v1928 = vmul.f32 %v1787, %v81
  %v1929 = vmul.f32 %v1792, %v86
  %v1930 = vmul.f32 %v1797, %v91
  %v1931 = vmul.f32 %v1802, %v96
  %v1932 = vmul.f32 %v1807, %v101
  %v1933 = vmul.f32 %v1812, %v106
  %v1934 = vmul.f32 %v1817, %v111
  %v1935 = vmul.f32 %v1822, %v116
  %v1936 = vadd.f32 %v1926, %v1927
  %v1937 = vadd.f32 %v1928, %v1929
  %v1938 = vadd.f32 %v1930, %v1931
  %v1939 = vadd.f32 %v1932, %v1933
  %v1940 = vadd.f32 %v1934, %v1935
  %v1941 = vadd.f32 %v1936, %v1937
  %v1942 = vadd.f32 %v1938, %v1939
  %v1943 = vadd.f32 %v1941, %v1942
  %v1944 = vadd.f32 %v1943, %v1940
  %v1946 = vrot.slane %v1944, 6
  %v1948 = vadd.f32 %v66, %v1946
  %v1949 = vtanh.pop %v1948
  %v1950 = vadd.f32 %v1949, 1.0
  %v1951 = vmul.f32 %v1950, 0.5
  %v1953 = vrot.slane %v1767, 6
  %v1955 = vmul.f32 %v1951, %v1953
  %1957 = vrot.lane.b32.xlu0 %v1949, 108
  %v1958 = vpop.permute.xlu0 %1957
  %v1960 = vmul.f32 %v1951, %v1958
  %1962 = vrot.lane.b32.xlu0 %v1960, 10
  %v1963 = vpop.permute.xlu0 %1962
  %v1965 = vadd.f32 %v1955, %v1963
  %v1966 = vtanh.pop %v1965
  %1968 = vrot.lane.b32.xlu0 %v1966, 20
  %v1969 = vpop.permute.xlu0 %1968
  %v1971 = vmul.f32 %v1951, %v1969
  %1973 = vset.pattern.permute.xlu0 30
  %1974 = vperm.xlu0 %1973, %v1971
  %v1975 = vpop.permute.xlu0 %1974
  %v1977 = vmul.f32 %v1975, %v156
  %1978 = vset.pattern.permute.xlu0 31
  %1979 = vperm.xlu0 %1978, %v1971
  %v1980 = vpop.permute.xlu0 %1979
  %v1982 = vmul.f32 %v1980, %v165
  %1983 = vset.pattern.permute.xlu0 32
  %1984 = vperm.xlu0 %1983, %v1971
  %v1985 = vpop.permute.xlu0 %1984
  %v1987 = vmul.f32 %v1985, %v174
  %1988 = vset.pattern.permute.xlu0 33
  %1989 = vperm.xlu0 %1988, %v1971
  %v1990 = vpop.permute.xlu0 %1989
  %v1992 = vmul.f32 %v1990, %v183
  %1993 = vset.pattern.permute.xlu0 34
  %1994 = vperm.xlu0 %1993, %v1971
  %v1995 = vpop.permute.xlu0 %1994
  %v1997 = vmul.f32 %v1995, %v192
  %1998 = vset.pattern.permute.xlu0 35
  %1999 = vperm.xlu0 %1998, %v1971
  %v2000 = vpop.permute.xlu0 %1999
  %v2002 = vmul.f32 %v2000, %v201
  %2003 = vset.pattern.permute.xlu0 36
  %2004 = vperm.xlu0 %2003, %v1971
  %v2005 = vpop.permute.xlu0 %2004
  %v2007 = vmul.f32 %v2005, %v210
  %2008 = vset.pattern.permute.xlu0 37
  %2009 = vperm.xlu0 %2008, %v1971
  %v2010 = vpop.permute.xlu0 %2009
  %v2012 = vmul.f32 %v2010, %v219
  %2013 = vset.pattern.permute.xlu0 38
  %2014 = vperm.xlu0 %2013, %v1971
  %v2015 = vpop.permute.xlu0 %2014
  %v2017 = vmul.f32 %v2015, %v228
  %2018 = vset.pattern.permute.xlu0 39
  %2019 = vperm.xlu0 %2018, %v1971
  %v2020 = vpop.permute.xlu0 %2019
  %v2022 = vmul.f32 %v2020, %v237
  %v2023 = vadd.f32 %v1977, %v1982
  %v2024 = vadd.f32 %v1987, %v1992
  %v2025 = vadd.f32 %v1997, %v2002
  %v2026 = vadd.f32 %v2007, %v2012
  %v2027 = vadd.f32 %v2017, %v2022
  %v2028 = vadd.f32 %v2023, %v2024
  %v2029 = vadd.f32 %v2025, %v2026
  %v2030 = vadd.f32 %v2028, %v2029
  %v2031 = vadd.f32 %v2030, %v2027
  %v2032 = vadd.f32 %v2031, %v251
  %2033 = vset.pattern.permute.xlu0 30
  %2034 = vperm.xlu0 %2033, %v1920
  %v2035 = vpop.permute.xlu0 %2034
  %v2037 = vmul.f32 %v2035, %v256
  %2038 = vset.pattern.permute.xlu0 31
  %2039 = vperm.xlu0 %2038, %v1920
  %v2040 = vpop.permute.xlu0 %2039
  %v2042 = vmul.f32 %v2040, %v261
  %2043 = vset.pattern.permute.xlu0 32
  %2044 = vperm.xlu0 %2043, %v1920
  %v2045 = vpop.permute.xlu0 %2044
  %v2047 = vmul.f32 %v2045, %v266
  %2048 = vset.pattern.permute.xlu0 33
  %2049 = vperm.xlu0 %2048, %v1920
  %v2050 = vpop.permute.xlu0 %2049
  %v2052 = vmul.f32 %v2050, %v271
  %2053 = vset.pattern.permute.xlu0 34
  %2054 = vperm.xlu0 %2053, %v1920
  %v2055 = vpop.permute.xlu0 %2054
  %v2057 = vmul.f32 %v2055, %v276
  %2058 = vset.pattern.permute.xlu0 35
  %2059 = vperm.xlu0 %2058, %v1920
  %v2060 = vpop.permute.xlu0 %2059
  %v2062 = vmul.f32 %v2060, %v281
  %2063 = vset.pattern.permute.xlu0 36
  %2064 = vperm.xlu0 %2063, %v1920
  %v2065 = vpop.permute.xlu0 %2064
  %v2067 = vmul.f32 %v2065, %v286
  %2068 = vset.pattern.permute.xlu0 37
  %2069 = vperm.xlu0 %2068, %v1920
  %v2070 = vpop.permute.xlu0 %2069
  %v2072 = vmul.f32 %v2070, %v291
  %2073 = vset.pattern.permute.xlu0 38
  %2074 = vperm.xlu0 %2073, %v1920
  %v2075 = vpop.permute.xlu0 %2074
  %v2077 = vmul.f32 %v2075, %v296
  %2078 = vset.pattern.permute.xlu0 39
  %2079 = vperm.xlu0 %2078, %v1920
  %v2080 = vpop.permute.xlu0 %2079
  %v2082 = vmul.f32 %v2080, %v301
  %v2083 = vadd.f32 %v2037, %v2042
  %v2084 = vadd.f32 %v2047, %v2052
  %v2085 = vadd.f32 %v2057, %v2062
  %v2086 = vadd.f32 %v2067, %v2072
  %v2087 = vadd.f32 %v2077, %v2082
  %v2088 = vadd.f32 %v2083, %v2084
  %v2089 = vadd.f32 %v2085, %v2086
  %v2090 = vadd.f32 %v2088, %v2089
  %v2091 = vadd.f32 %v2090, %v2087
  %v2093 = vrot.slane %v2091, 6
  %v2095 = vadd.f32 %v2032, %v2093
  %v2096 = vtanh.pop %v2095
  %v2097 = vadd.f32 %v2096, 1.0
  %v2098 = vmul.f32 %v2097, 0.5
  %v2100 = vrot.slane %v1914, 6
  %v2102 = vmul.f32 %v2098, %v2100
  %2104 = vrot.lane.b32.xlu0 %v2096, 108
  %v2105 = vpop.permute.xlu0 %2104
  %v2107 = vmul.f32 %v2098, %v2105
  %2109 = vrot.lane.b32.xlu0 %v2107, 10
  %v2110 = vpop.permute.xlu0 %2109
  %v2112 = vadd.f32 %v2102, %v2110
  %v2113 = vtanh.pop %v2112
  %2115 = vrot.lane.b32.xlu0 %v2113, 20
  %v2116 = vpop.permute.xlu0 %2115
  %v2118 = vmul.f32 %v2098, %v2116
  %2120 = vrot.lane.b32.xlu0 %v2118, 98
  %v2121 = vpop.permute.xlu0 %2120
  %2123 = vst.msk [vmem:[#allocation2 + $0x10] sm:$0xc] %vm536, %v2121
  %v2124 = vmul.f32 %v1975, %v71
  %v2125 = vmul.f32 %v1980, %v76
  %v2126 = vmul.f32 %v1985, %v81
  %v2127 = vmul.f32 %v1990, %v86
  %v2128 = vmul.f32 %v1995, %v91
  %v2129 = vmul.f32 %v2000, %v96
  %v2130 = vmul.f32 %v2005, %v101
  %v2131 = vmul.f32 %v2010, %v106
  %v2132 = vmul.f32 %v2015, %v111
  %v2133 = vmul.f32 %v2020, %v116
  %v2134 = vadd.f32 %v2124, %v2125
  %v2135 = vadd.f32 %v2126, %v2127
  %v2136 = vadd.f32 %v2128, %v2129
  %v2137 = vadd.f32 %v2130, %v2131
  %v2138 = vadd.f32 %v2132, %v2133
  %v2139 = vadd.f32 %v2134, %v2135
  %v2140 = vadd.f32 %v2136, %v2137
  %v2141 = vadd.f32 %v2139, %v2140
  %v2142 = vadd.f32 %v2141, %v2138
  %v2144 = vrot.slane %v2142, 6
  %v2146 = vadd.f32 %v66, %v2144
  %v2147 = vtanh.pop %v2146
  %v2148 = vadd.f32 %v2147, 1.0
  %v2149 = vmul.f32 %v2148, 0.5
  %v2151 = vrot.slane %v1965, 6
  %v2153 = vmul.f32 %v2149, %v2151
  %2155 = vrot.lane.b32.xlu0 %v2147, 108
  %v2156 = vpop.permute.xlu0 %2155
  %v2158 = vmul.f32 %v2149, %v2156
  %2160 = vrot.lane.b32.xlu0 %v2158, 10
  %v2161 = vpop.permute.xlu0 %2160
  %v2163 = vadd.f32 %v2153, %v2161
  %v2164 = vtanh.pop %v2163
  %2166 = vrot.lane.b32.xlu0 %v2164, 20
  %v2167 = vpop.permute.xlu0 %2166
  %v2169 = vmul.f32 %v2149, %v2167
  %2171 = vset.pattern.permute.xlu0 30
  %2172 = vperm.xlu0 %2171, %v2169
  %v2173 = vpop.permute.xlu0 %2172
  %v2175 = vmul.f32 %v2173, %v156
  %2176 = vset.pattern.permute.xlu0 31
  %2177 = vperm.xlu0 %2176, %v2169
  %v2178 = vpop.permute.xlu0 %2177
  %v2180 = vmul.f32 %v2178, %v165
  %2181 = vset.pattern.permute.xlu0 32
  %2182 = vperm.xlu0 %2181, %v2169
  %v2183 = vpop.permute.xlu0 %2182
  %v2185 = vmul.f32 %v2183, %v174
  %2186 = vset.pattern.permute.xlu0 33
  %2187 = vperm.xlu0 %2186, %v2169
  %v2188 = vpop.permute.xlu0 %2187
  %v2190 = vmul.f32 %v2188, %v183
  %2191 = vset.pattern.permute.xlu0 34
  %2192 = vperm.xlu0 %2191, %v2169
  %v2193 = vpop.permute.xlu0 %2192
  %v2195 = vmul.f32 %v2193, %v192
  %2196 = vset.pattern.permute.xlu0 35
  %2197 = vperm.xlu0 %2196, %v2169
  %v2198 = vpop.permute.xlu0 %2197
  %v2200 = vmul.f32 %v2198, %v201
  %2201 = vset.pattern.permute.xlu0 36
  %2202 = vperm.xlu0 %2201, %v2169
  %v2203 = vpop.permute.xlu0 %2202
  %v2205 = vmul.f32 %v2203, %v210
  %2206 = vset.pattern.permute.xlu0 37
  %2207 = vperm.xlu0 %2206, %v2169
  %v2208 = vpop.permute.xlu0 %2207
  %v2210 = vmul.f32 %v2208, %v219
  %2211 = vset.pattern.permute.xlu0 38
  %2212 = vperm.xlu0 %2211, %v2169
  %v2213 = vpop.permute.xlu0 %2212
  %v2215 = vmul.f32 %v2213, %v228
  %2216 = vset.pattern.permute.xlu0 39
  %2217 = vperm.xlu0 %2216, %v2169
  %v2218 = vpop.permute.xlu0 %2217
  %v2220 = vmul.f32 %v2218, %v237
  %v2221 = vadd.f32 %v2175, %v2180
  %v2222 = vadd.f32 %v2185, %v2190
  %v2223 = vadd.f32 %v2195, %v2200
  %v2224 = vadd.f32 %v2205, %v2210
  %v2225 = vadd.f32 %v2215, %v2220
  %v2226 = vadd.f32 %v2221, %v2222
  %v2227 = vadd.f32 %v2223, %v2224
  %v2228 = vadd.f32 %v2226, %v2227
  %v2229 = vadd.f32 %v2228, %v2225
  %v2230 = vadd.f32 %v2229, %v251
  %2231 = vset.pattern.permute.xlu0 30
  %2232 = vperm.xlu0 %2231, %v2118
  %v2233 = vpop.permute.xlu0 %2232
  %v2235 = vmul.f32 %v2233, %v256
  %2236 = vset.pattern.permute.xlu0 31
  %2237 = vperm.xlu0 %2236, %v2118
  %v2238 = vpop.permute.xlu0 %2237
  %v2240 = vmul.f32 %v2238, %v261
  %2241 = vset.pattern.permute.xlu0 32
  %2242 = vperm.xlu0 %2241, %v2118
  %v2243 = vpop.permute.xlu0 %2242
  %v2245 = vmul.f32 %v2243, %v266
  %2246 = vset.pattern.permute.xlu0 33
  %2247 = vperm.xlu0 %2246, %v2118
  %v2248 = vpop.permute.xlu0 %2247
  %v2250 = vmul.f32 %v2248, %v271
  %2251 = vset.pattern.permute.xlu0 34
  %2252 = vperm.xlu0 %2251, %v2118
  %v2253 = vpop.permute.xlu0 %2252
  %v2255 = vmul.f32 %v2253, %v276
  %2256 = vset.pattern.permute.xlu0 35
  %2257 = vperm.xlu0 %2256, %v2118
  %v2258 = vpop.permute.xlu0 %2257
  %v2260 = vmul.f32 %v2258, %v281
  %2261 = vset.pattern.permute.xlu0 36
  %2262 = vperm.xlu0 %2261, %v2118
  %v2263 = vpop.permute.xlu0 %2262
  %v2265 = vmul.f32 %v2263, %v286
  %2266 = vset.pattern.permute.xlu0 37
  %2267 = vperm.xlu0 %2266, %v2118
  %v2268 = vpop.permute.xlu0 %2267
  %v2270 = vmul.f32 %v2268, %v291
  %2271 = vset.pattern.permute.xlu0 38
  %2272 = vperm.xlu0 %2271, %v2118
  %v2273 = vpop.permute.xlu0 %2272
  %v2275 = vmul.f32 %v2273, %v296
  %2276 = vset.pattern.permute.xlu0 39
  %2277 = vperm.xlu0 %2276, %v2118
  %v2278 = vpop.permute.xlu0 %2277
  %v2280 = vmul.f32 %v2278, %v301
  %v2281 = vadd.f32 %v2235, %v2240
  %v2282 = vadd.f32 %v2245, %v2250
  %v2283 = vadd.f32 %v2255, %v2260
  %v2284 = vadd.f32 %v2265, %v2270
  %v2285 = vadd.f32 %v2275, %v2280
  %v2286 = vadd.f32 %v2281, %v2282
  %v2287 = vadd.f32 %v2283, %v2284
  %v2288 = vadd.f32 %v2286, %v2287
  %v2289 = vadd.f32 %v2288, %v2285
  %v2291 = vrot.slane %v2289, 6
  %v2293 = vadd.f32 %v2230, %v2291
  %v2294 = vtanh.pop %v2293
  %v2295 = vadd.f32 %v2294, 1.0
  %v2296 = vmul.f32 %v2295, 0.5
  %v2298 = vrot.slane %v2112, 6
  %v2300 = vmul.f32 %v2296, %v2298
  %2302 = vrot.lane.b32.xlu0 %v2294, 108
  %v2303 = vpop.permute.xlu0 %2302
  %v2305 = vmul.f32 %v2296, %v2303
  %2307 = vrot.lane.b32.xlu0 %v2305, 10
  %v2308 = vpop.permute.xlu0 %2307
  %v2310 = vadd.f32 %v2300, %v2308
  %v2311 = vtanh.pop %v2310
  %2313 = vrot.lane.b32.xlu0 %v2311, 20
  %v2314 = vpop.permute.xlu0 %2313
  %v2316 = vmul.f32 %v2296, %v2314
  %2318 = vrot.lane.b32.xlu0 %v2316, 98
  %v2319 = vpop.permute.xlu0 %2318
  %2321 = vst.msk [vmem:[#allocation2 + $0x10] sm:$0x30] %vm735, %v2319
  %v2322 = vmul.f32 %v2173, %v71
  %v2323 = vmul.f32 %v2178, %v76
  %v2324 = vmul.f32 %v2183, %v81
  %v2325 = vmul.f32 %v2188, %v86
  %v2326 = vmul.f32 %v2193, %v91
  %v2327 = vmul.f32 %v2198, %v96
  %v2328 = vmul.f32 %v2203, %v101
  %v2329 = vmul.f32 %v2208, %v106
  %v2330 = vmul.f32 %v2213, %v111
  %v2331 = vmul.f32 %v2218, %v116
  %v2332 = vadd.f32 %v2322, %v2323
  %v2333 = vadd.f32 %v2324, %v2325
  %v2334 = vadd.f32 %v2326, %v2327
  %v2335 = vadd.f32 %v2328, %v2329
  %v2336 = vadd.f32 %v2330, %v2331
  %v2337 = vadd.f32 %v2332, %v2333
  %v2338 = vadd.f32 %v2334, %v2335
  %v2339 = vadd.f32 %v2337, %v2338
  %v2340 = vadd.f32 %v2339, %v2336
  %v2342 = vrot.slane %v2340, 6
  %v2344 = vadd.f32 %v66, %v2342
  %v2345 = vtanh.pop %v2344
  %v2346 = vadd.f32 %v2345, 1.0
  %v2347 = vmul.f32 %v2346, 0.5
  %v2349 = vrot.slane %v2163, 6
  %v2351 = vmul.f32 %v2347, %v2349
  %2353 = vrot.lane.b32.xlu0 %v2345, 108
  %v2354 = vpop.permute.xlu0 %2353
  %v2356 = vmul.f32 %v2347, %v2354
  %2358 = vrot.lane.b32.xlu0 %v2356, 10
  %v2359 = vpop.permute.xlu0 %2358
  %v2361 = vadd.f32 %v2351, %v2359
  %v2362 = vtanh.pop %v2361
  %2364 = vrot.lane.b32.xlu0 %v2362, 20
  %v2365 = vpop.permute.xlu0 %2364
  %v2367 = vmul.f32 %v2347, %v2365
  %2369 = vset.pattern.permute.xlu0 30
  %2370 = vperm.xlu0 %2369, %v2367
  %v2371 = vpop.permute.xlu0 %2370
  %v2373 = vmul.f32 %v2371, %v156
  %2374 = vset.pattern.permute.xlu0 31
  %2375 = vperm.xlu0 %2374, %v2367
  %v2376 = vpop.permute.xlu0 %2375
  %v2378 = vmul.f32 %v2376, %v165
  %2379 = vset.pattern.permute.xlu0 32
  %2380 = vperm.xlu0 %2379, %v2367
  %v2381 = vpop.permute.xlu0 %2380
  %v2383 = vmul.f32 %v2381, %v174
  %2384 = vset.pattern.permute.xlu0 33
  %2385 = vperm.xlu0 %2384, %v2367
  %v2386 = vpop.permute.xlu0 %2385
  %v2388 = vmul.f32 %v2386, %v183
  %2389 = vset.pattern.permute.xlu0 34
  %2390 = vperm.xlu0 %2389, %v2367
  %v2391 = vpop.permute.xlu0 %2390
  %v2393 = vmul.f32 %v2391, %v192
  %2394 = vset.pattern.permute.xlu0 35
  %2395 = vperm.xlu0 %2394, %v2367
  %v2396 = vpop.permute.xlu0 %2395
  %v2398 = vmul.f32 %v2396, %v201
  %2399 = vset.pattern.permute.xlu0 36
  %2400 = vperm.xlu0 %2399, %v2367
  %v2401 = vpop.permute.xlu0 %2400
  %v2403 = vmul.f32 %v2401, %v210
  %2404 = vset.pattern.permute.xlu0 37
  %2405 = vperm.xlu0 %2404, %v2367
  %v2406 = vpop.permute.xlu0 %2405
  %v2408 = vmul.f32 %v2406, %v219
  %2409 = vset.pattern.permute.xlu0 38
  %2410 = vperm.xlu0 %2409, %v2367
  %v2411 = vpop.permute.xlu0 %2410
  %v2413 = vmul.f32 %v2411, %v228
  %2414 = vset.pattern.permute.xlu0 39
  %2415 = vperm.xlu0 %2414, %v2367
  %v2416 = vpop.permute.xlu0 %2415
  %v2418 = vmul.f32 %v2416, %v237
  %v2419 = vadd.f32 %v2373, %v2378
  %v2420 = vadd.f32 %v2383, %v2388
  %v2421 = vadd.f32 %v2393, %v2398
  %v2422 = vadd.f32 %v2403, %v2408
  %v2423 = vadd.f32 %v2413, %v2418
  %v2424 = vadd.f32 %v2419, %v2420
  %v2425 = vadd.f32 %v2421, %v2422
  %v2426 = vadd.f32 %v2424, %v2425
  %v2427 = vadd.f32 %v2426, %v2423
  %v2428 = vadd.f32 %v2427, %v251
  %2429 = vset.pattern.permute.xlu0 30
  %2430 = vperm.xlu0 %2429, %v2316
  %v2431 = vpop.permute.xlu0 %2430
  %v2433 = vmul.f32 %v2431, %v256
  %2434 = vset.pattern.permute.xlu0 31
  %2435 = vperm.xlu0 %2434, %v2316
  %v2436 = vpop.permute.xlu0 %2435
  %v2438 = vmul.f32 %v2436, %v261
  %2439 = vset.pattern.permute.xlu0 32
  %2440 = vperm.xlu0 %2439, %v2316
  %v2441 = vpop.permute.xlu0 %2440
  %v2443 = vmul.f32 %v2441, %v266
  %2444 = vset.pattern.permute.xlu0 33
  %2445 = vperm.xlu0 %2444, %v2316
  %v2446 = vpop.permute.xlu0 %2445
  %v2448 = vmul.f32 %v2446, %v271
  %2449 = vset.pattern.permute.xlu0 34
  %2450 = vperm.xlu0 %2449, %v2316
  %v2451 = vpop.permute.xlu0 %2450
  %v2453 = vmul.f32 %v2451, %v276
  %2454 = vset.pattern.permute.xlu0 35
  %2455 = vperm.xlu0 %2454, %v2316
  %v2456 = vpop.permute.xlu0 %2455
  %v2458 = vmul.f32 %v2456, %v281
  %2459 = vset.pattern.permute.xlu0 36
  %2460 = vperm.xlu0 %2459, %v2316
  %v2461 = vpop.permute.xlu0 %2460
  %v2463 = vmul.f32 %v2461, %v286
  %2464 = vset.pattern.permute.xlu0 37
  %2465 = vperm.xlu0 %2464, %v2316
  %v2466 = vpop.permute.xlu0 %2465
  %v2468 = vmul.f32 %v2466, %v291
  %2469 = vset.pattern.permute.xlu0 38
  %2470 = vperm.xlu0 %2469, %v2316
  %v2471 = vpop.permute.xlu0 %2470
  %v2473 = vmul.f32 %v2471, %v296
  %2474 = vset.pattern.permute.xlu0 39
  %2475 = vperm.xlu0 %2474, %v2316
  %v2476 = vpop.permute.xlu0 %2475
  %v2478 = vmul.f32 %v2476, %v301
  %v2479 = vadd.f32 %v2433, %v2438
  %v2480 = vadd.f32 %v2443, %v2448
  %v2481 = vadd.f32 %v2453, %v2458
  %v2482 = vadd.f32 %v2463, %v2468
  %v2483 = vadd.f32 %v2473, %v2478
  %v2484 = vadd.f32 %v2479, %v2480
  %v2485 = vadd.f32 %v2481, %v2482
  %v2486 = vadd.f32 %v2484, %v2485
  %v2487 = vadd.f32 %v2486, %v2483
  %v2489 = vrot.slane %v2487, 6
  %v2491 = vadd.f32 %v2428, %v2489
  %v2492 = vtanh.pop %v2491
  %v2493 = vadd.f32 %v2492, 1.0
  %v2494 = vmul.f32 %v2493, 0.5
  %v2496 = vrot.slane %v2310, 6
  %v2498 = vmul.f32 %v2494, %v2496
  %2500 = vrot.lane.b32.xlu0 %v2492, 108
  %v2501 = vpop.permute.xlu0 %2500
  %v2503 = vmul.f32 %v2494, %v2501
  %2505 = vrot.lane.b32.xlu0 %v2503, 10
  %v2506 = vpop.permute.xlu0 %2505
  %v2508 = vadd.f32 %v2498, %v2506
  %v2509 = vtanh.pop %v2508
  %2511 = vrot.lane.b32.xlu0 %v2509, 20
  %v2512 = vpop.permute.xlu0 %2511
  %v2514 = vmul.f32 %v2494, %v2512
  %2516 = vrot.lane.b32.xlu0 %v2514, 98
  %v2517 = vpop.permute.xlu0 %2516
  %2519 = vst.msk [vmem:[#allocation2 + $0x10] sm:$0xc0] %vm934, %v2517
  %v2520 = vmul.f32 %v2371, %v71
  %v2521 = vmul.f32 %v2376, %v76
  %v2522 = vmul.f32 %v2381, %v81
  %v2523 = vmul.f32 %v2386, %v86
  %v2524 = vmul.f32 %v2391, %v91
  %v2525 = vmul.f32 %v2396, %v96
  %v2526 = vmul.f32 %v2401, %v101
  %v2527 = vmul.f32 %v2406, %v106
  %v2528 = vmul.f32 %v2411, %v111
  %v2529 = vmul.f32 %v2416, %v116
  %v2530 = vadd.f32 %v2520, %v2521
  %v2531 = vadd.f32 %v2522, %v2523
  %v2532 = vadd.f32 %v2524, %v2525
  %v2533 = vadd.f32 %v2526, %v2527
  %v2534 = vadd.f32 %v2528, %v2529
  %v2535 = vadd.f32 %v2530, %v2531
  %v2536 = vadd.f32 %v2532, %v2533
  %v2537 = vadd.f32 %v2535, %v2536
  %v2538 = vadd.f32 %v2537, %v2534
  %v2540 = vrot.slane %v2538, 6
  %v2542 = vadd.f32 %v67, %v2540
  %v2543 = vtanh.pop %v2542
  %v2544 = vadd.f32 %v2543, 1.0
  %v2545 = vmul.f32 %v2544, 0.5
  %v2547 = vrot.slane %v2361, 6
  %v2549 = vmul.f32 %v2545, %v2547
  %2551 = vrot.lane.b32.xlu0 %v2543, 108
  %v2552 = vpop.permute.xlu0 %2551
  %v2554 = vmul.f32 %v2545, %v2552
  %2556 = vrot.lane.b32.xlu0 %v2554, 10
  %v2557 = vpop.permute.xlu0 %2556
  %v2559 = vadd.f32 %v2549, %v2557
  %v2560 = vtanh.pop %v2559
  %2562 = vrot.lane.b32.xlu0 %v2560, 20
  %v2563 = vpop.permute.xlu0 %2562
  %v2565 = vmul.f32 %v2545, %v2563
  %2567 = vset.pattern.permute.xlu0 30
  %2568 = vperm.xlu0 %2567, %v2565
  %v2569 = vpop.permute.xlu0 %2568
  %v2571 = vmul.f32 %v2569, %v156
  %2572 = vset.pattern.permute.xlu0 31
  %2573 = vperm.xlu0 %2572, %v2565
  %v2574 = vpop.permute.xlu0 %2573
  %v2576 = vmul.f32 %v2574, %v165
  %2577 = vset.pattern.permute.xlu0 32
  %2578 = vperm.xlu0 %2577, %v2565
  %v2579 = vpop.permute.xlu0 %2578
  %v2581 = vmul.f32 %v2579, %v174
  %2582 = vset.pattern.permute.xlu0 33
  %2583 = vperm.xlu0 %2582, %v2565
  %v2584 = vpop.permute.xlu0 %2583
  %v2586 = vmul.f32 %v2584, %v183
  %2587 = vset.pattern.permute.xlu0 34
  %2588 = vperm.xlu0 %2587, %v2565
  %v2589 = vpop.permute.xlu0 %2588
  %v2591 = vmul.f32 %v2589, %v192
  %2592 = vset.pattern.permute.xlu0 35
  %2593 = vperm.xlu0 %2592, %v2565
  %v2594 = vpop.permute.xlu0 %2593
  %v2596 = vmul.f32 %v2594, %v201
  %2597 = vset.pattern.permute.xlu0 36
  %2598 = vperm.xlu0 %2597, %v2565
  %v2599 = vpop.permute.xlu0 %2598
  %v2601 = vmul.f32 %v2599, %v210
  %2602 = vset.pattern.permute.xlu0 37
  %2603 = vperm.xlu0 %2602, %v2565
  %v2604 = vpop.permute.xlu0 %2603
  %v2606 = vmul.f32 %v2604, %v219
  %2607 = vset.pattern.permute.xlu0 38
  %2608 = vperm.xlu0 %2607, %v2565
  %v2609 = vpop.permute.xlu0 %2608
  %v2611 = vmul.f32 %v2609, %v228
  %2612 = vset.pattern.permute.xlu0 39
  %2613 = vperm.xlu0 %2612, %v2565
  %v2614 = vpop.permute.xlu0 %2613
  %v2616 = vmul.f32 %v2614, %v237
  %v2617 = vadd.f32 %v2571, %v2576
  %v2618 = vadd.f32 %v2581, %v2586
  %v2619 = vadd.f32 %v2591, %v2596
  %v2620 = vadd.f32 %v2601, %v2606
  %v2621 = vadd.f32 %v2611, %v2616
  %v2622 = vadd.f32 %v2617, %v2618
  %v2623 = vadd.f32 %v2619, %v2620
  %v2624 = vadd.f32 %v2622, %v2623
  %v2625 = vadd.f32 %v2624, %v2621
  %v2626 = vadd.f32 %v2625, %v251
  %2627 = vset.pattern.permute.xlu0 30
  %2628 = vperm.xlu0 %2627, %v2514
  %v2629 = vpop.permute.xlu0 %2628
  %v2631 = vmul.f32 %v2629, %v256
  %2632 = vset.pattern.permute.xlu0 31
  %2633 = vperm.xlu0 %2632, %v2514
  %v2634 = vpop.permute.xlu0 %2633
  %v2636 = vmul.f32 %v2634, %v261
  %2637 = vset.pattern.permute.xlu0 32
  %2638 = vperm.xlu0 %2637, %v2514
  %v2639 = vpop.permute.xlu0 %2638
  %v2641 = vmul.f32 %v2639, %v266
  %2642 = vset.pattern.permute.xlu0 33
  %2643 = vperm.xlu0 %2642, %v2514
  %v2644 = vpop.permute.xlu0 %2643
  %v2646 = vmul.f32 %v2644, %v271
  %2647 = vset.pattern.permute.xlu0 34
  %2648 = vperm.xlu0 %2647, %v2514
  %v2649 = vpop.permute.xlu0 %2648
  %v2651 = vmul.f32 %v2649, %v276
  %2652 = vset.pattern.permute.xlu0 35
  %2653 = vperm.xlu0 %2652, %v2514
  %v2654 = vpop.permute.xlu0 %2653
  %v2656 = vmul.f32 %v2654, %v281
  %2657 = vset.pattern.permute.xlu0 36
  %2658 = vperm.xlu0 %2657, %v2514
  %v2659 = vpop.permute.xlu0 %2658
  %v2661 = vmul.f32 %v2659, %v286
  %2662 = vset.pattern.permute.xlu0 37
  %2663 = vperm.xlu0 %2662, %v2514
  %v2664 = vpop.permute.xlu0 %2663
  %v2666 = vmul.f32 %v2664, %v291
  %2667 = vset.pattern.permute.xlu0 38
  %2668 = vperm.xlu0 %2667, %v2514
  %v2669 = vpop.permute.xlu0 %2668
  %v2671 = vmul.f32 %v2669, %v296
  %2672 = vset.pattern.permute.xlu0 39
  %2673 = vperm.xlu0 %2672, %v2514
  %v2674 = vpop.permute.xlu0 %2673
  %v2676 = vmul.f32 %v2674, %v301
  %v2677 = vadd.f32 %v2631, %v2636
  %v2678 = vadd.f32 %v2641, %v2646
  %v2679 = vadd.f32 %v2651, %v2656
  %v2680 = vadd.f32 %v2661, %v2666
  %v2681 = vadd.f32 %v2671, %v2676
  %v2682 = vadd.f32 %v2677, %v2678
  %v2683 = vadd.f32 %v2679, %v2680
  %v2684 = vadd.f32 %v2682, %v2683
  %v2685 = vadd.f32 %v2684, %v2681
  %v2687 = vrot.slane %v2685, 6
  %v2689 = vadd.f32 %v2626, %v2687
  %v2690 = vtanh.pop %v2689
  %v2691 = vadd.f32 %v2690, 1.0
  %v2692 = vmul.f32 %v2691, 0.5
  %v2694 = vrot.slane %v2508, 6
  %v2696 = vmul.f32 %v2692, %v2694
  %2698 = vrot.lane.b32.xlu0 %v2690, 108
  %v2699 = vpop.permute.xlu0 %2698
  %v2701 = vmul.f32 %v2692, %v2699
  %2703 = vrot.lane.b32.xlu0 %v2701, 10
  %v2704 = vpop.permute.xlu0 %2703
  %v2706 = vadd.f32 %v2696, %v2704
  %v2707 = vtanh.pop %v2706
  %2709 = vrot.lane.b32.xlu0 %v2707, 20
  %v2710 = vpop.permute.xlu0 %2709
  %v2712 = vmul.f32 %v2692, %v2710
  %2714 = vrot.lane.b32.xlu0 %v2712, 98
  %v2715 = vpop.permute.xlu0 %2714
  %2717 = vst.msk [vmem:[#allocation2 + $0x18] sm:$0x3] %vm337, %v2715
  %v2718 = vmul.f32 %v2569, %v71
  %v2719 = vmul.f32 %v2574, %v76
  %v2720 = vmul.f32 %v2579, %v81
  %v2721 = vmul.f32 %v2584, %v86
  %v2722 = vmul.f32 %v2589, %v91
  %v2723 = vmul.f32 %v2594, %v96
  %v2724 = vmul.f32 %v2599, %v101
  %v2725 = vmul.f32 %v2604, %v106
  %v2726 = vmul.f32 %v2609, %v111
  %v2727 = vmul.f32 %v2614, %v116
  %v2728 = vadd.f32 %v2718, %v2719
  %v2729 = vadd.f32 %v2720, %v2721
  %v2730 = vadd.f32 %v2722, %v2723
  %v2731 = vadd.f32 %v2724, %v2725
  %v2732 = vadd.f32 %v2726, %v2727
  %v2733 = vadd.f32 %v2728, %v2729
  %v2734 = vadd.f32 %v2730, %v2731
  %v2735 = vadd.f32 %v2733, %v2734
  %v2736 = vadd.f32 %v2735, %v2732
  %v2738 = vrot.slane %v2736, 6
  %v2740 = vadd.f32 %v67, %v2738
  %v2741 = vtanh.pop %v2740
  %v2742 = vadd.f32 %v2741, 1.0
  %v2743 = vmul.f32 %v2742, 0.5
  %v2745 = vrot.slane %v2559, 6
  %v2747 = vmul.f32 %v2743, %v2745
  %2749 = vrot.lane.b32.xlu0 %v2741, 108
  %v2750 = vpop.permute.xlu0 %2749
  %v2752 = vmul.f32 %v2743, %v2750
  %2754 = vrot.lane.b32.xlu0 %v2752, 10
  %v2755 = vpop.permute.xlu0 %2754
  %v2757 = vadd.f32 %v2747, %v2755
  %v2758 = vtanh.pop %v2757
  %2760 = vrot.lane.b32.xlu0 %v2758, 20
  %v2761 = vpop.permute.xlu0 %2760
  %v2763 = vmul.f32 %v2743, %v2761
  %2765 = vset.pattern.permute.xlu0 30
  %2766 = vperm.xlu0 %2765, %v2763
  %v2767 = vpop.permute.xlu0 %2766
  %v2769 = vmul.f32 %v2767, %v156
  %2770 = vset.pattern.permute.xlu0 31
  %2771 = vperm.xlu0 %2770, %v2763
  %v2772 = vpop.permute.xlu0 %2771
  %v2774 = vmul.f32 %v2772, %v165
  %2775 = vset.pattern.permute.xlu0 32
  %2776 = vperm.xlu0 %2775, %v2763
  %v2777 = vpop.permute.xlu0 %2776
  %v2779 = vmul.f32 %v2777, %v174
  %2780 = vset.pattern.permute.xlu0 33
  %2781 = vperm.xlu0 %2780, %v2763
  %v2782 = vpop.permute.xlu0 %2781
  %v2784 = vmul.f32 %v2782, %v183
  %2785 = vset.pattern.permute.xlu0 34
  %2786 = vperm.xlu0 %2785, %v2763
  %v2787 = vpop.permute.xlu0 %2786
  %v2789 = vmul.f32 %v2787, %v192
  %2790 = vset.pattern.permute.xlu0 35
  %2791 = vperm.xlu0 %2790, %v2763
  %v2792 = vpop.permute.xlu0 %2791
  %v2794 = vmul.f32 %v2792, %v201
  %2795 = vset.pattern.permute.xlu0 36
  %2796 = vperm.xlu0 %2795, %v2763
  %v2797 = vpop.permute.xlu0 %2796
  %v2799 = vmul.f32 %v2797, %v210
  %2800 = vset.pattern.permute.xlu0 37
  %2801 = vperm.xlu0 %2800, %v2763
  %v2802 = vpop.permute.xlu0 %2801
  %v2804 = vmul.f32 %v2802, %v219
  %2805 = vset.pattern.permute.xlu0 38
  %2806 = vperm.xlu0 %2805, %v2763
  %v2807 = vpop.permute.xlu0 %2806
  %v2809 = vmul.f32 %v2807, %v228
  %2810 = vset.pattern.permute.xlu0 39
  %2811 = vperm.xlu0 %2810, %v2763
  %v2812 = vpop.permute.xlu0 %2811
  %v2814 = vmul.f32 %v2812, %v237
  %v2815 = vadd.f32 %v2769, %v2774
  %v2816 = vadd.f32 %v2779, %v2784
  %v2817 = vadd.f32 %v2789, %v2794
  %v2818 = vadd.f32 %v2799, %v2804
  %v2819 = vadd.f32 %v2809, %v2814
  %v2820 = vadd.f32 %v2815, %v2816
  %v2821 = vadd.f32 %v2817, %v2818
  %v2822 = vadd.f32 %v2820, %v2821
  %v2823 = vadd.f32 %v2822, %v2819
  %v2824 = vadd.f32 %v2823, %v251
  %2825 = vset.pattern.permute.xlu0 30
  %2826 = vperm.xlu0 %2825, %v2712
  %v2827 = vpop.permute.xlu0 %2826
  %v2829 = vmul.f32 %v2827, %v256
  %2830 = vset.pattern.permute.xlu0 31
  %2831 = vperm.xlu0 %2830, %v2712
  %v2832 = vpop.permute.xlu0 %2831
  %v2834 = vmul.f32 %v2832, %v261
  %2835 = vset.pattern.permute.xlu0 32
  %2836 = vperm.xlu0 %2835, %v2712
  %v2837 = vpop.permute.xlu0 %2836
  %v2839 = vmul.f32 %v2837, %v266
  %2840 = vset.pattern.permute.xlu0 33
  %2841 = vperm.xlu0 %2840, %v2712
  %v2842 = vpop.permute.xlu0 %2841
  %v2844 = vmul.f32 %v2842, %v271
  %2845 = vset.pattern.permute.xlu0 34
  %2846 = vperm.xlu0 %2845, %v2712
  %v2847 = vpop.permute.xlu0 %2846
  %v2849 = vmul.f32 %v2847, %v276
  %2850 = vset.pattern.permute.xlu0 35
  %2851 = vperm.xlu0 %2850, %v2712
  %v2852 = vpop.permute.xlu0 %2851
  %v2854 = vmul.f32 %v2852, %v281
  %2855 = vset.pattern.permute.xlu0 36
  %2856 = vperm.xlu0 %2855, %v2712
  %v2857 = vpop.permute.xlu0 %2856
  %v2859 = vmul.f32 %v2857, %v286
  %2860 = vset.pattern.permute.xlu0 37
  %2861 = vperm.xlu0 %2860, %v2712
  %v2862 = vpop.permute.xlu0 %2861
  %v2864 = vmul.f32 %v2862, %v291
  %2865 = vset.pattern.permute.xlu0 38
  %2866 = vperm.xlu0 %2865, %v2712
  %v2867 = vpop.permute.xlu0 %2866
  %v2869 = vmul.f32 %v2867, %v296
  %2870 = vset.pattern.permute.xlu0 39
  %2871 = vperm.xlu0 %2870, %v2712
  %v2872 = vpop.permute.xlu0 %2871
  %v2874 = vmul.f32 %v2872, %v301
  %v2875 = vadd.f32 %v2829, %v2834
  %v2876 = vadd.f32 %v2839, %v2844
  %v2877 = vadd.f32 %v2849, %v2854
  %v2878 = vadd.f32 %v2859, %v2864
  %v2879 = vadd.f32 %v2869, %v2874
  %v2880 = vadd.f32 %v2875, %v2876
  %v2881 = vadd.f32 %v2877, %v2878
  %v2882 = vadd.f32 %v2880, %v2881
  %v2883 = vadd.f32 %v2882, %v2879
  %v2885 = vrot.slane %v2883, 6
  %v2887 = vadd.f32 %v2824, %v2885
  %v2888 = vtanh.pop %v2887
  %v2889 = vadd.f32 %v2888, 1.0
  %v2890 = vmul.f32 %v2889, 0.5
  %v2892 = vrot.slane %v2706, 6
  %v2894 = vmul.f32 %v2890, %v2892
  %2896 = vrot.lane.b32.xlu0 %v2888, 108
  %v2897 = vpop.permute.xlu0 %2896
  %v2899 = vmul.f32 %v2890, %v2897
  %2901 = vrot.lane.b32.xlu0 %v2899, 10
  %v2902 = vpop.permute.xlu0 %2901
  %v2904 = vadd.f32 %v2894, %v2902
  %v2905 = vtanh.pop %v2904
  %2907 = vrot.lane.b32.xlu0 %v2905, 20
  %v2908 = vpop.permute.xlu0 %2907
  %v2910 = vmul.f32 %v2890, %v2908
  %2912 = vrot.lane.b32.xlu0 %v2910, 98
  %v2913 = vpop.permute.xlu0 %2912
  %2915 = vst.msk [vmem:[#allocation2 + $0x18] sm:$0xc] %vm536, %v2913
  %v2916 = vmul.f32 %v2767, %v71
  %v2917 = vmul.f32 %v2772, %v76
  %v2918 = vmul.f32 %v2777, %v81
  %v2919 = vmul.f32 %v2782, %v86
  %v2920 = vmul.f32 %v2787, %v91
  %v2921 = vmul.f32 %v2792, %v96
  %v2922 = vmul.f32 %v2797, %v101
  %v2923 = vmul.f32 %v2802, %v106
  %v2924 = vmul.f32 %v2807, %v111
  %v2925 = vmul.f32 %v2812, %v116
  %v2926 = vadd.f32 %v2916, %v2917
  %v2927 = vadd.f32 %v2918, %v2919
  %v2928 = vadd.f32 %v2920, %v2921
  %v2929 = vadd.f32 %v2922, %v2923
  %v2930 = vadd.f32 %v2924, %v2925
  %v2931 = vadd.f32 %v2926, %v2927
  %v2932 = vadd.f32 %v2928, %v2929
  %v2933 = vadd.f32 %v2931, %v2932
  %v2934 = vadd.f32 %v2933, %v2930
  %v2936 = vrot.slane %v2934, 6
  %v2938 = vadd.f32 %v67, %v2936
  %v2939 = vtanh.pop %v2938
  %v2940 = vadd.f32 %v2939, 1.0
  %v2941 = vmul.f32 %v2940, 0.5
  %v2943 = vrot.slane %v2757, 6
  %v2945 = vmul.f32 %v2941, %v2943
  %2947 = vrot.lane.b32.xlu0 %v2939, 108
  %v2948 = vpop.permute.xlu0 %2947
  %v2950 = vmul.f32 %v2941, %v2948
  %2952 = vrot.lane.b32.xlu0 %v2950, 10
  %v2953 = vpop.permute.xlu0 %2952
  %v2955 = vadd.f32 %v2945, %v2953
  %v2956 = vtanh.pop %v2955
  %2958 = vrot.lane.b32.xlu0 %v2956, 20
  %v2959 = vpop.permute.xlu0 %2958
  %v2961 = vmul.f32 %v2941, %v2959
  %2963 = vset.pattern.permute.xlu0 30
  %2964 = vperm.xlu0 %2963, %v2961
  %v2965 = vpop.permute.xlu0 %2964
  %v2967 = vmul.f32 %v2965, %v156
  %2968 = vset.pattern.permute.xlu0 31
  %2969 = vperm.xlu0 %2968, %v2961
  %v2970 = vpop.permute.xlu0 %2969
  %v2972 = vmul.f32 %v2970, %v165
  %2973 = vset.pattern.permute.xlu0 32
  %2974 = vperm.xlu0 %2973, %v2961
  %v2975 = vpop.permute.xlu0 %2974
  %v2977 = vmul.f32 %v2975, %v174
  %2978 = vset.pattern.permute.xlu0 33
  %2979 = vperm.xlu0 %2978, %v2961
  %v2980 = vpop.permute.xlu0 %2979
  %v2982 = vmul.f32 %v2980, %v183
  %2983 = vset.pattern.permute.xlu0 34
  %2984 = vperm.xlu0 %2983, %v2961
  %v2985 = vpop.permute.xlu0 %2984
  %v2987 = vmul.f32 %v2985, %v192
  %2988 = vset.pattern.permute.xlu0 35
  %2989 = vperm.xlu0 %2988, %v2961
  %v2990 = vpop.permute.xlu0 %2989
  %v2992 = vmul.f32 %v2990, %v201
  %2993 = vset.pattern.permute.xlu0 36
  %2994 = vperm.xlu0 %2993, %v2961
  %v2995 = vpop.permute.xlu0 %2994
  %v2997 = vmul.f32 %v2995, %v210
  %2998 = vset.pattern.permute.xlu0 37
  %2999 = vperm.xlu0 %2998, %v2961
  %v3000 = vpop.permute.xlu0 %2999
  %v3002 = vmul.f32 %v3000, %v219
  %3003 = vset.pattern.permute.xlu0 38
  %3004 = vperm.xlu0 %3003, %v2961
  %v3005 = vpop.permute.xlu0 %3004
  %v3007 = vmul.f32 %v3005, %v228
  %3008 = vset.pattern.permute.xlu0 39
  %3009 = vperm.xlu0 %3008, %v2961
  %v3010 = vpop.permute.xlu0 %3009
  %v3012 = vmul.f32 %v3010, %v237
  %v3013 = vadd.f32 %v2967, %v2972
  %v3014 = vadd.f32 %v2977, %v2982
  %v3015 = vadd.f32 %v2987, %v2992
  %v3016 = vadd.f32 %v2997, %v3002
  %v3017 = vadd.f32 %v3007, %v3012
  %v3018 = vadd.f32 %v3013, %v3014
  %v3019 = vadd.f32 %v3015, %v3016
  %v3020 = vadd.f32 %v3018, %v3019
  %v3021 = vadd.f32 %v3020, %v3017
  %v3022 = vadd.f32 %v3021, %v251
  %3023 = vset.pattern.permute.xlu0 30
  %3024 = vperm.xlu0 %3023, %v2910
  %v3025 = vpop.permute.xlu0 %3024
  %v3027 = vmul.f32 %v3025, %v256
  %3028 = vset.pattern.permute.xlu0 31
  %3029 = vperm.xlu0 %3028, %v2910
  %v3030 = vpop.permute.xlu0 %3029
  %v3032 = vmul.f32 %v3030, %v261
  %3033 = vset.pattern.permute.xlu0 32
  %3034 = vperm.xlu0 %3033, %v2910
  %v3035 = vpop.permute.xlu0 %3034
  %v3037 = vmul.f32 %v3035, %v266
  %3038 = vset.pattern.permute.xlu0 33
  %3039 = vperm.xlu0 %3038, %v2910
  %v3040 = vpop.permute.xlu0 %3039
  %v3042 = vmul.f32 %v3040, %v271
  %3043 = vset.pattern.permute.xlu0 34
  %3044 = vperm.xlu0 %3043, %v2910
  %v3045 = vpop.permute.xlu0 %3044
  %v3047 = vmul.f32 %v3045, %v276
  %3048 = vset.pattern.permute.xlu0 35
  %3049 = vperm.xlu0 %3048, %v2910
  %v3050 = vpop.permute.xlu0 %3049
  %v3052 = vmul.f32 %v3050, %v281
  %3053 = vset.pattern.permute.xlu0 36
  %3054 = vperm.xlu0 %3053, %v2910
  %v3055 = vpop.permute.xlu0 %3054
  %v3057 = vmul.f32 %v3055, %v286
  %3058 = vset.pattern.permute.xlu0 37
  %3059 = vperm.xlu0 %3058, %v2910
  %v3060 = vpop.permute.xlu0 %3059
  %v3062 = vmul.f32 %v3060, %v291
  %3063 = vset.pattern.permute.xlu0 38
  %3064 = vperm.xlu0 %3063, %v2910
  %v3065 = vpop.permute.xlu0 %3064
  %v3067 = vmul.f32 %v3065, %v296
  %3068 = vset.pattern.permute.xlu0 39
  %3069 = vperm.xlu0 %3068, %v2910
  %v3070 = vpop.permute.xlu0 %3069
  %v3072 = vmul.f32 %v3070, %v301
  %v3073 = vadd.f32 %v3027, %v3032
  %v3074 = vadd.f32 %v3037, %v3042
  %v3075 = vadd.f32 %v3047, %v3052
  %v3076 = vadd.f32 %v3057, %v3062
  %v3077 = vadd.f32 %v3067, %v3072
  %v3078 = vadd.f32 %v3073, %v3074
  %v3079 = vadd.f32 %v3075, %v3076
  %v3080 = vadd.f32 %v3078, %v3079
  %v3081 = vadd.f32 %v3080, %v3077
  %v3083 = vrot.slane %v3081, 6
  %v3085 = vadd.f32 %v3022, %v3083
  %v3086 = vtanh.pop %v3085
  %v3087 = vadd.f32 %v3086, 1.0
  %v3088 = vmul.f32 %v3087, 0.5
  %v3090 = vrot.slane %v2904, 6
  %v3092 = vmul.f32 %v3088, %v3090
  %3094 = vrot.lane.b32.xlu0 %v3086, 108
  %v3095 = vpop.permute.xlu0 %3094
  %v3097 = vmul.f32 %v3088, %v3095
  %3099 = vrot.lane.b32.xlu0 %v3097, 10
  %v3100 = vpop.permute.xlu0 %3099
  %v3102 = vadd.f32 %v3092, %v3100
  %v3103 = vtanh.pop %v3102
  %3105 = vrot.lane.b32.xlu0 %v3103, 20
  %v3106 = vpop.permute.xlu0 %3105
  %v3108 = vmul.f32 %v3088, %v3106
  %3110 = vrot.lane.b32.xlu0 %v3108, 98
  %v3111 = vpop.permute.xlu0 %3110
  %3113 = vst.msk [vmem:[#allocation2 + $0x18] sm:$0x30] %vm735, %v3111
  %v3114 = vmul.f32 %v2965, %v71
  %v3115 = vmul.f32 %v2970, %v76
  %v3116 = vmul.f32 %v2975, %v81
  %v3117 = vmul.f32 %v2980, %v86
  %v3118 = vmul.f32 %v2985, %v91
  %v3119 = vmul.f32 %v2990, %v96
  %v3120 = vmul.f32 %v2995, %v101
  %v3121 = vmul.f32 %v3000, %v106
  %v3122 = vmul.f32 %v3005, %v111
  %v3123 = vmul.f32 %v3010, %v116
  %v3124 = vadd.f32 %v3114, %v3115
  %v3125 = vadd.f32 %v3116, %v3117
  %v3126 = vadd.f32 %v3118, %v3119
  %v3127 = vadd.f32 %v3120, %v3121
  %v3128 = vadd.f32 %v3122, %v3123
  %v3129 = vadd.f32 %v3124, %v3125
  %v3130 = vadd.f32 %v3126, %v3127
  %v3131 = vadd.f32 %v3129, %v3130
  %v3132 = vadd.f32 %v3131, %v3128
  %v3134 = vrot.slane %v3132, 6
  %v3136 = vadd.f32 %v67, %v3134
  %v3137 = vtanh.pop %v3136
  %v3138 = vadd.f32 %v3137, 1.0
  %v3139 = vmul.f32 %v3138, 0.5
  %v3141 = vrot.slane %v2955, 6
  %v3143 = vmul.f32 %v3139, %v3141
  %3145 = vrot.lane.b32.xlu0 %v3137, 108
  %v3146 = vpop.permute.xlu0 %3145
  %v3148 = vmul.f32 %v3139, %v3146
  %3150 = vrot.lane.b32.xlu0 %v3148, 10
  %v3151 = vpop.permute.xlu0 %3150
  %v3153 = vadd.f32 %v3143, %v3151
  %v3154 = vtanh.pop %v3153
  %3156 = vrot.lane.b32.xlu0 %v3154, 20
  %v3157 = vpop.permute.xlu0 %3156
  %v3159 = vmul.f32 %v3139, %v3157
  %3161 = vset.pattern.permute.xlu0 30
  %3162 = vperm.xlu0 %3161, %v3159
  %v3163 = vpop.permute.xlu0 %3162
  %v3165 = vmul.f32 %v3163, %v156
  %3166 = vset.pattern.permute.xlu0 31
  %3167 = vperm.xlu0 %3166, %v3159
  %v3168 = vpop.permute.xlu0 %3167
  %v3170 = vmul.f32 %v3168, %v165
  %3171 = vset.pattern.permute.xlu0 32
  %3172 = vperm.xlu0 %3171, %v3159
  %v3173 = vpop.permute.xlu0 %3172
  %v3175 = vmul.f32 %v3173, %v174
  %3176 = vset.pattern.permute.xlu0 33
  %3177 = vperm.xlu0 %3176, %v3159
  %v3178 = vpop.permute.xlu0 %3177
  %v3180 = vmul.f32 %v3178, %v183
  %3181 = vset.pattern.permute.xlu0 34
  %3182 = vperm.xlu0 %3181, %v3159
  %v3183 = vpop.permute.xlu0 %3182
  %v3185 = vmul.f32 %v3183, %v192
  %3186 = vset.pattern.permute.xlu0 35
  %3187 = vperm.xlu0 %3186, %v3159
  %v3188 = vpop.permute.xlu0 %3187
  %v3190 = vmul.f32 %v3188, %v201
  %3191 = vset.pattern.permute.xlu0 36
  %3192 = vperm.xlu0 %3191, %v3159
  %v3193 = vpop.permute.xlu0 %3192
  %v3195 = vmul.f32 %v3193, %v210
  %3196 = vset.pattern.permute.xlu0 37
  %3197 = vperm.xlu0 %3196, %v3159
  %v3198 = vpop.permute.xlu0 %3197
  %v3200 = vmul.f32 %v3198, %v219
  %3201 = vset.pattern.permute.xlu0 38
  %3202 = vperm.xlu0 %3201, %v3159
  %v3203 = vpop.permute.xlu0 %3202
  %v3205 = vmul.f32 %v3203, %v228
  %3206 = vset.pattern.permute.xlu0 39
  %3207 = vperm.xlu0 %3206, %v3159
  %v3208 = vpop.permute.xlu0 %3207
  %v3210 = vmul.f32 %v3208, %v237
  %v3211 = vadd.f32 %v3165, %v3170
  %v3212 = vadd.f32 %v3175, %v3180
  %v3213 = vadd.f32 %v3185, %v3190
  %v3214 = vadd.f32 %v3195, %v3200
  %v3215 = vadd.f32 %v3205, %v3210
  %v3216 = vadd.f32 %v3211, %v3212
  %v3217 = vadd.f32 %v3213, %v3214
  %v3218 = vadd.f32 %v3216, %v3217
  %v3219 = vadd.f32 %v3218, %v3215
  %v3220 = vadd.f32 %v3219, %v251
  %3221 = vset.pattern.permute.xlu0 30
  %3222 = vperm.xlu0 %3221, %v3108
  %v3223 = vpop.permute.xlu0 %3222
  %v3225 = vmul.f32 %v3223, %v256
  %3226 = vset.pattern.permute.xlu0 31
  %3227 = vperm.xlu0 %3226, %v3108
  %v3228 = vpop.permute.xlu0 %3227
  %v3230 = vmul.f32 %v3228, %v261
  %3231 = vset.pattern.permute.xlu0 32
  %3232 = vperm.xlu0 %3231, %v3108
  %v3233 = vpop.permute.xlu0 %3232
  %v3235 = vmul.f32 %v3233, %v266
  %3236 = vset.pattern.permute.xlu0 33
  %3237 = vperm.xlu0 %3236, %v3108
  %v3238 = vpop.permute.xlu0 %3237
  %v3240 = vmul.f32 %v3238, %v271
  %3241 = vset.pattern.permute.xlu0 34
  %3242 = vperm.xlu0 %3241, %v3108
  %v3243 = vpop.permute.xlu0 %3242
  %v3245 = vmul.f32 %v3243, %v276
  %3246 = vset.pattern.permute.xlu0 35
  %3247 = vperm.xlu0 %3246, %v3108
  %v3248 = vpop.permute.xlu0 %3247
  %v3250 = vmul.f32 %v3248, %v281
  %3251 = vset.pattern.permute.xlu0 36
  %3252 = vperm.xlu0 %3251, %v3108
  %v3253 = vpop.permute.xlu0 %3252
  %v3255 = vmul.f32 %v3253, %v286
  %3256 = vset.pattern.permute.xlu0 37
  %3257 = vperm.xlu0 %3256, %v3108
  %v3258 = vpop.permute.xlu0 %3257
  %v3260 = vmul.f32 %v3258, %v291
  %3261 = vset.pattern.permute.xlu0 38
  %3262 = vperm.xlu0 %3261, %v3108
  %v3263 = vpop.permute.xlu0 %3262
  %v3265 = vmul.f32 %v3263, %v296
  %3266 = vset.pattern.permute.xlu0 39
  %3267 = vperm.xlu0 %3266, %v3108
  %v3268 = vpop.permute.xlu0 %3267
  %v3270 = vmul.f32 %v3268, %v301
  %v3271 = vadd.f32 %v3225, %v3230
  %v3272 = vadd.f32 %v3235, %v3240
  %v3273 = vadd.f32 %v3245, %v3250
  %v3274 = vadd.f32 %v3255, %v3260
  %v3275 = vadd.f32 %v3265, %v3270
  %v3276 = vadd.f32 %v3271, %v3272
  %v3277 = vadd.f32 %v3273, %v3274
  %v3278 = vadd.f32 %v3276, %v3277
  %v3279 = vadd.f32 %v3278, %v3275
  %v3281 = vrot.slane %v3279, 6
  %v3283 = vadd.f32 %v3220, %v3281
  %v3284 = vtanh.pop %v3283
  %v3285 = vadd.f32 %v3284, 1.0
  %v3286 = vmul.f32 %v3285, 0.5
  %v3288 = vrot.slane %v3102, 6
  %v3290 = vmul.f32 %v3286, %v3288
  %3292 = vrot.lane.b32.xlu0 %v3284, 108
  %v3293 = vpop.permute.xlu0 %3292
  %v3295 = vmul.f32 %v3286, %v3293
  %3297 = vrot.lane.b32.xlu0 %v3295, 10
  %v3298 = vpop.permute.xlu0 %3297
  %v3300 = vadd.f32 %v3290, %v3298
  %v3301 = vtanh.pop %v3300
  %3303 = vrot.lane.b32.xlu0 %v3301, 20
  %v3304 = vpop.permute.xlu0 %3303
  %v3306 = vmul.f32 %v3286, %v3304
  %3308 = vrot.lane.b32.xlu0 %v3306, 98
  %v3309 = vpop.permute.xlu0 %3308
  %3311 = vst.msk [vmem:[#allocation2 + $0x18] sm:$0xc0] %vm934, %v3309
  %v3312 = vld [vmem:[#allocation2] sm:$0xff]
  %v3313 = vld [vmem:[#allocation2 + $0x8] sm:$0xff]
  %v3314 = vld [vmem:[#allocation2 + $0x10] sm:$0xff]
  %v3315 = vld [vmem:[#allocation2 + $0x18] sm:$0xff]
  %v3316 = vlaneseq
  %v3317 = vshrl.u32 %v3316, 7
  %v3318 = vsub.s32 0, %v3317
  %v3319 = vrot.slane %v24, %v3318
  %vm3320 = vcmask 80896
  %v3322 = vsel %vm3320, %v3312, 0
  %v3325 = vsel %vm3320, %v3313, 0
  %v3328 = vsel %vm3320, %v3314, 0
  %v3331 = vsel %vm3320, %v3315, 0
  %vm3333 = vcmask 1041408
  %v3335 = vsel %vm3333, %v23, 0
  %3337 = vmatprep.subr.mxu0 0.0
  %3338 = vmatpush1.msra.mxu0 %v22
  %3339 = vmatprep.subr.mxu0 0.0
  %3340 = vmatpush1.msra.mxu0 %v3335
  %3341 = vmatprep.subr.mxu0 0.0
  %3342 = vmatpush1.msra.mxu0 0.0
  %3343 = vmatprep.subr.mxu0 0.0
  %3344 = vmatpush1.msra.mxu0 0.0
  %3345 = vmatprep.subr.mxu0 0.0
  %3346 = vmatpush1.msra.mxu0 0.0
  %3347 = vmatprep.subr.mxu0 0.0
  %3348 = vmatpush1.msra.mxu0 0.0
  %3349 = vmatprep.subr.mxu0 0.0
  %3350 = vmatpush1.msra.mxu0 0.0
  %3351 = vmatprep.subr.mxu0 0.0
  %3352 = vmatpush1.msra.mxu0 0.0
  %3353 = vmatprep.subr.mxu0 0.0
  %3354 = vmatpush1.msra.mxu0 0.0
  %3355 = vmatprep.subr.mxu0 0.0
  %3356 = vmatpush1.msra.mxu0 0.0
  %3357 = vmatprep.subr.mxu0 0.0
  %3358 = vmatpush1.msra.mxu0 0.0
  %3359 = vmatprep.subr.mxu0 0.0
  %3360 = vmatpush1.msra.mxu0 0.0
  %3361 = vmatprep.subr.mxu0 0.0
  %3362 = vmatpush1.msra.mxu0 0.0
  %3363 = vmatprep.subr.mxu0 0.0
  %3364 = vmatpush1.msra.mxu0 0.0
  %3365 = vmatprep.subr.mxu0 0.0
  %3366 = vmatpush1.msra.mxu0 0.0
  %3367 = vmatprep.subr.mxu0 0.0
  %3368 = vmatpush1.msra.mxu0 0.0
  %3369 = vmatprep.subr.mxu0 0.0
  %3370 = vmatpush1.msra.mxu0 0.0
  %3371 = vmatprep.subr.mxu0 0.0
  %3372 = vmatpush1.msra.mxu0 0.0
  %3373 = vmatprep.subr.mxu0 0.0
  %3374 = vmatpush1.msra.mxu0 0.0
  %3375 = vmatprep.subr.mxu0 0.0
  %3376 = vmatpush1.msra.mxu0 0.0
  %3377 = vmatprep.subr.mxu0 0.0
  %3378 = vmatpush1.msra.mxu0 0.0
  %3379 = vmatprep.subr.mxu0 0.0
  %3380 = vmatpush1.msra.mxu0 0.0
  %3381 = vmatprep.subr.mxu0 0.0
  %3382 = vmatpush1.msra.mxu0 0.0
  %3383 = vmatprep.subr.mxu0 0.0
  %3384 = vmatpush1.msra.mxu0 0.0
  %3385 = vmatprep.subr.mxu0 0.0
  %3386 = vmatpush1.msra.mxu0 0.0
  %3387 = vmatprep.subr.mxu0 0.0
  %3388 = vmatpush1.msra.mxu0 0.0
  %3389 = vmatprep.subr.mxu0 0.0
  %3390 = vmatpush1.msra.mxu0 0.0
  %3391 = vmatprep.subr.mxu0 0.0
  %3392 = vmatpush1.msra.mxu0 0.0
  %3393 = vmatprep.subr.mxu0 0.0
  %3394 = vmatpush1.msra.mxu0 0.0
  %3395 = vmatprep.subr.mxu0 0.0
  %3396 = vmatpush1.msra.mxu0 0.0
  %3397 = vmatprep.subr.mxu0 0.0
  %3398 = vmatpush1.msra.mxu0 0.0
  %3399 = vmatprep.subr.mxu0 0.0
  %3400 = vmatpush1.msra.mxu0 0.0
  %3401 = vmatprep.mubr.f32.mxu0 0.0
  %3402 = vmatmul.mubr.f32.gmra.mrb[0].mxu0 %v3322
  %v3403 = vpop.f32.mrb[0].mxu0
  %v3404 = vadd.f32 %v3319, %v3403
  %v3405 = vpop.f32.mrb[0].mxu0
  %3406 = vmatprep.mubr.f32.mxu0 0.0
  %3407 = vmatmul.mubr.f32.gmra.mrb[0].mxu0 %v3325
  %v3408 = vpop.f32.mrb[0].mxu0
  %v3409 = vadd.f32 %v3319, %v3408
  %v3410 = vpop.f32.mrb[0].mxu0
  %3411 = vmatprep.mubr.f32.mxu0 0.0
  %3412 = vmatmul.mubr.f32.gmra.mrb[0].mxu0 %v3328
  %v3413 = vpop.f32.mrb[0].mxu0
  %v3414 = vadd.f32 %v3319, %v3413
  %v3415 = vpop.f32.mrb[0].mxu0
  %3416 = vmatprep.mubr.f32.mxu0 0.0
  %3417 = vmatmul.mubr.f32.gmra.mrb[0].mxu0 %v3331
  %v3418 = vpop.f32.mrb[0].mxu0
  %v3419 = vadd.f32 %v3319, %v3418
  %v3420 = vpop.f32.mrb[0].mxu0
  %3421 = vdwg.mxu0
  %v3422 = vtanh.pop %v3404
  %v3423 = vtanh.pop %v3409
  %v3424 = vtanh.pop %v3414
  %v3425 = vtanh.pop %v3419
  %v3426 = vlaneseq
  %v3427 = vshrl.u32 %v3426, 7
  %v3428 = vsub.s32 0, %v3427
  %v3429 = vrot.slane %v25, %v3428
  %v3430 = vmul.f32 %v3422, %v3429
  %v3431 = vmul.f32 %v3423, %v3429
  %v3432 = vmul.f32 %v3424, %v3429
  %v3433 = vmul.f32 %v3425, %v3429
  %v3434 = vsel %vm3320, %v3430, 0.0
  %3435 = vadd.xlane.f32.xlu0 %v3434
  %v3436 = vpop.xlane.xlu0 %3435
  %v3437 = vsel %vm3320, %v3431, 0.0
  %3438 = vadd.xlane.f32.xlu0 %v3437
  %v3439 = vpop.xlane.xlu0 %3438
  %v3440 = vsel %vm3320, %v3432, 0.0
  %3441 = vadd.xlane.f32.xlu0 %v3440
  %v3442 = vpop.xlane.xlu0 %3441
  %v3443 = vsel %vm3320, %v3433, 0.0
  %3444 = vadd.xlane.f32.xlu0 %v3443
  %v3445 = vpop.xlane.xlu0 %3444
  %v3446 = vlaneseq
  %v3447 = vshrl.u32 %v3446, 7
  %v3448 = vadd.s32 %v3447, 8
  %v3449 = vadd.s32 %v3447, 16
  %v3450 = vadd.s32 %v3447, 24
  %v3451 = vmax.f32 %v3436, %v3439
  %v3452 = vmax.f32 %v3442, %v3445
  %v3453 = vmax.f32 %v3451, %v3452
  %v3454 = vrot.slane %v3453, 4
  %v3455 = vmax.f32 %v3453, %v3454
  %v3456 = vrot.slane %v3455, 2
  %v3457 = vmax.f32 %v3455, %v3456
  %v3458 = vrot.slane %v3457, 1
  %v3459 = vmax.f32 %v3457, %v3458
  %v3460 = vsub.f32 %v3436, %v3459
  %v3461 = vsub.f32 %v3439, %v3459
  %v3462 = vsub.f32 %v3442, %v3459
  %v3463 = vsub.f32 %v3445, %v3459
  %v3464 = vmul.f32 %v3460, 1.442695
  %v3465 = vpow.pop %v3464
  %v3466 = vmul.f32 %v3461, 1.442695
  %v3467 = vpow.pop %v3466
  %v3468 = vmul.f32 %v3462, 1.442695
  %v3469 = vpow.pop %v3468
  %v3470 = vmul.f32 %v3463, 1.442695
  %v3471 = vpow.pop %v3470
  %vm3472 = vcmp.lt.s32.totalorder %v3447, 0
  %v3473 = vsub.s32 0, %v3447
  %v3474 = vsel %vm3472, %v3473, %v3447
  %v3475 = vshrl.u32 %v3474, 1
  %v3476 = vand.u32 %v3474, 1
  %v3477 = vsub.s32 0, %v3476
  %v3478 = vsel %vm3472, %v3477, %v3476
  %vm3479 = vcmp.lt.s32.totalorder %v3448, 0
  %v3480 = vsub.s32 0, %v3448
  %v3481 = vsel %vm3479, %v3480, %v3448
  %v3482 = vshrl.u32 %v3481, 1
  %v3483 = vand.u32 %v3481, 1
  %v3484 = vsub.s32 0, %v3483
  %v3485 = vsel %vm3479, %v3484, %v3483
  %vm3486 = vcmp.lt.s32.totalorder %v3449, 0
  %v3487 = vsub.s32 0, %v3449
  %v3488 = vsel %vm3486, %v3487, %v3449
  %v3489 = vshrl.u32 %v3488, 1
  %v3490 = vand.u32 %v3488, 1
  %v3491 = vsub.s32 0, %v3490
  %v3492 = vsel %vm3486, %v3491, %v3490
  %vm3493 = vcmp.lt.s32.totalorder %v3450, 0
  %v3494 = vsub.s32 0, %v3450
  %v3495 = vsel %vm3493, %v3494, %v3450
  %v3496 = vshrl.u32 %v3495, 1
  %v3497 = vand.u32 %v3495, 1
  %v3498 = vsub.s32 0, %v3497
  %v3499 = vsel %vm3493, %v3498, %v3497
  %vm3500 = vcmp.ne.s32.totalorder %v3478, 0
  %vm3501 = vcmp.ne.s32.totalorder %v3485, 0
  %vm3502 = vcmp.ne.s32.totalorder %v3492, 0
  %vm3503 = vcmp.ne.s32.totalorder %v3499, 0
  %vm3504 = vcmp.lt.s32.totalorder %v3478, 0
  %vm3505 = vcmp.lt.s32.totalorder %v3485, 0
  %vm3506 = vcmp.lt.s32.totalorder %v3492, 0
  %vm3507 = vcmp.lt.s32.totalorder %v3499, 0
  %vm3508 = vmand %vm3504, %vm3500
  %vm3509 = vmand %vm3505, %vm3501
  %vm3510 = vmand %vm3506, %vm3502
  %vm3511 = vmand %vm3507, %vm3503
  %v3512 = vadd.s32 %v3478, 2
  %v3513 = vadd.s32 %v3485, 2
  %v3514 = vadd.s32 %v3492, 2
  %v3515 = vadd.s32 %v3499, 2
  %v3516 = vsel %vm3508, %v3512, %v3478
  %v3517 = vsel %vm3509, %v3513, %v3485
  %v3518 = vsel %vm3510, %v3514, %v3492
  %v3519 = vsel %vm3511, %v3515, %v3499
  %vm3520 = vcmp.eq.s32.totalorder %v3516, 0
  %vm3521 = vcmp.eq.s32.totalorder %v3517, 0
  %vm3522 = vcmp.eq.s32.totalorder %v3518, 0
  %vm3523 = vcmp.eq.s32.totalorder %v3519, 0
  %v3524 = vsel %vm3520, %v3465, 0.0
  %v3525 = vsel %vm3521, %v3467, 0.0
  %v3526 = vsel %vm3522, %v3469, 0.0
  %v3527 = vsel %vm3523, %v3471, 0.0
  %v3528 = vadd.f32 %v3524, %v3525
  %v3529 = vadd.f32 %v3528, %v3526
  %v3530 = vadd.f32 %v3529, %v3527
  %v3531 = vrot.slane %v3530, 4
  %v3532 = vadd.f32 %v3530, %v3531
  %v3533 = vrot.slane %v3532, 2
  %v3534 = vadd.f32 %v3532, %v3533
  %v3535 = vrot.slane %v3534, 1
  %v3536 = vadd.f32 %v3534, %v3535
  %v3537 = vsel %vm3520, %v3536, 0.0
  %v3538 = vsel %vm3521, %v3536, 0.0
  %v3539 = vsel %vm3522, %v3536, 0.0
  %v3540 = vsel %vm3523, %v3536, 0.0
  %v3541 = vadd.f32 %v3537, 0.0
  %v3542 = vadd.f32 %v3538, 0.0
  %v3543 = vadd.f32 %v3539, 0.0
  %v3544 = vadd.f32 %v3540, 0.0
  %vm3545 = vcmp.eq.s32.totalorder %v3516, 1
  %vm3546 = vcmp.eq.s32.totalorder %v3517, 1
  %vm3547 = vcmp.eq.s32.totalorder %v3518, 1
  %vm3548 = vcmp.eq.s32.totalorder %v3519, 1
  %v3549 = vsel %vm3545, %v3465, 0.0
  %v3550 = vsel %vm3546, %v3467, 0.0
  %v3551 = vsel %vm3547, %v3469, 0.0
  %v3552 = vsel %vm3548, %v3471, 0.0
  %v3553 = vadd.f32 %v3549, %v3550
  %v3554 = vadd.f32 %v3553, %v3551
  %v3555 = vadd.f32 %v3554, %v3552
  %v3556 = vrot.slane %v3555, 4
  %v3557 = vadd.f32 %v3555, %v3556
  %v3558 = vrot.slane %v3557, 2
  %v3559 = vadd.f32 %v3557, %v3558
  %v3560 = vrot.slane %v3559, 1
  %v3561 = vadd.f32 %v3559, %v3560
  %v3562 = vsel %vm3545, %v3561, 0.0
  %v3563 = vsel %vm3546, %v3561, 0.0
  %v3564 = vsel %vm3547, %v3561, 0.0
  %v3565 = vsel %vm3548, %v3561, 0.0
  %v3566 = vadd.f32 %v3541, %v3562
  %v3567 = vadd.f32 %v3542, %v3563
  %v3568 = vadd.f32 %v3543, %v3564
  %v3569 = vadd.f32 %v3544, %v3565
  %v3570 = vrcp.pop %v3566
  %v3571 = vmul.f32 %v3465, %v3570
  %v3572 = vrcp.pop %v3567
  %v3573 = vmul.f32 %v3467, %v3572
  %v3574 = vrcp.pop %v3568
  %v3575 = vmul.f32 %v3469, %v3574
  %v3576 = vrcp.pop %v3569
  %v3577 = vmul.f32 %v3471, %v3576
  %vm3578 = vcmask 7168
  %3579 = vst.msk [vmem:[%s3] sm:$0xff] %vm3578, %v3571
  %3580 = vst.msk [vmem:[%s3 + $0x8] sm:$0xff] %vm3578, %v3573
  %3581 = vst.msk [vmem:[%s3 + $0x10] sm:$0xff] %vm3578, %v3575
  %3582 = vst.msk [vmem:[%s3 + $0x18] sm:$0xff] %vm3578, %v3577
  %v3583 = vmul.f32 %v3571, %v3312
  %v3584 = vmul.f32 %v3573, %v3313
  %v3585 = vmul.f32 %v3575, %v3314
  %v3586 = vmul.f32 %v3577, %v3315
  %v3587 = vsel %vm3520, 1, 0
  %v3588 = vsel %vm3521, 1, 0
  %v3589 = vsel %vm3522, 1, 0
  %v3590 = vsel %vm3523, 1, 0
  %vm3591 = vcmp.eq.s32.totalorder %v3587, 1
  %vm3592 = vcmp.eq.s32.totalorder %v3588, 1
  %vm3593 = vcmp.eq.s32.totalorder %v3589, 1
  %vm3594 = vcmp.eq.s32.totalorder %v3590, 1
  %v3595 = vsel %vm3591, %v3583, 0.0
  %v3596 = vsel %vm3592, %v3584, 0.0
  %v3597 = vsel %vm3593, %v3585, 0.0
  %v3598 = vsel %vm3594, %v3586, 0.0
  %v3599 = vsel %vm3320, %v3595, 0.0
  %v3600 = vsel %vm3320, %v3596, 0.0
  %v3601 = vadd.f32 %v3599, %v3600
  %v3602 = vsel %vm3320, %v3597, 0.0
  %v3603 = vadd.f32 %v3601, %v3602
  %v3604 = vsel %vm3320, %v3598, 0.0
  %v3605 = vadd.f32 %v3603, %v3604
  %v3606 = vrot.slane %v3605, 4
  %v3607 = vadd.f32 %v3605, %v3606
  %v3608 = vrot.slane %v3607, 2
  %v3609 = vadd.f32 %v3607, %v3608
  %v3610 = vrot.slane %v3609, 1
  %v3611 = vadd.f32 %v3609, %v3610
  %v3612 = vsel %vm3545, 1, 0
  %v3613 = vsel %vm3546, 1, 0
  %v3614 = vsel %vm3547, 1, 0
  %v3615 = vsel %vm3548, 1, 0
  %vm3616 = vcmp.eq.s32.totalorder %v3612, 1
  %vm3617 = vcmp.eq.s32.totalorder %v3613, 1
  %vm3618 = vcmp.eq.s32.totalorder %v3614, 1
  %vm3619 = vcmp.eq.s32.totalorder %v3615, 1
  %v3620 = vsel %vm3616, %v3583, 0.0
  %v3621 = vsel %vm3617, %v3584, 0.0
  %v3622 = vsel %vm3618, %v3585, 0.0
  %v3623 = vsel %vm3619, %v3586, 0.0
  %v3624 = vsel %vm3320, %v3620, 0.0
  %v3625 = vsel %vm3320, %v3621, 0.0
  %v3626 = vadd.f32 %v3624, %v3625
  %v3627 = vsel %vm3320, %v3622, 0.0
  %v3628 = vadd.f32 %v3626, %v3627
  %v3629 = vsel %vm3320, %v3623, 0.0
  %v3630 = vadd.f32 %v3628, %v3629
  %v3631 = vrot.slane %v3630, 4
  %v3632 = vadd.f32 %v3630, %v3631
  %v3633 = vrot.slane %v3632, 2
  %v3634 = vadd.f32 %v3632, %v3633
  %v3635 = vrot.slane %v3634, 1
  %v3636 = vadd.f32 %v3634, %v3635
  %vm3637 = vcmask 1040384
  %v3638 = vsel %vm3637, %v3611, %v3636
  %v3639 = vlaneseq
  %v3640 = vshrl.u32 %v3639, 7
  %v3641 = vsub.s32 0, %v3640
  %v3642 = vrot.slane %v26, %v3641
  %v3643 = vmul.f32 %v3638, %v3642
  %v3644 = vsel %vm337, %v3643, 0.0
  %3645 = vadd.xlane.f32.xlu0 %v3644
  %v3646 = vpop.xlane.xlu0 %3645
  %v3647 = vlaneseq
  %v3648 = vshrl.u32 %v3647, 7
  %v3649 = vsub.s32 0, %v3648
  %v3650 = vrot.slane %v27, %v3649
  %v3651 = vadd.f32 %v3646, %v3650
  %vm3652 = vcmask 1024
  %3653 = vst.msk [vmem:[%s2] sm:$0x3] %vm3652, %v3651
  // Predicated region
  $region10: #{attention_lstm_forward.1} parent=0 // pred_check
    _
  $region11: #{attention_lstm_forward.1} parent=0 // pred_check_branch
    %3655 = sbr.rel (0) target = $region13
  $region12: #{attention_lstm_forward.1} parent=0 // pred_region
    _
  $region13: #{attention_lstm_forward.1} parent=0 // pred_fallthru
    _
  // Predicated region
  $region14: #{attention_lstm_forward.1} parent=0 // pred_check
    _
  $region15: #{attention_lstm_forward.1} parent=0 // pred_check_branch
    %3657 = sbr.rel (0) target = $region17
  $region16: #{attention_lstm_forward.1} parent=0 // pred_region
    _
  $region17: #{attention_lstm_forward.1} parent=0 // pred_fallthru
    _
  // Predicated region
  $region18: #{attention_lstm_forward.1} parent=0 // pred_check
    _
  $region19: #{attention_lstm_forward.1} parent=0 // pred_check_branch
    %3659 = sbr.rel (0) target = $region21
  $region20: #{attention_lstm_forward.1} parent=0 // pred_region
    _
  $region21: #{attention_lstm_forward.1} parent=0 // pred_fallthru
    _
  // Predicated region
  $region22: #{attention_lstm_forward.1} parent=0 // pred_check
    _
  $region23: #{attention_lstm_forward.1} parent=0 // pred_check_branch
    %3661 = sbr.rel (0) target = $region25
  $region24: #{attention_lstm_forward.1} parent=0 // pred_region
    _
  $region25: #{attention_lstm_forward.1} parent=0 // pred_fallthru
    _

</llo_original>
